<compile_context>
chip_gen: v7x
topology: tpu7x:2x2x1
jax: 0.10.0
libtpu: 0.0.40
codegen_flags: <defaults>
</compile_context>

<pallas_src>
import functools

import jax
import jax.numpy as jnp
from jax.experimental import pallas as pl
from jax.experimental.pallas import tpu as pltpu

LANE = 128  # TPU lane width; channels are zero-padded to a multiple of this.


# ----------------------------- Pallas kernel ------------------------------ #
def basic_block_kernel(xres_ref, xp_ref, w1_ref, w2_ref,
                       g1_ref, b1_ref, g2_ref, b2_ref,
                       sw_ref, o_ref, pad_ref, *, c_valid):
    # xres_ref : (N, H*W, CP) f32      residual x, channel-padded, lane-dense
    # xp_ref   : (N, H+2, W+2, CP) bf16 spatially pre-padded conv1 input
    # w1/w2    : (9*CP, CP) bf16       (ky, kx, Cin_pad) flattened on K
    # g*/b*    : (1, CP) f32           SwitchNorm affine (zero in padded lanes)
    # sw_ref   : (12,) f32 in SMEM     [softmax(mw1), softmax(vw1),
    #                                   softmax(mw2), softmax(vw2)]
    # o_ref    : (N, H*W, CP) f32
    # pad_ref  : (N, H+2, W+2, CP) bf16 VMEM scratch, halo-padded conv2 input
    N, Hp, Wp, CP = xp_ref.shape
    H, W = Hp - 2, Wp - 2
    HW = H * W
    eps = 1e-5

    def conv3x3(vp, w_ref):
        # vp: zero-padded activation (N, H+2, W+2, CP) bf16; w_ref: (9*CP, CP) bf16
        slices = [vp[:, ky:ky + H, kx:kx + W, :]
                  for ky in range(3) for kx in range(3)]
        patches = jnp.concatenate(slices, axis=-1)           # bf16 (N,H,W,9*CP)
        patches = patches.reshape(N * HW, 9 * CP)
        y = jnp.dot(patches, w_ref[...],
                    preferred_element_type=jnp.float32)      # (N*HW, CP) f32
        return y.reshape(N, HW, CP)

    def switch_norm(y, gamma, beta, off):
        # y: (N, HW, CP) f32; padded channels of y are exactly zero, so channel
        # sums equal the valid-channel sums and LN stats divide by c_valid.
        mean_in = jnp.mean(y, axis=1, keepdims=True)                       # (N,1,CP)
        var_in = (jnp.sum((y - mean_in) ** 2, axis=1, keepdims=True)
                  / (HW - 1))                                # ddof=1 == torch .var()
        temp = var_in + mean_in * mean_in

        inv_c = 1.0 / c_valid
        mean_ln = jnp.sum(mean_in, axis=2, keepdims=True) * inv_c          # (N,1,1)
        var_ln = jnp.sum(temp, axis=2, keepdims=True) * inv_c - mean_ln ** 2
        mean_bn = jnp.mean(mean_in, axis=0, keepdims=True)                 # (1,1,CP)
        var_bn = jnp.mean(temp, axis=0, keepdims=True) - mean_bn ** 2

        m0 = sw_ref[off + 0]; m1 = sw_ref[off + 1]; m2 = sw_ref[off + 2]
        v0 = sw_ref[off + 3]; v1 = sw_ref[off + 4]; v2 = sw_ref[off + 5]

        mean = m0 * mean_in + m1 * mean_ln + m2 * mean_bn                  # (N,1,CP)
        var = v0 * var_in + v1 * var_ln + v2 * var_bn
        var = jnp.maximum(var, 0.0)          # guard E[x^2]-E[x]^2 cancellation

        inv = jax.lax.rsqrt(var + eps)                                     # EUP
        scale = gamma.reshape(1, 1, CP) * inv
        bias = beta.reshape(1, 1, CP) - mean * scale
        return y * scale + bias                              # one FMA per element

    # ---- conv1 -> SN1 -> ReLU --------------------------------------------
    out = conv3x3(xp_ref[...], w1_ref)                                     # f32
    out = switch_norm(out, g1_ref[...], b1_ref[...], 0)
    out = jnp.maximum(out, 0.0)

    # ---- halo-padded conv2 input in scratch (zero halo only, once) --------
    zrow = jnp.zeros((N, 1, Wp, CP), jnp.bfloat16)
    pad_ref[:, 0:1, :, :] = zrow
    pad_ref[:, H + 1:H + 2, :, :] = zrow
    zcol = jnp.zeros((N, H, 1, CP), jnp.bfloat16)
    pad_ref[:, 1:H + 1, 0:1, :] = zcol
    pad_ref[:, 1:H + 1, W + 1:W + 2, :] = zcol
    pad_ref[:, 1:H + 1, 1:W + 1, :] = out.astype(jnp.bfloat16).reshape(N, H, W, CP)

    # ---- conv2 -> SN2 -> residual add -> ReLU ------------------------------
    out = conv3x3(pad_ref[...], w2_ref)
    out = switch_norm(out, g2_ref[...], b2_ref[...], 6)
    out = jnp.maximum(out + xres_ref[...], 0.0)
    o_ref[...] = out


# ------------------------------- wrapper ----------------------------------- #
def basic_block_forward(x_nchw, params):
    n, cin, h, w = x_nchw.shape
    cout = params["w1"].shape[0]
    assert cin == cout, "stride=1 / downsample=None BasicBlock requires Cin == Cout"
    cp = ((cout + LANE - 1) // LANE) * LANE                  # lane-dense channels

    x_nhwc = jnp.transpose(x_nchw, (0, 2, 3, 1)).astype(jnp.float32)
    x_padc = jnp.pad(x_nhwc, ((0, 0), (0, 0), (0, 0), (0, cp - cin)))
    xres = x_padc.reshape(n, h * w, cp)                                   # f32 residual
    xp = jnp.pad(x_padc, ((0, 0), (1, 1), (1, 1), (0, 0))).astype(jnp.bfloat16)

    # PyTorch conv weight (O, I, 3, 3) -> (ky, kx, I, O), channel-pad, (9*CP, CP) bf16
    def prep_w(w_oihw):
        wk = jnp.transpose(w_oihw, (2, 3, 1, 0))
        wk = jnp.pad(wk, ((0, 0), (0, 0), (0, cp - cin), (0, cp - cout)))
        return wk.reshape(9 * cp, cp).astype(jnp.bfloat16)

    w1, w2 = prep_w(params["w1"]), prep_w(params["w2"])

    def prep_affine(p):
        return jnp.pad(p.reshape(1, cout).astype(jnp.float32),
                       ((0, 0), (0, cp - cout)))

    g1, b1 = prep_affine(params["g1"]), prep_affine(params["b1"])
    g2, b2 = prep_affine(params["g2"]), prep_affine(params["b2"])

    # softmax of the mixture weights hoisted out of the kernel (data independent)
    sw = jnp.concatenate([
        jax.nn.softmax(params["mw1"].reshape(-1)),
        jax.nn.softmax(params["vw1"].reshape(-1)),
        jax.nn.softmax(params["mw2"].reshape(-1)),
        jax.nn.softmax(params["vw2"].reshape(-1)),
    ]).astype(jnp.float32)                                                # (12,)

    vspec = pl.BlockSpec(memory_space=pltpu.MemorySpace.VMEM)
    sspec = pl.BlockSpec(memory_space=pltpu.MemorySpace.SMEM)

    flops = 4 * n * h * w * (9 * cp) * cp                    # two 3x3 convs (padded)
    bytes_accessed = int(
        xp.size * 2 + xres.size * 4 + n * h * w * cp * 4     # act in/res/out
        + (w1.size + w2.size) * 2 + (4 * cp + 12) * 4        # weights + affine
        + 2 * 9 * n * h * w * cp * 2)                        # im2col 9x read amp (bf16)
    cost = pl.CostEstimate(flops=flops,
                           transcendentals=2 * n * cp,       # rsqrt per (N, CP)
                           bytes_accessed=bytes_accessed)

    kernel = functools.partial(basic_block_kernel, c_valid=cout)

    out = pl.pallas_call(
        kernel,
        out_shape=jax.ShapeDtypeStruct((n, h * w, cp), jnp.float32),
        in_specs=[vspec] * 8 + [sspec],
        out_specs=vspec,
        scratch_shapes=[pltpu.VMEM((n, h + 2, w + 2, cp), jnp.bfloat16)],
        compiler_params=pltpu.CompilerParams(vmem_limit_bytes=32 * 1024 * 1024),
        cost_estimate=cost,
    )(xres, xp, w1, w2, g1, b1, g2, b2, sw)

    out = out[:, :, :cout].reshape(n, h, w, cout)            # strip padded lanes
    return jnp.transpose(out, (0, 3, 1, 2))                  # back to NCHW


# -------------------------- pure-JAX references ----------------------------- #
def _ref_conv3x3(x, w_oihw, matmul_dtype=jnp.float32):
    return jax.lax.conv_general_dilated(
        x.astype(matmul_dtype), w_oihw.astype(matmul_dtype),
        window_strides=(1, 1), padding=((1, 1), (1, 1)),
        dimension_numbers=("NCHW", "OIHW", "NCHW"),
        preferred_element_type=jnp.float32)


def _ref_switch_norm(x, gamma, beta, mw, vw, eps=1e-5):
    n, c, h, w = x.shape
    xr = x.reshape(n, c, -1)
    mean_in = xr.mean(-1, keepdims=True)
    var_in = xr.var(-1, keepdims=True, ddof=1)               # torch .var() (unbiased)
    temp = var_in + mean_in ** 2
    mean_ln = mean_in.mean(1, keepdims=True)
    var_ln = temp.mean(1, keepdims=True) - mean_ln ** 2
    mean_bn = mean_in.mean(0, keepdims=True)
    var_bn = temp.mean(0, keepdims=True) - mean_bn ** 2
    mws = jax.nn.softmax(mw)
    vws = jax.nn.softmax(vw)
    mean = mws[0] * mean_in + mws[1] * mean_ln + mws[2] * mean_bn
    var = vws[0] * var_in + vws[1] * var_ln + vws[2] * var_bn
    xn = ((xr - mean) / jnp.sqrt(var + eps)).reshape(n, c, h, w)
    return xn * gamma.reshape(1, c, 1, 1) + beta.reshape(1, c, 1, 1)


def _ref_basic_block(x, p, matmul_dtype=jnp.float32):
    out = _ref_conv3x3(x, p["w1"], matmul_dtype)
    out = _ref_switch_norm(out, p["g1"], p["b1"], p["mw1"], p["vw1"])
    out = jnp.maximum(out, 0.0)
    out = _ref_conv3x3(out, p["w2"], matmul_dtype)
    out = _ref_switch_norm(out, p["g2"], p["b2"], p["mw2"], p["vw2"])
    out = out + x
    return jnp.maximum(out, 0.0)


# --------------------------------- main ------------------------------------ #
if __name__ == "__main__":
    N, C, H, W = 2, 8, 16, 16          # inplanes == planes, stride=1, downsample=None
    key = jax.random.PRNGKey(0)
    ks = jax.random.split(key, 12)

    params = {
        "w1": 0.2 * jax.random.normal(ks[0], (C, C, 3, 3), jnp.float32),
        "w2": 0.2 * jax.random.normal(ks[1], (C, C, 3, 3), jnp.float32),
        "g1": 1.0 + 0.1 * jax.random.normal(ks[2], (1, C, 1, 1), jnp.float32),
        "b1": 0.1 * jax.random.normal(ks[3], (1, C, 1, 1), jnp.float32),
        "mw1": jax.random.normal(ks[4], (3,), jnp.float32),
        "vw1": jax.random.normal(ks[5], (3,), jnp.float32),
        "g2": 1.0 + 0.1 * jax.random.normal(ks[6], (1, C, 1, 1), jnp.float32),
        "b2": 0.1 * jax.random.normal(ks[7], (1, C, 1, 1), jnp.float32),
        "mw2": jax.random.normal(ks[8], (3,), jnp.float32),
        "vw2": jax.random.normal(ks[9], (3,), jnp.float32),
    }
    x = jax.random.normal(ks[10], (N, C, H, W), jnp.float32)

    out = jax.block_until_ready(basic_block_forward(x, params))
    assert out.shape == (N, C, H, W)

    # precision-matched reference (bf16 conv operands, f32 accumulation)
    ref_bf16 = jax.block_until_ready(_ref_basic_block(x, params, jnp.bfloat16))
    err = float(jnp.max(jnp.abs(out - ref_bf16)))
    assert jnp.allclose(out, ref_bf16, atol=2e-3, rtol=2e-3), err

    # full-f32 reference sanity check (bounds the bf16-matmul deviation)
    ref_f32 = jax.block_until_ready(_ref_basic_block(x, params, jnp.float32))
    err_f32 = float(jnp.max(jnp.abs(out - ref_f32)))
    assert err_f32 < 0.1, err_f32

    print("KERNEL_OK")
</pallas_src>

<mosaic_0001>
module attributes {stable_mosaic.version = 11 : i64} {
  func.func @basic_block_kernel(%arg0: memref<2x256x128xf32, #tpu.memory_space<vmem>>, %arg1: memref<2x18x18x128xbf16, #tpu.memory_space<vmem>>, %arg2: memref<1152x128xbf16, #tpu.memory_space<vmem>>, %arg3: memref<1152x128xbf16, #tpu.memory_space<vmem>>, %arg4: memref<1x128xf32, #tpu.memory_space<vmem>>, %arg5: memref<1x128xf32, #tpu.memory_space<vmem>>, %arg6: memref<1x128xf32, #tpu.memory_space<vmem>>, %arg7: memref<1x128xf32, #tpu.memory_space<vmem>>, %arg8: memref<12xf32, #tpu.memory_space<smem>>, %arg9: memref<2x256x128xf32, #tpu.memory_space<vmem>>, %arg10: memref<2x18x18x128xbf16, #tpu.memory_space<vmem>>) attributes {dimension_semantics = [], scalar_prefetch = 0 : i64, scratch_operands = 1 : i64, tpu.core_type = #tpu.core_type<tc>} {
    %c0 = arith.constant 0 : index
    %c0_0 = arith.constant 0 : index
    %c0_1 = arith.constant 0 : index
    %c0_2 = arith.constant 0 : index
    %0 = vector.load %arg1[%c0, %c0_0, %c0_1, %c0_2] : memref<2x18x18x128xbf16, #tpu.memory_space<vmem>>, vector<2x18x18x128xbf16>
    %1 = vector.extract_strided_slice %0 {offsets = [0, 0, 0, 0], sizes = [2, 16, 16, 128], strides = [1, 1, 1, 1]} : vector<2x18x18x128xbf16> to vector<2x16x16x128xbf16>
    %2 = vector.extract_strided_slice %0 {offsets = [0, 0, 1, 0], sizes = [2, 16, 16, 128], strides = [1, 1, 1, 1]} : vector<2x18x18x128xbf16> to vector<2x16x16x128xbf16>
    %3 = vector.extract_strided_slice %0 {offsets = [0, 0, 2, 0], sizes = [2, 16, 16, 128], strides = [1, 1, 1, 1]} : vector<2x18x18x128xbf16> to vector<2x16x16x128xbf16>
    %4 = vector.extract_strided_slice %0 {offsets = [0, 1, 0, 0], sizes = [2, 16, 16, 128], strides = [1, 1, 1, 1]} : vector<2x18x18x128xbf16> to vector<2x16x16x128xbf16>
    %5 = vector.extract_strided_slice %0 {offsets = [0, 1, 1, 0], sizes = [2, 16, 16, 128], strides = [1, 1, 1, 1]} : vector<2x18x18x128xbf16> to vector<2x16x16x128xbf16>
    %6 = vector.extract_strided_slice %0 {offsets = [0, 1, 2, 0], sizes = [2, 16, 16, 128], strides = [1, 1, 1, 1]} : vector<2x18x18x128xbf16> to vector<2x16x16x128xbf16>
    %7 = vector.extract_strided_slice %0 {offsets = [0, 2, 0, 0], sizes = [2, 16, 16, 128], strides = [1, 1, 1, 1]} : vector<2x18x18x128xbf16> to vector<2x16x16x128xbf16>
    %8 = vector.extract_strided_slice %0 {offsets = [0, 2, 1, 0], sizes = [2, 16, 16, 128], strides = [1, 1, 1, 1]} : vector<2x18x18x128xbf16> to vector<2x16x16x128xbf16>
    %9 = vector.extract_strided_slice %0 {offsets = [0, 2, 2, 0], sizes = [2, 16, 16, 128], strides = [1, 1, 1, 1]} : vector<2x18x18x128xbf16> to vector<2x16x16x128xbf16>
    %10 = tpu.concatenate %1, %2, %3, %4, %5, %6, %7, %8, %9 in 3 : vector<2x16x16x128xbf16>, vector<2x16x16x128xbf16>, vector<2x16x16x128xbf16>, vector<2x16x16x128xbf16>, vector<2x16x16x128xbf16>, vector<2x16x16x128xbf16>, vector<2x16x16x128xbf16>, vector<2x16x16x128xbf16>, vector<2x16x16x128xbf16> -> vector<2x16x16x1152xbf16>
    %11 = vector.shape_cast %10 : vector<2x16x16x1152xbf16> to vector<512x1152xbf16>
    %c0_3 = arith.constant 0 : index
    %c0_4 = arith.constant 0 : index
    %12 = vector.load %arg2[%c0_3, %c0_4] : memref<1152x128xbf16, #tpu.memory_space<vmem>>, vector<1152x128xbf16>
    %cst = arith.constant dense<0.000000e+00> : vector<512x128xf32>
    %13 = tpu.matmul %11, %12, %cst {dimension_numbers = #tpu.dot_dimension_numbers<[1], [0], [0], [1], [0, 0, 1, 1], [], []>} : vector<512x1152xbf16>, vector<1152x128xbf16>, vector<512x128xf32> -> vector<512x128xf32>
    %14 = vector.shape_cast %13 : vector<512x128xf32> to vector<2x256x128xf32>
    %c0_5 = arith.constant 0 : index
    %c0_6 = arith.constant 0 : index
    %15 = vector.load %arg4[%c0_5, %c0_6] : memref<1x128xf32, #tpu.memory_space<vmem>>, vector<1x128xf32>
    %c0_7 = arith.constant 0 : index
    %c0_8 = arith.constant 0 : index
    %16 = vector.load %arg5[%c0_7, %c0_8] : memref<1x128xf32, #tpu.memory_space<vmem>>, vector<1x128xf32>
    %cst_9 = arith.constant dense<0.000000e+00> : vector<2x128xf32>
    %17 = vector.multi_reduction <add>, %14, %cst_9 [1] : vector<2x256x128xf32> to vector<2x128xf32>
    %18 = vector.shape_cast %17 : vector<2x128xf32> to vector<2x1x128xf32>
    %cst_10 = arith.constant 2.560000e+02 : f32
    %19 = vector.broadcast %cst_10 : f32 to vector<2x1x128xf32>
    %20 = arith.divf %18, %19 : vector<2x1x128xf32>
    %21 = vector.broadcast %20 : vector<2x1x128xf32> to vector<2x256x128xf32>
    %22 = arith.subf %14, %21 : vector<2x256x128xf32>
    %23 = arith.mulf %22, %22 : vector<2x256x128xf32>
    %cst_11 = arith.constant dense<0.000000e+00> : vector<2x128xf32>
    %24 = vector.multi_reduction <add>, %23, %cst_11 [1] : vector<2x256x128xf32> to vector<2x128xf32>
    %25 = vector.shape_cast %24 : vector<2x128xf32> to vector<2x1x128xf32>
    %cst_12 = arith.constant 2.550000e+02 : f32
    %26 = vector.broadcast %cst_12 : f32 to vector<2x1x128xf32>
    %27 = arith.divf %25, %26 : vector<2x1x128xf32>
    %28 = arith.mulf %20, %20 : vector<2x1x128xf32>
    %29 = arith.addf %27, %28 : vector<2x1x128xf32>
    %cst_13 = arith.constant dense<0.000000e+00> : vector<2x1xf32>
    %30 = vector.multi_reduction <add>, %20, %cst_13 [2] : vector<2x1x128xf32> to vector<2x1xf32>
    %31 = vector.shape_cast %30 : vector<2x1xf32> to vector<2x1x1xf32>
    %cst_14 = arith.constant 1.250000e-01 : f32
    %32 = vector.broadcast %cst_14 : f32 to vector<2x1x1xf32>
    %33 = arith.mulf %31, %32 : vector<2x1x1xf32>
    %cst_15 = arith.constant dense<0.000000e+00> : vector<2x1xf32>
    %34 = vector.multi_reduction <add>, %29, %cst_15 [2] : vector<2x1x128xf32> to vector<2x1xf32>
    %35 = vector.shape_cast %34 : vector<2x1xf32> to vector<2x1x1xf32>
    %cst_16 = arith.constant 1.250000e-01 : f32
    %36 = vector.broadcast %cst_16 : f32 to vector<2x1x1xf32>
    %37 = arith.mulf %35, %36 : vector<2x1x1xf32>
    %38 = arith.mulf %33, %33 : vector<2x1x1xf32>
    %39 = arith.subf %37, %38 : vector<2x1x1xf32>
    %cst_17 = arith.constant dense<0.000000e+00> : vector<1x128xf32>
    %40 = vector.multi_reduction <add>, %20, %cst_17 [0] : vector<2x1x128xf32> to vector<1x128xf32>
    %41 = vector.shape_cast %40 : vector<1x128xf32> to vector<1x1x128xf32>
    %cst_18 = arith.constant 2.000000e+00 : f32
    %42 = vector.broadcast %cst_18 : f32 to vector<1x1x128xf32>
    %43 = arith.divf %41, %42 : vector<1x1x128xf32>
    %cst_19 = arith.constant dense<0.000000e+00> : vector<1x128xf32>
    %44 = vector.multi_reduction <add>, %29, %cst_19 [0] : vector<2x1x128xf32> to vector<1x128xf32>
    %45 = vector.shape_cast %44 : vector<1x128xf32> to vector<1x1x128xf32>
    %cst_20 = arith.constant 2.000000e+00 : f32
    %46 = vector.broadcast %cst_20 : f32 to vector<1x1x128xf32>
    %47 = arith.divf %45, %46 : vector<1x1x128xf32>
    %48 = arith.mulf %43, %43 : vector<1x1x128xf32>
    %49 = arith.subf %47, %48 : vector<1x1x128xf32>
    %c0_21 = arith.constant 0 : index
    %50 = memref.load %arg8[%c0_21] : memref<12xf32, #tpu.memory_space<smem>>
    %c1 = arith.constant 1 : index
    %51 = memref.load %arg8[%c1] : memref<12xf32, #tpu.memory_space<smem>>
    %c2 = arith.constant 2 : index
    %52 = memref.load %arg8[%c2] : memref<12xf32, #tpu.memory_space<smem>>
    %c3 = arith.constant 3 : index
    %53 = memref.load %arg8[%c3] : memref<12xf32, #tpu.memory_space<smem>>
    %c4 = arith.constant 4 : index
    %54 = memref.load %arg8[%c4] : memref<12xf32, #tpu.memory_space<smem>>
    %c5 = arith.constant 5 : index
    %55 = memref.load %arg8[%c5] : memref<12xf32, #tpu.memory_space<smem>>
    %56 = vector.broadcast %50 : f32 to vector<2x1x128xf32>
    %57 = arith.mulf %56, %20 : vector<2x1x128xf32>
    %58 = vector.broadcast %51 : f32 to vector<2x1x1xf32>
    %59 = arith.mulf %58, %33 : vector<2x1x1xf32>
    %60 = vector.broadcast %59 : vector<2x1x1xf32> to vector<2x1x128xf32>
    %61 = arith.addf %57, %60 : vector<2x1x128xf32>
    %62 = vector.broadcast %52 : f32 to vector<1x1x128xf32>
    %63 = arith.mulf %62, %43 : vector<1x1x128xf32>
    %64 = vector.broadcast %63 : vector<1x1x128xf32> to vector<2x1x128xf32>
    %65 = arith.addf %61, %64 : vector<2x1x128xf32>
    %66 = vector.broadcast %53 : f32 to vector<2x1x128xf32>
    %67 = arith.mulf %66, %27 : vector<2x1x128xf32>
    %68 = vector.broadcast %54 : f32 to vector<2x1x1xf32>
    %69 = arith.mulf %68, %39 : vector<2x1x1xf32>
    %70 = vector.broadcast %69 : vector<2x1x1xf32> to vector<2x1x128xf32>
    %71 = arith.addf %67, %70 : vector<2x1x128xf32>
    %72 = vector.broadcast %55 : f32 to vector<1x1x128xf32>
    %73 = arith.mulf %72, %49 : vector<1x1x128xf32>
    %74 = vector.broadcast %73 : vector<1x1x128xf32> to vector<2x1x128xf32>
    %75 = arith.addf %71, %74 : vector<2x1x128xf32>
    %cst_22 = arith.constant 0.000000e+00 : f32
    %76 = vector.broadcast %cst_22 : f32 to vector<2x1x128xf32>
    %77 = arith.maximumf %75, %76 : vector<2x1x128xf32>
    %cst_23 = arith.constant 9.99999974E-6 : f32
    %78 = vector.broadcast %cst_23 : f32 to vector<2x1x128xf32>
    %79 = arith.addf %77, %78 : vector<2x1x128xf32>
    %80 = math.rsqrt %79 : vector<2x1x128xf32>
    %81 = vector.shape_cast %15 : vector<1x128xf32> to vector<1x1x128xf32>
    %82 = vector.broadcast %81 : vector<1x1x128xf32> to vector<2x1x128xf32>
    %83 = arith.mulf %82, %80 : vector<2x1x128xf32>
    %84 = vector.shape_cast %16 : vector<1x128xf32> to vector<1x1x128xf32>
    %85 = arith.mulf %65, %83 : vector<2x1x128xf32>
    %86 = vector.broadcast %84 : vector<1x1x128xf32> to vector<2x1x128xf32>
    %87 = arith.subf %86, %85 : vector<2x1x128xf32>
    %88 = vector.broadcast %83 : vector<2x1x128xf32> to vector<2x256x128xf32>
    %89 = arith.mulf %14, %88 : vector<2x256x128xf32>
    %90 = vector.broadcast %87 : vector<2x1x128xf32> to vector<2x256x128xf32>
    %91 = arith.addf %89, %90 : vector<2x256x128xf32>
    %cst_24 = arith.constant 0.000000e+00 : f32
    %92 = vector.broadcast %cst_24 : f32 to vector<2x256x128xf32>
    %93 = arith.maximumf %91, %92 : vector<2x256x128xf32>
    %cst_25 = arith.constant 0.000000e+00 : bf16
    %94 = vector.broadcast %cst_25 : bf16 to vector<2x1x18x128xbf16>
    %c0_26 = arith.constant 0 : index
    %c0_27 = arith.constant 0 : index
    %c0_28 = arith.constant 0 : index
    %c0_29 = arith.constant 0 : index
    %95 = vector.load %arg10[%c0_26, %c0_27, %c0_28, %c0_29] : memref<2x18x18x128xbf16, #tpu.memory_space<vmem>>, vector<2x1x18x128xbf16>
    tpu.vector_store %arg10[%c0_26, %c0_27, %c0_28, %c0_29], %94 {strides = array<i32>} : memref<2x18x18x128xbf16, #tpu.memory_space<vmem>>, vector<2x1x18x128xbf16>,
    %c0_30 = arith.constant 0 : index
    %c17 = arith.constant 17 : index
    %c0_31 = arith.constant 0 : index
    %c0_32 = arith.constant 0 : index
    %96 = vector.load %arg10[%c0_30, %c17, %c0_31, %c0_32] : memref<2x18x18x128xbf16, #tpu.memory_space<vmem>>, vector<2x1x18x128xbf16>
    tpu.vector_store %arg10[%c0_30, %c17, %c0_31, %c0_32], %94 {strides = array<i32>} : memref<2x18x18x128xbf16, #tpu.memory_space<vmem>>, vector<2x1x18x128xbf16>,
    %cst_33 = arith.constant 0.000000e+00 : bf16
    %97 = vector.broadcast %cst_33 : bf16 to vector<2x16x1x128xbf16>
    %c0_34 = arith.constant 0 : index
    %c1_35 = arith.constant 1 : index
    %c0_36 = arith.constant 0 : index
    %c0_37 = arith.constant 0 : index
    %98 = vector.load %arg10[%c0_34, %c1_35, %c0_36, %c0_37] : memref<2x18x18x128xbf16, #tpu.memory_space<vmem>>, vector<2x16x1x128xbf16>
    tpu.vector_store %arg10[%c0_34, %c1_35, %c0_36, %c0_37], %97 {strides = array<i32>} : memref<2x18x18x128xbf16, #tpu.memory_space<vmem>>, vector<2x16x1x128xbf16>,
    %c0_38 = arith.constant 0 : index
    %c1_39 = arith.constant 1 : index
    %c17_40 = arith.constant 17 : index
    %c0_41 = arith.constant 0 : index
    %99 = vector.load %arg10[%c0_38, %c1_39, %c17_40, %c0_41] : memref<2x18x18x128xbf16, #tpu.memory_space<vmem>>, vector<2x16x1x128xbf16>
    tpu.vector_store %arg10[%c0_38, %c1_39, %c17_40, %c0_41], %97 {strides = array<i32>} : memref<2x18x18x128xbf16, #tpu.memory_space<vmem>>, vector<2x16x1x128xbf16>,
    %100 = arith.truncf %93 : vector<2x256x128xf32> to vector<2x256x128xbf16>
    %101 = vector.shape_cast %100 : vector<2x256x128xbf16> to vector<2x16x16x128xbf16>
    %c0_42 = arith.constant 0 : index
    %c1_43 = arith.constant 1 : index
    %c1_44 = arith.constant 1 : index
    %c0_45 = arith.constant 0 : index
    %102 = vector.load %arg10[%c0_42, %c1_43, %c1_44, %c0_45] : memref<2x18x18x128xbf16, #tpu.memory_space<vmem>>, vector<2x16x16x128xbf16>
    tpu.vector_store %arg10[%c0_42, %c1_43, %c1_44, %c0_45], %101 {strides = array<i32>} : memref<2x18x18x128xbf16, #tpu.memory_space<vmem>>, vector<2x16x16x128xbf16>,
    %c0_46 = arith.constant 0 : index
    %c0_47 = arith.constant 0 : index
    %c0_48 = arith.constant 0 : index
    %c0_49 = arith.constant 0 : index
    %103 = vector.load %arg10[%c0_46, %c0_47, %c0_48, %c0_49] : memref<2x18x18x128xbf16, #tpu.memory_space<vmem>>, vector<2x18x18x128xbf16>
    %104 = vector.extract_strided_slice %103 {offsets = [0, 0, 0, 0], sizes = [2, 16, 16, 128], strides = [1, 1, 1, 1]} : vector<2x18x18x128xbf16> to vector<2x16x16x128xbf16>
    %105 = vector.extract_strided_slice %103 {offsets = [0, 0, 1, 0], sizes = [2, 16, 16, 128], strides = [1, 1, 1, 1]} : vector<2x18x18x128xbf16> to vector<2x16x16x128xbf16>
    %106 = vector.extract_strided_slice %103 {offsets = [0, 0, 2, 0], sizes = [2, 16, 16, 128], strides = [1, 1, 1, 1]} : vector<2x18x18x128xbf16> to vector<2x16x16x128xbf16>
    %107 = vector.extract_strided_slice %103 {offsets = [0, 1, 0, 0], sizes = [2, 16, 16, 128], strides = [1, 1, 1, 1]} : vector<2x18x18x128xbf16> to vector<2x16x16x128xbf16>
    %108 = vector.extract_strided_slice %103 {offsets = [0, 1, 1, 0], sizes = [2, 16, 16, 128], strides = [1, 1, 1, 1]} : vector<2x18x18x128xbf16> to vector<2x16x16x128xbf16>
    %109 = vector.extract_strided_slice %103 {offsets = [0, 1, 2, 0], sizes = [2, 16, 16, 128], strides = [1, 1, 1, 1]} : vector<2x18x18x128xbf16> to vector<2x16x16x128xbf16>
    %110 = vector.extract_strided_slice %103 {offsets = [0, 2, 0, 0], sizes = [2, 16, 16, 128], strides = [1, 1, 1, 1]} : vector<2x18x18x128xbf16> to vector<2x16x16x128xbf16>
    %111 = vector.extract_strided_slice %103 {offsets = [0, 2, 1, 0], sizes = [2, 16, 16, 128], strides = [1, 1, 1, 1]} : vector<2x18x18x128xbf16> to vector<2x16x16x128xbf16>
    %112 = vector.extract_strided_slice %103 {offsets = [0, 2, 2, 0], sizes = [2, 16, 16, 128], strides = [1, 1, 1, 1]} : vector<2x18x18x128xbf16> to vector<2x16x16x128xbf16>
    %113 = tpu.concatenate %104, %105, %106, %107, %108, %109, %110, %111, %112 in 3 : vector<2x16x16x128xbf16>, vector<2x16x16x128xbf16>, vector<2x16x16x128xbf16>, vector<2x16x16x128xbf16>, vector<2x16x16x128xbf16>, vector<2x16x16x128xbf16>, vector<2x16x16x128xbf16>, vector<2x16x16x128xbf16>, vector<2x16x16x128xbf16> -> vector<2x16x16x1152xbf16>
    %114 = vector.shape_cast %113 : vector<2x16x16x1152xbf16> to vector<512x1152xbf16>
    %c0_50 = arith.constant 0 : index
    %c0_51 = arith.constant 0 : index
    %115 = vector.load %arg3[%c0_50, %c0_51] : memref<1152x128xbf16, #tpu.memory_space<vmem>>, vector<1152x128xbf16>
    %cst_52 = arith.constant dense<0.000000e+00> : vector<512x128xf32>
    %116 = tpu.matmul %114, %115, %cst_52 {dimension_numbers = #tpu.dot_dimension_numbers<[1], [0], [0], [1], [0, 0, 1, 1], [], []>} : vector<512x1152xbf16>, vector<1152x128xbf16>, vector<512x128xf32> -> vector<512x128xf32>
    %117 = vector.shape_cast %116 : vector<512x128xf32> to vector<2x256x128xf32>
    %c0_53 = arith.constant 0 : index
    %c0_54 = arith.constant 0 : index
    %118 = vector.load %arg6[%c0_53, %c0_54] : memref<1x128xf32, #tpu.memory_space<vmem>>, vector<1x128xf32>
    %c0_55 = arith.constant 0 : index
    %c0_56 = arith.constant 0 : index
    %119 = vector.load %arg7[%c0_55, %c0_56] : memref<1x128xf32, #tpu.memory_space<vmem>>, vector<1x128xf32>
    %cst_57 = arith.constant dense<0.000000e+00> : vector<2x128xf32>
    %120 = vector.multi_reduction <add>, %117, %cst_57 [1] : vector<2x256x128xf32> to vector<2x128xf32>
    %121 = vector.shape_cast %120 : vector<2x128xf32> to vector<2x1x128xf32>
    %cst_58 = arith.constant 2.560000e+02 : f32
    %122 = vector.broadcast %cst_58 : f32 to vector<2x1x128xf32>
    %123 = arith.divf %121, %122 : vector<2x1x128xf32>
    %124 = vector.broadcast %123 : vector<2x1x128xf32> to vector<2x256x128xf32>
    %125 = arith.subf %117, %124 : vector<2x256x128xf32>
    %126 = arith.mulf %125, %125 : vector<2x256x128xf32>
    %cst_59 = arith.constant dense<0.000000e+00> : vector<2x128xf32>
    %127 = vector.multi_reduction <add>, %126, %cst_59 [1] : vector<2x256x128xf32> to vector<2x128xf32>
    %128 = vector.shape_cast %127 : vector<2x128xf32> to vector<2x1x128xf32>
    %cst_60 = arith.constant 2.550000e+02 : f32
    %129 = vector.broadcast %cst_60 : f32 to vector<2x1x128xf32>
    %130 = arith.divf %128, %129 : vector<2x1x128xf32>
    %131 = arith.mulf %123, %123 : vector<2x1x128xf32>
    %132 = arith.addf %130, %131 : vector<2x1x128xf32>
    %cst_61 = arith.constant dense<0.000000e+00> : vector<2x1xf32>
    %133 = vector.multi_reduction <add>, %123, %cst_61 [2] : vector<2x1x128xf32> to vector<2x1xf32>
    %134 = vector.shape_cast %133 : vector<2x1xf32> to vector<2x1x1xf32>
    %cst_62 = arith.constant 1.250000e-01 : f32
    %135 = vector.broadcast %cst_62 : f32 to vector<2x1x1xf32>
    %136 = arith.mulf %134, %135 : vector<2x1x1xf32>
    %cst_63 = arith.constant dense<0.000000e+00> : vector<2x1xf32>
    %137 = vector.multi_reduction <add>, %132, %cst_63 [2] : vector<2x1x128xf32> to vector<2x1xf32>
    %138 = vector.shape_cast %137 : vector<2x1xf32> to vector<2x1x1xf32>
    %cst_64 = arith.constant 1.250000e-01 : f32
    %139 = vector.broadcast %cst_64 : f32 to vector<2x1x1xf32>
    %140 = arith.mulf %138, %139 : vector<2x1x1xf32>
    %141 = arith.mulf %136, %136 : vector<2x1x1xf32>
    %142 = arith.subf %140, %141 : vector<2x1x1xf32>
    %cst_65 = arith.constant dense<0.000000e+00> : vector<1x128xf32>
    %143 = vector.multi_reduction <add>, %123, %cst_65 [0] : vector<2x1x128xf32> to vector<1x128xf32>
    %144 = vector.shape_cast %143 : vector<1x128xf32> to vector<1x1x128xf32>
    %cst_66 = arith.constant 2.000000e+00 : f32
    %145 = vector.broadcast %cst_66 : f32 to vector<1x1x128xf32>
    %146 = arith.divf %144, %145 : vector<1x1x128xf32>
    %cst_67 = arith.constant dense<0.000000e+00> : vector<1x128xf32>
    %147 = vector.multi_reduction <add>, %132, %cst_67 [0] : vector<2x1x128xf32> to vector<1x128xf32>
    %148 = vector.shape_cast %147 : vector<1x128xf32> to vector<1x1x128xf32>
    %cst_68 = arith.constant 2.000000e+00 : f32
    %149 = vector.broadcast %cst_68 : f32 to vector<1x1x128xf32>
    %150 = arith.divf %148, %149 : vector<1x1x128xf32>
    %151 = arith.mulf %146, %146 : vector<1x1x128xf32>
    %152 = arith.subf %150, %151 : vector<1x1x128xf32>
    %c6 = arith.constant 6 : index
    %153 = memref.load %arg8[%c6] : memref<12xf32, #tpu.memory_space<smem>>
    %c7 = arith.constant 7 : index
    %154 = memref.load %arg8[%c7] : memref<12xf32, #tpu.memory_space<smem>>
    %c8 = arith.constant 8 : index
    %155 = memref.load %arg8[%c8] : memref<12xf32, #tpu.memory_space<smem>>
    %c9 = arith.constant 9 : index
    %156 = memref.load %arg8[%c9] : memref<12xf32, #tpu.memory_space<smem>>
    %c10 = arith.constant 10 : index
    %157 = memref.load %arg8[%c10] : memref<12xf32, #tpu.memory_space<smem>>
    %c11 = arith.constant 11 : index
    %158 = memref.load %arg8[%c11] : memref<12xf32, #tpu.memory_space<smem>>
    %159 = vector.broadcast %153 : f32 to vector<2x1x128xf32>
    %160 = arith.mulf %159, %123 : vector<2x1x128xf32>
    %161 = vector.broadcast %154 : f32 to vector<2x1x1xf32>
    %162 = arith.mulf %161, %136 : vector<2x1x1xf32>
    %163 = vector.broadcast %162 : vector<2x1x1xf32> to vector<2x1x128xf32>
    %164 = arith.addf %160, %163 : vector<2x1x128xf32>
    %165 = vector.broadcast %155 : f32 to vector<1x1x128xf32>
    %166 = arith.mulf %165, %146 : vector<1x1x128xf32>
    %167 = vector.broadcast %166 : vector<1x1x128xf32> to vector<2x1x128xf32>
    %168 = arith.addf %164, %167 : vector<2x1x128xf32>
    %169 = vector.broadcast %156 : f32 to vector<2x1x128xf32>
    %170 = arith.mulf %169, %130 : vector<2x1x128xf32>
    %171 = vector.broadcast %157 : f32 to vector<2x1x1xf32>
    %172 = arith.mulf %171, %142 : vector<2x1x1xf32>
    %173 = vector.broadcast %172 : vector<2x1x1xf32> to vector<2x1x128xf32>
    %174 = arith.addf %170, %173 : vector<2x1x128xf32>
    %175 = vector.broadcast %158 : f32 to vector<1x1x128xf32>
    %176 = arith.mulf %175, %152 : vector<1x1x128xf32>
    %177 = vector.broadcast %176 : vector<1x1x128xf32> to vector<2x1x128xf32>
    %178 = arith.addf %174, %177 : vector<2x1x128xf32>
    %cst_69 = arith.constant 0.000000e+00 : f32
    %179 = vector.broadcast %cst_69 : f32 to vector<2x1x128xf32>
    %180 = arith.maximumf %178, %179 : vector<2x1x128xf32>
    %cst_70 = arith.constant 9.99999974E-6 : f32
    %181 = vector.broadcast %cst_70 : f32 to vector<2x1x128xf32>
    %182 = arith.addf %180, %181 : vector<2x1x128xf32>
    %183 = math.rsqrt %182 : vector<2x1x128xf32>
    %184 = vector.shape_cast %118 : vector<1x128xf32> to vector<1x1x128xf32>
    %185 = vector.broadcast %184 : vector<1x1x128xf32> to vector<2x1x128xf32>
    %186 = arith.mulf %185, %183 : vector<2x1x128xf32>
    %187 = vector.shape_cast %119 : vector<1x128xf32> to vector<1x1x128xf32>
    %188 = arith.mulf %168, %186 : vector<2x1x128xf32>
    %189 = vector.broadcast %187 : vector<1x1x128xf32> to vector<2x1x128xf32>
    %190 = arith.subf %189, %188 : vector<2x1x128xf32>
    %191 = vector.broadcast %186 : vector<2x1x128xf32> to vector<2x256x128xf32>
    %192 = arith.mulf %117, %191 : vector<2x256x128xf32>
    %193 = vector.broadcast %190 : vector<2x1x128xf32> to vector<2x256x128xf32>
    %194 = arith.addf %192, %193 : vector<2x256x128xf32>
    %c0_71 = arith.constant 0 : index
    %c0_72 = arith.constant 0 : index
    %c0_73 = arith.constant 0 : index
    %195 = vector.load %arg0[%c0_71, %c0_72, %c0_73] : memref<2x256x128xf32, #tpu.memory_space<vmem>>, vector<2x256x128xf32>
    %196 = arith.addf %194, %195 : vector<2x256x128xf32>
    %cst_74 = arith.constant 0.000000e+00 : f32
    %197 = vector.broadcast %cst_74 : f32 to vector<2x256x128xf32>
    %198 = arith.maximumf %196, %197 : vector<2x256x128xf32>
    %c0_75 = arith.constant 0 : index
    %c0_76 = arith.constant 0 : index
    %c0_77 = arith.constant 0 : index
    %199 = vector.load %arg9[%c0_75, %c0_76, %c0_77] : memref<2x256x128xf32, #tpu.memory_space<vmem>>, vector<2x256x128xf32>
    tpu.vector_store %arg9[%c0_75, %c0_76, %c0_77], %198 {strides = array<i32>} : memref<2x256x128xf32, #tpu.memory_space<vmem>>, vector<2x256x128xf32>,
    return
  }
}

</mosaic_0001>

<llo_original>
// kernel: tpu_custom_call.1
$region0: #{tpu_custom_call.1}
  #allocation0 [shape = 'u32[]', space=smem, size = 0x4, offset = 0x4, fixed_abs, tag = 'smem constant byte address 0x4 - core index']
  #allocation1 [shape = 'u32[144,128]{1,0:T(1,128)}', space=vmem, size = 0x12000, scoped, tag = 'internal scratch']
  #allocation2 [shape = 'bf16[2,18,18,128]{3,2,1,0:T(8,128)(2,1)}', space=vmem, size = 0x36000, scoped, tag = 'scratch operand']
  %s0 = inlined_call_operand.hbm [shape: f32[2,256,128], index: 0, kind: input, shape index: {}]
  %s1 = inlined_call_operand.vmem [shape: bf16[2,18,18,128], index: 1, kind: input, shape index: {}]
  %s2 = inlined_call_operand.vmem [shape: bf16[1152,128], index: 2, kind: input, shape index: {}]
  %s3 = inlined_call_operand.hbm [shape: bf16[1152,128], index: 3, kind: input, shape index: {}]
  %s4 = inlined_call_operand.vmem [shape: f32[1,128], index: 4, kind: input, shape index: {}]
  %s5 = inlined_call_operand.vmem [shape: f32[1,128], index: 5, kind: input, shape index: {}]
  %s6 = inlined_call_operand.vmem [shape: f32[1,128], index: 6, kind: input, shape index: {}]
  %s7 = inlined_call_operand.vmem [shape: f32[1,128], index: 7, kind: input, shape index: {}]
  %s8 = inlined_call_operand.vmem [shape: f32[12], index: 8, kind: input, shape index: {}]
  %s9 = inlined_call_operand.hbm [shape: f32[2,256,128], index: 9, kind: output, shape index: {}]
  %s10 = sld [smem:[#allocation0]]
  $region58: #{tpu_custom_call.1} parent=0
    _
  %s12 = ssub.s32 1, %s10
  %s13 = scalar_select 0, %s12, %s10
  $region1: #{tpu_custom_call.1} parent=0
    #allocation3 [shape = 'u8[262144]{0}', space=vmem, size = 0x40000, scoped, tag = 'input window, operand 0, single buffered']
    #allocation4 [shape = 's32[1]{0}', space=sflag, size = 0x4, scoped, tag = 'scoped memory for tpu_custom_call.1']
    #allocation5 [shape = 's32[1]{0}', space=sflag, size = 0x4, scoped, tag = 'scoped memory for tpu_custom_call.1']
    #allocation6 [shape = 's32[1]{0}', space=sflag, size = 0x4, scoped, tag = 'scoped memory for tpu_custom_call.1']
    #allocation7 [shape = 'u8[294912]{0}', space=vmem, size = 0x48000, scoped, tag = 'input window, operand 3, single buffered']
    #allocation8 [shape = 's32[1]{0}', space=sflag, size = 0x4, scoped, tag = 'scoped memory for tpu_custom_call.1']
    #allocation9 [shape = 'u8[512]{0}', space=smem, size = 0x200, scoped, tag = 'input window, operand 8, single buffered']
    #allocation10 [shape = 'u8[262144]{0}', space=vmem, size = 0x40000, scoped, tag = 'output window, operand 0, single buffered']
    %14 = vsyncpa [#allocation4], 0
    %15 = vsyncpa [#allocation8], 0
    %16 = vsyncpa [#allocation6], 0
    %17 = vsyncpa [#allocation5], 0
    // Predicated region
    $region2: #{tpu_custom_call.1} parent=1 // pred_check
      _
    $region3: #{tpu_custom_call.1} parent=1 // pred_check_branch
      %19 = sbr.rel (0) target = $region5
    $region4: #{tpu_custom_call.1} parent=1 // pred_region
      %s21 = ssub.s32 8192, 8192
      %22 = vsyncadd [#allocation4], %s21
      %s23 = sshll.u32 [#allocation3], 4
      %s24 = int_to_ptr.vmem [resolvable:$true] %s23
      %29 = dma.hbm_to_vmem [thread:$0]  %s0, 8192, %s24, [#allocation4], 128, 128, 8
    $region5: #{tpu_custom_call.1} parent=1 // pred_fallthru
      _
    // Predicated region
    $region6: #{tpu_custom_call.1} parent=1 // pred_check
      _
    $region7: #{tpu_custom_call.1} parent=1 // pred_check_branch
      %31 = sbr.rel (0) target = $region9
    $region8: #{tpu_custom_call.1} parent=1 // pred_region
      _
    $region9: #{tpu_custom_call.1} parent=1 // pred_fallthru
      _
    // Predicated region
    $region10: #{tpu_custom_call.1} parent=1 // pred_check
      _
    $region11: #{tpu_custom_call.1} parent=1 // pred_check_branch
      %33 = sbr.rel (0) target = $region13
    $region12: #{tpu_custom_call.1} parent=1 // pred_region
      _
    $region13: #{tpu_custom_call.1} parent=1 // pred_fallthru
      _
    // Predicated region
    $region14: #{tpu_custom_call.1} parent=1 // pred_check
      _
    $region15: #{tpu_custom_call.1} parent=1 // pred_check_branch
      %35 = sbr.rel (0) target = $region17
    $region16: #{tpu_custom_call.1} parent=1 // pred_region
      %s37 = ssub.s32 9216, 9216
      %38 = vsyncadd [#allocation8], %s37
      %s39 = sshll.u32 [#allocation7], 4
      %s40 = int_to_ptr.vmem [resolvable:$true] %s39
      %45 = dma.hbm_to_vmem [thread:$0]  %s3, 9216, %s40, [#allocation8], 64, 64, 4
    $region17: #{tpu_custom_call.1} parent=1 // pred_fallthru
      _
    // Predicated region
    $region18: #{tpu_custom_call.1} parent=1 // pred_check
      _
    $region19: #{tpu_custom_call.1} parent=1 // pred_check_branch
      %47 = sbr.rel (0) target = $region21
    $region20: #{tpu_custom_call.1} parent=1 // pred_region
      _
    $region21: #{tpu_custom_call.1} parent=1 // pred_fallthru
      _
    // Predicated region
    $region22: #{tpu_custom_call.1} parent=1 // pred_check
      _
    $region23: #{tpu_custom_call.1} parent=1 // pred_check_branch
      %49 = sbr.rel (0) target = $region25
    $region24: #{tpu_custom_call.1} parent=1 // pred_region
      _
    $region25: #{tpu_custom_call.1} parent=1 // pred_fallthru
      _
    // Predicated region
    $region26: #{tpu_custom_call.1} parent=1 // pred_check
      _
    $region27: #{tpu_custom_call.1} parent=1 // pred_check_branch
      %51 = sbr.rel (0) target = $region29
    $region28: #{tpu_custom_call.1} parent=1 // pred_region
      _
    $region29: #{tpu_custom_call.1} parent=1 // pred_fallthru
      _
    // Predicated region
    $region30: #{tpu_custom_call.1} parent=1 // pred_check
      _
    $region31: #{tpu_custom_call.1} parent=1 // pred_check_branch
      %53 = sbr.rel (0) target = $region33
    $region32: #{tpu_custom_call.1} parent=1 // pred_region
      _
    $region33: #{tpu_custom_call.1} parent=1 // pred_fallthru
      _
    // Predicated region
    $region34: #{tpu_custom_call.1} parent=1 // pred_check
      _
    $region35: #{tpu_custom_call.1} parent=1 // pred_check_branch
      %55 = sbr.rel (0) target = $region37
    $region36: #{tpu_custom_call.1} parent=1 // pred_region
      %s57 = ssub.s32 16, 16
      %58 = vsyncadd [#allocation6], %s57
      %s60 = sshll.u32 %s8, 4
      %s61 = int_to_ptr.vmem [resolvable:$true] %s60
      %63 = dma.vmem_to_smem %s61, 16, [#allocation9], [#allocation6]
    $region37: #{tpu_custom_call.1} parent=1 // pred_fallthru
      _
    // Predicated region
    $region38: #{tpu_custom_call.1} parent=1 // pred_check
      _
    $region39: #{tpu_custom_call.1} parent=1 // pred_check_branch
      %65 = sbr.rel (0) target = $region41
    $region40: #{tpu_custom_call.1} parent=1 // pred_region
      %66 = dma.done [#allocation4], 8192
    $region41: #{tpu_custom_call.1} parent=1 // pred_fallthru
      _
    // Predicated region
    $region42: #{tpu_custom_call.1} parent=1 // pred_check
      _
    $region43: #{tpu_custom_call.1} parent=1 // pred_check_branch
      %68 = sbr.rel (0) target = $region45
    $region44: #{tpu_custom_call.1} parent=1 // pred_region
      %69 = dma.done [#allocation8], 9216
    $region45: #{tpu_custom_call.1} parent=1 // pred_fallthru
      _
    // Predicated region
    $region46: #{tpu_custom_call.1} parent=1 // pred_check
      _
    $region47: #{tpu_custom_call.1} parent=1 // pred_check_branch
      %71 = sbr.rel (0) target = $region49
    $region48: #{tpu_custom_call.1} parent=1 // pred_region
      %72 = dma.done [#allocation6], 16
    $region49: #{tpu_custom_call.1} parent=1 // pred_fallthru
      _
    %73 = sfence
    %v75 = vld [vmem:[%s1] sm:$0xf]
    %v76 = vld [vmem:[%s1 + $0x4] sm:$0xf]
    %v77 = vld [vmem:[%s1 + $0x8] sm:$0x1]
    %v78 = vld [vmem:[%s1 + $0xc] sm:$0xf]
    %v79 = vld [vmem:[%s1 + $0x10] sm:$0xf]
    %v80 = vld [vmem:[%s1 + $0x14] sm:$0x1]
    %v81 = vld [vmem:[%s1 + $0x18] sm:$0xf]
    %v82 = vld [vmem:[%s1 + $0x1c] sm:$0xf]
    %v83 = vld [vmem:[%s1 + $0x20] sm:$0x1]
    %v84 = vld [vmem:[%s1 + $0x24] sm:$0xf]
    %v85 = vld [vmem:[%s1 + $0x28] sm:$0xf]
    %v86 = vld [vmem:[%s1 + $0x2c] sm:$0x1]
    %v87 = vld [vmem:[%s1 + $0x30] sm:$0xf]
    %v88 = vld [vmem:[%s1 + $0x34] sm:$0xf]
    %v89 = vld [vmem:[%s1 + $0x38] sm:$0x1]
    %v90 = vld [vmem:[%s1 + $0x3c] sm:$0xf]
    %v91 = vld [vmem:[%s1 + $0x40] sm:$0xf]
    %v92 = vld [vmem:[%s1 + $0x44] sm:$0x1]
    %v93 = vld [vmem:[%s1 + $0x48] sm:$0xf]
    %v94 = vld [vmem:[%s1 + $0x4c] sm:$0xf]
    %v95 = vld [vmem:[%s1 + $0x50] sm:$0x1]
    %v96 = vld [vmem:[%s1 + $0x54] sm:$0xf]
    %v97 = vld [vmem:[%s1 + $0x58] sm:$0xf]
    %v98 = vld [vmem:[%s1 + $0x5c] sm:$0x1]
    %v99 = vld [vmem:[%s1 + $0x60] sm:$0xf]
    %v100 = vld [vmem:[%s1 + $0x64] sm:$0xf]
    %v101 = vld [vmem:[%s1 + $0x68] sm:$0x1]
    %v102 = vld [vmem:[%s1 + $0x6c] sm:$0xf]
    %v103 = vld [vmem:[%s1 + $0x70] sm:$0xf]
    %v104 = vld [vmem:[%s1 + $0x74] sm:$0x1]
    %v105 = vld [vmem:[%s1 + $0x78] sm:$0xf]
    %v106 = vld [vmem:[%s1 + $0x7c] sm:$0xf]
    %v107 = vld [vmem:[%s1 + $0x80] sm:$0x1]
    %v108 = vld [vmem:[%s1 + $0x84] sm:$0xf]
    %v109 = vld [vmem:[%s1 + $0x88] sm:$0xf]
    %v110 = vld [vmem:[%s1 + $0x8c] sm:$0x1]
    %v111 = vld [vmem:[%s1 + $0x90] sm:$0xf]
    %v112 = vld [vmem:[%s1 + $0x94] sm:$0xf]
    %v113 = vld [vmem:[%s1 + $0x98] sm:$0x1]
    %v114 = vld [vmem:[%s1 + $0x9c] sm:$0xf]
    %v115 = vld [vmem:[%s1 + $0xa0] sm:$0xf]
    %v116 = vld [vmem:[%s1 + $0xa4] sm:$0x1]
    %v117 = vld [vmem:[%s1 + $0xa8] sm:$0xf]
    %v118 = vld [vmem:[%s1 + $0xac] sm:$0xf]
    %v119 = vld [vmem:[%s1 + $0xb0] sm:$0x1]
    %v120 = vld [vmem:[%s1 + $0xb4] sm:$0xf]
    %v121 = vld [vmem:[%s1 + $0xb8] sm:$0xf]
    %v122 = vld [vmem:[%s1 + $0xbc] sm:$0x1]
    %v123 = vld [vmem:[%s1 + $0xc0] sm:$0xf]
    %v124 = vld [vmem:[%s1 + $0xc4] sm:$0xf]
    %v125 = vld [vmem:[%s1 + $0xc8] sm:$0x1]
    %v126 = vld [vmem:[%s1 + $0xcc] sm:$0xf]
    %v127 = vld [vmem:[%s1 + $0xd0] sm:$0xf]
    %v128 = vld [vmem:[%s1 + $0xd4] sm:$0x1]
    %v129 = vld [vmem:[%s1 + $0xd8] sm:$0xf]
    %v130 = vld [vmem:[%s1 + $0xdc] sm:$0xf]
    %v131 = vld [vmem:[%s1 + $0xe0] sm:$0x1]
    %v132 = vld [vmem:[%s1 + $0xe4] sm:$0xf]
    %v133 = vld [vmem:[%s1 + $0xe8] sm:$0xf]
    %v134 = vld [vmem:[%s1 + $0xec] sm:$0x1]
    %v135 = vld [vmem:[%s1 + $0xf0] sm:$0xf]
    %v136 = vld [vmem:[%s1 + $0xf4] sm:$0xf]
    %v137 = vld [vmem:[%s1 + $0xf8] sm:$0x1]
    %v138 = vld [vmem:[%s1 + $0xfc] sm:$0xf]
    %v139 = vld [vmem:[%s1 + $0x100] sm:$0xf]
    %v140 = vld [vmem:[%s1 + $0x104] sm:$0x1]
    %v141 = vld [vmem:[%s1 + $0x108] sm:$0xf]
    %v142 = vld [vmem:[%s1 + $0x10c] sm:$0xf]
    %v143 = vld [vmem:[%s1 + $0x110] sm:$0x1]
    %v144 = vld [vmem:[%s1 + $0x114] sm:$0xf]
    %v145 = vld [vmem:[%s1 + $0x118] sm:$0xf]
    %v146 = vld [vmem:[%s1 + $0x11c] sm:$0x1]
    %v147 = vld [vmem:[%s1 + $0x120] sm:$0xf]
    %v148 = vld [vmem:[%s1 + $0x124] sm:$0xf]
    %v149 = vld [vmem:[%s1 + $0x128] sm:$0x1]
    %v150 = vld [vmem:[%s1 + $0x12c] sm:$0xf]
    %v151 = vld [vmem:[%s1 + $0x130] sm:$0xf]
    %v152 = vld [vmem:[%s1 + $0x134] sm:$0x1]
    %v153 = vld [vmem:[%s1 + $0x138] sm:$0xf]
    %v154 = vld [vmem:[%s1 + $0x13c] sm:$0xf]
    %v155 = vld [vmem:[%s1 + $0x140] sm:$0x1]
    %v156 = vld [vmem:[%s1 + $0x144] sm:$0xf]
    %v157 = vld [vmem:[%s1 + $0x148] sm:$0xf]
    %v158 = vld [vmem:[%s1 + $0x14c] sm:$0x1]
    %v159 = vld [vmem:[%s1 + $0x150] sm:$0xf]
    %v160 = vld [vmem:[%s1 + $0x154] sm:$0xf]
    %v161 = vld [vmem:[%s1 + $0x158] sm:$0x1]
    %v162 = vld [vmem:[%s1 + $0x15c] sm:$0xf]
    %v163 = vld [vmem:[%s1 + $0x160] sm:$0xf]
    %v164 = vld [vmem:[%s1 + $0x164] sm:$0x1]
    %v165 = vld [vmem:[%s1 + $0x168] sm:$0xf]
    %v166 = vld [vmem:[%s1 + $0x16c] sm:$0xf]
    %v167 = vld [vmem:[%s1 + $0x170] sm:$0x1]
    %v168 = vld [vmem:[%s1 + $0x174] sm:$0xf]
    %v169 = vld [vmem:[%s1 + $0x178] sm:$0xf]
    %v170 = vld [vmem:[%s1 + $0x17c] sm:$0x1]
    %v171 = vld [vmem:[%s1 + $0x180] sm:$0xf]
    %v172 = vld [vmem:[%s1 + $0x184] sm:$0xf]
    %v173 = vld [vmem:[%s1 + $0x188] sm:$0x1]
    %v174 = vld [vmem:[%s1 + $0x18c] sm:$0xf]
    %v175 = vld [vmem:[%s1 + $0x190] sm:$0xf]
    %v176 = vld [vmem:[%s1 + $0x194] sm:$0x1]
    %v177 = vld [vmem:[%s1 + $0x198] sm:$0xf]
    %v178 = vld [vmem:[%s1 + $0x19c] sm:$0xf]
    %v179 = vld [vmem:[%s1 + $0x1a0] sm:$0x1]
    %v180 = vld [vmem:[%s1 + $0x1a4] sm:$0xf]
    %v181 = vld [vmem:[%s1 + $0x1a8] sm:$0xf]
    %v182 = vld [vmem:[%s1 + $0x1ac] sm:$0x1]
    %v247 = vunpack.c.l.b16 %v75
    %v248 = vunpack.c.l.b16 %v76
    %v249 = vunpack.c.l.b16 %v78
    %v250 = vunpack.c.l.b16 %v79
    %v251 = vunpack.c.l.b16 %v81
    %v252 = vunpack.c.l.b16 %v82
    %v253 = vunpack.c.l.b16 %v84
    %v254 = vunpack.c.l.b16 %v85
    %v255 = vunpack.c.l.b16 %v87
    %v256 = vunpack.c.l.b16 %v88
    %v257 = vunpack.c.l.b16 %v90
    %v258 = vunpack.c.l.b16 %v91
    %v259 = vunpack.c.l.b16 %v93
    %v260 = vunpack.c.l.b16 %v94
    %v261 = vunpack.c.l.b16 %v96
    %v262 = vunpack.c.l.b16 %v97
    %v263 = vunpack.c.l.b16 %v99
    %v264 = vunpack.c.l.b16 %v100
    %v265 = vunpack.c.l.b16 %v102
    %v266 = vunpack.c.l.b16 %v103
    %v267 = vunpack.c.l.b16 %v105
    %v268 = vunpack.c.l.b16 %v106
    %v269 = vunpack.c.l.b16 %v108
    %v270 = vunpack.c.l.b16 %v109
    %v271 = vunpack.c.l.b16 %v111
    %v272 = vunpack.c.l.b16 %v112
    %v273 = vunpack.c.l.b16 %v114
    %v274 = vunpack.c.l.b16 %v115
    %v275 = vunpack.c.l.b16 %v117
    %v276 = vunpack.c.l.b16 %v118
    %v277 = vunpack.c.l.b16 %v120
    %v278 = vunpack.c.l.b16 %v121
    %v279 = vunpack.c.l.b16 %v129
    %v280 = vunpack.c.l.b16 %v130
    %v281 = vunpack.c.l.b16 %v132
    %v282 = vunpack.c.l.b16 %v133
    %v283 = vunpack.c.l.b16 %v135
    %v284 = vunpack.c.l.b16 %v136
    %v285 = vunpack.c.l.b16 %v138
    %v286 = vunpack.c.l.b16 %v139
    %v287 = vunpack.c.l.b16 %v141
    %v288 = vunpack.c.l.b16 %v142
    %v289 = vunpack.c.l.b16 %v144
    %v290 = vunpack.c.l.b16 %v145
    %v291 = vunpack.c.l.b16 %v147
    %v292 = vunpack.c.l.b16 %v148
    %v293 = vunpack.c.l.b16 %v150
    %v294 = vunpack.c.l.b16 %v151
    %v295 = vunpack.c.l.b16 %v153
    %v296 = vunpack.c.l.b16 %v154
    %v297 = vunpack.c.l.b16 %v156
    %v298 = vunpack.c.l.b16 %v157
    %v299 = vunpack.c.l.b16 %v159
    %v300 = vunpack.c.l.b16 %v160
    %v301 = vunpack.c.l.b16 %v162
    %v302 = vunpack.c.l.b16 %v163
    %v303 = vunpack.c.l.b16 %v165
    %v304 = vunpack.c.l.b16 %v166
    %v305 = vunpack.c.l.b16 %v168
    %v306 = vunpack.c.l.b16 %v169
    %v307 = vunpack.c.l.b16 %v171
    %v308 = vunpack.c.l.b16 %v172
    %v309 = vunpack.c.l.b16 %v174
    %v310 = vunpack.c.l.b16 %v175
    %v311 = vpack.c.b16 %v248, %v247
    %v312 = vpack.c.b16 %v250, %v249
    %v313 = vpack.c.b16 %v252, %v251
    %v314 = vpack.c.b16 %v254, %v253
    %v315 = vpack.c.b16 %v256, %v255
    %v316 = vpack.c.b16 %v258, %v257
    %v317 = vpack.c.b16 %v260, %v259
    %v318 = vpack.c.b16 %v262, %v261
    %v319 = vpack.c.b16 %v264, %v263
    %v320 = vpack.c.b16 %v266, %v265
    %v321 = vpack.c.b16 %v268, %v267
    %v322 = vpack.c.b16 %v270, %v269
    %v323 = vpack.c.b16 %v272, %v271
    %v324 = vpack.c.b16 %v274, %v273
    %v325 = vpack.c.b16 %v276, %v275
    %v326 = vpack.c.b16 %v278, %v277
    %v327 = vpack.c.b16 %v280, %v279
    %v328 = vpack.c.b16 %v282, %v281
    %v329 = vpack.c.b16 %v284, %v283
    %v330 = vpack.c.b16 %v286, %v285
    %v331 = vpack.c.b16 %v288, %v287
    %v332 = vpack.c.b16 %v290, %v289
    %v333 = vpack.c.b16 %v292, %v291
    %v334 = vpack.c.b16 %v294, %v293
    %v335 = vpack.c.b16 %v296, %v295
    %v336 = vpack.c.b16 %v298, %v297
    %v337 = vpack.c.b16 %v300, %v299
    %v338 = vpack.c.b16 %v302, %v301
    %v339 = vpack.c.b16 %v304, %v303
    %v340 = vpack.c.b16 %v306, %v305
    %v341 = vpack.c.b16 %v308, %v307
    %v342 = vpack.c.b16 %v310, %v309
    %v407 = vunpack.c.l.b16 %v77
    %v408 = vunpack.c.l.b16 %v80
    %v409 = vunpack.c.l.b16 %v83
    %v410 = vunpack.c.l.b16 %v86
    %v411 = vunpack.c.l.b16 %v89
    %v412 = vunpack.c.l.b16 %v92
    %v413 = vunpack.c.l.b16 %v95
    %v414 = vunpack.c.l.b16 %v98
    %v415 = vunpack.c.l.b16 %v101
    %v416 = vunpack.c.l.b16 %v104
    %v417 = vunpack.c.l.b16 %v107
    %v418 = vunpack.c.l.b16 %v110
    %v419 = vunpack.c.l.b16 %v113
    %v420 = vunpack.c.l.b16 %v116
    %v421 = vunpack.c.l.b16 %v119
    %v422 = vunpack.c.l.b16 %v122
    %v423 = vunpack.c.l.b16 %v131
    %v424 = vunpack.c.l.b16 %v134
    %v425 = vunpack.c.l.b16 %v137
    %v426 = vunpack.c.l.b16 %v140
    %v427 = vunpack.c.l.b16 %v143
    %v428 = vunpack.c.l.b16 %v146
    %v429 = vunpack.c.l.b16 %v149
    %v430 = vunpack.c.l.b16 %v152
    %v431 = vunpack.c.l.b16 %v155
    %v432 = vunpack.c.l.b16 %v158
    %v433 = vunpack.c.l.b16 %v161
    %v434 = vunpack.c.l.b16 %v164
    %v435 = vunpack.c.l.b16 %v167
    %v436 = vunpack.c.l.b16 %v170
    %v437 = vunpack.c.l.b16 %v173
    %v438 = vunpack.c.l.b16 %v176
    %v439 = vpack.c.b16 %v407, %v407
    %v440 = vpack.c.b16 %v408, %v408
    %v441 = vpack.c.b16 %v409, %v409
    %v442 = vpack.c.b16 %v410, %v410
    %v443 = vpack.c.b16 %v411, %v411
    %v444 = vpack.c.b16 %v412, %v412
    %v445 = vpack.c.b16 %v413, %v413
    %v446 = vpack.c.b16 %v414, %v414
    %v447 = vpack.c.b16 %v415, %v415
    %v448 = vpack.c.b16 %v416, %v416
    %v449 = vpack.c.b16 %v417, %v417
    %v450 = vpack.c.b16 %v418, %v418
    %v451 = vpack.c.b16 %v419, %v419
    %v452 = vpack.c.b16 %v420, %v420
    %v453 = vpack.c.b16 %v421, %v421
    %v454 = vpack.c.b16 %v422, %v422
    %v455 = vpack.c.b16 %v423, %v423
    %v456 = vpack.c.b16 %v424, %v424
    %v457 = vpack.c.b16 %v425, %v425
    %v458 = vpack.c.b16 %v426, %v426
    %v459 = vpack.c.b16 %v427, %v427
    %v460 = vpack.c.b16 %v428, %v428
    %v461 = vpack.c.b16 %v429, %v429
    %v462 = vpack.c.b16 %v430, %v430
    %v463 = vpack.c.b16 %v431, %v431
    %v464 = vpack.c.b16 %v432, %v432
    %v465 = vpack.c.b16 %v433, %v433
    %v466 = vpack.c.b16 %v434, %v434
    %v467 = vpack.c.b16 %v435, %v435
    %v468 = vpack.c.b16 %v436, %v436
    %v469 = vpack.c.b16 %v437, %v437
    %v470 = vpack.c.b16 %v438, %v438
    %vm471 = vsmask.f32 7424
    %v473 = vshrl.u32 %v311, 16
    %v475 = vshll.u32 %v311, 16
    %v477 = vrot.slane %v475, 1
    %v478 = vor.u32 %v473, %v477
    %v480 = vshll.u32 %v439, 16
    %v482 = vrot.slane %v480, 1
    %v483 = vsel %vm471, %v478, %v482
    %v485 = vshrl.u32 %v312, 16
    %v487 = vshll.u32 %v312, 16
    %v489 = vrot.slane %v487, 1
    %v490 = vor.u32 %v485, %v489
    %v492 = vshll.u32 %v440, 16
    %v494 = vrot.slane %v492, 1
    %v495 = vsel %vm471, %v490, %v494
    %v497 = vshrl.u32 %v313, 16
    %v499 = vshll.u32 %v313, 16
    %v501 = vrot.slane %v499, 1
    %v502 = vor.u32 %v497, %v501
    %v504 = vshll.u32 %v441, 16
    %v506 = vrot.slane %v504, 1
    %v507 = vsel %vm471, %v502, %v506
    %v509 = vshrl.u32 %v314, 16
    %v511 = vshll.u32 %v314, 16
    %v513 = vrot.slane %v511, 1
    %v514 = vor.u32 %v509, %v513
    %v516 = vshll.u32 %v442, 16
    %v518 = vrot.slane %v516, 1
    %v519 = vsel %vm471, %v514, %v518
    %v521 = vshrl.u32 %v315, 16
    %v523 = vshll.u32 %v315, 16
    %v525 = vrot.slane %v523, 1
    %v526 = vor.u32 %v521, %v525
    %v528 = vshll.u32 %v443, 16
    %v530 = vrot.slane %v528, 1
    %v531 = vsel %vm471, %v526, %v530
    %v533 = vshrl.u32 %v316, 16
    %v535 = vshll.u32 %v316, 16
    %v537 = vrot.slane %v535, 1
    %v538 = vor.u32 %v533, %v537
    %v540 = vshll.u32 %v444, 16
    %v542 = vrot.slane %v540, 1
    %v543 = vsel %vm471, %v538, %v542
    %v545 = vshrl.u32 %v317, 16
    %v547 = vshll.u32 %v317, 16
    %v549 = vrot.slane %v547, 1
    %v550 = vor.u32 %v545, %v549
    %v552 = vshll.u32 %v445, 16
    %v554 = vrot.slane %v552, 1
    %v555 = vsel %vm471, %v550, %v554
    %v557 = vshrl.u32 %v318, 16
    %v559 = vshll.u32 %v318, 16
    %v561 = vrot.slane %v559, 1
    %v562 = vor.u32 %v557, %v561
    %v564 = vshll.u32 %v446, 16
    %v566 = vrot.slane %v564, 1
    %v567 = vsel %vm471, %v562, %v566
    %v569 = vshrl.u32 %v319, 16
    %v571 = vshll.u32 %v319, 16
    %v573 = vrot.slane %v571, 1
    %v574 = vor.u32 %v569, %v573
    %v576 = vshll.u32 %v447, 16
    %v578 = vrot.slane %v576, 1
    %v579 = vsel %vm471, %v574, %v578
    %v581 = vshrl.u32 %v320, 16
    %v583 = vshll.u32 %v320, 16
    %v585 = vrot.slane %v583, 1
    %v586 = vor.u32 %v581, %v585
    %v588 = vshll.u32 %v448, 16
    %v590 = vrot.slane %v588, 1
    %v591 = vsel %vm471, %v586, %v590
    %v593 = vshrl.u32 %v321, 16
    %v595 = vshll.u32 %v321, 16
    %v597 = vrot.slane %v595, 1
    %v598 = vor.u32 %v593, %v597
    %v600 = vshll.u32 %v449, 16
    %v602 = vrot.slane %v600, 1
    %v603 = vsel %vm471, %v598, %v602
    %v605 = vshrl.u32 %v322, 16
    %v607 = vshll.u32 %v322, 16
    %v609 = vrot.slane %v607, 1
    %v610 = vor.u32 %v605, %v609
    %v612 = vshll.u32 %v450, 16
    %v614 = vrot.slane %v612, 1
    %v615 = vsel %vm471, %v610, %v614
    %v617 = vshrl.u32 %v323, 16
    %v619 = vshll.u32 %v323, 16
    %v621 = vrot.slane %v619, 1
    %v622 = vor.u32 %v617, %v621
    %v624 = vshll.u32 %v451, 16
    %v626 = vrot.slane %v624, 1
    %v627 = vsel %vm471, %v622, %v626
    %v629 = vshrl.u32 %v324, 16
    %v631 = vshll.u32 %v324, 16
    %v633 = vrot.slane %v631, 1
    %v634 = vor.u32 %v629, %v633
    %v636 = vshll.u32 %v452, 16
    %v638 = vrot.slane %v636, 1
    %v639 = vsel %vm471, %v634, %v638
    %v641 = vshrl.u32 %v325, 16
    %v643 = vshll.u32 %v325, 16
    %v645 = vrot.slane %v643, 1
    %v646 = vor.u32 %v641, %v645
    %v648 = vshll.u32 %v453, 16
    %v650 = vrot.slane %v648, 1
    %v651 = vsel %vm471, %v646, %v650
    %v653 = vshrl.u32 %v326, 16
    %v655 = vshll.u32 %v326, 16
    %v657 = vrot.slane %v655, 1
    %v658 = vor.u32 %v653, %v657
    %v660 = vshll.u32 %v454, 16
    %v662 = vrot.slane %v660, 1
    %v663 = vsel %vm471, %v658, %v662
    %v665 = vshrl.u32 %v327, 16
    %v667 = vshll.u32 %v327, 16
    %v669 = vrot.slane %v667, 1
    %v670 = vor.u32 %v665, %v669
    %v672 = vshll.u32 %v455, 16
    %v674 = vrot.slane %v672, 1
    %v675 = vsel %vm471, %v670, %v674
    %v677 = vshrl.u32 %v328, 16
    %v679 = vshll.u32 %v328, 16
    %v681 = vrot.slane %v679, 1
    %v682 = vor.u32 %v677, %v681
    %v684 = vshll.u32 %v456, 16
    %v686 = vrot.slane %v684, 1
    %v687 = vsel %vm471, %v682, %v686
    %v689 = vshrl.u32 %v329, 16
    %v691 = vshll.u32 %v329, 16
    %v693 = vrot.slane %v691, 1
    %v694 = vor.u32 %v689, %v693
    %v696 = vshll.u32 %v457, 16
    %v698 = vrot.slane %v696, 1
    %v699 = vsel %vm471, %v694, %v698
    %v701 = vshrl.u32 %v330, 16
    %v703 = vshll.u32 %v330, 16
    %v705 = vrot.slane %v703, 1
    %v706 = vor.u32 %v701, %v705
    %v708 = vshll.u32 %v458, 16
    %v710 = vrot.slane %v708, 1
    %v711 = vsel %vm471, %v706, %v710
    %v713 = vshrl.u32 %v331, 16
    %v715 = vshll.u32 %v331, 16
    %v717 = vrot.slane %v715, 1
    %v718 = vor.u32 %v713, %v717
    %v720 = vshll.u32 %v459, 16
    %v722 = vrot.slane %v720, 1
    %v723 = vsel %vm471, %v718, %v722
    %v725 = vshrl.u32 %v332, 16
    %v727 = vshll.u32 %v332, 16
    %v729 = vrot.slane %v727, 1
    %v730 = vor.u32 %v725, %v729
    %v732 = vshll.u32 %v460, 16
    %v734 = vrot.slane %v732, 1
    %v735 = vsel %vm471, %v730, %v734
    %v737 = vshrl.u32 %v333, 16
    %v739 = vshll.u32 %v333, 16
    %v741 = vrot.slane %v739, 1
    %v742 = vor.u32 %v737, %v741
    %v744 = vshll.u32 %v461, 16
    %v746 = vrot.slane %v744, 1
    %v747 = vsel %vm471, %v742, %v746
    %v749 = vshrl.u32 %v334, 16
    %v751 = vshll.u32 %v334, 16
    %v753 = vrot.slane %v751, 1
    %v754 = vor.u32 %v749, %v753
    %v756 = vshll.u32 %v462, 16
    %v758 = vrot.slane %v756, 1
    %v759 = vsel %vm471, %v754, %v758
    %v761 = vshrl.u32 %v335, 16
    %v763 = vshll.u32 %v335, 16
    %v765 = vrot.slane %v763, 1
    %v766 = vor.u32 %v761, %v765
    %v768 = vshll.u32 %v463, 16
    %v770 = vrot.slane %v768, 1
    %v771 = vsel %vm471, %v766, %v770
    %v773 = vshrl.u32 %v336, 16
    %v775 = vshll.u32 %v336, 16
    %v777 = vrot.slane %v775, 1
    %v778 = vor.u32 %v773, %v777
    %v780 = vshll.u32 %v464, 16
    %v782 = vrot.slane %v780, 1
    %v783 = vsel %vm471, %v778, %v782
    %v785 = vshrl.u32 %v337, 16
    %v787 = vshll.u32 %v337, 16
    %v789 = vrot.slane %v787, 1
    %v790 = vor.u32 %v785, %v789
    %v792 = vshll.u32 %v465, 16
    %v794 = vrot.slane %v792, 1
    %v795 = vsel %vm471, %v790, %v794
    %v797 = vshrl.u32 %v338, 16
    %v799 = vshll.u32 %v338, 16
    %v801 = vrot.slane %v799, 1
    %v802 = vor.u32 %v797, %v801
    %v804 = vshll.u32 %v466, 16
    %v806 = vrot.slane %v804, 1
    %v807 = vsel %vm471, %v802, %v806
    %v809 = vshrl.u32 %v339, 16
    %v811 = vshll.u32 %v339, 16
    %v813 = vrot.slane %v811, 1
    %v814 = vor.u32 %v809, %v813
    %v816 = vshll.u32 %v467, 16
    %v818 = vrot.slane %v816, 1
    %v819 = vsel %vm471, %v814, %v818
    %v821 = vshrl.u32 %v340, 16
    %v823 = vshll.u32 %v340, 16
    %v825 = vrot.slane %v823, 1
    %v826 = vor.u32 %v821, %v825
    %v828 = vshll.u32 %v468, 16
    %v830 = vrot.slane %v828, 1
    %v831 = vsel %vm471, %v826, %v830
    %v833 = vshrl.u32 %v341, 16
    %v835 = vshll.u32 %v341, 16
    %v837 = vrot.slane %v835, 1
    %v838 = vor.u32 %v833, %v837
    %v840 = vshll.u32 %v469, 16
    %v842 = vrot.slane %v840, 1
    %v843 = vsel %vm471, %v838, %v842
    %v845 = vshrl.u32 %v342, 16
    %v847 = vshll.u32 %v342, 16
    %v849 = vrot.slane %v847, 1
    %v850 = vor.u32 %v845, %v849
    %v852 = vshll.u32 %v470, 16
    %v854 = vrot.slane %v852, 1
    %v855 = vsel %vm471, %v850, %v854
    %vm888 = vcmask 1046528
    %v889 = vrot.slane %v311, 1
    %v890 = vrot.slane %v439, 1
    %v891 = vsel %vm888, %v889, %v890
    %v892 = vrot.slane %v312, 1
    %v893 = vrot.slane %v440, 1
    %v894 = vsel %vm888, %v892, %v893
    %v895 = vrot.slane %v313, 1
    %v896 = vrot.slane %v441, 1
    %v897 = vsel %vm888, %v895, %v896
    %v898 = vrot.slane %v314, 1
    %v899 = vrot.slane %v442, 1
    %v900 = vsel %vm888, %v898, %v899
    %v901 = vrot.slane %v315, 1
    %v902 = vrot.slane %v443, 1
    %v903 = vsel %vm888, %v901, %v902
    %v904 = vrot.slane %v316, 1
    %v905 = vrot.slane %v444, 1
    %v906 = vsel %vm888, %v904, %v905
    %v907 = vrot.slane %v317, 1
    %v908 = vrot.slane %v445, 1
    %v909 = vsel %vm888, %v907, %v908
    %v910 = vrot.slane %v318, 1
    %v911 = vrot.slane %v446, 1
    %v912 = vsel %vm888, %v910, %v911
    %v913 = vrot.slane %v319, 1
    %v914 = vrot.slane %v447, 1
    %v915 = vsel %vm888, %v913, %v914
    %v916 = vrot.slane %v320, 1
    %v917 = vrot.slane %v448, 1
    %v918 = vsel %vm888, %v916, %v917
    %v919 = vrot.slane %v321, 1
    %v920 = vrot.slane %v449, 1
    %v921 = vsel %vm888, %v919, %v920
    %v922 = vrot.slane %v322, 1
    %v923 = vrot.slane %v450, 1
    %v924 = vsel %vm888, %v922, %v923
    %v925 = vrot.slane %v323, 1
    %v926 = vrot.slane %v451, 1
    %v927 = vsel %vm888, %v925, %v926
    %v928 = vrot.slane %v324, 1
    %v929 = vrot.slane %v452, 1
    %v930 = vsel %vm888, %v928, %v929
    %v931 = vrot.slane %v325, 1
    %v932 = vrot.slane %v453, 1
    %v933 = vsel %vm888, %v931, %v932
    %v934 = vrot.slane %v326, 1
    %v935 = vrot.slane %v454, 1
    %v936 = vsel %vm888, %v934, %v935
    %v937 = vrot.slane %v327, 1
    %v938 = vrot.slane %v455, 1
    %v939 = vsel %vm888, %v937, %v938
    %v940 = vrot.slane %v328, 1
    %v941 = vrot.slane %v456, 1
    %v942 = vsel %vm888, %v940, %v941
    %v943 = vrot.slane %v329, 1
    %v944 = vrot.slane %v457, 1
    %v945 = vsel %vm888, %v943, %v944
    %v946 = vrot.slane %v330, 1
    %v947 = vrot.slane %v458, 1
    %v948 = vsel %vm888, %v946, %v947
    %v949 = vrot.slane %v331, 1
    %v950 = vrot.slane %v459, 1
    %v951 = vsel %vm888, %v949, %v950
    %v952 = vrot.slane %v332, 1
    %v953 = vrot.slane %v460, 1
    %v954 = vsel %vm888, %v952, %v953
    %v955 = vrot.slane %v333, 1
    %v956 = vrot.slane %v461, 1
    %v957 = vsel %vm888, %v955, %v956
    %v958 = vrot.slane %v334, 1
    %v959 = vrot.slane %v462, 1
    %v960 = vsel %vm888, %v958, %v959
    %v961 = vrot.slane %v335, 1
    %v962 = vrot.slane %v463, 1
    %v963 = vsel %vm888, %v961, %v962
    %v964 = vrot.slane %v336, 1
    %v965 = vrot.slane %v464, 1
    %v966 = vsel %vm888, %v964, %v965
    %v967 = vrot.slane %v337, 1
    %v968 = vrot.slane %v465, 1
    %v969 = vsel %vm888, %v967, %v968
    %v970 = vrot.slane %v338, 1
    %v971 = vrot.slane %v466, 1
    %v972 = vsel %vm888, %v970, %v971
    %v973 = vrot.slane %v339, 1
    %v974 = vrot.slane %v467, 1
    %v975 = vsel %vm888, %v973, %v974
    %v976 = vrot.slane %v340, 1
    %v977 = vrot.slane %v468, 1
    %v978 = vsel %vm888, %v976, %v977
    %v979 = vrot.slane %v341, 1
    %v980 = vrot.slane %v469, 1
    %v981 = vsel %vm888, %v979, %v980
    %v982 = vrot.slane %v342, 1
    %v983 = vrot.slane %v470, 1
    %v984 = vsel %vm888, %v982, %v983
    %v1021 = vunpack.c.l.b16 %v123
    %v1022 = vunpack.c.l.b16 %v124
    %v1023 = vunpack.c.l.b16 %v177
    %v1024 = vunpack.c.l.b16 %v178
    %v1025 = vpack.c.b16 %v1022, %v1021
    %v1026 = vpack.c.b16 %v1024, %v1023
    %v1031 = vunpack.c.l.b16 %v125
    %v1032 = vunpack.c.l.b16 %v179
    %v1033 = vpack.c.b16 %v1031, %v1031
    %v1034 = vpack.c.b16 %v1032, %v1032
    %v1036 = vshrl.u32 %v1025, 16
    %v1038 = vshll.u32 %v1025, 16
    %v1040 = vrot.slane %v1038, 1
    %v1041 = vor.u32 %v1036, %v1040
    %v1043 = vshll.u32 %v1033, 16
    %v1045 = vrot.slane %v1043, 1
    %v1046 = vsel %vm471, %v1041, %v1045
    %v1048 = vshrl.u32 %v1026, 16
    %v1050 = vshll.u32 %v1026, 16
    %v1052 = vrot.slane %v1050, 1
    %v1053 = vor.u32 %v1048, %v1052
    %v1055 = vshll.u32 %v1034, 16
    %v1057 = vrot.slane %v1055, 1
    %v1058 = vsel %vm471, %v1053, %v1057
    %v1061 = vrot.slane %v1025, 1
    %v1062 = vrot.slane %v1033, 1
    %v1063 = vsel %vm888, %v1061, %v1062
    %v1064 = vrot.slane %v1026, 1
    %v1065 = vrot.slane %v1034, 1
    %v1066 = vsel %vm888, %v1064, %v1065
    %v1073 = vunpack.c.l.b16 %v126
    %v1074 = vunpack.c.l.b16 %v127
    %v1075 = vunpack.c.l.b16 %v180
    %v1076 = vunpack.c.l.b16 %v181
    %v1077 = vpack.c.b16 %v1074, %v1073
    %v1078 = vpack.c.b16 %v1076, %v1075
    %v1083 = vunpack.c.l.b16 %v128
    %v1084 = vunpack.c.l.b16 %v182
    %v1085 = vpack.c.b16 %v1083, %v1083
    %v1086 = vpack.c.b16 %v1084, %v1084
    %v1088 = vshrl.u32 %v1077, 16
    %v1090 = vshll.u32 %v1077, 16
    %v1092 = vrot.slane %v1090, 1
    %v1093 = vor.u32 %v1088, %v1092
    %v1095 = vshll.u32 %v1085, 16
    %v1097 = vrot.slane %v1095, 1
    %v1098 = vsel %vm471, %v1093, %v1097
    %v1100 = vshrl.u32 %v1078, 16
    %v1102 = vshll.u32 %v1078, 16
    %v1104 = vrot.slane %v1102, 1
    %v1105 = vor.u32 %v1100, %v1104
    %v1107 = vshll.u32 %v1086, 16
    %v1109 = vrot.slane %v1107, 1
    %v1110 = vsel %vm471, %v1105, %v1109
    %v1113 = vrot.slane %v1077, 1
    %v1114 = vrot.slane %v1085, 1
    %v1115 = vsel %vm888, %v1113, %v1114
    %v1116 = vrot.slane %v1078, 1
    %v1117 = vrot.slane %v1086, 1
    %v1118 = vsel %vm888, %v1116, %v1117
    %v1121 = vld [vmem:[%s2] sm:$0xf]
    %v1122 = vld [vmem:[%s2 + $0x4] sm:$0xf]
    %v1123 = vld [vmem:[%s2 + $0x8] sm:$0xf]
    %v1124 = vld [vmem:[%s2 + $0xc] sm:$0xf]
    %v1125 = vld [vmem:[%s2 + $0x10] sm:$0xf]
    %v1126 = vld [vmem:[%s2 + $0x14] sm:$0xf]
    %v1127 = vld [vmem:[%s2 + $0x18] sm:$0xf]
    %v1128 = vld [vmem:[%s2 + $0x1c] sm:$0xf]
    %v1129 = vld [vmem:[%s2 + $0x20] sm:$0xf]
    %v1130 = vld [vmem:[%s2 + $0x24] sm:$0xf]
    %v1131 = vld [vmem:[%s2 + $0x28] sm:$0xf]
    %v1132 = vld [vmem:[%s2 + $0x2c] sm:$0xf]
    %v1133 = vld [vmem:[%s2 + $0x30] sm:$0xf]
    %v1134 = vld [vmem:[%s2 + $0x34] sm:$0xf]
    %v1135 = vld [vmem:[%s2 + $0x38] sm:$0xf]
    %v1136 = vld [vmem:[%s2 + $0x3c] sm:$0xf]
    %v1137 = vld [vmem:[%s2 + $0x40] sm:$0xf]
    %v1138 = vld [vmem:[%s2 + $0x44] sm:$0xf]
    %v1139 = vld [vmem:[%s2 + $0x48] sm:$0xf]
    %v1140 = vld [vmem:[%s2 + $0x4c] sm:$0xf]
    %v1141 = vld [vmem:[%s2 + $0x50] sm:$0xf]
    %v1142 = vld [vmem:[%s2 + $0x54] sm:$0xf]
    %v1143 = vld [vmem:[%s2 + $0x58] sm:$0xf]
    %v1144 = vld [vmem:[%s2 + $0x5c] sm:$0xf]
    %v1145 = vld [vmem:[%s2 + $0x60] sm:$0xf]
    %v1146 = vld [vmem:[%s2 + $0x64] sm:$0xf]
    %v1147 = vld [vmem:[%s2 + $0x68] sm:$0xf]
    %v1148 = vld [vmem:[%s2 + $0x6c] sm:$0xf]
    %v1149 = vld [vmem:[%s2 + $0x70] sm:$0xf]
    %v1150 = vld [vmem:[%s2 + $0x74] sm:$0xf]
    %v1151 = vld [vmem:[%s2 + $0x78] sm:$0xf]
    %v1152 = vld [vmem:[%s2 + $0x7c] sm:$0xf]
    %v1153 = vld [vmem:[%s2 + $0x80] sm:$0xf]
    %v1154 = vld [vmem:[%s2 + $0x84] sm:$0xf]
    %v1155 = vld [vmem:[%s2 + $0x88] sm:$0xf]
    %v1156 = vld [vmem:[%s2 + $0x8c] sm:$0xf]
    %v1157 = vld [vmem:[%s2 + $0x90] sm:$0xf]
    %v1158 = vld [vmem:[%s2 + $0x94] sm:$0xf]
    %v1159 = vld [vmem:[%s2 + $0x98] sm:$0xf]
    %v1160 = vld [vmem:[%s2 + $0x9c] sm:$0xf]
    %v1161 = vld [vmem:[%s2 + $0xa0] sm:$0xf]
    %v1162 = vld [vmem:[%s2 + $0xa4] sm:$0xf]
    %v1163 = vld [vmem:[%s2 + $0xa8] sm:$0xf]
    %v1164 = vld [vmem:[%s2 + $0xac] sm:$0xf]
    %v1165 = vld [vmem:[%s2 + $0xb0] sm:$0xf]
    %v1166 = vld [vmem:[%s2 + $0xb4] sm:$0xf]
    %v1167 = vld [vmem:[%s2 + $0xb8] sm:$0xf]
    %v1168 = vld [vmem:[%s2 + $0xbc] sm:$0xf]
    %v1169 = vld [vmem:[%s2 + $0xc0] sm:$0xf]
    %v1170 = vld [vmem:[%s2 + $0xc4] sm:$0xf]
    %v1171 = vld [vmem:[%s2 + $0xc8] sm:$0xf]
    %v1172 = vld [vmem:[%s2 + $0xcc] sm:$0xf]
    %v1173 = vld [vmem:[%s2 + $0xd0] sm:$0xf]
    %v1174 = vld [vmem:[%s2 + $0xd4] sm:$0xf]
    %v1175 = vld [vmem:[%s2 + $0xd8] sm:$0xf]
    %v1176 = vld [vmem:[%s2 + $0xdc] sm:$0xf]
    %v1177 = vld [vmem:[%s2 + $0xe0] sm:$0xf]
    %v1178 = vld [vmem:[%s2 + $0xe4] sm:$0xf]
    %v1179 = vld [vmem:[%s2 + $0xe8] sm:$0xf]
    %v1180 = vld [vmem:[%s2 + $0xec] sm:$0xf]
    %v1181 = vld [vmem:[%s2 + $0xf0] sm:$0xf]
    %v1182 = vld [vmem:[%s2 + $0xf4] sm:$0xf]
    %v1183 = vld [vmem:[%s2 + $0xf8] sm:$0xf]
    %v1184 = vld [vmem:[%s2 + $0xfc] sm:$0xf]
    %v1185 = vld [vmem:[%s2 + $0x100] sm:$0xf]
    %v1186 = vld [vmem:[%s2 + $0x104] sm:$0xf]
    %v1187 = vld [vmem:[%s2 + $0x108] sm:$0xf]
    %v1188 = vld [vmem:[%s2 + $0x10c] sm:$0xf]
    %v1189 = vld [vmem:[%s2 + $0x110] sm:$0xf]
    %v1190 = vld [vmem:[%s2 + $0x114] sm:$0xf]
    %v1191 = vld [vmem:[%s2 + $0x118] sm:$0xf]
    %v1192 = vld [vmem:[%s2 + $0x11c] sm:$0xf]
    %v1193 = vld [vmem:[%s2 + $0x120] sm:$0xf]
    %v1194 = vld [vmem:[%s2 + $0x124] sm:$0xf]
    %v1195 = vld [vmem:[%s2 + $0x128] sm:$0xf]
    %v1196 = vld [vmem:[%s2 + $0x12c] sm:$0xf]
    %v1197 = vld [vmem:[%s2 + $0x130] sm:$0xf]
    %v1198 = vld [vmem:[%s2 + $0x134] sm:$0xf]
    %v1199 = vld [vmem:[%s2 + $0x138] sm:$0xf]
    %v1200 = vld [vmem:[%s2 + $0x13c] sm:$0xf]
    %v1201 = vld [vmem:[%s2 + $0x140] sm:$0xf]
    %v1202 = vld [vmem:[%s2 + $0x144] sm:$0xf]
    %v1203 = vld [vmem:[%s2 + $0x148] sm:$0xf]
    %v1204 = vld [vmem:[%s2 + $0x14c] sm:$0xf]
    %v1205 = vld [vmem:[%s2 + $0x150] sm:$0xf]
    %v1206 = vld [vmem:[%s2 + $0x154] sm:$0xf]
    %v1207 = vld [vmem:[%s2 + $0x158] sm:$0xf]
    %v1208 = vld [vmem:[%s2 + $0x15c] sm:$0xf]
    %v1209 = vld [vmem:[%s2 + $0x160] sm:$0xf]
    %v1210 = vld [vmem:[%s2 + $0x164] sm:$0xf]
    %v1211 = vld [vmem:[%s2 + $0x168] sm:$0xf]
    %v1212 = vld [vmem:[%s2 + $0x16c] sm:$0xf]
    %v1213 = vld [vmem:[%s2 + $0x170] sm:$0xf]
    %v1214 = vld [vmem:[%s2 + $0x174] sm:$0xf]
    %v1215 = vld [vmem:[%s2 + $0x178] sm:$0xf]
    %v1216 = vld [vmem:[%s2 + $0x17c] sm:$0xf]
    %v1217 = vld [vmem:[%s2 + $0x180] sm:$0xf]
    %v1218 = vld [vmem:[%s2 + $0x184] sm:$0xf]
    %v1219 = vld [vmem:[%s2 + $0x188] sm:$0xf]
    %v1220 = vld [vmem:[%s2 + $0x18c] sm:$0xf]
    %v1221 = vld [vmem:[%s2 + $0x190] sm:$0xf]
    %v1222 = vld [vmem:[%s2 + $0x194] sm:$0xf]
    %v1223 = vld [vmem:[%s2 + $0x198] sm:$0xf]
    %v1224 = vld [vmem:[%s2 + $0x19c] sm:$0xf]
    %v1225 = vld [vmem:[%s2 + $0x1a0] sm:$0xf]
    %v1226 = vld [vmem:[%s2 + $0x1a4] sm:$0xf]
    %v1227 = vld [vmem:[%s2 + $0x1a8] sm:$0xf]
    %v1228 = vld [vmem:[%s2 + $0x1ac] sm:$0xf]
    %v1229 = vld [vmem:[%s2 + $0x1b0] sm:$0xf]
    %v1230 = vld [vmem:[%s2 + $0x1b4] sm:$0xf]
    %v1231 = vld [vmem:[%s2 + $0x1b8] sm:$0xf]
    %v1232 = vld [vmem:[%s2 + $0x1bc] sm:$0xf]
    %v1233 = vld [vmem:[%s2 + $0x1c0] sm:$0xf]
    %v1234 = vld [vmem:[%s2 + $0x1c4] sm:$0xf]
    %v1235 = vld [vmem:[%s2 + $0x1c8] sm:$0xf]
    %v1236 = vld [vmem:[%s2 + $0x1cc] sm:$0xf]
    %v1237 = vld [vmem:[%s2 + $0x1d0] sm:$0xf]
    %v1238 = vld [vmem:[%s2 + $0x1d4] sm:$0xf]
    %v1239 = vld [vmem:[%s2 + $0x1d8] sm:$0xf]
    %v1240 = vld [vmem:[%s2 + $0x1dc] sm:$0xf]
    %v1241 = vld [vmem:[%s2 + $0x1e0] sm:$0xf]
    %v1242 = vld [vmem:[%s2 + $0x1e4] sm:$0xf]
    %v1243 = vld [vmem:[%s2 + $0x1e8] sm:$0xf]
    %v1244 = vld [vmem:[%s2 + $0x1ec] sm:$0xf]
    %v1245 = vld [vmem:[%s2 + $0x1f0] sm:$0xf]
    %v1246 = vld [vmem:[%s2 + $0x1f4] sm:$0xf]
    %v1247 = vld [vmem:[%s2 + $0x1f8] sm:$0xf]
    %v1248 = vld [vmem:[%s2 + $0x1fc] sm:$0xf]
    %v1249 = vld [vmem:[%s2 + $0x200] sm:$0xf]
    %v1250 = vld [vmem:[%s2 + $0x204] sm:$0xf]
    %v1251 = vld [vmem:[%s2 + $0x208] sm:$0xf]
    %v1252 = vld [vmem:[%s2 + $0x20c] sm:$0xf]
    %v1253 = vld [vmem:[%s2 + $0x210] sm:$0xf]
    %v1254 = vld [vmem:[%s2 + $0x214] sm:$0xf]
    %v1255 = vld [vmem:[%s2 + $0x218] sm:$0xf]
    %v1256 = vld [vmem:[%s2 + $0x21c] sm:$0xf]
    %v1257 = vld [vmem:[%s2 + $0x220] sm:$0xf]
    %v1258 = vld [vmem:[%s2 + $0x224] sm:$0xf]
    %v1259 = vld [vmem:[%s2 + $0x228] sm:$0xf]
    %v1260 = vld [vmem:[%s2 + $0x22c] sm:$0xf]
    %v1261 = vld [vmem:[%s2 + $0x230] sm:$0xf]
    %v1262 = vld [vmem:[%s2 + $0x234] sm:$0xf]
    %v1263 = vld [vmem:[%s2 + $0x238] sm:$0xf]
    %v1264 = vld [vmem:[%s2 + $0x23c] sm:$0xf]
    %v1409 = vunpack.c.l.b16 %v1121
    %v1410 = vunpack.c.l.b16 %v1122
    %v1411 = vunpack.c.l.b16 %v1123
    %v1412 = vunpack.c.l.b16 %v1124
    %v1413 = vunpack.c.l.b16 %v1125
    %v1414 = vunpack.c.l.b16 %v1126
    %v1415 = vunpack.c.l.b16 %v1127
    %v1416 = vunpack.c.l.b16 %v1128
    %v1417 = vunpack.c.l.b16 %v1129
    %v1418 = vunpack.c.l.b16 %v1130
    %v1419 = vunpack.c.l.b16 %v1131
    %v1420 = vunpack.c.l.b16 %v1132
    %v1421 = vunpack.c.l.b16 %v1133
    %v1422 = vunpack.c.l.b16 %v1134
    %v1423 = vunpack.c.l.b16 %v1135
    %v1424 = vunpack.c.l.b16 %v1136
    %v1425 = vunpack.c.l.b16 %v1137
    %v1426 = vunpack.c.l.b16 %v1138
    %v1427 = vunpack.c.l.b16 %v1139
    %v1428 = vunpack.c.l.b16 %v1140
    %v1429 = vunpack.c.l.b16 %v1141
    %v1430 = vunpack.c.l.b16 %v1142
    %v1431 = vunpack.c.l.b16 %v1143
    %v1432 = vunpack.c.l.b16 %v1144
    %v1433 = vunpack.c.l.b16 %v1145
    %v1434 = vunpack.c.l.b16 %v1146
    %v1435 = vunpack.c.l.b16 %v1147
    %v1436 = vunpack.c.l.b16 %v1148
    %v1437 = vunpack.c.l.b16 %v1149
    %v1438 = vunpack.c.l.b16 %v1150
    %v1439 = vunpack.c.l.b16 %v1151
    %v1440 = vunpack.c.l.b16 %v1152
    %v1441 = vunpack.c.l.b16 %v1153
    %v1442 = vunpack.c.l.b16 %v1154
    %v1443 = vunpack.c.l.b16 %v1155
    %v1444 = vunpack.c.l.b16 %v1156
    %v1445 = vunpack.c.l.b16 %v1157
    %v1446 = vunpack.c.l.b16 %v1158
    %v1447 = vunpack.c.l.b16 %v1159
    %v1448 = vunpack.c.l.b16 %v1160
    %v1449 = vunpack.c.l.b16 %v1161
    %v1450 = vunpack.c.l.b16 %v1162
    %v1451 = vunpack.c.l.b16 %v1163
    %v1452 = vunpack.c.l.b16 %v1164
    %v1453 = vunpack.c.l.b16 %v1165
    %v1454 = vunpack.c.l.b16 %v1166
    %v1455 = vunpack.c.l.b16 %v1167
    %v1456 = vunpack.c.l.b16 %v1168
    %v1457 = vunpack.c.l.b16 %v1169
    %v1458 = vunpack.c.l.b16 %v1170
    %v1459 = vunpack.c.l.b16 %v1171
    %v1460 = vunpack.c.l.b16 %v1172
    %v1461 = vunpack.c.l.b16 %v1173
    %v1462 = vunpack.c.l.b16 %v1174
    %v1463 = vunpack.c.l.b16 %v1175
    %v1464 = vunpack.c.l.b16 %v1176
    %v1465 = vunpack.c.l.b16 %v1177
    %v1466 = vunpack.c.l.b16 %v1178
    %v1467 = vunpack.c.l.b16 %v1179
    %v1468 = vunpack.c.l.b16 %v1180
    %v1469 = vunpack.c.l.b16 %v1181
    %v1470 = vunpack.c.l.b16 %v1182
    %v1471 = vunpack.c.l.b16 %v1183
    %v1472 = vunpack.c.l.b16 %v1184
    %v1473 = vunpack.c.l.b16 %v1185
    %v1474 = vunpack.c.l.b16 %v1186
    %v1475 = vunpack.c.l.b16 %v1187
    %v1476 = vunpack.c.l.b16 %v1188
    %v1477 = vunpack.c.l.b16 %v1189
    %v1478 = vunpack.c.l.b16 %v1190
    %v1479 = vunpack.c.l.b16 %v1191
    %v1480 = vunpack.c.l.b16 %v1192
    %v1481 = vunpack.c.l.b16 %v1193
    %v1482 = vunpack.c.l.b16 %v1194
    %v1483 = vunpack.c.l.b16 %v1195
    %v1484 = vunpack.c.l.b16 %v1196
    %v1485 = vunpack.c.l.b16 %v1197
    %v1486 = vunpack.c.l.b16 %v1198
    %v1487 = vunpack.c.l.b16 %v1199
    %v1488 = vunpack.c.l.b16 %v1200
    %v1489 = vunpack.c.l.b16 %v1201
    %v1490 = vunpack.c.l.b16 %v1202
    %v1491 = vunpack.c.l.b16 %v1203
    %v1492 = vunpack.c.l.b16 %v1204
    %v1493 = vunpack.c.l.b16 %v1205
    %v1494 = vunpack.c.l.b16 %v1206
    %v1495 = vunpack.c.l.b16 %v1207
    %v1496 = vunpack.c.l.b16 %v1208
    %v1497 = vunpack.c.l.b16 %v1209
    %v1498 = vunpack.c.l.b16 %v1210
    %v1499 = vunpack.c.l.b16 %v1211
    %v1500 = vunpack.c.l.b16 %v1212
    %v1501 = vunpack.c.l.b16 %v1213
    %v1502 = vunpack.c.l.b16 %v1214
    %v1503 = vunpack.c.l.b16 %v1215
    %v1504 = vunpack.c.l.b16 %v1216
    %v1505 = vunpack.c.l.b16 %v1217
    %v1506 = vunpack.c.l.b16 %v1218
    %v1507 = vunpack.c.l.b16 %v1219
    %v1508 = vunpack.c.l.b16 %v1220
    %v1509 = vunpack.c.l.b16 %v1221
    %v1510 = vunpack.c.l.b16 %v1222
    %v1511 = vunpack.c.l.b16 %v1223
    %v1512 = vunpack.c.l.b16 %v1224
    %v1513 = vunpack.c.l.b16 %v1225
    %v1514 = vunpack.c.l.b16 %v1226
    %v1515 = vunpack.c.l.b16 %v1227
    %v1516 = vunpack.c.l.b16 %v1228
    %v1517 = vunpack.c.l.b16 %v1229
    %v1518 = vunpack.c.l.b16 %v1230
    %v1519 = vunpack.c.l.b16 %v1231
    %v1520 = vunpack.c.l.b16 %v1232
    %v1521 = vunpack.c.l.b16 %v1233
    %v1522 = vunpack.c.l.b16 %v1234
    %v1523 = vunpack.c.l.b16 %v1235
    %v1524 = vunpack.c.l.b16 %v1236
    %v1525 = vunpack.c.l.b16 %v1237
    %v1526 = vunpack.c.l.b16 %v1238
    %v1527 = vunpack.c.l.b16 %v1239
    %v1528 = vunpack.c.l.b16 %v1240
    %v1529 = vunpack.c.l.b16 %v1241
    %v1530 = vunpack.c.l.b16 %v1242
    %v1531 = vunpack.c.l.b16 %v1243
    %v1532 = vunpack.c.l.b16 %v1244
    %v1533 = vunpack.c.l.b16 %v1245
    %v1534 = vunpack.c.l.b16 %v1246
    %v1535 = vunpack.c.l.b16 %v1247
    %v1536 = vunpack.c.l.b16 %v1248
    %v1537 = vunpack.c.l.b16 %v1249
    %v1538 = vunpack.c.l.b16 %v1250
    %v1539 = vunpack.c.l.b16 %v1251
    %v1540 = vunpack.c.l.b16 %v1252
    %v1541 = vunpack.c.l.b16 %v1253
    %v1542 = vunpack.c.l.b16 %v1254
    %v1543 = vunpack.c.l.b16 %v1255
    %v1544 = vunpack.c.l.b16 %v1256
    %v1545 = vunpack.c.l.b16 %v1257
    %v1546 = vunpack.c.l.b16 %v1258
    %v1547 = vunpack.c.l.b16 %v1259
    %v1548 = vunpack.c.l.b16 %v1260
    %v1549 = vunpack.c.l.b16 %v1261
    %v1550 = vunpack.c.l.b16 %v1262
    %v1551 = vunpack.c.l.b16 %v1263
    %v1552 = vunpack.c.l.b16 %v1264
    %v1553 = vpack.c.b16 %v1410, %v1409
    %v1554 = vpack.c.b16 %v1412, %v1411
    %v1555 = vpack.c.b16 %v1414, %v1413
    %v1556 = vpack.c.b16 %v1416, %v1415
    %v1557 = vpack.c.b16 %v1418, %v1417
    %v1558 = vpack.c.b16 %v1420, %v1419
    %v1559 = vpack.c.b16 %v1422, %v1421
    %v1560 = vpack.c.b16 %v1424, %v1423
    %v1561 = vpack.c.b16 %v1426, %v1425
    %v1562 = vpack.c.b16 %v1428, %v1427
    %v1563 = vpack.c.b16 %v1430, %v1429
    %v1564 = vpack.c.b16 %v1432, %v1431
    %v1565 = vpack.c.b16 %v1434, %v1433
    %v1566 = vpack.c.b16 %v1436, %v1435
    %v1567 = vpack.c.b16 %v1438, %v1437
    %v1568 = vpack.c.b16 %v1440, %v1439
    %v1569 = vpack.c.b16 %v1442, %v1441
    %v1570 = vpack.c.b16 %v1444, %v1443
    %v1571 = vpack.c.b16 %v1446, %v1445
    %v1572 = vpack.c.b16 %v1448, %v1447
    %v1573 = vpack.c.b16 %v1450, %v1449
    %v1574 = vpack.c.b16 %v1452, %v1451
    %v1575 = vpack.c.b16 %v1454, %v1453
    %v1576 = vpack.c.b16 %v1456, %v1455
    %v1577 = vpack.c.b16 %v1458, %v1457
    %v1578 = vpack.c.b16 %v1460, %v1459
    %v1579 = vpack.c.b16 %v1462, %v1461
    %v1580 = vpack.c.b16 %v1464, %v1463
    %v1581 = vpack.c.b16 %v1466, %v1465
    %v1582 = vpack.c.b16 %v1468, %v1467
    %v1583 = vpack.c.b16 %v1470, %v1469
    %v1584 = vpack.c.b16 %v1472, %v1471
    %v1585 = vpack.c.b16 %v1474, %v1473
    %v1586 = vpack.c.b16 %v1476, %v1475
    %v1587 = vpack.c.b16 %v1478, %v1477
    %v1588 = vpack.c.b16 %v1480, %v1479
    %v1589 = vpack.c.b16 %v1482, %v1481
    %v1590 = vpack.c.b16 %v1484, %v1483
    %v1591 = vpack.c.b16 %v1486, %v1485
    %v1592 = vpack.c.b16 %v1488, %v1487
    %v1593 = vpack.c.b16 %v1490, %v1489
    %v1594 = vpack.c.b16 %v1492, %v1491
    %v1595 = vpack.c.b16 %v1494, %v1493
    %v1596 = vpack.c.b16 %v1496, %v1495
    %v1597 = vpack.c.b16 %v1498, %v1497
    %v1598 = vpack.c.b16 %v1500, %v1499
    %v1599 = vpack.c.b16 %v1502, %v1501
    %v1600 = vpack.c.b16 %v1504, %v1503
    %v1601 = vpack.c.b16 %v1506, %v1505
    %v1602 = vpack.c.b16 %v1508, %v1507
    %v1603 = vpack.c.b16 %v1510, %v1509
    %v1604 = vpack.c.b16 %v1512, %v1511
    %v1605 = vpack.c.b16 %v1514, %v1513
    %v1606 = vpack.c.b16 %v1516, %v1515
    %v1607 = vpack.c.b16 %v1518, %v1517
    %v1608 = vpack.c.b16 %v1520, %v1519
    %v1609 = vpack.c.b16 %v1522, %v1521
    %v1610 = vpack.c.b16 %v1524, %v1523
    %v1611 = vpack.c.b16 %v1526, %v1525
    %v1612 = vpack.c.b16 %v1528, %v1527
    %v1613 = vpack.c.b16 %v1530, %v1529
    %v1614 = vpack.c.b16 %v1532, %v1531
    %v1615 = vpack.c.b16 %v1534, %v1533
    %v1616 = vpack.c.b16 %v1536, %v1535
    %v1617 = vpack.c.b16 %v1538, %v1537
    %v1618 = vpack.c.b16 %v1540, %v1539
    %v1619 = vpack.c.b16 %v1542, %v1541
    %v1620 = vpack.c.b16 %v1544, %v1543
    %v1621 = vpack.c.b16 %v1546, %v1545
    %v1622 = vpack.c.b16 %v1548, %v1547
    %v1623 = vpack.c.b16 %v1550, %v1549
    %v1624 = vpack.c.b16 %v1552, %v1551
    %1697 = vmatprep.subr.bf16.mxu0 0
    %1698 = vmatpush1.bf16.msra.mxu0 %v1553
    %1699 = vmatprep.subr.bf16.mxu0 0
    %1700 = vmatpush1.bf16.msra.mxu0 %v1554
    %1701 = vmatprep.subr.bf16.mxu0 0
    %1702 = vmatpush1.bf16.msra.mxu0 %v1555
    %1703 = vmatprep.subr.bf16.mxu0 0
    %1704 = vmatpush1.bf16.msra.mxu0 %v1556
    %1705 = vmatprep.subr.bf16.mxu0 0
    %1706 = vmatpush1.bf16.msra.mxu0 %v1557
    %1707 = vmatprep.subr.bf16.mxu0 0
    %1708 = vmatpush1.bf16.msra.mxu0 %v1558
    %1709 = vmatprep.subr.bf16.mxu0 0
    %1710 = vmatpush1.bf16.msra.mxu0 %v1559
    %1711 = vmatprep.subr.bf16.mxu0 0
    %1712 = vmatpush1.bf16.msra.mxu0 %v1560
    %1713 = vmatprep.subr.bf16.mxu0 0
    %1714 = vmatpush1.bf16.msra.mxu0 %v1561
    %1715 = vmatprep.subr.bf16.mxu0 0
    %1716 = vmatpush1.bf16.msra.mxu0 %v1562
    %1717 = vmatprep.subr.bf16.mxu0 0
    %1718 = vmatpush1.bf16.msra.mxu0 %v1563
    %1719 = vmatprep.subr.bf16.mxu0 0
    %1720 = vmatpush1.bf16.msra.mxu0 %v1564
    %1721 = vmatprep.subr.bf16.mxu0 0
    %1722 = vmatpush1.bf16.msra.mxu0 %v1565
    %1723 = vmatprep.subr.bf16.mxu0 0
    %1724 = vmatpush1.bf16.msra.mxu0 %v1566
    %1725 = vmatprep.subr.bf16.mxu0 0
    %1726 = vmatpush1.bf16.msra.mxu0 %v1567
    %1727 = vmatprep.subr.bf16.mxu0 0
    %1728 = vmatpush1.bf16.msra.mxu0 %v1568
    %1729 = vmatprep.mubr.bf16.mxu0 %v483
    %1730 = vmatmul.mubr.bf16.gmra.mrb[0].mxu0 %v311
    %v1731 = vpop.f32.mrb[0].mxu0
    %v1732 = vadd.f32 0.0, %v1731
    %v1733 = vpop.f32.mrb[0].mxu0
    %v1734 = vpop.f32.mrb[0].mxu0
    %v1735 = vadd.f32 0.0, %v1734
    %v1736 = vpop.f32.mrb[0].mxu0
    %1737 = vmatprep.mubr.bf16.mxu0 %v495
    %1738 = vmatmul.mubr.bf16.gmra.mrb[0].mxu0 %v312
    %v1739 = vpop.f32.mrb[0].mxu0
    %v1740 = vadd.f32 0.0, %v1739
    %v1741 = vpop.f32.mrb[0].mxu0
    %v1742 = vpop.f32.mrb[0].mxu0
    %v1743 = vadd.f32 0.0, %v1742
    %v1744 = vpop.f32.mrb[0].mxu0
    %1745 = vmatprep.mubr.bf16.mxu0 %v507
    %1746 = vmatmul.mubr.bf16.gmra.mrb[0].mxu0 %v313
    %v1747 = vpop.f32.mrb[0].mxu0
    %v1748 = vadd.f32 0.0, %v1747
    %v1749 = vpop.f32.mrb[0].mxu0
    %v1750 = vpop.f32.mrb[0].mxu0
    %v1751 = vadd.f32 0.0, %v1750
    %v1752 = vpop.f32.mrb[0].mxu0
    %1753 = vmatprep.mubr.bf16.mxu0 %v519
    %1754 = vmatmul.mubr.bf16.gmra.mrb[0].mxu0 %v314
    %v1755 = vpop.f32.mrb[0].mxu0
    %v1756 = vadd.f32 0.0, %v1755
    %v1757 = vpop.f32.mrb[0].mxu0
    %v1758 = vpop.f32.mrb[0].mxu0
    %v1759 = vadd.f32 0.0, %v1758
    %v1760 = vpop.f32.mrb[0].mxu0
    %1761 = vmatprep.mubr.bf16.mxu0 %v531
    %1762 = vmatmul.mubr.bf16.gmra.mrb[0].mxu0 %v315
    %v1763 = vpop.f32.mrb[0].mxu0
    %v1764 = vadd.f32 0.0, %v1763
    %v1765 = vpop.f32.mrb[0].mxu0
    %v1766 = vpop.f32.mrb[0].mxu0
    %v1767 = vadd.f32 0.0, %v1766
    %v1768 = vpop.f32.mrb[0].mxu0
    %1769 = vmatprep.mubr.bf16.mxu0 %v543
    %1770 = vmatmul.mubr.bf16.gmra.mrb[0].mxu0 %v316
    %v1771 = vpop.f32.mrb[0].mxu0
    %v1772 = vadd.f32 0.0, %v1771
    %v1773 = vpop.f32.mrb[0].mxu0
    %v1774 = vpop.f32.mrb[0].mxu0
    %v1775 = vadd.f32 0.0, %v1774
    %v1776 = vpop.f32.mrb[0].mxu0
    %1777 = vmatprep.mubr.bf16.mxu0 %v555
    %1778 = vmatmul.mubr.bf16.gmra.mrb[0].mxu0 %v317
    %v1779 = vpop.f32.mrb[0].mxu0
    %v1780 = vadd.f32 0.0, %v1779
    %v1781 = vpop.f32.mrb[0].mxu0
    %v1782 = vpop.f32.mrb[0].mxu0
    %v1783 = vadd.f32 0.0, %v1782
    %v1784 = vpop.f32.mrb[0].mxu0
    %1785 = vmatprep.mubr.bf16.mxu0 %v567
    %1786 = vmatmul.mubr.bf16.gmra.mrb[0].mxu0 %v318
    %v1787 = vpop.f32.mrb[0].mxu0
    %v1788 = vadd.f32 0.0, %v1787
    %v1789 = vpop.f32.mrb[0].mxu0
    %v1790 = vpop.f32.mrb[0].mxu0
    %v1791 = vadd.f32 0.0, %v1790
    %v1792 = vpop.f32.mrb[0].mxu0
    %1793 = vmatprep.mubr.bf16.mxu0 %v579
    %1794 = vmatmul.mubr.bf16.gmra.mrb[0].mxu0 %v319
    %v1795 = vpop.f32.mrb[0].mxu0
    %v1796 = vadd.f32 0.0, %v1795
    %v1797 = vpop.f32.mrb[0].mxu0
    %v1798 = vpop.f32.mrb[0].mxu0
    %v1799 = vadd.f32 0.0, %v1798
    %v1800 = vpop.f32.mrb[0].mxu0
    %1801 = vmatprep.mubr.bf16.mxu0 %v591
    %1802 = vmatmul.mubr.bf16.gmra.mrb[0].mxu0 %v320
    %v1803 = vpop.f32.mrb[0].mxu0
    %v1804 = vadd.f32 0.0, %v1803
    %v1805 = vpop.f32.mrb[0].mxu0
    %v1806 = vpop.f32.mrb[0].mxu0
    %v1807 = vadd.f32 0.0, %v1806
    %v1808 = vpop.f32.mrb[0].mxu0
    %1809 = vmatprep.mubr.bf16.mxu0 %v603
    %1810 = vmatmul.mubr.bf16.gmra.mrb[0].mxu0 %v321
    %v1811 = vpop.f32.mrb[0].mxu0
    %v1812 = vadd.f32 0.0, %v1811
    %v1813 = vpop.f32.mrb[0].mxu0
    %v1814 = vpop.f32.mrb[0].mxu0
    %v1815 = vadd.f32 0.0, %v1814
    %v1816 = vpop.f32.mrb[0].mxu0
    %1817 = vmatprep.mubr.bf16.mxu0 %v615
    %1818 = vmatmul.mubr.bf16.gmra.mrb[0].mxu0 %v322
    %v1819 = vpop.f32.mrb[0].mxu0
    %v1820 = vadd.f32 0.0, %v1819
    %v1821 = vpop.f32.mrb[0].mxu0
    %v1822 = vpop.f32.mrb[0].mxu0
    %v1823 = vadd.f32 0.0, %v1822
    %v1824 = vpop.f32.mrb[0].mxu0
    %1825 = vmatprep.mubr.bf16.mxu0 %v627
    %1826 = vmatmul.mubr.bf16.gmra.mrb[0].mxu0 %v323
    %v1827 = vpop.f32.mrb[0].mxu0
    %v1828 = vadd.f32 0.0, %v1827
    %v1829 = vpop.f32.mrb[0].mxu0
    %v1830 = vpop.f32.mrb[0].mxu0
    %v1831 = vadd.f32 0.0, %v1830
    %v1832 = vpop.f32.mrb[0].mxu0
    %1833 = vmatprep.mubr.bf16.mxu0 %v639
    %1834 = vmatmul.mubr.bf16.gmra.mrb[0].mxu0 %v324
    %v1835 = vpop.f32.mrb[0].mxu0
    %v1836 = vadd.f32 0.0, %v1835
    %v1837 = vpop.f32.mrb[0].mxu0
    %v1838 = vpop.f32.mrb[0].mxu0
    %v1839 = vadd.f32 0.0, %v1838
    %v1840 = vpop.f32.mrb[0].mxu0
    %1841 = vmatprep.mubr.bf16.mxu0 %v651
    %1842 = vmatmul.mubr.bf16.gmra.mrb[0].mxu0 %v325
    %v1843 = vpop.f32.mrb[0].mxu0
    %v1844 = vadd.f32 0.0, %v1843
    %v1845 = vpop.f32.mrb[0].mxu0
    %v1846 = vpop.f32.mrb[0].mxu0
    %v1847 = vadd.f32 0.0, %v1846
    %v1848 = vpop.f32.mrb[0].mxu0
    %1849 = vmatprep.mubr.bf16.mxu0 %v663
    %1850 = vmatmul.mubr.bf16.gmra.mrb[0].mxu0 %v326
    %v1851 = vpop.f32.mrb[0].mxu0
    %v1852 = vadd.f32 0.0, %v1851
    %v1853 = vpop.f32.mrb[0].mxu0
    %v1854 = vpop.f32.mrb[0].mxu0
    %v1855 = vadd.f32 0.0, %v1854
    %v1856 = vpop.f32.mrb[0].mxu0
    %1857 = vmatprep.mubr.bf16.mxu0 %v675
    %1858 = vmatmul.mubr.bf16.gmra.mrb[0].mxu0 %v327
    %v1859 = vpop.f32.mrb[0].mxu0
    %v1860 = vadd.f32 0.0, %v1859
    %v1861 = vpop.f32.mrb[0].mxu0
    %v1862 = vpop.f32.mrb[0].mxu0
    %v1863 = vadd.f32 0.0, %v1862
    %v1864 = vpop.f32.mrb[0].mxu0
    %1865 = vmatprep.mubr.bf16.mxu0 %v687
    %1866 = vmatmul.mubr.bf16.gmra.mrb[0].mxu0 %v328
    %v1867 = vpop.f32.mrb[0].mxu0
    %v1868 = vadd.f32 0.0, %v1867
    %v1869 = vpop.f32.mrb[0].mxu0
    %v1870 = vpop.f32.mrb[0].mxu0
    %v1871 = vadd.f32 0.0, %v1870
    %v1872 = vpop.f32.mrb[0].mxu0
    %1873 = vmatprep.mubr.bf16.mxu0 %v699
    %1874 = vmatmul.mubr.bf16.gmra.mrb[0].mxu0 %v329
    %v1875 = vpop.f32.mrb[0].mxu0
    %v1876 = vadd.f32 0.0, %v1875
    %v1877 = vpop.f32.mrb[0].mxu0
    %v1878 = vpop.f32.mrb[0].mxu0
    %v1879 = vadd.f32 0.0, %v1878
    %v1880 = vpop.f32.mrb[0].mxu0
    %1881 = vmatprep.mubr.bf16.mxu0 %v711
    %1882 = vmatmul.mubr.bf16.gmra.mrb[0].mxu0 %v330
    %v1883 = vpop.f32.mrb[0].mxu0
    %v1884 = vadd.f32 0.0, %v1883
    %v1885 = vpop.f32.mrb[0].mxu0
    %v1886 = vpop.f32.mrb[0].mxu0
    %v1887 = vadd.f32 0.0, %v1886
    %v1888 = vpop.f32.mrb[0].mxu0
    %1889 = vmatprep.mubr.bf16.mxu0 %v723
    %1890 = vmatmul.mubr.bf16.gmra.mrb[0].mxu0 %v331
    %v1891 = vpop.f32.mrb[0].mxu0
    %v1892 = vadd.f32 0.0, %v1891
    %v1893 = vpop.f32.mrb[0].mxu0
    %v1894 = vpop.f32.mrb[0].mxu0
    %v1895 = vadd.f32 0.0, %v1894
    %v1896 = vpop.f32.mrb[0].mxu0
    %1897 = vmatprep.mubr.bf16.mxu0 %v735
    %1898 = vmatmul.mubr.bf16.gmra.mrb[0].mxu0 %v332
    %v1899 = vpop.f32.mrb[0].mxu0
    %v1900 = vadd.f32 0.0, %v1899
    %v1901 = vpop.f32.mrb[0].mxu0
    %v1902 = vpop.f32.mrb[0].mxu0
    %v1903 = vadd.f32 0.0, %v1902
    %v1904 = vpop.f32.mrb[0].mxu0
    %1905 = vmatprep.mubr.bf16.mxu0 %v747
    %1906 = vmatmul.mubr.bf16.gmra.mrb[0].mxu0 %v333
    %v1907 = vpop.f32.mrb[0].mxu0
    %v1908 = vadd.f32 0.0, %v1907
    %v1909 = vpop.f32.mrb[0].mxu0
    %v1910 = vpop.f32.mrb[0].mxu0
    %v1911 = vadd.f32 0.0, %v1910
    %v1912 = vpop.f32.mrb[0].mxu0
    %1913 = vmatprep.mubr.bf16.mxu0 %v759
    %1914 = vmatmul.mubr.bf16.gmra.mrb[0].mxu0 %v334
    %v1915 = vpop.f32.mrb[0].mxu0
    %v1916 = vadd.f32 0.0, %v1915
    %v1917 = vpop.f32.mrb[0].mxu0
    %v1918 = vpop.f32.mrb[0].mxu0
    %v1919 = vadd.f32 0.0, %v1918
    %v1920 = vpop.f32.mrb[0].mxu0
    %1921 = vmatprep.mubr.bf16.mxu0 %v771
    %1922 = vmatmul.mubr.bf16.gmra.mrb[0].mxu0 %v335
    %v1923 = vpop.f32.mrb[0].mxu0
    %v1924 = vadd.f32 0.0, %v1923
    %v1925 = vpop.f32.mrb[0].mxu0
    %v1926 = vpop.f32.mrb[0].mxu0
    %v1927 = vadd.f32 0.0, %v1926
    %v1928 = vpop.f32.mrb[0].mxu0
    %1929 = vmatprep.mubr.bf16.mxu0 %v783
    %1930 = vmatmul.mubr.bf16.gmra.mrb[0].mxu0 %v336
    %v1931 = vpop.f32.mrb[0].mxu0
    %v1932 = vadd.f32 0.0, %v1931
    %v1933 = vpop.f32.mrb[0].mxu0
    %v1934 = vpop.f32.mrb[0].mxu0
    %v1935 = vadd.f32 0.0, %v1934
    %v1936 = vpop.f32.mrb[0].mxu0
    %1937 = vmatprep.mubr.bf16.mxu0 %v795
    %1938 = vmatmul.mubr.bf16.gmra.mrb[0].mxu0 %v337
    %v1939 = vpop.f32.mrb[0].mxu0
    %v1940 = vadd.f32 0.0, %v1939
    %v1941 = vpop.f32.mrb[0].mxu0
    %v1942 = vpop.f32.mrb[0].mxu0
    %v1943 = vadd.f32 0.0, %v1942
    %v1944 = vpop.f32.mrb[0].mxu0
    %1945 = vmatprep.mubr.bf16.mxu0 %v807
    %1946 = vmatmul.mubr.bf16.gmra.mrb[0].mxu0 %v338
    %v1947 = vpop.f32.mrb[0].mxu0
    %v1948 = vadd.f32 0.0, %v1947
    %v1949 = vpop.f32.mrb[0].mxu0
    %v1950 = vpop.f32.mrb[0].mxu0
    %v1951 = vadd.f32 0.0, %v1950
    %v1952 = vpop.f32.mrb[0].mxu0
    %1953 = vmatprep.mubr.bf16.mxu0 %v819
    %1954 = vmatmul.mubr.bf16.gmra.mrb[0].mxu0 %v339
    %v1955 = vpop.f32.mrb[0].mxu0
    %v1956 = vadd.f32 0.0, %v1955
    %v1957 = vpop.f32.mrb[0].mxu0
    %v1958 = vpop.f32.mrb[0].mxu0
    %v1959 = vadd.f32 0.0, %v1958
    %v1960 = vpop.f32.mrb[0].mxu0
    %1961 = vmatprep.mubr.bf16.mxu0 %v831
    %1962 = vmatmul.mubr.bf16.gmra.mrb[0].mxu0 %v340
    %v1963 = vpop.f32.mrb[0].mxu0
    %v1964 = vadd.f32 0.0, %v1963
    %v1965 = vpop.f32.mrb[0].mxu0
    %v1966 = vpop.f32.mrb[0].mxu0
    %v1967 = vadd.f32 0.0, %v1966
    %v1968 = vpop.f32.mrb[0].mxu0
    %1969 = vmatprep.mubr.bf16.mxu0 %v843
    %1970 = vmatmul.mubr.bf16.gmra.mrb[0].mxu0 %v341
    %v1971 = vpop.f32.mrb[0].mxu0
    %v1972 = vadd.f32 0.0, %v1971
    %v1973 = vpop.f32.mrb[0].mxu0
    %v1974 = vpop.f32.mrb[0].mxu0
    %v1975 = vadd.f32 0.0, %v1974
    %v1976 = vpop.f32.mrb[0].mxu0
    %1977 = vmatprep.mubr.bf16.mxu0 %v855
    %1978 = vmatmul.mubr.bf16.gmra.mrb[0].mxu0 %v342
    %v1979 = vpop.f32.mrb[0].mxu0
    %v1980 = vadd.f32 0.0, %v1979
    %v1981 = vpop.f32.mrb[0].mxu0
    %v1982 = vpop.f32.mrb[0].mxu0
    %v1983 = vadd.f32 0.0, %v1982
    %v1984 = vpop.f32.mrb[0].mxu0
    %1985 = vdwg.mxu0
    %1986 = vmatprep.subr.bf16.mxu0 0
    %1987 = vmatpush1.bf16.msra.mxu0 %v1569
    %1988 = vmatprep.subr.bf16.mxu0 0
    %1989 = vmatpush1.bf16.msra.mxu0 %v1570
    %1990 = vmatprep.subr.bf16.mxu0 0
    %1991 = vmatpush1.bf16.msra.mxu0 %v1571
    %1992 = vmatprep.subr.bf16.mxu0 0
    %1993 = vmatpush1.bf16.msra.mxu0 %v1572
    %1994 = vmatprep.subr.bf16.mxu0 0
    %1995 = vmatpush1.bf16.msra.mxu0 %v1573
    %1996 = vmatprep.subr.bf16.mxu0 0
    %1997 = vmatpush1.bf16.msra.mxu0 %v1574
    %1998 = vmatprep.subr.bf16.mxu0 0
    %1999 = vmatpush1.bf16.msra.mxu0 %v1575
    %2000 = vmatprep.subr.bf16.mxu0 0
    %2001 = vmatpush1.bf16.msra.mxu0 %v1576
    %2002 = vmatprep.subr.bf16.mxu0 0
    %2003 = vmatpush1.bf16.msra.mxu0 %v1577
    %2004 = vmatprep.subr.bf16.mxu0 0
    %2005 = vmatpush1.bf16.msra.mxu0 %v1578
    %2006 = vmatprep.subr.bf16.mxu0 0
    %2007 = vmatpush1.bf16.msra.mxu0 %v1579
    %2008 = vmatprep.subr.bf16.mxu0 0
    %2009 = vmatpush1.bf16.msra.mxu0 %v1580
    %2010 = vmatprep.subr.bf16.mxu0 0
    %2011 = vmatpush1.bf16.msra.mxu0 %v1581
    %2012 = vmatprep.subr.bf16.mxu0 0
    %2013 = vmatpush1.bf16.msra.mxu0 %v1582
    %2014 = vmatprep.subr.bf16.mxu0 0
    %2015 = vmatpush1.bf16.msra.mxu0 %v1583
    %2016 = vmatprep.subr.bf16.mxu0 0
    %2017 = vmatpush1.bf16.msra.mxu0 %v1584
    %2018 = vmatprep.mubr.bf16.mxu0 %v312
    %2019 = vmatmul.mubr.bf16.gmra.mrb[0].mxu0 %v891
    %v2020 = vpop.f32.mrb[0].mxu0
    %v2021 = vadd.f32 %v1732, %v2020
    %v2022 = vpop.f32.mrb[0].mxu0
    %v2023 = vpop.f32.mrb[0].mxu0
    %v2024 = vadd.f32 %v1735, %v2023
    %v2025 = vpop.f32.mrb[0].mxu0
    %2026 = vmatprep.mubr.bf16.mxu0 %v313
    %2027 = vmatmul.mubr.bf16.gmra.mrb[0].mxu0 %v894
    %v2028 = vpop.f32.mrb[0].mxu0
    %v2029 = vadd.f32 %v1740, %v2028
    %v2030 = vpop.f32.mrb[0].mxu0
    %v2031 = vpop.f32.mrb[0].mxu0
    %v2032 = vadd.f32 %v1743, %v2031
    %v2033 = vpop.f32.mrb[0].mxu0
    %2034 = vmatprep.mubr.bf16.mxu0 %v314
    %2035 = vmatmul.mubr.bf16.gmra.mrb[0].mxu0 %v897
    %v2036 = vpop.f32.mrb[0].mxu0
    %v2037 = vadd.f32 %v1748, %v2036
    %v2038 = vpop.f32.mrb[0].mxu0
    %v2039 = vpop.f32.mrb[0].mxu0
    %v2040 = vadd.f32 %v1751, %v2039
    %v2041 = vpop.f32.mrb[0].mxu0
    %2042 = vmatprep.mubr.bf16.mxu0 %v315
    %2043 = vmatmul.mubr.bf16.gmra.mrb[0].mxu0 %v900
    %v2044 = vpop.f32.mrb[0].mxu0
    %v2045 = vadd.f32 %v1756, %v2044
    %v2046 = vpop.f32.mrb[0].mxu0
    %v2047 = vpop.f32.mrb[0].mxu0
    %v2048 = vadd.f32 %v1759, %v2047
    %v2049 = vpop.f32.mrb[0].mxu0
    %2050 = vmatprep.mubr.bf16.mxu0 %v316
    %2051 = vmatmul.mubr.bf16.gmra.mrb[0].mxu0 %v903
    %v2052 = vpop.f32.mrb[0].mxu0
    %v2053 = vadd.f32 %v1764, %v2052
    %v2054 = vpop.f32.mrb[0].mxu0
    %v2055 = vpop.f32.mrb[0].mxu0
    %v2056 = vadd.f32 %v1767, %v2055
    %v2057 = vpop.f32.mrb[0].mxu0
    %2058 = vmatprep.mubr.bf16.mxu0 %v317
    %2059 = vmatmul.mubr.bf16.gmra.mrb[0].mxu0 %v906
    %v2060 = vpop.f32.mrb[0].mxu0
    %v2061 = vadd.f32 %v1772, %v2060
    %v2062 = vpop.f32.mrb[0].mxu0
    %v2063 = vpop.f32.mrb[0].mxu0
    %v2064 = vadd.f32 %v1775, %v2063
    %v2065 = vpop.f32.mrb[0].mxu0
    %2066 = vmatprep.mubr.bf16.mxu0 %v318
    %2067 = vmatmul.mubr.bf16.gmra.mrb[0].mxu0 %v909
    %v2068 = vpop.f32.mrb[0].mxu0
    %v2069 = vadd.f32 %v1780, %v2068
    %v2070 = vpop.f32.mrb[0].mxu0
    %v2071 = vpop.f32.mrb[0].mxu0
    %v2072 = vadd.f32 %v1783, %v2071
    %v2073 = vpop.f32.mrb[0].mxu0
    %2074 = vmatprep.mubr.bf16.mxu0 %v319
    %2075 = vmatmul.mubr.bf16.gmra.mrb[0].mxu0 %v912
    %v2076 = vpop.f32.mrb[0].mxu0
    %v2077 = vadd.f32 %v1788, %v2076
    %v2078 = vpop.f32.mrb[0].mxu0
    %v2079 = vpop.f32.mrb[0].mxu0
    %v2080 = vadd.f32 %v1791, %v2079
    %v2081 = vpop.f32.mrb[0].mxu0
    %2082 = vmatprep.mubr.bf16.mxu0 %v320
    %2083 = vmatmul.mubr.bf16.gmra.mrb[0].mxu0 %v915
    %v2084 = vpop.f32.mrb[0].mxu0
    %v2085 = vadd.f32 %v1796, %v2084
    %v2086 = vpop.f32.mrb[0].mxu0
    %v2087 = vpop.f32.mrb[0].mxu0
    %v2088 = vadd.f32 %v1799, %v2087
    %v2089 = vpop.f32.mrb[0].mxu0
    %2090 = vmatprep.mubr.bf16.mxu0 %v321
    %2091 = vmatmul.mubr.bf16.gmra.mrb[0].mxu0 %v918
    %v2092 = vpop.f32.mrb[0].mxu0
    %v2093 = vadd.f32 %v1804, %v2092
    %v2094 = vpop.f32.mrb[0].mxu0
    %v2095 = vpop.f32.mrb[0].mxu0
    %v2096 = vadd.f32 %v1807, %v2095
    %v2097 = vpop.f32.mrb[0].mxu0
    %2098 = vmatprep.mubr.bf16.mxu0 %v322
    %2099 = vmatmul.mubr.bf16.gmra.mrb[0].mxu0 %v921
    %v2100 = vpop.f32.mrb[0].mxu0
    %v2101 = vadd.f32 %v1812, %v2100
    %v2102 = vpop.f32.mrb[0].mxu0
    %v2103 = vpop.f32.mrb[0].mxu0
    %v2104 = vadd.f32 %v1815, %v2103
    %v2105 = vpop.f32.mrb[0].mxu0
    %2106 = vmatprep.mubr.bf16.mxu0 %v323
    %2107 = vmatmul.mubr.bf16.gmra.mrb[0].mxu0 %v924
    %v2108 = vpop.f32.mrb[0].mxu0
    %v2109 = vadd.f32 %v1820, %v2108
    %v2110 = vpop.f32.mrb[0].mxu0
    %v2111 = vpop.f32.mrb[0].mxu0
    %v2112 = vadd.f32 %v1823, %v2111
    %v2113 = vpop.f32.mrb[0].mxu0
    %2114 = vmatprep.mubr.bf16.mxu0 %v324
    %2115 = vmatmul.mubr.bf16.gmra.mrb[0].mxu0 %v927
    %v2116 = vpop.f32.mrb[0].mxu0
    %v2117 = vadd.f32 %v1828, %v2116
    %v2118 = vpop.f32.mrb[0].mxu0
    %v2119 = vpop.f32.mrb[0].mxu0
    %v2120 = vadd.f32 %v1831, %v2119
    %v2121 = vpop.f32.mrb[0].mxu0
    %2122 = vmatprep.mubr.bf16.mxu0 %v325
    %2123 = vmatmul.mubr.bf16.gmra.mrb[0].mxu0 %v930
    %v2124 = vpop.f32.mrb[0].mxu0
    %v2125 = vadd.f32 %v1836, %v2124
    %v2126 = vpop.f32.mrb[0].mxu0
    %v2127 = vpop.f32.mrb[0].mxu0
    %v2128 = vadd.f32 %v1839, %v2127
    %v2129 = vpop.f32.mrb[0].mxu0
    %2130 = vmatprep.mubr.bf16.mxu0 %v326
    %2131 = vmatmul.mubr.bf16.gmra.mrb[0].mxu0 %v933
    %v2132 = vpop.f32.mrb[0].mxu0
    %v2133 = vadd.f32 %v1844, %v2132
    %v2134 = vpop.f32.mrb[0].mxu0
    %v2135 = vpop.f32.mrb[0].mxu0
    %v2136 = vadd.f32 %v1847, %v2135
    %v2137 = vpop.f32.mrb[0].mxu0
    %2138 = vmatprep.mubr.bf16.mxu0 %v1025
    %2139 = vmatmul.mubr.bf16.gmra.mrb[0].mxu0 %v936
    %v2140 = vpop.f32.mrb[0].mxu0
    %v2141 = vadd.f32 %v1852, %v2140
    %v2142 = vpop.f32.mrb[0].mxu0
    %v2143 = vpop.f32.mrb[0].mxu0
    %v2144 = vadd.f32 %v1855, %v2143
    %v2145 = vpop.f32.mrb[0].mxu0
    %2146 = vmatprep.mubr.bf16.mxu0 %v328
    %2147 = vmatmul.mubr.bf16.gmra.mrb[0].mxu0 %v939
    %v2148 = vpop.f32.mrb[0].mxu0
    %v2149 = vadd.f32 %v1860, %v2148
    %v2150 = vpop.f32.mrb[0].mxu0
    %v2151 = vpop.f32.mrb[0].mxu0
    %v2152 = vadd.f32 %v1863, %v2151
    %v2153 = vpop.f32.mrb[0].mxu0
    %2154 = vmatprep.mubr.bf16.mxu0 %v329
    %2155 = vmatmul.mubr.bf16.gmra.mrb[0].mxu0 %v942
    %v2156 = vpop.f32.mrb[0].mxu0
    %v2157 = vadd.f32 %v1868, %v2156
    %v2158 = vpop.f32.mrb[0].mxu0
    %v2159 = vpop.f32.mrb[0].mxu0
    %v2160 = vadd.f32 %v1871, %v2159
    %v2161 = vpop.f32.mrb[0].mxu0
    %2162 = vmatprep.mubr.bf16.mxu0 %v330
    %2163 = vmatmul.mubr.bf16.gmra.mrb[0].mxu0 %v945
    %v2164 = vpop.f32.mrb[0].mxu0
    %v2165 = vadd.f32 %v1876, %v2164
    %v2166 = vpop.f32.mrb[0].mxu0
    %v2167 = vpop.f32.mrb[0].mxu0
    %v2168 = vadd.f32 %v1879, %v2167
    %v2169 = vpop.f32.mrb[0].mxu0
    %2170 = vmatprep.mubr.bf16.mxu0 %v331
    %2171 = vmatmul.mubr.bf16.gmra.mrb[0].mxu0 %v948
    %v2172 = vpop.f32.mrb[0].mxu0
    %v2173 = vadd.f32 %v1884, %v2172
    %v2174 = vpop.f32.mrb[0].mxu0
    %v2175 = vpop.f32.mrb[0].mxu0
    %v2176 = vadd.f32 %v1887, %v2175
    %v2177 = vpop.f32.mrb[0].mxu0
    %2178 = vmatprep.mubr.bf16.mxu0 %v332
    %2179 = vmatmul.mubr.bf16.gmra.mrb[0].mxu0 %v951
    %v2180 = vpop.f32.mrb[0].mxu0
    %v2181 = vadd.f32 %v1892, %v2180
    %v2182 = vpop.f32.mrb[0].mxu0
    %v2183 = vpop.f32.mrb[0].mxu0
    %v2184 = vadd.f32 %v1895, %v2183
    %v2185 = vpop.f32.mrb[0].mxu0
    %2186 = vmatprep.mubr.bf16.mxu0 %v333
    %2187 = vmatmul.mubr.bf16.gmra.mrb[0].mxu0 %v954
    %v2188 = vpop.f32.mrb[0].mxu0
    %v2189 = vadd.f32 %v1900, %v2188
    %v2190 = vpop.f32.mrb[0].mxu0
    %v2191 = vpop.f32.mrb[0].mxu0
    %v2192 = vadd.f32 %v1903, %v2191
    %v2193 = vpop.f32.mrb[0].mxu0
    %2194 = vmatprep.mubr.bf16.mxu0 %v334
    %2195 = vmatmul.mubr.bf16.gmra.mrb[0].mxu0 %v957
    %v2196 = vpop.f32.mrb[0].mxu0
    %v2197 = vadd.f32 %v1908, %v2196
    %v2198 = vpop.f32.mrb[0].mxu0
    %v2199 = vpop.f32.mrb[0].mxu0
    %v2200 = vadd.f32 %v1911, %v2199
    %v2201 = vpop.f32.mrb[0].mxu0
    %2202 = vmatprep.mubr.bf16.mxu0 %v335
    %2203 = vmatmul.mubr.bf16.gmra.mrb[0].mxu0 %v960
    %v2204 = vpop.f32.mrb[0].mxu0
    %v2205 = vadd.f32 %v1916, %v2204
    %v2206 = vpop.f32.mrb[0].mxu0
    %v2207 = vpop.f32.mrb[0].mxu0
    %v2208 = vadd.f32 %v1919, %v2207
    %v2209 = vpop.f32.mrb[0].mxu0
    %2210 = vmatprep.mubr.bf16.mxu0 %v336
    %2211 = vmatmul.mubr.bf16.gmra.mrb[0].mxu0 %v963
    %v2212 = vpop.f32.mrb[0].mxu0
    %v2213 = vadd.f32 %v1924, %v2212
    %v2214 = vpop.f32.mrb[0].mxu0
    %v2215 = vpop.f32.mrb[0].mxu0
    %v2216 = vadd.f32 %v1927, %v2215
    %v2217 = vpop.f32.mrb[0].mxu0
    %2218 = vmatprep.mubr.bf16.mxu0 %v337
    %2219 = vmatmul.mubr.bf16.gmra.mrb[0].mxu0 %v966
    %v2220 = vpop.f32.mrb[0].mxu0
    %v2221 = vadd.f32 %v1932, %v2220
    %v2222 = vpop.f32.mrb[0].mxu0
    %v2223 = vpop.f32.mrb[0].mxu0
    %v2224 = vadd.f32 %v1935, %v2223
    %v2225 = vpop.f32.mrb[0].mxu0
    %2226 = vmatprep.mubr.bf16.mxu0 %v338
    %2227 = vmatmul.mubr.bf16.gmra.mrb[0].mxu0 %v969
    %v2228 = vpop.f32.mrb[0].mxu0
    %v2229 = vadd.f32 %v1940, %v2228
    %v2230 = vpop.f32.mrb[0].mxu0
    %v2231 = vpop.f32.mrb[0].mxu0
    %v2232 = vadd.f32 %v1943, %v2231
    %v2233 = vpop.f32.mrb[0].mxu0
    %2234 = vmatprep.mubr.bf16.mxu0 %v339
    %2235 = vmatmul.mubr.bf16.gmra.mrb[0].mxu0 %v972
    %v2236 = vpop.f32.mrb[0].mxu0
    %v2237 = vadd.f32 %v1948, %v2236
    %v2238 = vpop.f32.mrb[0].mxu0
    %v2239 = vpop.f32.mrb[0].mxu0
    %v2240 = vadd.f32 %v1951, %v2239
    %v2241 = vpop.f32.mrb[0].mxu0
    %2242 = vmatprep.mubr.bf16.mxu0 %v340
    %2243 = vmatmul.mubr.bf16.gmra.mrb[0].mxu0 %v975
    %v2244 = vpop.f32.mrb[0].mxu0
    %v2245 = vadd.f32 %v1956, %v2244
    %v2246 = vpop.f32.mrb[0].mxu0
    %v2247 = vpop.f32.mrb[0].mxu0
    %v2248 = vadd.f32 %v1959, %v2247
    %v2249 = vpop.f32.mrb[0].mxu0
    %2250 = vmatprep.mubr.bf16.mxu0 %v341
    %2251 = vmatmul.mubr.bf16.gmra.mrb[0].mxu0 %v978
    %v2252 = vpop.f32.mrb[0].mxu0
    %v2253 = vadd.f32 %v1964, %v2252
    %v2254 = vpop.f32.mrb[0].mxu0
    %v2255 = vpop.f32.mrb[0].mxu0
    %v2256 = vadd.f32 %v1967, %v2255
    %v2257 = vpop.f32.mrb[0].mxu0
    %2258 = vmatprep.mubr.bf16.mxu0 %v342
    %2259 = vmatmul.mubr.bf16.gmra.mrb[0].mxu0 %v981
    %v2260 = vpop.f32.mrb[0].mxu0
    %v2261 = vadd.f32 %v1972, %v2260
    %v2262 = vpop.f32.mrb[0].mxu0
    %v2263 = vpop.f32.mrb[0].mxu0
    %v2264 = vadd.f32 %v1975, %v2263
    %v2265 = vpop.f32.mrb[0].mxu0
    %2266 = vmatprep.mubr.bf16.mxu0 %v1026
    %2267 = vmatmul.mubr.bf16.gmra.mrb[0].mxu0 %v984
    %v2268 = vpop.f32.mrb[0].mxu0
    %v2269 = vadd.f32 %v1980, %v2268
    %v2270 = vpop.f32.mrb[0].mxu0
    %v2271 = vpop.f32.mrb[0].mxu0
    %v2272 = vadd.f32 %v1983, %v2271
    %v2273 = vpop.f32.mrb[0].mxu0
    %2274 = vdwg.mxu0
    %2275 = vmatprep.subr.bf16.mxu0 0
    %2276 = vmatpush1.bf16.msra.mxu0 %v1585
    %2277 = vmatprep.subr.bf16.mxu0 0
    %2278 = vmatpush1.bf16.msra.mxu0 %v1586
    %2279 = vmatprep.subr.bf16.mxu0 0
    %2280 = vmatpush1.bf16.msra.mxu0 %v1587
    %2281 = vmatprep.subr.bf16.mxu0 0
    %2282 = vmatpush1.bf16.msra.mxu0 %v1588
    %2283 = vmatprep.subr.bf16.mxu0 0
    %2284 = vmatpush1.bf16.msra.mxu0 %v1589
    %2285 = vmatprep.subr.bf16.mxu0 0
    %2286 = vmatpush1.bf16.msra.mxu0 %v1590
    %2287 = vmatprep.subr.bf16.mxu0 0
    %2288 = vmatpush1.bf16.msra.mxu0 %v1591
    %2289 = vmatprep.subr.bf16.mxu0 0
    %2290 = vmatpush1.bf16.msra.mxu0 %v1592
    %2291 = vmatprep.subr.bf16.mxu0 0
    %2292 = vmatpush1.bf16.msra.mxu0 %v1593
    %2293 = vmatprep.subr.bf16.mxu0 0
    %2294 = vmatpush1.bf16.msra.mxu0 %v1594
    %2295 = vmatprep.subr.bf16.mxu0 0
    %2296 = vmatpush1.bf16.msra.mxu0 %v1595
    %2297 = vmatprep.subr.bf16.mxu0 0
    %2298 = vmatpush1.bf16.msra.mxu0 %v1596
    %2299 = vmatprep.subr.bf16.mxu0 0
    %2300 = vmatpush1.bf16.msra.mxu0 %v1597
    %2301 = vmatprep.subr.bf16.mxu0 0
    %2302 = vmatpush1.bf16.msra.mxu0 %v1598
    %2303 = vmatprep.subr.bf16.mxu0 0
    %2304 = vmatpush1.bf16.msra.mxu0 %v1599
    %2305 = vmatprep.subr.bf16.mxu0 0
    %2306 = vmatpush1.bf16.msra.mxu0 %v1600
    %2307 = vmatprep.mubr.bf16.mxu0 %v894
    %2308 = vmatmul.mubr.bf16.gmra.mrb[0].mxu0 %v495
    %v2309 = vpop.f32.mrb[0].mxu0
    %v2310 = vadd.f32 %v2021, %v2309
    %v2311 = vpop.f32.mrb[0].mxu0
    %v2312 = vpop.f32.mrb[0].mxu0
    %v2313 = vadd.f32 %v2024, %v2312
    %v2314 = vpop.f32.mrb[0].mxu0
    %2315 = vmatprep.mubr.bf16.mxu0 %v897
    %2316 = vmatmul.mubr.bf16.gmra.mrb[0].mxu0 %v507
    %v2317 = vpop.f32.mrb[0].mxu0
    %v2318 = vadd.f32 %v2029, %v2317
    %v2319 = vpop.f32.mrb[0].mxu0
    %v2320 = vpop.f32.mrb[0].mxu0
    %v2321 = vadd.f32 %v2032, %v2320
    %v2322 = vpop.f32.mrb[0].mxu0
    %2323 = vmatprep.mubr.bf16.mxu0 %v900
    %2324 = vmatmul.mubr.bf16.gmra.mrb[0].mxu0 %v519
    %v2325 = vpop.f32.mrb[0].mxu0
    %v2326 = vadd.f32 %v2037, %v2325
    %v2327 = vpop.f32.mrb[0].mxu0
    %v2328 = vpop.f32.mrb[0].mxu0
    %v2329 = vadd.f32 %v2040, %v2328
    %v2330 = vpop.f32.mrb[0].mxu0
    %2331 = vmatprep.mubr.bf16.mxu0 %v903
    %2332 = vmatmul.mubr.bf16.gmra.mrb[0].mxu0 %v531
    %v2333 = vpop.f32.mrb[0].mxu0
    %v2334 = vadd.f32 %v2045, %v2333
    %v2335 = vpop.f32.mrb[0].mxu0
    %v2336 = vpop.f32.mrb[0].mxu0
    %v2337 = vadd.f32 %v2048, %v2336
    %v2338 = vpop.f32.mrb[0].mxu0
    %2339 = vmatprep.mubr.bf16.mxu0 %v906
    %2340 = vmatmul.mubr.bf16.gmra.mrb[0].mxu0 %v543
    %v2341 = vpop.f32.mrb[0].mxu0
    %v2342 = vadd.f32 %v2053, %v2341
    %v2343 = vpop.f32.mrb[0].mxu0
    %v2344 = vpop.f32.mrb[0].mxu0
    %v2345 = vadd.f32 %v2056, %v2344
    %v2346 = vpop.f32.mrb[0].mxu0
    %2347 = vmatprep.mubr.bf16.mxu0 %v909
    %2348 = vmatmul.mubr.bf16.gmra.mrb[0].mxu0 %v555
    %v2349 = vpop.f32.mrb[0].mxu0
    %v2350 = vadd.f32 %v2061, %v2349
    %v2351 = vpop.f32.mrb[0].mxu0
    %v2352 = vpop.f32.mrb[0].mxu0
    %v2353 = vadd.f32 %v2064, %v2352
    %v2354 = vpop.f32.mrb[0].mxu0
    %2355 = vmatprep.mubr.bf16.mxu0 %v912
    %2356 = vmatmul.mubr.bf16.gmra.mrb[0].mxu0 %v567
    %v2357 = vpop.f32.mrb[0].mxu0
    %v2358 = vadd.f32 %v2069, %v2357
    %v2359 = vpop.f32.mrb[0].mxu0
    %v2360 = vpop.f32.mrb[0].mxu0
    %v2361 = vadd.f32 %v2072, %v2360
    %v2362 = vpop.f32.mrb[0].mxu0
    %2363 = vmatprep.mubr.bf16.mxu0 %v915
    %2364 = vmatmul.mubr.bf16.gmra.mrb[0].mxu0 %v579
    %v2365 = vpop.f32.mrb[0].mxu0
    %v2366 = vadd.f32 %v2077, %v2365
    %v2367 = vpop.f32.mrb[0].mxu0
    %v2368 = vpop.f32.mrb[0].mxu0
    %v2369 = vadd.f32 %v2080, %v2368
    %v2370 = vpop.f32.mrb[0].mxu0
    %2371 = vmatprep.mubr.bf16.mxu0 %v918
    %2372 = vmatmul.mubr.bf16.gmra.mrb[0].mxu0 %v591
    %v2373 = vpop.f32.mrb[0].mxu0
    %v2374 = vadd.f32 %v2085, %v2373
    %v2375 = vpop.f32.mrb[0].mxu0
    %v2376 = vpop.f32.mrb[0].mxu0
    %v2377 = vadd.f32 %v2088, %v2376
    %v2378 = vpop.f32.mrb[0].mxu0
    %2379 = vmatprep.mubr.bf16.mxu0 %v921
    %2380 = vmatmul.mubr.bf16.gmra.mrb[0].mxu0 %v603
    %v2381 = vpop.f32.mrb[0].mxu0
    %v2382 = vadd.f32 %v2093, %v2381
    %v2383 = vpop.f32.mrb[0].mxu0
    %v2384 = vpop.f32.mrb[0].mxu0
    %v2385 = vadd.f32 %v2096, %v2384
    %v2386 = vpop.f32.mrb[0].mxu0
    %2387 = vmatprep.mubr.bf16.mxu0 %v924
    %2388 = vmatmul.mubr.bf16.gmra.mrb[0].mxu0 %v615
    %v2389 = vpop.f32.mrb[0].mxu0
    %v2390 = vadd.f32 %v2101, %v2389
    %v2391 = vpop.f32.mrb[0].mxu0
    %v2392 = vpop.f32.mrb[0].mxu0
    %v2393 = vadd.f32 %v2104, %v2392
    %v2394 = vpop.f32.mrb[0].mxu0
    %2395 = vmatprep.mubr.bf16.mxu0 %v927
    %2396 = vmatmul.mubr.bf16.gmra.mrb[0].mxu0 %v627
    %v2397 = vpop.f32.mrb[0].mxu0
    %v2398 = vadd.f32 %v2109, %v2397
    %v2399 = vpop.f32.mrb[0].mxu0
    %v2400 = vpop.f32.mrb[0].mxu0
    %v2401 = vadd.f32 %v2112, %v2400
    %v2402 = vpop.f32.mrb[0].mxu0
    %2403 = vmatprep.mubr.bf16.mxu0 %v930
    %2404 = vmatmul.mubr.bf16.gmra.mrb[0].mxu0 %v639
    %v2405 = vpop.f32.mrb[0].mxu0
    %v2406 = vadd.f32 %v2117, %v2405
    %v2407 = vpop.f32.mrb[0].mxu0
    %v2408 = vpop.f32.mrb[0].mxu0
    %v2409 = vadd.f32 %v2120, %v2408
    %v2410 = vpop.f32.mrb[0].mxu0
    %2411 = vmatprep.mubr.bf16.mxu0 %v933
    %2412 = vmatmul.mubr.bf16.gmra.mrb[0].mxu0 %v651
    %v2413 = vpop.f32.mrb[0].mxu0
    %v2414 = vadd.f32 %v2125, %v2413
    %v2415 = vpop.f32.mrb[0].mxu0
    %v2416 = vpop.f32.mrb[0].mxu0
    %v2417 = vadd.f32 %v2128, %v2416
    %v2418 = vpop.f32.mrb[0].mxu0
    %2419 = vmatprep.mubr.bf16.mxu0 %v936
    %2420 = vmatmul.mubr.bf16.gmra.mrb[0].mxu0 %v663
    %v2421 = vpop.f32.mrb[0].mxu0
    %v2422 = vadd.f32 %v2133, %v2421
    %v2423 = vpop.f32.mrb[0].mxu0
    %v2424 = vpop.f32.mrb[0].mxu0
    %v2425 = vadd.f32 %v2136, %v2424
    %v2426 = vpop.f32.mrb[0].mxu0
    %2427 = vmatprep.mubr.bf16.mxu0 %v1063
    %2428 = vmatmul.mubr.bf16.gmra.mrb[0].mxu0 %v1046
    %v2429 = vpop.f32.mrb[0].mxu0
    %v2430 = vadd.f32 %v2141, %v2429
    %v2431 = vpop.f32.mrb[0].mxu0
    %v2432 = vpop.f32.mrb[0].mxu0
    %v2433 = vadd.f32 %v2144, %v2432
    %v2434 = vpop.f32.mrb[0].mxu0
    %2435 = vmatprep.mubr.bf16.mxu0 %v942
    %2436 = vmatmul.mubr.bf16.gmra.mrb[0].mxu0 %v687
    %v2437 = vpop.f32.mrb[0].mxu0
    %v2438 = vadd.f32 %v2149, %v2437
    %v2439 = vpop.f32.mrb[0].mxu0
    %v2440 = vpop.f32.mrb[0].mxu0
    %v2441 = vadd.f32 %v2152, %v2440
    %v2442 = vpop.f32.mrb[0].mxu0
    %2443 = vmatprep.mubr.bf16.mxu0 %v945
    %2444 = vmatmul.mubr.bf16.gmra.mrb[0].mxu0 %v699
    %v2445 = vpop.f32.mrb[0].mxu0
    %v2446 = vadd.f32 %v2157, %v2445
    %v2447 = vpop.f32.mrb[0].mxu0
    %v2448 = vpop.f32.mrb[0].mxu0
    %v2449 = vadd.f32 %v2160, %v2448
    %v2450 = vpop.f32.mrb[0].mxu0
    %2451 = vmatprep.mubr.bf16.mxu0 %v948
    %2452 = vmatmul.mubr.bf16.gmra.mrb[0].mxu0 %v711
    %v2453 = vpop.f32.mrb[0].mxu0
    %v2454 = vadd.f32 %v2165, %v2453
    %v2455 = vpop.f32.mrb[0].mxu0
    %v2456 = vpop.f32.mrb[0].mxu0
    %v2457 = vadd.f32 %v2168, %v2456
    %v2458 = vpop.f32.mrb[0].mxu0
    %2459 = vmatprep.mubr.bf16.mxu0 %v951
    %2460 = vmatmul.mubr.bf16.gmra.mrb[0].mxu0 %v723
    %v2461 = vpop.f32.mrb[0].mxu0
    %v2462 = vadd.f32 %v2173, %v2461
    %v2463 = vpop.f32.mrb[0].mxu0
    %v2464 = vpop.f32.mrb[0].mxu0
    %v2465 = vadd.f32 %v2176, %v2464
    %v2466 = vpop.f32.mrb[0].mxu0
    %2467 = vmatprep.mubr.bf16.mxu0 %v954
    %2468 = vmatmul.mubr.bf16.gmra.mrb[0].mxu0 %v735
    %v2469 = vpop.f32.mrb[0].mxu0
    %v2470 = vadd.f32 %v2181, %v2469
    %v2471 = vpop.f32.mrb[0].mxu0
    %v2472 = vpop.f32.mrb[0].mxu0
    %v2473 = vadd.f32 %v2184, %v2472
    %v2474 = vpop.f32.mrb[0].mxu0
    %2475 = vmatprep.mubr.bf16.mxu0 %v957
    %2476 = vmatmul.mubr.bf16.gmra.mrb[0].mxu0 %v747
    %v2477 = vpop.f32.mrb[0].mxu0
    %v2478 = vadd.f32 %v2189, %v2477
    %v2479 = vpop.f32.mrb[0].mxu0
    %v2480 = vpop.f32.mrb[0].mxu0
    %v2481 = vadd.f32 %v2192, %v2480
    %v2482 = vpop.f32.mrb[0].mxu0
    %2483 = vmatprep.mubr.bf16.mxu0 %v960
    %2484 = vmatmul.mubr.bf16.gmra.mrb[0].mxu0 %v759
    %v2485 = vpop.f32.mrb[0].mxu0
    %v2486 = vadd.f32 %v2197, %v2485
    %v2487 = vpop.f32.mrb[0].mxu0
    %v2488 = vpop.f32.mrb[0].mxu0
    %v2489 = vadd.f32 %v2200, %v2488
    %v2490 = vpop.f32.mrb[0].mxu0
    %2491 = vmatprep.mubr.bf16.mxu0 %v963
    %2492 = vmatmul.mubr.bf16.gmra.mrb[0].mxu0 %v771
    %v2493 = vpop.f32.mrb[0].mxu0
    %v2494 = vadd.f32 %v2205, %v2493
    %v2495 = vpop.f32.mrb[0].mxu0
    %v2496 = vpop.f32.mrb[0].mxu0
    %v2497 = vadd.f32 %v2208, %v2496
    %v2498 = vpop.f32.mrb[0].mxu0
    %2499 = vmatprep.mubr.bf16.mxu0 %v966
    %2500 = vmatmul.mubr.bf16.gmra.mrb[0].mxu0 %v783
    %v2501 = vpop.f32.mrb[0].mxu0
    %v2502 = vadd.f32 %v2213, %v2501
    %v2503 = vpop.f32.mrb[0].mxu0
    %v2504 = vpop.f32.mrb[0].mxu0
    %v2505 = vadd.f32 %v2216, %v2504
    %v2506 = vpop.f32.mrb[0].mxu0
    %2507 = vmatprep.mubr.bf16.mxu0 %v969
    %2508 = vmatmul.mubr.bf16.gmra.mrb[0].mxu0 %v795
    %v2509 = vpop.f32.mrb[0].mxu0
    %v2510 = vadd.f32 %v2221, %v2509
    %v2511 = vpop.f32.mrb[0].mxu0
    %v2512 = vpop.f32.mrb[0].mxu0
    %v2513 = vadd.f32 %v2224, %v2512
    %v2514 = vpop.f32.mrb[0].mxu0
    %2515 = vmatprep.mubr.bf16.mxu0 %v972
    %2516 = vmatmul.mubr.bf16.gmra.mrb[0].mxu0 %v807
    %v2517 = vpop.f32.mrb[0].mxu0
    %v2518 = vadd.f32 %v2229, %v2517
    %v2519 = vpop.f32.mrb[0].mxu0
    %v2520 = vpop.f32.mrb[0].mxu0
    %v2521 = vadd.f32 %v2232, %v2520
    %v2522 = vpop.f32.mrb[0].mxu0
    %2523 = vmatprep.mubr.bf16.mxu0 %v975
    %2524 = vmatmul.mubr.bf16.gmra.mrb[0].mxu0 %v819
    %v2525 = vpop.f32.mrb[0].mxu0
    %v2526 = vadd.f32 %v2237, %v2525
    %v2527 = vpop.f32.mrb[0].mxu0
    %v2528 = vpop.f32.mrb[0].mxu0
    %v2529 = vadd.f32 %v2240, %v2528
    %v2530 = vpop.f32.mrb[0].mxu0
    %2531 = vmatprep.mubr.bf16.mxu0 %v978
    %2532 = vmatmul.mubr.bf16.gmra.mrb[0].mxu0 %v831
    %v2533 = vpop.f32.mrb[0].mxu0
    %v2534 = vadd.f32 %v2245, %v2533
    %v2535 = vpop.f32.mrb[0].mxu0
    %v2536 = vpop.f32.mrb[0].mxu0
    %v2537 = vadd.f32 %v2248, %v2536
    %v2538 = vpop.f32.mrb[0].mxu0
    %2539 = vmatprep.mubr.bf16.mxu0 %v981
    %2540 = vmatmul.mubr.bf16.gmra.mrb[0].mxu0 %v843
    %v2541 = vpop.f32.mrb[0].mxu0
    %v2542 = vadd.f32 %v2253, %v2541
    %v2543 = vpop.f32.mrb[0].mxu0
    %v2544 = vpop.f32.mrb[0].mxu0
    %v2545 = vadd.f32 %v2256, %v2544
    %v2546 = vpop.f32.mrb[0].mxu0
    %2547 = vmatprep.mubr.bf16.mxu0 %v984
    %2548 = vmatmul.mubr.bf16.gmra.mrb[0].mxu0 %v855
    %v2549 = vpop.f32.mrb[0].mxu0
    %v2550 = vadd.f32 %v2261, %v2549
    %v2551 = vpop.f32.mrb[0].mxu0
    %v2552 = vpop.f32.mrb[0].mxu0
    %v2553 = vadd.f32 %v2264, %v2552
    %v2554 = vpop.f32.mrb[0].mxu0
    %2555 = vmatprep.mubr.bf16.mxu0 %v1066
    %2556 = vmatmul.mubr.bf16.gmra.mrb[0].mxu0 %v1058
    %v2557 = vpop.f32.mrb[0].mxu0
    %v2558 = vadd.f32 %v2269, %v2557
    %v2559 = vpop.f32.mrb[0].mxu0
    %v2560 = vpop.f32.mrb[0].mxu0
    %v2561 = vadd.f32 %v2272, %v2560
    %v2562 = vpop.f32.mrb[0].mxu0
    %2563 = vdwg.mxu0
    %2564 = vmatprep.subr.bf16.mxu0 0
    %2565 = vmatpush1.bf16.msra.mxu0 %v1601
    %2566 = vmatprep.subr.bf16.mxu0 0
    %2567 = vmatpush1.bf16.msra.mxu0 %v1602
    %2568 = vmatprep.subr.bf16.mxu0 0
    %2569 = vmatpush1.bf16.msra.mxu0 %v1603
    %2570 = vmatprep.subr.bf16.mxu0 0
    %2571 = vmatpush1.bf16.msra.mxu0 %v1604
    %2572 = vmatprep.subr.bf16.mxu0 0
    %2573 = vmatpush1.bf16.msra.mxu0 %v1605
    %2574 = vmatprep.subr.bf16.mxu0 0
    %2575 = vmatpush1.bf16.msra.mxu0 %v1606
    %2576 = vmatprep.subr.bf16.mxu0 0
    %2577 = vmatpush1.bf16.msra.mxu0 %v1607
    %2578 = vmatprep.subr.bf16.mxu0 0
    %2579 = vmatpush1.bf16.msra.mxu0 %v1608
    %2580 = vmatprep.subr.bf16.mxu0 0
    %2581 = vmatpush1.bf16.msra.mxu0 %v1609
    %2582 = vmatprep.subr.bf16.mxu0 0
    %2583 = vmatpush1.bf16.msra.mxu0 %v1610
    %2584 = vmatprep.subr.bf16.mxu0 0
    %2585 = vmatpush1.bf16.msra.mxu0 %v1611
    %2586 = vmatprep.subr.bf16.mxu0 0
    %2587 = vmatpush1.bf16.msra.mxu0 %v1612
    %2588 = vmatprep.subr.bf16.mxu0 0
    %2589 = vmatpush1.bf16.msra.mxu0 %v1613
    %2590 = vmatprep.subr.bf16.mxu0 0
    %2591 = vmatpush1.bf16.msra.mxu0 %v1614
    %2592 = vmatprep.subr.bf16.mxu0 0
    %2593 = vmatpush1.bf16.msra.mxu0 %v1615
    %2594 = vmatprep.subr.bf16.mxu0 0
    %2595 = vmatpush1.bf16.msra.mxu0 %v1616
    %2596 = vmatprep.mubr.bf16.mxu0 %v507
    %2597 = vmatmul.mubr.bf16.gmra.mrb[0].mxu0 %v313
    %v2598 = vpop.f32.mrb[0].mxu0
    %v2599 = vadd.f32 %v2310, %v2598
    %v2600 = vpop.f32.mrb[0].mxu0
    %v2601 = vpop.f32.mrb[0].mxu0
    %v2602 = vadd.f32 %v2313, %v2601
    %v2603 = vpop.f32.mrb[0].mxu0
    %2604 = vmatprep.mubr.bf16.mxu0 %v519
    %2605 = vmatmul.mubr.bf16.gmra.mrb[0].mxu0 %v314
    %v2606 = vpop.f32.mrb[0].mxu0
    %v2607 = vadd.f32 %v2318, %v2606
    %v2608 = vpop.f32.mrb[0].mxu0
    %v2609 = vpop.f32.mrb[0].mxu0
    %v2610 = vadd.f32 %v2321, %v2609
    %v2611 = vpop.f32.mrb[0].mxu0
    %2612 = vmatprep.mubr.bf16.mxu0 %v531
    %2613 = vmatmul.mubr.bf16.gmra.mrb[0].mxu0 %v315
    %v2614 = vpop.f32.mrb[0].mxu0
    %v2615 = vadd.f32 %v2326, %v2614
    %v2616 = vpop.f32.mrb[0].mxu0
    %v2617 = vpop.f32.mrb[0].mxu0
    %v2618 = vadd.f32 %v2329, %v2617
    %v2619 = vpop.f32.mrb[0].mxu0
    %2620 = vmatprep.mubr.bf16.mxu0 %v543
    %2621 = vmatmul.mubr.bf16.gmra.mrb[0].mxu0 %v316
    %v2622 = vpop.f32.mrb[0].mxu0
    %v2623 = vadd.f32 %v2334, %v2622
    %v2624 = vpop.f32.mrb[0].mxu0
    %v2625 = vpop.f32.mrb[0].mxu0
    %v2626 = vadd.f32 %v2337, %v2625
    %v2627 = vpop.f32.mrb[0].mxu0
    %2628 = vmatprep.mubr.bf16.mxu0 %v555
    %2629 = vmatmul.mubr.bf16.gmra.mrb[0].mxu0 %v317
    %v2630 = vpop.f32.mrb[0].mxu0
    %v2631 = vadd.f32 %v2342, %v2630
    %v2632 = vpop.f32.mrb[0].mxu0
    %v2633 = vpop.f32.mrb[0].mxu0
    %v2634 = vadd.f32 %v2345, %v2633
    %v2635 = vpop.f32.mrb[0].mxu0
    %2636 = vmatprep.mubr.bf16.mxu0 %v567
    %2637 = vmatmul.mubr.bf16.gmra.mrb[0].mxu0 %v318
    %v2638 = vpop.f32.mrb[0].mxu0
    %v2639 = vadd.f32 %v2350, %v2638
    %v2640 = vpop.f32.mrb[0].mxu0
    %v2641 = vpop.f32.mrb[0].mxu0
    %v2642 = vadd.f32 %v2353, %v2641
    %v2643 = vpop.f32.mrb[0].mxu0
    %2644 = vmatprep.mubr.bf16.mxu0 %v579
    %2645 = vmatmul.mubr.bf16.gmra.mrb[0].mxu0 %v319
    %v2646 = vpop.f32.mrb[0].mxu0
    %v2647 = vadd.f32 %v2358, %v2646
    %v2648 = vpop.f32.mrb[0].mxu0
    %v2649 = vpop.f32.mrb[0].mxu0
    %v2650 = vadd.f32 %v2361, %v2649
    %v2651 = vpop.f32.mrb[0].mxu0
    %2652 = vmatprep.mubr.bf16.mxu0 %v591
    %2653 = vmatmul.mubr.bf16.gmra.mrb[0].mxu0 %v320
    %v2654 = vpop.f32.mrb[0].mxu0
    %v2655 = vadd.f32 %v2366, %v2654
    %v2656 = vpop.f32.mrb[0].mxu0
    %v2657 = vpop.f32.mrb[0].mxu0
    %v2658 = vadd.f32 %v2369, %v2657
    %v2659 = vpop.f32.mrb[0].mxu0
    %2660 = vmatprep.mubr.bf16.mxu0 %v603
    %2661 = vmatmul.mubr.bf16.gmra.mrb[0].mxu0 %v321
    %v2662 = vpop.f32.mrb[0].mxu0
    %v2663 = vadd.f32 %v2374, %v2662
    %v2664 = vpop.f32.mrb[0].mxu0
    %v2665 = vpop.f32.mrb[0].mxu0
    %v2666 = vadd.f32 %v2377, %v2665
    %v2667 = vpop.f32.mrb[0].mxu0
    %2668 = vmatprep.mubr.bf16.mxu0 %v615
    %2669 = vmatmul.mubr.bf16.gmra.mrb[0].mxu0 %v322
    %v2670 = vpop.f32.mrb[0].mxu0
    %v2671 = vadd.f32 %v2382, %v2670
    %v2672 = vpop.f32.mrb[0].mxu0
    %v2673 = vpop.f32.mrb[0].mxu0
    %v2674 = vadd.f32 %v2385, %v2673
    %v2675 = vpop.f32.mrb[0].mxu0
    %2676 = vmatprep.mubr.bf16.mxu0 %v627
    %2677 = vmatmul.mubr.bf16.gmra.mrb[0].mxu0 %v323
    %v2678 = vpop.f32.mrb[0].mxu0
    %v2679 = vadd.f32 %v2390, %v2678
    %v2680 = vpop.f32.mrb[0].mxu0
    %v2681 = vpop.f32.mrb[0].mxu0
    %v2682 = vadd.f32 %v2393, %v2681
    %v2683 = vpop.f32.mrb[0].mxu0
    %2684 = vmatprep.mubr.bf16.mxu0 %v639
    %2685 = vmatmul.mubr.bf16.gmra.mrb[0].mxu0 %v324
    %v2686 = vpop.f32.mrb[0].mxu0
    %v2687 = vadd.f32 %v2398, %v2686
    %v2688 = vpop.f32.mrb[0].mxu0
    %v2689 = vpop.f32.mrb[0].mxu0
    %v2690 = vadd.f32 %v2401, %v2689
    %v2691 = vpop.f32.mrb[0].mxu0
    %2692 = vmatprep.mubr.bf16.mxu0 %v651
    %2693 = vmatmul.mubr.bf16.gmra.mrb[0].mxu0 %v325
    %v2694 = vpop.f32.mrb[0].mxu0
    %v2695 = vadd.f32 %v2406, %v2694
    %v2696 = vpop.f32.mrb[0].mxu0
    %v2697 = vpop.f32.mrb[0].mxu0
    %v2698 = vadd.f32 %v2409, %v2697
    %v2699 = vpop.f32.mrb[0].mxu0
    %2700 = vmatprep.mubr.bf16.mxu0 %v663
    %2701 = vmatmul.mubr.bf16.gmra.mrb[0].mxu0 %v326
    %v2702 = vpop.f32.mrb[0].mxu0
    %v2703 = vadd.f32 %v2414, %v2702
    %v2704 = vpop.f32.mrb[0].mxu0
    %v2705 = vpop.f32.mrb[0].mxu0
    %v2706 = vadd.f32 %v2417, %v2705
    %v2707 = vpop.f32.mrb[0].mxu0
    %2708 = vmatprep.mubr.bf16.mxu0 %v1046
    %2709 = vmatmul.mubr.bf16.gmra.mrb[0].mxu0 %v1025
    %v2710 = vpop.f32.mrb[0].mxu0
    %v2711 = vadd.f32 %v2422, %v2710
    %v2712 = vpop.f32.mrb[0].mxu0
    %v2713 = vpop.f32.mrb[0].mxu0
    %v2714 = vadd.f32 %v2425, %v2713
    %v2715 = vpop.f32.mrb[0].mxu0
    %2716 = vmatprep.mubr.bf16.mxu0 %v1098
    %2717 = vmatmul.mubr.bf16.gmra.mrb[0].mxu0 %v1077
    %v2718 = vpop.f32.mrb[0].mxu0
    %v2719 = vadd.f32 %v2430, %v2718
    %v2720 = vpop.f32.mrb[0].mxu0
    %v2721 = vpop.f32.mrb[0].mxu0
    %v2722 = vadd.f32 %v2433, %v2721
    %v2723 = vpop.f32.mrb[0].mxu0
    %2724 = vmatprep.mubr.bf16.mxu0 %v699
    %2725 = vmatmul.mubr.bf16.gmra.mrb[0].mxu0 %v329
    %v2726 = vpop.f32.mrb[0].mxu0
    %v2727 = vadd.f32 %v2438, %v2726
    %v2728 = vpop.f32.mrb[0].mxu0
    %v2729 = vpop.f32.mrb[0].mxu0
    %v2730 = vadd.f32 %v2441, %v2729
    %v2731 = vpop.f32.mrb[0].mxu0
    %2732 = vmatprep.mubr.bf16.mxu0 %v711
    %2733 = vmatmul.mubr.bf16.gmra.mrb[0].mxu0 %v330
    %v2734 = vpop.f32.mrb[0].mxu0
    %v2735 = vadd.f32 %v2446, %v2734
    %v2736 = vpop.f32.mrb[0].mxu0
    %v2737 = vpop.f32.mrb[0].mxu0
    %v2738 = vadd.f32 %v2449, %v2737
    %v2739 = vpop.f32.mrb[0].mxu0
    %2740 = vmatprep.mubr.bf16.mxu0 %v723
    %2741 = vmatmul.mubr.bf16.gmra.mrb[0].mxu0 %v331
    %v2742 = vpop.f32.mrb[0].mxu0
    %v2743 = vadd.f32 %v2454, %v2742
    %v2744 = vpop.f32.mrb[0].mxu0
    %v2745 = vpop.f32.mrb[0].mxu0
    %v2746 = vadd.f32 %v2457, %v2745
    %v2747 = vpop.f32.mrb[0].mxu0
    %2748 = vmatprep.mubr.bf16.mxu0 %v735
    %2749 = vmatmul.mubr.bf16.gmra.mrb[0].mxu0 %v332
    %v2750 = vpop.f32.mrb[0].mxu0
    %v2751 = vadd.f32 %v2462, %v2750
    %v2752 = vpop.f32.mrb[0].mxu0
    %v2753 = vpop.f32.mrb[0].mxu0
    %v2754 = vadd.f32 %v2465, %v2753
    %v2755 = vpop.f32.mrb[0].mxu0
    %2756 = vmatprep.mubr.bf16.mxu0 %v747
    %2757 = vmatmul.mubr.bf16.gmra.mrb[0].mxu0 %v333
    %v2758 = vpop.f32.mrb[0].mxu0
    %v2759 = vadd.f32 %v2470, %v2758
    %v2760 = vpop.f32.mrb[0].mxu0
    %v2761 = vpop.f32.mrb[0].mxu0
    %v2762 = vadd.f32 %v2473, %v2761
    %v2763 = vpop.f32.mrb[0].mxu0
    %2764 = vmatprep.mubr.bf16.mxu0 %v759
    %2765 = vmatmul.mubr.bf16.gmra.mrb[0].mxu0 %v334
    %v2766 = vpop.f32.mrb[0].mxu0
    %v2767 = vadd.f32 %v2478, %v2766
    %v2768 = vpop.f32.mrb[0].mxu0
    %v2769 = vpop.f32.mrb[0].mxu0
    %v2770 = vadd.f32 %v2481, %v2769
    %v2771 = vpop.f32.mrb[0].mxu0
    %2772 = vmatprep.mubr.bf16.mxu0 %v771
    %2773 = vmatmul.mubr.bf16.gmra.mrb[0].mxu0 %v335
    %v2774 = vpop.f32.mrb[0].mxu0
    %v2775 = vadd.f32 %v2486, %v2774
    %v2776 = vpop.f32.mrb[0].mxu0
    %v2777 = vpop.f32.mrb[0].mxu0
    %v2778 = vadd.f32 %v2489, %v2777
    %v2779 = vpop.f32.mrb[0].mxu0
    %2780 = vmatprep.mubr.bf16.mxu0 %v783
    %2781 = vmatmul.mubr.bf16.gmra.mrb[0].mxu0 %v336
    %v2782 = vpop.f32.mrb[0].mxu0
    %v2783 = vadd.f32 %v2494, %v2782
    %v2784 = vpop.f32.mrb[0].mxu0
    %v2785 = vpop.f32.mrb[0].mxu0
    %v2786 = vadd.f32 %v2497, %v2785
    %v2787 = vpop.f32.mrb[0].mxu0
    %2788 = vmatprep.mubr.bf16.mxu0 %v795
    %2789 = vmatmul.mubr.bf16.gmra.mrb[0].mxu0 %v337
    %v2790 = vpop.f32.mrb[0].mxu0
    %v2791 = vadd.f32 %v2502, %v2790
    %v2792 = vpop.f32.mrb[0].mxu0
    %v2793 = vpop.f32.mrb[0].mxu0
    %v2794 = vadd.f32 %v2505, %v2793
    %v2795 = vpop.f32.mrb[0].mxu0
    %2796 = vmatprep.mubr.bf16.mxu0 %v807
    %2797 = vmatmul.mubr.bf16.gmra.mrb[0].mxu0 %v338
    %v2798 = vpop.f32.mrb[0].mxu0
    %v2799 = vadd.f32 %v2510, %v2798
    %v2800 = vpop.f32.mrb[0].mxu0
    %v2801 = vpop.f32.mrb[0].mxu0
    %v2802 = vadd.f32 %v2513, %v2801
    %v2803 = vpop.f32.mrb[0].mxu0
    %2804 = vmatprep.mubr.bf16.mxu0 %v819
    %2805 = vmatmul.mubr.bf16.gmra.mrb[0].mxu0 %v339
    %v2806 = vpop.f32.mrb[0].mxu0
    %v2807 = vadd.f32 %v2518, %v2806
    %v2808 = vpop.f32.mrb[0].mxu0
    %v2809 = vpop.f32.mrb[0].mxu0
    %v2810 = vadd.f32 %v2521, %v2809
    %v2811 = vpop.f32.mrb[0].mxu0
    %2812 = vmatprep.mubr.bf16.mxu0 %v831
    %2813 = vmatmul.mubr.bf16.gmra.mrb[0].mxu0 %v340
    %v2814 = vpop.f32.mrb[0].mxu0
    %v2815 = vadd.f32 %v2526, %v2814
    %v2816 = vpop.f32.mrb[0].mxu0
    %v2817 = vpop.f32.mrb[0].mxu0
    %v2818 = vadd.f32 %v2529, %v2817
    %v2819 = vpop.f32.mrb[0].mxu0
    %2820 = vmatprep.mubr.bf16.mxu0 %v843
    %2821 = vmatmul.mubr.bf16.gmra.mrb[0].mxu0 %v341
    %v2822 = vpop.f32.mrb[0].mxu0
    %v2823 = vadd.f32 %v2534, %v2822
    %v2824 = vpop.f32.mrb[0].mxu0
    %v2825 = vpop.f32.mrb[0].mxu0
    %v2826 = vadd.f32 %v2537, %v2825
    %v2827 = vpop.f32.mrb[0].mxu0
    %2828 = vmatprep.mubr.bf16.mxu0 %v855
    %2829 = vmatmul.mubr.bf16.gmra.mrb[0].mxu0 %v342
    %v2830 = vpop.f32.mrb[0].mxu0
    %v2831 = vadd.f32 %v2542, %v2830
    %v2832 = vpop.f32.mrb[0].mxu0
    %v2833 = vpop.f32.mrb[0].mxu0
    %v2834 = vadd.f32 %v2545, %v2833
    %v2835 = vpop.f32.mrb[0].mxu0
    %2836 = vmatprep.mubr.bf16.mxu0 %v1058
    %2837 = vmatmul.mubr.bf16.gmra.mrb[0].mxu0 %v1026
    %v2838 = vpop.f32.mrb[0].mxu0
    %v2839 = vadd.f32 %v2550, %v2838
    %v2840 = vpop.f32.mrb[0].mxu0
    %v2841 = vpop.f32.mrb[0].mxu0
    %v2842 = vadd.f32 %v2553, %v2841
    %v2843 = vpop.f32.mrb[0].mxu0
    %2844 = vmatprep.mubr.bf16.mxu0 %v1110
    %2845 = vmatmul.mubr.bf16.gmra.mrb[0].mxu0 %v1078
    %v2846 = vpop.f32.mrb[0].mxu0
    %v2847 = vadd.f32 %v2558, %v2846
    %v2848 = vpop.f32.mrb[0].mxu0
    %v2849 = vpop.f32.mrb[0].mxu0
    %v2850 = vadd.f32 %v2561, %v2849
    %v2851 = vpop.f32.mrb[0].mxu0
    %2852 = vdwg.mxu0
    %2853 = vmatprep.subr.bf16.mxu0 0
    %2854 = vmatpush1.bf16.msra.mxu0 %v1617
    %2855 = vmatprep.subr.bf16.mxu0 0
    %2856 = vmatpush1.bf16.msra.mxu0 %v1618
    %2857 = vmatprep.subr.bf16.mxu0 0
    %2858 = vmatpush1.bf16.msra.mxu0 %v1619
    %2859 = vmatprep.subr.bf16.mxu0 0
    %2860 = vmatpush1.bf16.msra.mxu0 %v1620
    %2861 = vmatprep.subr.bf16.mxu0 0
    %2862 = vmatpush1.bf16.msra.mxu0 %v1621
    %2863 = vmatprep.subr.bf16.mxu0 0
    %2864 = vmatpush1.bf16.msra.mxu0 %v1622
    %2865 = vmatprep.subr.bf16.mxu0 0
    %2866 = vmatpush1.bf16.msra.mxu0 %v1623
    %2867 = vmatprep.subr.bf16.mxu0 0
    %2868 = vmatpush1.bf16.msra.mxu0 %v1624
    %2869 = vmatprep.subr.bf16.mxu0 0
    %2870 = vmatpush1.bf16.msra.mxu0 0
    %2871 = vmatprep.subr.bf16.mxu0 0
    %2872 = vmatpush1.bf16.msra.mxu0 0
    %2873 = vmatprep.subr.bf16.mxu0 0
    %2874 = vmatpush1.bf16.msra.mxu0 0
    %2875 = vmatprep.subr.bf16.mxu0 0
    %2876 = vmatpush1.bf16.msra.mxu0 0
    %2877 = vmatprep.subr.bf16.mxu0 0
    %2878 = vmatpush1.bf16.msra.mxu0 0
    %2879 = vmatprep.subr.bf16.mxu0 0
    %2880 = vmatpush1.bf16.msra.mxu0 0
    %2881 = vmatprep.subr.bf16.mxu0 0
    %2882 = vmatpush1.bf16.msra.mxu0 0
    %2883 = vmatprep.subr.bf16.mxu0 0
    %2884 = vmatpush1.bf16.msra.mxu0 0
    %2885 = vmatprep.mubr.bf16.mxu0 0
    %2886 = vmatmul.mubr.bf16.gmra.mrb[0].mxu0 %v897
    %v2887 = vpop.f32.mrb[0].mxu0
    %v2888 = vadd.f32 %v2599, %v2887
    %v2889 = vpop.f32.mrb[0].mxu0
    %v2890 = vpop.f32.mrb[0].mxu0
    %v2891 = vadd.f32 %v2602, %v2890
    %v2892 = vpop.f32.mrb[0].mxu0
    %2893 = vmatprep.mubr.bf16.mxu0 0
    %2894 = vmatmul.mubr.bf16.gmra.mrb[0].mxu0 %v900
    %v2895 = vpop.f32.mrb[0].mxu0
    %v2896 = vadd.f32 %v2607, %v2895
    %v2897 = vpop.f32.mrb[0].mxu0
    %v2898 = vpop.f32.mrb[0].mxu0
    %v2899 = vadd.f32 %v2610, %v2898
    %v2900 = vpop.f32.mrb[0].mxu0
    %2901 = vmatprep.mubr.bf16.mxu0 0
    %2902 = vmatmul.mubr.bf16.gmra.mrb[0].mxu0 %v903
    %v2903 = vpop.f32.mrb[0].mxu0
    %v2904 = vadd.f32 %v2615, %v2903
    %v2905 = vpop.f32.mrb[0].mxu0
    %v2906 = vpop.f32.mrb[0].mxu0
    %v2907 = vadd.f32 %v2618, %v2906
    %v2908 = vpop.f32.mrb[0].mxu0
    %2909 = vmatprep.mubr.bf16.mxu0 0
    %2910 = vmatmul.mubr.bf16.gmra.mrb[0].mxu0 %v906
    %v2911 = vpop.f32.mrb[0].mxu0
    %v2912 = vadd.f32 %v2623, %v2911
    %v2913 = vpop.f32.mrb[0].mxu0
    %v2914 = vpop.f32.mrb[0].mxu0
    %v2915 = vadd.f32 %v2626, %v2914
    %v2916 = vpop.f32.mrb[0].mxu0
    %2917 = vmatprep.mubr.bf16.mxu0 0
    %2918 = vmatmul.mubr.bf16.gmra.mrb[0].mxu0 %v909
    %v2919 = vpop.f32.mrb[0].mxu0
    %v2920 = vadd.f32 %v2631, %v2919
    %v2921 = vpop.f32.mrb[0].mxu0
    %v2922 = vpop.f32.mrb[0].mxu0
    %v2923 = vadd.f32 %v2634, %v2922
    %v2924 = vpop.f32.mrb[0].mxu0
    %2925 = vmatprep.mubr.bf16.mxu0 0
    %2926 = vmatmul.mubr.bf16.gmra.mrb[0].mxu0 %v912
    %v2927 = vpop.f32.mrb[0].mxu0
    %v2928 = vadd.f32 %v2639, %v2927
    %v2929 = vpop.f32.mrb[0].mxu0
    %v2930 = vpop.f32.mrb[0].mxu0
    %v2931 = vadd.f32 %v2642, %v2930
    %v2932 = vpop.f32.mrb[0].mxu0
    %2933 = vmatprep.mubr.bf16.mxu0 0
    %2934 = vmatmul.mubr.bf16.gmra.mrb[0].mxu0 %v915
    %v2935 = vpop.f32.mrb[0].mxu0
    %v2936 = vadd.f32 %v2647, %v2935
    %v2937 = vpop.f32.mrb[0].mxu0
    %v2938 = vpop.f32.mrb[0].mxu0
    %v2939 = vadd.f32 %v2650, %v2938
    %v2940 = vpop.f32.mrb[0].mxu0
    %2941 = vmatprep.mubr.bf16.mxu0 0
    %2942 = vmatmul.mubr.bf16.gmra.mrb[0].mxu0 %v918
    %v2943 = vpop.f32.mrb[0].mxu0
    %v2944 = vadd.f32 %v2655, %v2943
    %v2945 = vpop.f32.mrb[0].mxu0
    %v2946 = vpop.f32.mrb[0].mxu0
    %v2947 = vadd.f32 %v2658, %v2946
    %v2948 = vpop.f32.mrb[0].mxu0
    %2949 = vmatprep.mubr.bf16.mxu0 0
    %2950 = vmatmul.mubr.bf16.gmra.mrb[0].mxu0 %v921
    %v2951 = vpop.f32.mrb[0].mxu0
    %v2952 = vadd.f32 %v2663, %v2951
    %v2953 = vpop.f32.mrb[0].mxu0
    %v2954 = vpop.f32.mrb[0].mxu0
    %v2955 = vadd.f32 %v2666, %v2954
    %v2956 = vpop.f32.mrb[0].mxu0
    %2957 = vmatprep.mubr.bf16.mxu0 0
    %2958 = vmatmul.mubr.bf16.gmra.mrb[0].mxu0 %v924
    %v2959 = vpop.f32.mrb[0].mxu0
    %v2960 = vadd.f32 %v2671, %v2959
    %v2961 = vpop.f32.mrb[0].mxu0
    %v2962 = vpop.f32.mrb[0].mxu0
    %v2963 = vadd.f32 %v2674, %v2962
    %v2964 = vpop.f32.mrb[0].mxu0
    %2965 = vmatprep.mubr.bf16.mxu0 0
    %2966 = vmatmul.mubr.bf16.gmra.mrb[0].mxu0 %v927
    %v2967 = vpop.f32.mrb[0].mxu0
    %v2968 = vadd.f32 %v2679, %v2967
    %v2969 = vpop.f32.mrb[0].mxu0
    %v2970 = vpop.f32.mrb[0].mxu0
    %v2971 = vadd.f32 %v2682, %v2970
    %v2972 = vpop.f32.mrb[0].mxu0
    %2973 = vmatprep.mubr.bf16.mxu0 0
    %2974 = vmatmul.mubr.bf16.gmra.mrb[0].mxu0 %v930
    %v2975 = vpop.f32.mrb[0].mxu0
    %v2976 = vadd.f32 %v2687, %v2975
    %v2977 = vpop.f32.mrb[0].mxu0
    %v2978 = vpop.f32.mrb[0].mxu0
    %v2979 = vadd.f32 %v2690, %v2978
    %v2980 = vpop.f32.mrb[0].mxu0
    %2981 = vmatprep.mubr.bf16.mxu0 0
    %2982 = vmatmul.mubr.bf16.gmra.mrb[0].mxu0 %v933
    %v2983 = vpop.f32.mrb[0].mxu0
    %v2984 = vadd.f32 %v2695, %v2983
    %v2985 = vpop.f32.mrb[0].mxu0
    %v2986 = vpop.f32.mrb[0].mxu0
    %v2987 = vadd.f32 %v2698, %v2986
    %v2988 = vpop.f32.mrb[0].mxu0
    %2989 = vmatprep.mubr.bf16.mxu0 0
    %2990 = vmatmul.mubr.bf16.gmra.mrb[0].mxu0 %v936
    %v2991 = vpop.f32.mrb[0].mxu0
    %v2992 = vadd.f32 %v2703, %v2991
    %v2993 = vpop.f32.mrb[0].mxu0
    %v2994 = vpop.f32.mrb[0].mxu0
    %v2995 = vadd.f32 %v2706, %v2994
    %v2996 = vpop.f32.mrb[0].mxu0
    %2997 = vmatprep.mubr.bf16.mxu0 0
    %2998 = vmatmul.mubr.bf16.gmra.mrb[0].mxu0 %v1063
    %v2999 = vpop.f32.mrb[0].mxu0
    %v3000 = vadd.f32 %v2711, %v2999
    %v3001 = vpop.f32.mrb[0].mxu0
    %v3002 = vpop.f32.mrb[0].mxu0
    %v3003 = vadd.f32 %v2714, %v3002
    %v3004 = vpop.f32.mrb[0].mxu0
    %3005 = vmatprep.mubr.bf16.mxu0 0
    %3006 = vmatmul.mubr.bf16.gmra.mrb[0].mxu0 %v1115
    %v3007 = vpop.f32.mrb[0].mxu0
    %v3008 = vadd.f32 %v2719, %v3007
    %v3009 = vpop.f32.mrb[0].mxu0
    %v3010 = vpop.f32.mrb[0].mxu0
    %v3011 = vadd.f32 %v2722, %v3010
    %v3012 = vpop.f32.mrb[0].mxu0
    %3013 = vmatprep.mubr.bf16.mxu0 0
    %3014 = vmatmul.mubr.bf16.gmra.mrb[0].mxu0 %v945
    %v3015 = vpop.f32.mrb[0].mxu0
    %v3016 = vadd.f32 %v2727, %v3015
    %v3017 = vpop.f32.mrb[0].mxu0
    %v3018 = vpop.f32.mrb[0].mxu0
    %v3019 = vadd.f32 %v2730, %v3018
    %v3020 = vpop.f32.mrb[0].mxu0
    %3021 = vmatprep.mubr.bf16.mxu0 0
    %3022 = vmatmul.mubr.bf16.gmra.mrb[0].mxu0 %v948
    %v3023 = vpop.f32.mrb[0].mxu0
    %v3024 = vadd.f32 %v2735, %v3023
    %v3025 = vpop.f32.mrb[0].mxu0
    %v3026 = vpop.f32.mrb[0].mxu0
    %v3027 = vadd.f32 %v2738, %v3026
    %v3028 = vpop.f32.mrb[0].mxu0
    %3029 = vmatprep.mubr.bf16.mxu0 0
    %3030 = vmatmul.mubr.bf16.gmra.mrb[0].mxu0 %v951
    %v3031 = vpop.f32.mrb[0].mxu0
    %v3032 = vadd.f32 %v2743, %v3031
    %v3033 = vpop.f32.mrb[0].mxu0
    %v3034 = vpop.f32.mrb[0].mxu0
    %v3035 = vadd.f32 %v2746, %v3034
    %v3036 = vpop.f32.mrb[0].mxu0
    %3037 = vmatprep.mubr.bf16.mxu0 0
    %3038 = vmatmul.mubr.bf16.gmra.mrb[0].mxu0 %v954
    %v3039 = vpop.f32.mrb[0].mxu0
    %v3040 = vadd.f32 %v2751, %v3039
    %v3041 = vpop.f32.mrb[0].mxu0
    %v3042 = vpop.f32.mrb[0].mxu0
    %v3043 = vadd.f32 %v2754, %v3042
    %v3044 = vpop.f32.mrb[0].mxu0
    %3045 = vmatprep.mubr.bf16.mxu0 0
    %3046 = vmatmul.mubr.bf16.gmra.mrb[0].mxu0 %v957
    %v3047 = vpop.f32.mrb[0].mxu0
    %v3048 = vadd.f32 %v2759, %v3047
    %v3049 = vpop.f32.mrb[0].mxu0
    %v3050 = vpop.f32.mrb[0].mxu0
    %v3051 = vadd.f32 %v2762, %v3050
    %v3052 = vpop.f32.mrb[0].mxu0
    %3053 = vmatprep.mubr.bf16.mxu0 0
    %3054 = vmatmul.mubr.bf16.gmra.mrb[0].mxu0 %v960
    %v3055 = vpop.f32.mrb[0].mxu0
    %v3056 = vadd.f32 %v2767, %v3055
    %v3057 = vpop.f32.mrb[0].mxu0
    %v3058 = vpop.f32.mrb[0].mxu0
    %v3059 = vadd.f32 %v2770, %v3058
    %v3060 = vpop.f32.mrb[0].mxu0
    %3061 = vmatprep.mubr.bf16.mxu0 0
    %3062 = vmatmul.mubr.bf16.gmra.mrb[0].mxu0 %v963
    %v3063 = vpop.f32.mrb[0].mxu0
    %v3064 = vadd.f32 %v2775, %v3063
    %v3065 = vpop.f32.mrb[0].mxu0
    %v3066 = vpop.f32.mrb[0].mxu0
    %v3067 = vadd.f32 %v2778, %v3066
    %v3068 = vpop.f32.mrb[0].mxu0
    %3069 = vmatprep.mubr.bf16.mxu0 0
    %3070 = vmatmul.mubr.bf16.gmra.mrb[0].mxu0 %v966
    %v3071 = vpop.f32.mrb[0].mxu0
    %v3072 = vadd.f32 %v2783, %v3071
    %v3073 = vpop.f32.mrb[0].mxu0
    %v3074 = vpop.f32.mrb[0].mxu0
    %v3075 = vadd.f32 %v2786, %v3074
    %v3076 = vpop.f32.mrb[0].mxu0
    %3077 = vmatprep.mubr.bf16.mxu0 0
    %3078 = vmatmul.mubr.bf16.gmra.mrb[0].mxu0 %v969
    %v3079 = vpop.f32.mrb[0].mxu0
    %v3080 = vadd.f32 %v2791, %v3079
    %v3081 = vpop.f32.mrb[0].mxu0
    %v3082 = vpop.f32.mrb[0].mxu0
    %v3083 = vadd.f32 %v2794, %v3082
    %v3084 = vpop.f32.mrb[0].mxu0
    %3085 = vmatprep.mubr.bf16.mxu0 0
    %3086 = vmatmul.mubr.bf16.gmra.mrb[0].mxu0 %v972
    %v3087 = vpop.f32.mrb[0].mxu0
    %v3088 = vadd.f32 %v2799, %v3087
    %v3089 = vpop.f32.mrb[0].mxu0
    %v3090 = vpop.f32.mrb[0].mxu0
    %v3091 = vadd.f32 %v2802, %v3090
    %v3092 = vpop.f32.mrb[0].mxu0
    %3093 = vmatprep.mubr.bf16.mxu0 0
    %3094 = vmatmul.mubr.bf16.gmra.mrb[0].mxu0 %v975
    %v3095 = vpop.f32.mrb[0].mxu0
    %v3096 = vadd.f32 %v2807, %v3095
    %v3097 = vpop.f32.mrb[0].mxu0
    %v3098 = vpop.f32.mrb[0].mxu0
    %v3099 = vadd.f32 %v2810, %v3098
    %v3100 = vpop.f32.mrb[0].mxu0
    %3101 = vmatprep.mubr.bf16.mxu0 0
    %3102 = vmatmul.mubr.bf16.gmra.mrb[0].mxu0 %v978
    %v3103 = vpop.f32.mrb[0].mxu0
    %v3104 = vadd.f32 %v2815, %v3103
    %v3105 = vpop.f32.mrb[0].mxu0
    %v3106 = vpop.f32.mrb[0].mxu0
    %v3107 = vadd.f32 %v2818, %v3106
    %v3108 = vpop.f32.mrb[0].mxu0
    %3109 = vmatprep.mubr.bf16.mxu0 0
    %3110 = vmatmul.mubr.bf16.gmra.mrb[0].mxu0 %v981
    %v3111 = vpop.f32.mrb[0].mxu0
    %v3112 = vadd.f32 %v2823, %v3111
    %v3113 = vpop.f32.mrb[0].mxu0
    %v3114 = vpop.f32.mrb[0].mxu0
    %v3115 = vadd.f32 %v2826, %v3114
    %v3116 = vpop.f32.mrb[0].mxu0
    %3117 = vmatprep.mubr.bf16.mxu0 0
    %3118 = vmatmul.mubr.bf16.gmra.mrb[0].mxu0 %v984
    %v3119 = vpop.f32.mrb[0].mxu0
    %v3120 = vadd.f32 %v2831, %v3119
    %v3121 = vpop.f32.mrb[0].mxu0
    %v3122 = vpop.f32.mrb[0].mxu0
    %v3123 = vadd.f32 %v2834, %v3122
    %v3124 = vpop.f32.mrb[0].mxu0
    %3125 = vmatprep.mubr.bf16.mxu0 0
    %3126 = vmatmul.mubr.bf16.gmra.mrb[0].mxu0 %v1066
    %v3127 = vpop.f32.mrb[0].mxu0
    %v3128 = vadd.f32 %v2839, %v3127
    %v3129 = vpop.f32.mrb[0].mxu0
    %v3130 = vpop.f32.mrb[0].mxu0
    %v3131 = vadd.f32 %v2842, %v3130
    %v3132 = vpop.f32.mrb[0].mxu0
    %3133 = vmatprep.mubr.bf16.mxu0 0
    %3134 = vmatmul.mubr.bf16.gmra.mrb[0].mxu0 %v1118
    %v3135 = vpop.f32.mrb[0].mxu0
    %v3136 = vadd.f32 %v2847, %v3135
    %v3137 = vpop.f32.mrb[0].mxu0
    %v3138 = vpop.f32.mrb[0].mxu0
    %v3139 = vadd.f32 %v2850, %v3138
    %v3140 = vpop.f32.mrb[0].mxu0
    %3141 = vdwg.mxu0
    %v3142 = vld [vmem:[%s4] sm:$0x1]
    %v3143 = vld [vmem:[%s5] sm:$0x1]
    %v3144 = vadd.f32 %v2888, %v2891
    %v3145 = vadd.f32 %v3144, %v2896
    %v3146 = vadd.f32 %v3145, %v2899
    %v3147 = vadd.f32 %v3146, %v2904
    %v3148 = vadd.f32 %v3147, %v2907
    %v3149 = vadd.f32 %v3148, %v2912
    %v3150 = vadd.f32 %v3149, %v2915
    %v3151 = vadd.f32 %v3150, %v2920
    %v3152 = vadd.f32 %v3151, %v2923
    %v3153 = vadd.f32 %v3152, %v2928
    %v3154 = vadd.f32 %v3153, %v2931
    %v3155 = vadd.f32 %v3154, %v2936
    %v3156 = vadd.f32 %v3155, %v2939
    %v3157 = vadd.f32 %v3156, %v2944
    %v3158 = vadd.f32 %v3157, %v2947
    %v3159 = vadd.f32 %v3158, %v2952
    %v3160 = vadd.f32 %v3159, %v2955
    %v3161 = vadd.f32 %v3160, %v2960
    %v3162 = vadd.f32 %v3161, %v2963
    %v3163 = vadd.f32 %v3162, %v2968
    %v3164 = vadd.f32 %v3163, %v2971
    %v3165 = vadd.f32 %v3164, %v2976
    %v3166 = vadd.f32 %v3165, %v2979
    %v3167 = vadd.f32 %v3166, %v2984
    %v3168 = vadd.f32 %v3167, %v2987
    %v3169 = vadd.f32 %v3168, %v2992
    %v3170 = vadd.f32 %v3169, %v2995
    %v3171 = vadd.f32 %v3170, %v3000
    %v3172 = vadd.f32 %v3171, %v3003
    %v3173 = vadd.f32 %v3172, %v3008
    %v3174 = vadd.f32 %v3173, %v3011
    %v3175 = vrot.slane %v3174, 4
    %v3176 = vadd.f32 %v3174, %v3175
    %v3177 = vrot.slane %v3176, 2
    %v3178 = vadd.f32 %v3176, %v3177
    %v3179 = vrot.slane %v3178, 1
    %v3180 = vadd.f32 %v3178, %v3179
    %v3181 = vadd.f32 %v3016, %v3019
    %v3182 = vadd.f32 %v3181, %v3024
    %v3183 = vadd.f32 %v3182, %v3027
    %v3184 = vadd.f32 %v3183, %v3032
    %v3185 = vadd.f32 %v3184, %v3035
    %v3186 = vadd.f32 %v3185, %v3040
    %v3187 = vadd.f32 %v3186, %v3043
    %v3188 = vadd.f32 %v3187, %v3048
    %v3189 = vadd.f32 %v3188, %v3051
    %v3190 = vadd.f32 %v3189, %v3056
    %v3191 = vadd.f32 %v3190, %v3059
    %v3192 = vadd.f32 %v3191, %v3064
    %v3193 = vadd.f32 %v3192, %v3067
    %v3194 = vadd.f32 %v3193, %v3072
    %v3195 = vadd.f32 %v3194, %v3075
    %v3196 = vadd.f32 %v3195, %v3080
    %v3197 = vadd.f32 %v3196, %v3083
    %v3198 = vadd.f32 %v3197, %v3088
    %v3199 = vadd.f32 %v3198, %v3091
    %v3200 = vadd.f32 %v3199, %v3096
    %v3201 = vadd.f32 %v3200, %v3099
    %v3202 = vadd.f32 %v3201, %v3104
    %v3203 = vadd.f32 %v3202, %v3107
    %v3204 = vadd.f32 %v3203, %v3112
    %v3205 = vadd.f32 %v3204, %v3115
    %v3206 = vadd.f32 %v3205, %v3120
    %v3207 = vadd.f32 %v3206, %v3123
    %v3208 = vadd.f32 %v3207, %v3128
    %v3209 = vadd.f32 %v3208, %v3131
    %v3210 = vadd.f32 %v3209, %v3136
    %v3211 = vadd.f32 %v3210, %v3139
    %v3212 = vrot.slane %v3211, 4
    %v3213 = vadd.f32 %v3211, %v3212
    %v3214 = vrot.slane %v3213, 2
    %v3215 = vadd.f32 %v3213, %v3214
    %v3216 = vrot.slane %v3215, 1
    %v3217 = vadd.f32 %v3215, %v3216
    %v3218 = vrcp.pop 256.0
    %v3219 = vmul.f32 %v3180, %v3218
    %v3220 = vmul.f32 %v3217, %v3218
    %v3221 = vsub.f32 %v2888, %v3219
    %v3222 = vsub.f32 %v2891, %v3219
    %v3223 = vsub.f32 %v2896, %v3219
    %v3224 = vsub.f32 %v2899, %v3219
    %v3225 = vsub.f32 %v2904, %v3219
    %v3226 = vsub.f32 %v2907, %v3219
    %v3227 = vsub.f32 %v2912, %v3219
    %v3228 = vsub.f32 %v2915, %v3219
    %v3229 = vsub.f32 %v2920, %v3219
    %v3230 = vsub.f32 %v2923, %v3219
    %v3231 = vsub.f32 %v2928, %v3219
    %v3232 = vsub.f32 %v2931, %v3219
    %v3233 = vsub.f32 %v2936, %v3219
    %v3234 = vsub.f32 %v2939, %v3219
    %v3235 = vsub.f32 %v2944, %v3219
    %v3236 = vsub.f32 %v2947, %v3219
    %v3237 = vsub.f32 %v2952, %v3219
    %v3238 = vsub.f32 %v2955, %v3219
    %v3239 = vsub.f32 %v2960, %v3219
    %v3240 = vsub.f32 %v2963, %v3219
    %v3241 = vsub.f32 %v2968, %v3219
    %v3242 = vsub.f32 %v2971, %v3219
    %v3243 = vsub.f32 %v2976, %v3219
    %v3244 = vsub.f32 %v2979, %v3219
    %v3245 = vsub.f32 %v2984, %v3219
    %v3246 = vsub.f32 %v2987, %v3219
    %v3247 = vsub.f32 %v2992, %v3219
    %v3248 = vsub.f32 %v2995, %v3219
    %v3249 = vsub.f32 %v3000, %v3219
    %v3250 = vsub.f32 %v3003, %v3219
    %v3251 = vsub.f32 %v3008, %v3219
    %v3252 = vsub.f32 %v3011, %v3219
    %v3253 = vsub.f32 %v3016, %v3220
    %v3254 = vsub.f32 %v3019, %v3220
    %v3255 = vsub.f32 %v3024, %v3220
    %v3256 = vsub.f32 %v3027, %v3220
    %v3257 = vsub.f32 %v3032, %v3220
    %v3258 = vsub.f32 %v3035, %v3220
    %v3259 = vsub.f32 %v3040, %v3220
    %v3260 = vsub.f32 %v3043, %v3220
    %v3261 = vsub.f32 %v3048, %v3220
    %v3262 = vsub.f32 %v3051, %v3220
    %v3263 = vsub.f32 %v3056, %v3220
    %v3264 = vsub.f32 %v3059, %v3220
    %v3265 = vsub.f32 %v3064, %v3220
    %v3266 = vsub.f32 %v3067, %v3220
    %v3267 = vsub.f32 %v3072, %v3220
    %v3268 = vsub.f32 %v3075, %v3220
    %v3269 = vsub.f32 %v3080, %v3220
    %v3270 = vsub.f32 %v3083, %v3220
    %v3271 = vsub.f32 %v3088, %v3220
    %v3272 = vsub.f32 %v3091, %v3220
    %v3273 = vsub.f32 %v3096, %v3220
    %v3274 = vsub.f32 %v3099, %v3220
    %v3275 = vsub.f32 %v3104, %v3220
    %v3276 = vsub.f32 %v3107, %v3220
    %v3277 = vsub.f32 %v3112, %v3220
    %v3278 = vsub.f32 %v3115, %v3220
    %v3279 = vsub.f32 %v3120, %v3220
    %v3280 = vsub.f32 %v3123, %v3220
    %v3281 = vsub.f32 %v3128, %v3220
    %v3282 = vsub.f32 %v3131, %v3220
    %v3283 = vsub.f32 %v3136, %v3220
    %v3284 = vsub.f32 %v3139, %v3220
    %v3285 = vmul.f32 %v3221, %v3221
    %v3286 = vmul.f32 %v3222, %v3222
    %v3287 = vmul.f32 %v3223, %v3223
    %v3288 = vmul.f32 %v3224, %v3224
    %v3289 = vmul.f32 %v3225, %v3225
    %v3290 = vmul.f32 %v3226, %v3226
    %v3291 = vmul.f32 %v3227, %v3227
    %v3292 = vmul.f32 %v3228, %v3228
    %v3293 = vmul.f32 %v3229, %v3229
    %v3294 = vmul.f32 %v3230, %v3230
    %v3295 = vmul.f32 %v3231, %v3231
    %v3296 = vmul.f32 %v3232, %v3232
    %v3297 = vmul.f32 %v3233, %v3233
    %v3298 = vmul.f32 %v3234, %v3234
    %v3299 = vmul.f32 %v3235, %v3235
    %v3300 = vmul.f32 %v3236, %v3236
    %v3301 = vmul.f32 %v3237, %v3237
    %v3302 = vmul.f32 %v3238, %v3238
    %v3303 = vmul.f32 %v3239, %v3239
    %v3304 = vmul.f32 %v3240, %v3240
    %v3305 = vmul.f32 %v3241, %v3241
    %v3306 = vmul.f32 %v3242, %v3242
    %v3307 = vmul.f32 %v3243, %v3243
    %v3308 = vmul.f32 %v3244, %v3244
    %v3309 = vmul.f32 %v3245, %v3245
    %v3310 = vmul.f32 %v3246, %v3246
    %v3311 = vmul.f32 %v3247, %v3247
    %v3312 = vmul.f32 %v3248, %v3248
    %v3313 = vmul.f32 %v3249, %v3249
    %v3314 = vmul.f32 %v3250, %v3250
    %v3315 = vmul.f32 %v3251, %v3251
    %v3316 = vmul.f32 %v3252, %v3252
    %v3317 = vmul.f32 %v3253, %v3253
    %v3318 = vmul.f32 %v3254, %v3254
    %v3319 = vmul.f32 %v3255, %v3255
    %v3320 = vmul.f32 %v3256, %v3256
    %v3321 = vmul.f32 %v3257, %v3257
    %v3322 = vmul.f32 %v3258, %v3258
    %v3323 = vmul.f32 %v3259, %v3259
    %v3324 = vmul.f32 %v3260, %v3260
    %v3325 = vmul.f32 %v3261, %v3261
    %v3326 = vmul.f32 %v3262, %v3262
    %v3327 = vmul.f32 %v3263, %v3263
    %v3328 = vmul.f32 %v3264, %v3264
    %v3329 = vmul.f32 %v3265, %v3265
    %v3330 = vmul.f32 %v3266, %v3266
    %v3331 = vmul.f32 %v3267, %v3267
    %v3332 = vmul.f32 %v3268, %v3268
    %v3333 = vmul.f32 %v3269, %v3269
    %v3334 = vmul.f32 %v3270, %v3270
    %v3335 = vmul.f32 %v3271, %v3271
    %v3336 = vmul.f32 %v3272, %v3272
    %v3337 = vmul.f32 %v3273, %v3273
    %v3338 = vmul.f32 %v3274, %v3274
    %v3339 = vmul.f32 %v3275, %v3275
    %v3340 = vmul.f32 %v3276, %v3276
    %v3341 = vmul.f32 %v3277, %v3277
    %v3342 = vmul.f32 %v3278, %v3278
    %v3343 = vmul.f32 %v3279, %v3279
    %v3344 = vmul.f32 %v3280, %v3280
    %v3345 = vmul.f32 %v3281, %v3281
    %v3346 = vmul.f32 %v3282, %v3282
    %v3347 = vmul.f32 %v3283, %v3283
    %v3348 = vmul.f32 %v3284, %v3284
    %v3349 = vadd.f32 %v3285, %v3286
    %v3350 = vadd.f32 %v3349, %v3287
    %v3351 = vadd.f32 %v3350, %v3288
    %v3352 = vadd.f32 %v3351, %v3289
    %v3353 = vadd.f32 %v3352, %v3290
    %v3354 = vadd.f32 %v3353, %v3291
    %v3355 = vadd.f32 %v3354, %v3292
    %v3356 = vadd.f32 %v3355, %v3293
    %v3357 = vadd.f32 %v3356, %v3294
    %v3358 = vadd.f32 %v3357, %v3295
    %v3359 = vadd.f32 %v3358, %v3296
    %v3360 = vadd.f32 %v3359, %v3297
    %v3361 = vadd.f32 %v3360, %v3298
    %v3362 = vadd.f32 %v3361, %v3299
    %v3363 = vadd.f32 %v3362, %v3300
    %v3364 = vadd.f32 %v3363, %v3301
    %v3365 = vadd.f32 %v3364, %v3302
    %v3366 = vadd.f32 %v3365, %v3303
    %v3367 = vadd.f32 %v3366, %v3304
    %v3368 = vadd.f32 %v3367, %v3305
    %v3369 = vadd.f32 %v3368, %v3306
    %v3370 = vadd.f32 %v3369, %v3307
    %v3371 = vadd.f32 %v3370, %v3308
    %v3372 = vadd.f32 %v3371, %v3309
    %v3373 = vadd.f32 %v3372, %v3310
    %v3374 = vadd.f32 %v3373, %v3311
    %v3375 = vadd.f32 %v3374, %v3312
    %v3376 = vadd.f32 %v3375, %v3313
    %v3377 = vadd.f32 %v3376, %v3314
    %v3378 = vadd.f32 %v3377, %v3315
    %v3379 = vadd.f32 %v3378, %v3316
    %v3380 = vrot.slane %v3379, 4
    %v3381 = vadd.f32 %v3379, %v3380
    %v3382 = vrot.slane %v3381, 2
    %v3383 = vadd.f32 %v3381, %v3382
    %v3384 = vrot.slane %v3383, 1
    %v3385 = vadd.f32 %v3383, %v3384
    %v3386 = vadd.f32 %v3317, %v3318
    %v3387 = vadd.f32 %v3386, %v3319
    %v3388 = vadd.f32 %v3387, %v3320
    %v3389 = vadd.f32 %v3388, %v3321
    %v3390 = vadd.f32 %v3389, %v3322
    %v3391 = vadd.f32 %v3390, %v3323
    %v3392 = vadd.f32 %v3391, %v3324
    %v3393 = vadd.f32 %v3392, %v3325
    %v3394 = vadd.f32 %v3393, %v3326
    %v3395 = vadd.f32 %v3394, %v3327
    %v3396 = vadd.f32 %v3395, %v3328
    %v3397 = vadd.f32 %v3396, %v3329
    %v3398 = vadd.f32 %v3397, %v3330
    %v3399 = vadd.f32 %v3398, %v3331
    %v3400 = vadd.f32 %v3399, %v3332
    %v3401 = vadd.f32 %v3400, %v3333
    %v3402 = vadd.f32 %v3401, %v3334
    %v3403 = vadd.f32 %v3402, %v3335
    %v3404 = vadd.f32 %v3403, %v3336
    %v3405 = vadd.f32 %v3404, %v3337
    %v3406 = vadd.f32 %v3405, %v3338
    %v3407 = vadd.f32 %v3406, %v3339
    %v3408 = vadd.f32 %v3407, %v3340
    %v3409 = vadd.f32 %v3408, %v3341
    %v3410 = vadd.f32 %v3409, %v3342
    %v3411 = vadd.f32 %v3410, %v3343
    %v3412 = vadd.f32 %v3411, %v3344
    %v3413 = vadd.f32 %v3412, %v3345
    %v3414 = vadd.f32 %v3413, %v3346
    %v3415 = vadd.f32 %v3414, %v3347
    %v3416 = vadd.f32 %v3415, %v3348
    %v3417 = vrot.slane %v3416, 4
    %v3418 = vadd.f32 %v3416, %v3417
    %v3419 = vrot.slane %v3418, 2
    %v3420 = vadd.f32 %v3418, %v3419
    %v3421 = vrot.slane %v3420, 1
    %v3422 = vadd.f32 %v3420, %v3421
    %v3423 = vrcp.pop 255.0
    %v3424 = vmul.f32 %v3385, %v3423
    %v3425 = vmul.f32 %v3422, %v3423
    %v3426 = vmul.f32 %v3219, %v3219
    %v3427 = vmul.f32 %v3220, %v3220
    %v3428 = vadd.f32 %v3424, %v3426
    %v3429 = vadd.f32 %v3425, %v3427
    %3430 = vadd.xlane.f32.xlu0 %v3219
    %v3431 = vpop.xlane.xlu0 %3430
    %3432 = vadd.xlane.f32.xlu0 %v3220
    %v3433 = vpop.xlane.xlu0 %3432
    %v3434 = vmul.f32 %v3431, 0.125
    %v3435 = vmul.f32 %v3433, 0.125
    %3436 = vadd.xlane.f32.xlu0 %v3428
    %v3437 = vpop.xlane.xlu0 %3436
    %3438 = vadd.xlane.f32.xlu0 %v3429
    %v3439 = vpop.xlane.xlu0 %3438
    %v3440 = vmul.f32 %v3437, 0.125
    %v3441 = vmul.f32 %v3439, 0.125
    %v3442 = vmul.f32 %v3434, %v3434
    %v3443 = vmul.f32 %v3435, %v3435
    %v3444 = vsub.f32 %v3440, %v3442
    %v3445 = vsub.f32 %v3441, %v3443
    %v3446 = vadd.f32 %v3219, %v3220
    %v3447 = vrcp.pop 2.0
    %v3448 = vmul.f32 %v3446, %v3447
    %v3449 = vadd.f32 %v3428, %v3429
    %v3450 = vmul.f32 %v3449, %v3447
    %v3451 = vmul.f32 %v3448, %v3448
    %v3452 = vsub.f32 %v3450, %v3451
    %s3453 = sld [smem:[#allocation9]]
    %s3454 = sld [smem:[#allocation9 + $0x1]]
    %s3455 = sld [smem:[#allocation9 + $0x2]]
    %s3456 = sld [smem:[#allocation9 + $0x3]]
    %s3457 = sld [smem:[#allocation9 + $0x4]]
    %s3458 = sld [smem:[#allocation9 + $0x5]]
    %v3459 = vstv %s3453
    %v3460 = vmul.f32 %v3459, %v3219
    %v3461 = vmul.f32 %v3459, %v3220
    %v3462 = vstv %s3454
    %v3463 = vmul.f32 %v3462, %v3434
    %v3464 = vmul.f32 %v3462, %v3435
    %v3465 = vadd.f32 %v3460, %v3463
    %v3466 = vadd.f32 %v3461, %v3464
    %v3467 = vstv %s3455
    %v3468 = vmul.f32 %v3467, %v3448
    %v3469 = vadd.f32 %v3465, %v3468
    %v3470 = vadd.f32 %v3466, %v3468
    %v3471 = vstv %s3456
    %v3472 = vmul.f32 %v3471, %v3424
    %v3473 = vmul.f32 %v3471, %v3425
    %v3474 = vstv %s3457
    %v3475 = vmul.f32 %v3474, %v3444
    %v3476 = vmul.f32 %v3474, %v3445
    %v3477 = vadd.f32 %v3472, %v3475
    %v3478 = vadd.f32 %v3473, %v3476
    %v3479 = vstv %s3458
    %v3480 = vmul.f32 %v3479, %v3452
    %v3481 = vadd.f32 %v3477, %v3480
    %v3482 = vadd.f32 %v3478, %v3480
    %v3483 = vmax.f32 %v3481, 0.0
    %v3484 = vmax.f32 %v3482, 0.0
    %v3485 = vadd.f32 %v3483, 1e-05
    %v3486 = vadd.f32 %v3484, 1e-05
    %v3487 = vrsqrt.pop %v3485
    %v3488 = vrsqrt.pop %v3486
    %v3489 = vmul.f32 %v3142, %v3487
    %v3490 = vmul.f32 %v3142, %v3488
    %v3491 = vmul.f32 %v3469, %v3489
    %v3492 = vmul.f32 %v3470, %v3490
    %v3493 = vsub.f32 %v3143, %v3491
    %v3494 = vsub.f32 %v3143, %v3492
    %v3497 = vlaneseq
    %v3498 = vshrl.u32 %v3497, 7
    %v3499 = vsub.s32 0, %v3498
    %v3500 = vrot.slane %v3489, %v3499
    %v3501 = vlaneseq
    %v3502 = vshrl.u32 %v3501, 7
    %v3503 = vsub.s32 0, %v3502
    %v3504 = vrot.slane %v3490, %v3503
    %v3507 = vmul.f32 %v2888, %v3500
    %v3508 = vmul.f32 %v2891, %v3500
    %v3509 = vmul.f32 %v2896, %v3500
    %v3510 = vmul.f32 %v2899, %v3500
    %v3511 = vmul.f32 %v2904, %v3500
    %v3512 = vmul.f32 %v2907, %v3500
    %v3513 = vmul.f32 %v2912, %v3500
    %v3514 = vmul.f32 %v2915, %v3500
    %v3515 = vmul.f32 %v2920, %v3500
    %v3516 = vmul.f32 %v2923, %v3500
    %v3517 = vmul.f32 %v2928, %v3500
    %v3518 = vmul.f32 %v2931, %v3500
    %v3519 = vmul.f32 %v2936, %v3500
    %v3520 = vmul.f32 %v2939, %v3500
    %v3521 = vmul.f32 %v2944, %v3500
    %v3522 = vmul.f32 %v2947, %v3500
    %v3523 = vmul.f32 %v2952, %v3500
    %v3524 = vmul.f32 %v2955, %v3500
    %v3525 = vmul.f32 %v2960, %v3500
    %v3526 = vmul.f32 %v2963, %v3500
    %v3527 = vmul.f32 %v2968, %v3500
    %v3528 = vmul.f32 %v2971, %v3500
    %v3529 = vmul.f32 %v2976, %v3500
    %v3530 = vmul.f32 %v2979, %v3500
    %v3531 = vmul.f32 %v2984, %v3500
    %v3532 = vmul.f32 %v2987, %v3500
    %v3533 = vmul.f32 %v2992, %v3500
    %v3534 = vmul.f32 %v2995, %v3500
    %v3535 = vmul.f32 %v3000, %v3500
    %v3536 = vmul.f32 %v3003, %v3500
    %v3537 = vmul.f32 %v3008, %v3500
    %v3538 = vmul.f32 %v3011, %v3500
    %v3539 = vmul.f32 %v3016, %v3504
    %v3540 = vmul.f32 %v3019, %v3504
    %v3541 = vmul.f32 %v3024, %v3504
    %v3542 = vmul.f32 %v3027, %v3504
    %v3543 = vmul.f32 %v3032, %v3504
    %v3544 = vmul.f32 %v3035, %v3504
    %v3545 = vmul.f32 %v3040, %v3504
    %v3546 = vmul.f32 %v3043, %v3504
    %v3547 = vmul.f32 %v3048, %v3504
    %v3548 = vmul.f32 %v3051, %v3504
    %v3549 = vmul.f32 %v3056, %v3504
    %v3550 = vmul.f32 %v3059, %v3504
    %v3551 = vmul.f32 %v3064, %v3504
    %v3552 = vmul.f32 %v3067, %v3504
    %v3553 = vmul.f32 %v3072, %v3504
    %v3554 = vmul.f32 %v3075, %v3504
    %v3555 = vmul.f32 %v3080, %v3504
    %v3556 = vmul.f32 %v3083, %v3504
    %v3557 = vmul.f32 %v3088, %v3504
    %v3558 = vmul.f32 %v3091, %v3504
    %v3559 = vmul.f32 %v3096, %v3504
    %v3560 = vmul.f32 %v3099, %v3504
    %v3561 = vmul.f32 %v3104, %v3504
    %v3562 = vmul.f32 %v3107, %v3504
    %v3563 = vmul.f32 %v3112, %v3504
    %v3564 = vmul.f32 %v3115, %v3504
    %v3565 = vmul.f32 %v3120, %v3504
    %v3566 = vmul.f32 %v3123, %v3504
    %v3567 = vmul.f32 %v3128, %v3504
    %v3568 = vmul.f32 %v3131, %v3504
    %v3569 = vmul.f32 %v3136, %v3504
    %v3570 = vmul.f32 %v3139, %v3504
    %v3573 = vlaneseq
    %v3574 = vshrl.u32 %v3573, 7
    %v3575 = vsub.s32 0, %v3574
    %v3576 = vrot.slane %v3493, %v3575
    %v3577 = vlaneseq
    %v3578 = vshrl.u32 %v3577, 7
    %v3579 = vsub.s32 0, %v3578
    %v3580 = vrot.slane %v3494, %v3579
    %v3583 = vadd.f32 %v3507, %v3576
    %v3584 = vadd.f32 %v3508, %v3576
    %v3585 = vadd.f32 %v3509, %v3576
    %v3586 = vadd.f32 %v3510, %v3576
    %v3587 = vadd.f32 %v3511, %v3576
    %v3588 = vadd.f32 %v3512, %v3576
    %v3589 = vadd.f32 %v3513, %v3576
    %v3590 = vadd.f32 %v3514, %v3576
    %v3591 = vadd.f32 %v3515, %v3576
    %v3592 = vadd.f32 %v3516, %v3576
    %v3593 = vadd.f32 %v3517, %v3576
    %v3594 = vadd.f32 %v3518, %v3576
    %v3595 = vadd.f32 %v3519, %v3576
    %v3596 = vadd.f32 %v3520, %v3576
    %v3597 = vadd.f32 %v3521, %v3576
    %v3598 = vadd.f32 %v3522, %v3576
    %v3599 = vadd.f32 %v3523, %v3576
    %v3600 = vadd.f32 %v3524, %v3576
    %v3601 = vadd.f32 %v3525, %v3576
    %v3602 = vadd.f32 %v3526, %v3576
    %v3603 = vadd.f32 %v3527, %v3576
    %v3604 = vadd.f32 %v3528, %v3576
    %v3605 = vadd.f32 %v3529, %v3576
    %v3606 = vadd.f32 %v3530, %v3576
    %v3607 = vadd.f32 %v3531, %v3576
    %v3608 = vadd.f32 %v3532, %v3576
    %v3609 = vadd.f32 %v3533, %v3576
    %v3610 = vadd.f32 %v3534, %v3576
    %v3611 = vadd.f32 %v3535, %v3576
    %v3612 = vadd.f32 %v3536, %v3576
    %v3613 = vadd.f32 %v3537, %v3576
    %v3614 = vadd.f32 %v3538, %v3576
    %v3615 = vadd.f32 %v3539, %v3580
    %v3616 = vadd.f32 %v3540, %v3580
    %v3617 = vadd.f32 %v3541, %v3580
    %v3618 = vadd.f32 %v3542, %v3580
    %v3619 = vadd.f32 %v3543, %v3580
    %v3620 = vadd.f32 %v3544, %v3580
    %v3621 = vadd.f32 %v3545, %v3580
    %v3622 = vadd.f32 %v3546, %v3580
    %v3623 = vadd.f32 %v3547, %v3580
    %v3624 = vadd.f32 %v3548, %v3580
    %v3625 = vadd.f32 %v3549, %v3580
    %v3626 = vadd.f32 %v3550, %v3580
    %v3627 = vadd.f32 %v3551, %v3580
    %v3628 = vadd.f32 %v3552, %v3580
    %v3629 = vadd.f32 %v3553, %v3580
    %v3630 = vadd.f32 %v3554, %v3580
    %v3631 = vadd.f32 %v3555, %v3580
    %v3632 = vadd.f32 %v3556, %v3580
    %v3633 = vadd.f32 %v3557, %v3580
    %v3634 = vadd.f32 %v3558, %v3580
    %v3635 = vadd.f32 %v3559, %v3580
    %v3636 = vadd.f32 %v3560, %v3580
    %v3637 = vadd.f32 %v3561, %v3580
    %v3638 = vadd.f32 %v3562, %v3580
    %v3639 = vadd.f32 %v3563, %v3580
    %v3640 = vadd.f32 %v3564, %v3580
    %v3641 = vadd.f32 %v3565, %v3580
    %v3642 = vadd.f32 %v3566, %v3580
    %v3643 = vadd.f32 %v3567, %v3580
    %v3644 = vadd.f32 %v3568, %v3580
    %v3645 = vadd.f32 %v3569, %v3580
    %v3646 = vadd.f32 %v3570, %v3580
    %v3647 = vmax.f32 %v3583, 0.0
    %v3648 = vmax.f32 %v3584, 0.0
    %v3649 = vmax.f32 %v3585, 0.0
    %v3650 = vmax.f32 %v3586, 0.0
    %v3651 = vmax.f32 %v3587, 0.0
    %v3652 = vmax.f32 %v3588, 0.0
    %v3653 = vmax.f32 %v3589, 0.0
    %v3654 = vmax.f32 %v3590, 0.0
    %v3655 = vmax.f32 %v3591, 0.0
    %v3656 = vmax.f32 %v3592, 0.0
    %v3657 = vmax.f32 %v3593, 0.0
    %v3658 = vmax.f32 %v3594, 0.0
    %v3659 = vmax.f32 %v3595, 0.0
    %v3660 = vmax.f32 %v3596, 0.0
    %v3661 = vmax.f32 %v3597, 0.0
    %v3662 = vmax.f32 %v3598, 0.0
    %v3663 = vmax.f32 %v3599, 0.0
    %v3664 = vmax.f32 %v3600, 0.0
    %v3665 = vmax.f32 %v3601, 0.0
    %v3666 = vmax.f32 %v3602, 0.0
    %v3667 = vmax.f32 %v3603, 0.0
    %v3668 = vmax.f32 %v3604, 0.0
    %v3669 = vmax.f32 %v3605, 0.0
    %v3670 = vmax.f32 %v3606, 0.0
    %v3671 = vmax.f32 %v3607, 0.0
    %v3672 = vmax.f32 %v3608, 0.0
    %v3673 = vmax.f32 %v3609, 0.0
    %v3674 = vmax.f32 %v3610, 0.0
    %v3675 = vmax.f32 %v3611, 0.0
    %v3676 = vmax.f32 %v3612, 0.0
    %v3677 = vmax.f32 %v3613, 0.0
    %v3678 = vmax.f32 %v3614, 0.0
    %v3679 = vmax.f32 %v3615, 0.0
    %v3680 = vmax.f32 %v3616, 0.0
    %v3681 = vmax.f32 %v3617, 0.0
    %v3682 = vmax.f32 %v3618, 0.0
    %v3683 = vmax.f32 %v3619, 0.0
    %v3684 = vmax.f32 %v3620, 0.0
    %v3685 = vmax.f32 %v3621, 0.0
    %v3686 = vmax.f32 %v3622, 0.0
    %v3687 = vmax.f32 %v3623, 0.0
    %v3688 = vmax.f32 %v3624, 0.0
    %v3689 = vmax.f32 %v3625, 0.0
    %v3690 = vmax.f32 %v3626, 0.0
    %v3691 = vmax.f32 %v3627, 0.0
    %v3692 = vmax.f32 %v3628, 0.0
    %v3693 = vmax.f32 %v3629, 0.0
    %v3694 = vmax.f32 %v3630, 0.0
    %v3695 = vmax.f32 %v3631, 0.0
    %v3696 = vmax.f32 %v3632, 0.0
    %v3697 = vmax.f32 %v3633, 0.0
    %v3698 = vmax.f32 %v3634, 0.0
    %v3699 = vmax.f32 %v3635, 0.0
    %v3700 = vmax.f32 %v3636, 0.0
    %v3701 = vmax.f32 %v3637, 0.0
    %v3702 = vmax.f32 %v3638, 0.0
    %v3703 = vmax.f32 %v3639, 0.0
    %v3704 = vmax.f32 %v3640, 0.0
    %v3705 = vmax.f32 %v3641, 0.0
    %v3706 = vmax.f32 %v3642, 0.0
    %v3707 = vmax.f32 %v3643, 0.0
    %v3708 = vmax.f32 %v3644, 0.0
    %v3709 = vmax.f32 %v3645, 0.0
    %v3710 = vmax.f32 %v3646, 0.0
    %3711 = vst [vmem:[#allocation2] sm:$0xf] 0
    %3712 = vst [vmem:[#allocation2 + $0x4] sm:$0xf] 0
    %3713 = vst [vmem:[#allocation2 + $0x8] sm:$0x1] 0
    %3714 = vst [vmem:[#allocation2 + $0xd8] sm:$0xf] 0
    %3715 = vst [vmem:[#allocation2 + $0xdc] sm:$0xf] 0
    %3716 = vst [vmem:[#allocation2 + $0xe0] sm:$0x1] 0
    %s3717 = scalar_lea.vmem [#allocation2], 204
    %3718 = vst [vmem:[%s3717] sm:$0xf] 0
    %3719 = vst [vmem:[%s3717 + $0x4] sm:$0xf] 0
    %3720 = vst [vmem:[%s3717 + $0x8] sm:$0x1] 0
    %3721 = vst [vmem:[%s3717 + $0xd8] sm:$0xf] 0
    %3722 = vst [vmem:[%s3717 + $0xdc] sm:$0xf] 0
    %3723 = vst [vmem:[%s3717 + $0xe0] sm:$0x1] 0
    %s3724 = scalar_lea.vmem [#allocation2], 12
    %vm3725 = vcmask 1040384
    %vm3726 = vsmask.f32 256
    %vm3727 = vmand %vm3725, %vm3726
    %v3728 = vld [vmem:[%s3724] sm:$0x1]
    %v3729 = vsel %vm3727, 0, %v3728
    %3730 = vst [vmem:[%s3724] sm:$0x1] %v3729
    %v3731 = vld [vmem:[%s3724 + $0xc] sm:$0x1]
    %v3732 = vsel %vm3727, 0, %v3731
    %3733 = vst [vmem:[%s3724 + $0xc] sm:$0x1] %v3732
    %v3734 = vld [vmem:[%s3724 + $0x18] sm:$0x1]
    %v3735 = vsel %vm3727, 0, %v3734
    %3736 = vst [vmem:[%s3724 + $0x18] sm:$0x1] %v3735
    %v3737 = vld [vmem:[%s3724 + $0x24] sm:$0x1]
    %v3738 = vsel %vm3727, 0, %v3737
    %3739 = vst [vmem:[%s3724 + $0x24] sm:$0x1] %v3738
    %v3740 = vld [vmem:[%s3724 + $0x30] sm:$0x1]
    %v3741 = vsel %vm3727, 0, %v3740
    %3742 = vst [vmem:[%s3724 + $0x30] sm:$0x1] %v3741
    %v3743 = vld [vmem:[%s3724 + $0x3c] sm:$0x1]
    %v3744 = vsel %vm3727, 0, %v3743
    %3745 = vst [vmem:[%s3724 + $0x3c] sm:$0x1] %v3744
    %v3746 = vld [vmem:[%s3724 + $0x48] sm:$0x1]
    %v3747 = vsel %vm3727, 0, %v3746
    %3748 = vst [vmem:[%s3724 + $0x48] sm:$0x1] %v3747
    %v3749 = vld [vmem:[%s3724 + $0x54] sm:$0x1]
    %v3750 = vsel %vm3727, 0, %v3749
    %3751 = vst [vmem:[%s3724 + $0x54] sm:$0x1] %v3750
    %v3752 = vld [vmem:[%s3724 + $0x60] sm:$0x1]
    %v3753 = vsel %vm3727, 0, %v3752
    %3754 = vst [vmem:[%s3724 + $0x60] sm:$0x1] %v3753
    %v3755 = vld [vmem:[%s3724 + $0x6c] sm:$0x1]
    %v3756 = vsel %vm3727, 0, %v3755
    %3757 = vst [vmem:[%s3724 + $0x6c] sm:$0x1] %v3756
    %v3758 = vld [vmem:[%s3724 + $0x78] sm:$0x1]
    %v3759 = vsel %vm3727, 0, %v3758
    %3760 = vst [vmem:[%s3724 + $0x78] sm:$0x1] %v3759
    %v3761 = vld [vmem:[%s3724 + $0x84] sm:$0x1]
    %v3762 = vsel %vm3727, 0, %v3761
    %3763 = vst [vmem:[%s3724 + $0x84] sm:$0x1] %v3762
    %v3764 = vld [vmem:[%s3724 + $0x90] sm:$0x1]
    %v3765 = vsel %vm3727, 0, %v3764
    %3766 = vst [vmem:[%s3724 + $0x90] sm:$0x1] %v3765
    %v3767 = vld [vmem:[%s3724 + $0x9c] sm:$0x1]
    %v3768 = vsel %vm3727, 0, %v3767
    %3769 = vst [vmem:[%s3724 + $0x9c] sm:$0x1] %v3768
    %v3770 = vld [vmem:[%s3724 + $0xa8] sm:$0x1]
    %v3771 = vsel %vm3727, 0, %v3770
    %3772 = vst [vmem:[%s3724 + $0xa8] sm:$0x1] %v3771
    %v3773 = vld [vmem:[%s3724 + $0xb4] sm:$0x1]
    %v3774 = vsel %vm3727, 0, %v3773
    %3775 = vst [vmem:[%s3724 + $0xb4] sm:$0x1] %v3774
    %v3776 = vld [vmem:[%s3724 + $0xd8] sm:$0x1]
    %v3777 = vsel %vm3727, 0, %v3776
    %3778 = vst [vmem:[%s3724 + $0xd8] sm:$0x1] %v3777
    %v3779 = vld [vmem:[%s3724 + $0xe4] sm:$0x1]
    %v3780 = vsel %vm3727, 0, %v3779
    %3781 = vst [vmem:[%s3724 + $0xe4] sm:$0x1] %v3780
    %v3782 = vld [vmem:[%s3724 + $0xf0] sm:$0x1]
    %v3783 = vsel %vm3727, 0, %v3782
    %3784 = vst [vmem:[%s3724 + $0xf0] sm:$0x1] %v3783
    %v3785 = vld [vmem:[%s3724 + $0xfc] sm:$0x1]
    %v3786 = vsel %vm3727, 0, %v3785
    %3787 = vst [vmem:[%s3724 + $0xfc] sm:$0x1] %v3786
    %v3788 = vld [vmem:[%s3724 + $0x108] sm:$0x1]
    %v3789 = vsel %vm3727, 0, %v3788
    %3790 = vst [vmem:[%s3724 + $0x108] sm:$0x1] %v3789
    %v3791 = vld [vmem:[%s3724 + $0x114] sm:$0x1]
    %v3792 = vsel %vm3727, 0, %v3791
    %3793 = vst [vmem:[%s3724 + $0x114] sm:$0x1] %v3792
    %v3794 = vld [vmem:[%s3724 + $0x120] sm:$0x1]
    %v3795 = vsel %vm3727, 0, %v3794
    %3796 = vst [vmem:[%s3724 + $0x120] sm:$0x1] %v3795
    %v3797 = vld [vmem:[%s3724 + $0x12c] sm:$0x1]
    %v3798 = vsel %vm3727, 0, %v3797
    %3799 = vst [vmem:[%s3724 + $0x12c] sm:$0x1] %v3798
    %v3800 = vld [vmem:[%s3724 + $0x138] sm:$0x1]
    %v3801 = vsel %vm3727, 0, %v3800
    %3802 = vst [vmem:[%s3724 + $0x138] sm:$0x1] %v3801
    %v3803 = vld [vmem:[%s3724 + $0x144] sm:$0x1]
    %v3804 = vsel %vm3727, 0, %v3803
    %3805 = vst [vmem:[%s3724 + $0x144] sm:$0x1] %v3804
    %v3806 = vld [vmem:[%s3724 + $0x150] sm:$0x1]
    %v3807 = vsel %vm3727, 0, %v3806
    %3808 = vst [vmem:[%s3724 + $0x150] sm:$0x1] %v3807
    %v3809 = vld [vmem:[%s3724 + $0x15c] sm:$0x1]
    %v3810 = vsel %vm3727, 0, %v3809
    %3811 = vst [vmem:[%s3724 + $0x15c] sm:$0x1] %v3810
    %v3812 = vld [vmem:[%s3724 + $0x168] sm:$0x1]
    %v3813 = vsel %vm3727, 0, %v3812
    %3814 = vst [vmem:[%s3724 + $0x168] sm:$0x1] %v3813
    %v3815 = vld [vmem:[%s3724 + $0x174] sm:$0x1]
    %v3816 = vsel %vm3727, 0, %v3815
    %3817 = vst [vmem:[%s3724 + $0x174] sm:$0x1] %v3816
    %v3818 = vld [vmem:[%s3724 + $0x180] sm:$0x1]
    %v3819 = vsel %vm3727, 0, %v3818
    %3820 = vst [vmem:[%s3724 + $0x180] sm:$0x1] %v3819
    %v3821 = vld [vmem:[%s3724 + $0x18c] sm:$0x1]
    %v3822 = vsel %vm3727, 0, %v3821
    %3823 = vst [vmem:[%s3724 + $0x18c] sm:$0x1] %v3822
    %vm3824 = vsmask.f32 7938
    %vm3825 = vmand %vm3725, %vm3824
    %v3826 = vld [vmem:[%s3724 + $0x8] sm:$0x1]
    %v3827 = vsel %vm3825, 0, %v3826
    %3828 = vst [vmem:[%s3724 + $0x8] sm:$0x1] %v3827
    %v3829 = vld [vmem:[%s3724 + $0x14] sm:$0x1]
    %v3830 = vsel %vm3825, 0, %v3829
    %3831 = vst [vmem:[%s3724 + $0x14] sm:$0x1] %v3830
    %v3832 = vld [vmem:[%s3724 + $0x20] sm:$0x1]
    %v3833 = vsel %vm3825, 0, %v3832
    %3834 = vst [vmem:[%s3724 + $0x20] sm:$0x1] %v3833
    %v3835 = vld [vmem:[%s3724 + $0x2c] sm:$0x1]
    %v3836 = vsel %vm3825, 0, %v3835
    %3837 = vst [vmem:[%s3724 + $0x2c] sm:$0x1] %v3836
    %v3838 = vld [vmem:[%s3724 + $0x38] sm:$0x1]
    %v3839 = vsel %vm3825, 0, %v3838
    %3840 = vst [vmem:[%s3724 + $0x38] sm:$0x1] %v3839
    %v3841 = vld [vmem:[%s3724 + $0x44] sm:$0x1]
    %v3842 = vsel %vm3825, 0, %v3841
    %3843 = vst [vmem:[%s3724 + $0x44] sm:$0x1] %v3842
    %v3844 = vld [vmem:[%s3724 + $0x50] sm:$0x1]
    %v3845 = vsel %vm3825, 0, %v3844
    %3846 = vst [vmem:[%s3724 + $0x50] sm:$0x1] %v3845
    %v3847 = vld [vmem:[%s3724 + $0x5c] sm:$0x1]
    %v3848 = vsel %vm3825, 0, %v3847
    %3849 = vst [vmem:[%s3724 + $0x5c] sm:$0x1] %v3848
    %v3850 = vld [vmem:[%s3724 + $0x68] sm:$0x1]
    %v3851 = vsel %vm3825, 0, %v3850
    %3852 = vst [vmem:[%s3724 + $0x68] sm:$0x1] %v3851
    %v3853 = vld [vmem:[%s3724 + $0x74] sm:$0x1]
    %v3854 = vsel %vm3825, 0, %v3853
    %3855 = vst [vmem:[%s3724 + $0x74] sm:$0x1] %v3854
    %v3856 = vld [vmem:[%s3724 + $0x80] sm:$0x1]
    %v3857 = vsel %vm3825, 0, %v3856
    %3858 = vst [vmem:[%s3724 + $0x80] sm:$0x1] %v3857
    %v3859 = vld [vmem:[%s3724 + $0x8c] sm:$0x1]
    %v3860 = vsel %vm3825, 0, %v3859
    %3861 = vst [vmem:[%s3724 + $0x8c] sm:$0x1] %v3860
    %v3862 = vld [vmem:[%s3724 + $0x98] sm:$0x1]
    %v3863 = vsel %vm3825, 0, %v3862
    %3864 = vst [vmem:[%s3724 + $0x98] sm:$0x1] %v3863
    %v3865 = vld [vmem:[%s3724 + $0xa4] sm:$0x1]
    %v3866 = vsel %vm3825, 0, %v3865
    %3867 = vst [vmem:[%s3724 + $0xa4] sm:$0x1] %v3866
    %v3868 = vld [vmem:[%s3724 + $0xb0] sm:$0x1]
    %v3869 = vsel %vm3825, 0, %v3868
    %3870 = vst [vmem:[%s3724 + $0xb0] sm:$0x1] %v3869
    %v3871 = vld [vmem:[%s3724 + $0xbc] sm:$0x1]
    %v3872 = vsel %vm3825, 0, %v3871
    %3873 = vst [vmem:[%s3724 + $0xbc] sm:$0x1] %v3872
    %v3874 = vld [vmem:[%s3724 + $0xe0] sm:$0x1]
    %v3875 = vsel %vm3825, 0, %v3874
    %3876 = vst [vmem:[%s3724 + $0xe0] sm:$0x1] %v3875
    %v3877 = vld [vmem:[%s3724 + $0xec] sm:$0x1]
    %v3878 = vsel %vm3825, 0, %v3877
    %3879 = vst [vmem:[%s3724 + $0xec] sm:$0x1] %v3878
    %v3880 = vld [vmem:[%s3724 + $0xf8] sm:$0x1]
    %v3881 = vsel %vm3825, 0, %v3880
    %3882 = vst [vmem:[%s3724 + $0xf8] sm:$0x1] %v3881
    %v3883 = vld [vmem:[%s3724 + $0x104] sm:$0x1]
    %v3884 = vsel %vm3825, 0, %v3883
    %3885 = vst [vmem:[%s3724 + $0x104] sm:$0x1] %v3884
    %v3886 = vld [vmem:[%s3724 + $0x110] sm:$0x1]
    %v3887 = vsel %vm3825, 0, %v3886
    %3888 = vst [vmem:[%s3724 + $0x110] sm:$0x1] %v3887
    %v3889 = vld [vmem:[%s3724 + $0x11c] sm:$0x1]
    %v3890 = vsel %vm3825, 0, %v3889
    %3891 = vst [vmem:[%s3724 + $0x11c] sm:$0x1] %v3890
    %v3892 = vld [vmem:[%s3724 + $0x128] sm:$0x1]
    %v3893 = vsel %vm3825, 0, %v3892
    %3894 = vst [vmem:[%s3724 + $0x128] sm:$0x1] %v3893
    %v3895 = vld [vmem:[%s3724 + $0x134] sm:$0x1]
    %v3896 = vsel %vm3825, 0, %v3895
    %3897 = vst [vmem:[%s3724 + $0x134] sm:$0x1] %v3896
    %v3898 = vld [vmem:[%s3724 + $0x140] sm:$0x1]
    %v3899 = vsel %vm3825, 0, %v3898
    %3900 = vst [vmem:[%s3724 + $0x140] sm:$0x1] %v3899
    %v3901 = vld [vmem:[%s3724 + $0x14c] sm:$0x1]
    %v3902 = vsel %vm3825, 0, %v3901
    %3903 = vst [vmem:[%s3724 + $0x14c] sm:$0x1] %v3902
    %v3904 = vld [vmem:[%s3724 + $0x158] sm:$0x1]
    %v3905 = vsel %vm3825, 0, %v3904
    %3906 = vst [vmem:[%s3724 + $0x158] sm:$0x1] %v3905
    %v3907 = vld [vmem:[%s3724 + $0x164] sm:$0x1]
    %v3908 = vsel %vm3825, 0, %v3907
    %3909 = vst [vmem:[%s3724 + $0x164] sm:$0x1] %v3908
    %v3910 = vld [vmem:[%s3724 + $0x170] sm:$0x1]
    %v3911 = vsel %vm3825, 0, %v3910
    %3912 = vst [vmem:[%s3724 + $0x170] sm:$0x1] %v3911
    %v3913 = vld [vmem:[%s3724 + $0x17c] sm:$0x1]
    %v3914 = vsel %vm3825, 0, %v3913
    %3915 = vst [vmem:[%s3724 + $0x17c] sm:$0x1] %v3914
    %v3916 = vld [vmem:[%s3724 + $0x188] sm:$0x1]
    %v3917 = vsel %vm3825, 0, %v3916
    %3918 = vst [vmem:[%s3724 + $0x188] sm:$0x1] %v3917
    %v3919 = vld [vmem:[%s3724 + $0x194] sm:$0x1]
    %v3920 = vsel %vm3825, 0, %v3919
    %3921 = vst [vmem:[%s3724 + $0x194] sm:$0x1] %v3920
    %v3922 = vpack.c.bf16 %v3648, %v3647
    %v3923 = vpack.c.bf16 %v3650, %v3649
    %v3924 = vpack.c.bf16 %v3652, %v3651
    %v3925 = vpack.c.bf16 %v3654, %v3653
    %v3926 = vpack.c.bf16 %v3656, %v3655
    %v3927 = vpack.c.bf16 %v3658, %v3657
    %v3928 = vpack.c.bf16 %v3660, %v3659
    %v3929 = vpack.c.bf16 %v3662, %v3661
    %v3930 = vpack.c.bf16 %v3664, %v3663
    %v3931 = vpack.c.bf16 %v3666, %v3665
    %v3932 = vpack.c.bf16 %v3668, %v3667
    %v3933 = vpack.c.bf16 %v3670, %v3669
    %v3934 = vpack.c.bf16 %v3672, %v3671
    %v3935 = vpack.c.bf16 %v3674, %v3673
    %v3936 = vpack.c.bf16 %v3676, %v3675
    %v3937 = vpack.c.bf16 %v3678, %v3677
    %v3938 = vpack.c.bf16 %v3680, %v3679
    %v3939 = vpack.c.bf16 %v3682, %v3681
    %v3940 = vpack.c.bf16 %v3684, %v3683
    %v3941 = vpack.c.bf16 %v3686, %v3685
    %v3942 = vpack.c.bf16 %v3688, %v3687
    %v3943 = vpack.c.bf16 %v3690, %v3689
    %v3944 = vpack.c.bf16 %v3692, %v3691
    %v3945 = vpack.c.bf16 %v3694, %v3693
    %v3946 = vpack.c.bf16 %v3696, %v3695
    %v3947 = vpack.c.bf16 %v3698, %v3697
    %v3948 = vpack.c.bf16 %v3700, %v3699
    %v3949 = vpack.c.bf16 %v3702, %v3701
    %v3950 = vpack.c.bf16 %v3704, %v3703
    %v3951 = vpack.c.bf16 %v3706, %v3705
    %v3952 = vpack.c.bf16 %v3708, %v3707
    %v3953 = vpack.c.bf16 %v3710, %v3709
    %v3986 = vunpack.c.l.b16 %v3922
    %v3987 = vunpack.c.h.b16 %v3922
    %v3988 = vunpack.c.l.b16 %v3923
    %v3989 = vunpack.c.h.b16 %v3923
    %v3990 = vunpack.c.l.b16 %v3924
    %v3991 = vunpack.c.h.b16 %v3924
    %v3992 = vunpack.c.l.b16 %v3925
    %v3993 = vunpack.c.h.b16 %v3925
    %v3994 = vunpack.c.l.b16 %v3926
    %v3995 = vunpack.c.h.b16 %v3926
    %v3996 = vunpack.c.l.b16 %v3927
    %v3997 = vunpack.c.h.b16 %v3927
    %v3998 = vunpack.c.l.b16 %v3928
    %v3999 = vunpack.c.h.b16 %v3928
    %v4000 = vunpack.c.l.b16 %v3929
    %v4001 = vunpack.c.h.b16 %v3929
    %v4002 = vunpack.c.l.b16 %v3930
    %v4003 = vunpack.c.h.b16 %v3930
    %v4004 = vunpack.c.l.b16 %v3931
    %v4005 = vunpack.c.h.b16 %v3931
    %v4006 = vunpack.c.l.b16 %v3932
    %v4007 = vunpack.c.h.b16 %v3932
    %v4008 = vunpack.c.l.b16 %v3933
    %v4009 = vunpack.c.h.b16 %v3933
    %v4010 = vunpack.c.l.b16 %v3934
    %v4011 = vunpack.c.h.b16 %v3934
    %v4012 = vunpack.c.l.b16 %v3935
    %v4013 = vunpack.c.h.b16 %v3935
    %v4014 = vunpack.c.l.b16 %v3936
    %v4015 = vunpack.c.h.b16 %v3936
    %v4016 = vunpack.c.l.b16 %v3937
    %v4017 = vunpack.c.h.b16 %v3937
    %v4018 = vunpack.c.l.b16 %v3938
    %v4019 = vunpack.c.h.b16 %v3938
    %v4020 = vunpack.c.l.b16 %v3939
    %v4021 = vunpack.c.h.b16 %v3939
    %v4022 = vunpack.c.l.b16 %v3940
    %v4023 = vunpack.c.h.b16 %v3940
    %v4024 = vunpack.c.l.b16 %v3941
    %v4025 = vunpack.c.h.b16 %v3941
    %v4026 = vunpack.c.l.b16 %v3942
    %v4027 = vunpack.c.h.b16 %v3942
    %v4028 = vunpack.c.l.b16 %v3943
    %v4029 = vunpack.c.h.b16 %v3943
    %v4030 = vunpack.c.l.b16 %v3944
    %v4031 = vunpack.c.h.b16 %v3944
    %v4032 = vunpack.c.l.b16 %v3945
    %v4033 = vunpack.c.h.b16 %v3945
    %v4034 = vunpack.c.l.b16 %v3946
    %v4035 = vunpack.c.h.b16 %v3946
    %v4036 = vunpack.c.l.b16 %v3947
    %v4037 = vunpack.c.h.b16 %v3947
    %v4038 = vunpack.c.l.b16 %v3948
    %v4039 = vunpack.c.h.b16 %v3948
    %v4040 = vunpack.c.l.b16 %v3949
    %v4041 = vunpack.c.h.b16 %v3949
    %v4042 = vunpack.c.l.b16 %v3950
    %v4043 = vunpack.c.h.b16 %v3950
    %v4044 = vunpack.c.l.b16 %v3951
    %v4045 = vunpack.c.h.b16 %v3951
    %v4046 = vunpack.c.l.b16 %v3952
    %v4047 = vunpack.c.h.b16 %v3952
    %v4048 = vunpack.c.l.b16 %v3953
    %v4049 = vunpack.c.h.b16 %v3953
    %v4050 = vpack.c.b16 %v3986, %v3986
    %v4051 = vpack.c.b16 %v3987, %v3987
    %v4052 = vpack.c.b16 %v3988, %v3988
    %v4053 = vpack.c.b16 %v3989, %v3989
    %v4054 = vpack.c.b16 %v3990, %v3990
    %v4055 = vpack.c.b16 %v3991, %v3991
    %v4056 = vpack.c.b16 %v3992, %v3992
    %v4057 = vpack.c.b16 %v3993, %v3993
    %v4058 = vpack.c.b16 %v3994, %v3994
    %v4059 = vpack.c.b16 %v3995, %v3995
    %v4060 = vpack.c.b16 %v3996, %v3996
    %v4061 = vpack.c.b16 %v3997, %v3997
    %v4062 = vpack.c.b16 %v3998, %v3998
    %v4063 = vpack.c.b16 %v3999, %v3999
    %v4064 = vpack.c.b16 %v4000, %v4000
    %v4065 = vpack.c.b16 %v4001, %v4001
    %v4066 = vpack.c.b16 %v4002, %v4002
    %v4067 = vpack.c.b16 %v4003, %v4003
    %v4068 = vpack.c.b16 %v4004, %v4004
    %v4069 = vpack.c.b16 %v4005, %v4005
    %v4070 = vpack.c.b16 %v4006, %v4006
    %v4071 = vpack.c.b16 %v4007, %v4007
    %v4072 = vpack.c.b16 %v4008, %v4008
    %v4073 = vpack.c.b16 %v4009, %v4009
    %v4074 = vpack.c.b16 %v4010, %v4010
    %v4075 = vpack.c.b16 %v4011, %v4011
    %v4076 = vpack.c.b16 %v4012, %v4012
    %v4077 = vpack.c.b16 %v4013, %v4013
    %v4078 = vpack.c.b16 %v4014, %v4014
    %v4079 = vpack.c.b16 %v4015, %v4015
    %v4080 = vpack.c.b16 %v4016, %v4016
    %v4081 = vpack.c.b16 %v4017, %v4017
    %v4082 = vpack.c.b16 %v4018, %v4018
    %v4083 = vpack.c.b16 %v4019, %v4019
    %v4084 = vpack.c.b16 %v4020, %v4020
    %v4085 = vpack.c.b16 %v4021, %v4021
    %v4086 = vpack.c.b16 %v4022, %v4022
    %v4087 = vpack.c.b16 %v4023, %v4023
    %v4088 = vpack.c.b16 %v4024, %v4024
    %v4089 = vpack.c.b16 %v4025, %v4025
    %v4090 = vpack.c.b16 %v4026, %v4026
    %v4091 = vpack.c.b16 %v4027, %v4027
    %v4092 = vpack.c.b16 %v4028, %v4028
    %v4093 = vpack.c.b16 %v4029, %v4029
    %v4094 = vpack.c.b16 %v4030, %v4030
    %v4095 = vpack.c.b16 %v4031, %v4031
    %v4096 = vpack.c.b16 %v4032, %v4032
    %v4097 = vpack.c.b16 %v4033, %v4033
    %v4098 = vpack.c.b16 %v4034, %v4034
    %v4099 = vpack.c.b16 %v4035, %v4035
    %v4100 = vpack.c.b16 %v4036, %v4036
    %v4101 = vpack.c.b16 %v4037, %v4037
    %v4102 = vpack.c.b16 %v4038, %v4038
    %v4103 = vpack.c.b16 %v4039, %v4039
    %v4104 = vpack.c.b16 %v4040, %v4040
    %v4105 = vpack.c.b16 %v4041, %v4041
    %v4106 = vpack.c.b16 %v4042, %v4042
    %v4107 = vpack.c.b16 %v4043, %v4043
    %v4108 = vpack.c.b16 %v4044, %v4044
    %v4109 = vpack.c.b16 %v4045, %v4045
    %v4110 = vpack.c.b16 %v4046, %v4046
    %v4111 = vpack.c.b16 %v4047, %v4047
    %v4112 = vpack.c.b16 %v4048, %v4048
    %v4113 = vpack.c.b16 %v4049, %v4049
    %vm4114 = vsmask.f32 4368
    %vm4115 = vmor %vm3726, %vm4114
    %v4117 = vshrl.u32 %v4050, 16
    %v4119 = vrot.slane %v4117, 7
    %v4120 = vshll.u32 %v4050, 16
    %v4122 = vor.u32 %v4119, %v4120
    %v4123 = vrot.slane %v4119, 4
    %v4125 = vshrl.u32 %v4051, 16
    %v4127 = vrot.slane %v4125, 7
    %v4128 = vshll.u32 %v4051, 16
    %v4130 = vor.u32 %v4127, %v4128
    %v4131 = vsel %vm4115, %v4123, %v4130
    %v4132 = vrot.slane %v4127, 4
    %v4134 = vshrl.u32 %v4052, 16
    %v4136 = vrot.slane %v4134, 7
    %v4137 = vshll.u32 %v4052, 16
    %v4139 = vor.u32 %v4136, %v4137
    %v4140 = vrot.slane %v4136, 4
    %v4142 = vshrl.u32 %v4053, 16
    %v4144 = vrot.slane %v4142, 7
    %v4145 = vshll.u32 %v4053, 16
    %v4147 = vor.u32 %v4144, %v4145
    %v4148 = vsel %vm4115, %v4140, %v4147
    %v4149 = vrot.slane %v4144, 4
    %v4151 = vshrl.u32 %v4054, 16
    %v4153 = vrot.slane %v4151, 7
    %v4154 = vshll.u32 %v4054, 16
    %v4156 = vor.u32 %v4153, %v4154
    %v4157 = vrot.slane %v4153, 4
    %v4159 = vshrl.u32 %v4055, 16
    %v4161 = vrot.slane %v4159, 7
    %v4162 = vshll.u32 %v4055, 16
    %v4164 = vor.u32 %v4161, %v4162
    %v4165 = vsel %vm4115, %v4157, %v4164
    %v4166 = vrot.slane %v4161, 4
    %v4168 = vshrl.u32 %v4056, 16
    %v4170 = vrot.slane %v4168, 7
    %v4171 = vshll.u32 %v4056, 16
    %v4173 = vor.u32 %v4170, %v4171
    %v4174 = vrot.slane %v4170, 4
    %v4176 = vshrl.u32 %v4057, 16
    %v4178 = vrot.slane %v4176, 7
    %v4179 = vshll.u32 %v4057, 16
    %v4181 = vor.u32 %v4178, %v4179
    %v4182 = vsel %vm4115, %v4174, %v4181
    %v4183 = vrot.slane %v4178, 4
    %v4185 = vshrl.u32 %v4058, 16
    %v4187 = vrot.slane %v4185, 7
    %v4188 = vshll.u32 %v4058, 16
    %v4190 = vor.u32 %v4187, %v4188
    %v4191 = vrot.slane %v4187, 4
    %v4193 = vshrl.u32 %v4059, 16
    %v4195 = vrot.slane %v4193, 7
    %v4196 = vshll.u32 %v4059, 16
    %v4198 = vor.u32 %v4195, %v4196
    %v4199 = vsel %vm4115, %v4191, %v4198
    %v4200 = vrot.slane %v4195, 4
    %v4202 = vshrl.u32 %v4060, 16
    %v4204 = vrot.slane %v4202, 7
    %v4205 = vshll.u32 %v4060, 16
    %v4207 = vor.u32 %v4204, %v4205
    %v4208 = vrot.slane %v4204, 4
    %v4210 = vshrl.u32 %v4061, 16
    %v4212 = vrot.slane %v4210, 7
    %v4213 = vshll.u32 %v4061, 16
    %v4215 = vor.u32 %v4212, %v4213
    %v4216 = vsel %vm4115, %v4208, %v4215
    %v4217 = vrot.slane %v4212, 4
    %v4219 = vshrl.u32 %v4062, 16
    %v4221 = vrot.slane %v4219, 7
    %v4222 = vshll.u32 %v4062, 16
    %v4224 = vor.u32 %v4221, %v4222
    %v4225 = vrot.slane %v4221, 4
    %v4227 = vshrl.u32 %v4063, 16
    %v4229 = vrot.slane %v4227, 7
    %v4230 = vshll.u32 %v4063, 16
    %v4232 = vor.u32 %v4229, %v4230
    %v4233 = vsel %vm4115, %v4225, %v4232
    %v4234 = vrot.slane %v4229, 4
    %v4236 = vshrl.u32 %v4064, 16
    %v4238 = vrot.slane %v4236, 7
    %v4239 = vshll.u32 %v4064, 16
    %v4241 = vor.u32 %v4238, %v4239
    %v4242 = vrot.slane %v4238, 4
    %v4244 = vshrl.u32 %v4065, 16
    %v4246 = vrot.slane %v4244, 7
    %v4247 = vshll.u32 %v4065, 16
    %v4249 = vor.u32 %v4246, %v4247
    %v4250 = vsel %vm4115, %v4242, %v4249
    %v4251 = vrot.slane %v4246, 4
    %v4253 = vshrl.u32 %v4066, 16
    %v4255 = vrot.slane %v4253, 7
    %v4256 = vshll.u32 %v4066, 16
    %v4258 = vor.u32 %v4255, %v4256
    %v4259 = vrot.slane %v4255, 4
    %v4261 = vshrl.u32 %v4067, 16
    %v4263 = vrot.slane %v4261, 7
    %v4264 = vshll.u32 %v4067, 16
    %v4266 = vor.u32 %v4263, %v4264
    %v4267 = vsel %vm4115, %v4259, %v4266
    %v4268 = vrot.slane %v4263, 4
    %v4270 = vshrl.u32 %v4068, 16
    %v4272 = vrot.slane %v4270, 7
    %v4273 = vshll.u32 %v4068, 16
    %v4275 = vor.u32 %v4272, %v4273
    %v4276 = vrot.slane %v4272, 4
    %v4278 = vshrl.u32 %v4069, 16
    %v4280 = vrot.slane %v4278, 7
    %v4281 = vshll.u32 %v4069, 16
    %v4283 = vor.u32 %v4280, %v4281
    %v4284 = vsel %vm4115, %v4276, %v4283
    %v4285 = vrot.slane %v4280, 4
    %v4287 = vshrl.u32 %v4070, 16
    %v4289 = vrot.slane %v4287, 7
    %v4290 = vshll.u32 %v4070, 16
    %v4292 = vor.u32 %v4289, %v4290
    %v4293 = vrot.slane %v4289, 4
    %v4295 = vshrl.u32 %v4071, 16
    %v4297 = vrot.slane %v4295, 7
    %v4298 = vshll.u32 %v4071, 16
    %v4300 = vor.u32 %v4297, %v4298
    %v4301 = vsel %vm4115, %v4293, %v4300
    %v4302 = vrot.slane %v4297, 4
    %v4304 = vshrl.u32 %v4072, 16
    %v4306 = vrot.slane %v4304, 7
    %v4307 = vshll.u32 %v4072, 16
    %v4309 = vor.u32 %v4306, %v4307
    %v4310 = vrot.slane %v4306, 4
    %v4312 = vshrl.u32 %v4073, 16
    %v4314 = vrot.slane %v4312, 7
    %v4315 = vshll.u32 %v4073, 16
    %v4317 = vor.u32 %v4314, %v4315
    %v4318 = vsel %vm4115, %v4310, %v4317
    %v4319 = vrot.slane %v4314, 4
    %v4321 = vshrl.u32 %v4074, 16
    %v4323 = vrot.slane %v4321, 7
    %v4324 = vshll.u32 %v4074, 16
    %v4326 = vor.u32 %v4323, %v4324
    %v4327 = vrot.slane %v4323, 4
    %v4329 = vshrl.u32 %v4075, 16
    %v4331 = vrot.slane %v4329, 7
    %v4332 = vshll.u32 %v4075, 16
    %v4334 = vor.u32 %v4331, %v4332
    %v4335 = vsel %vm4115, %v4327, %v4334
    %v4336 = vrot.slane %v4331, 4
    %v4338 = vshrl.u32 %v4076, 16
    %v4340 = vrot.slane %v4338, 7
    %v4341 = vshll.u32 %v4076, 16
    %v4343 = vor.u32 %v4340, %v4341
    %v4344 = vrot.slane %v4340, 4
    %v4346 = vshrl.u32 %v4077, 16
    %v4348 = vrot.slane %v4346, 7
    %v4349 = vshll.u32 %v4077, 16
    %v4351 = vor.u32 %v4348, %v4349
    %v4352 = vsel %vm4115, %v4344, %v4351
    %v4353 = vrot.slane %v4348, 4
    %v4355 = vshrl.u32 %v4078, 16
    %v4357 = vrot.slane %v4355, 7
    %v4358 = vshll.u32 %v4078, 16
    %v4360 = vor.u32 %v4357, %v4358
    %v4361 = vrot.slane %v4357, 4
    %v4363 = vshrl.u32 %v4079, 16
    %v4365 = vrot.slane %v4363, 7
    %v4366 = vshll.u32 %v4079, 16
    %v4368 = vor.u32 %v4365, %v4366
    %v4369 = vsel %vm4115, %v4361, %v4368
    %v4370 = vrot.slane %v4365, 4
    %v4372 = vshrl.u32 %v4080, 16
    %v4374 = vrot.slane %v4372, 7
    %v4375 = vshll.u32 %v4080, 16
    %v4377 = vor.u32 %v4374, %v4375
    %v4378 = vrot.slane %v4374, 4
    %v4380 = vshrl.u32 %v4081, 16
    %v4382 = vrot.slane %v4380, 7
    %v4383 = vshll.u32 %v4081, 16
    %v4385 = vor.u32 %v4382, %v4383
    %v4386 = vsel %vm4115, %v4378, %v4385
    %v4387 = vrot.slane %v4382, 4
    %v4389 = vshrl.u32 %v4082, 16
    %v4391 = vrot.slane %v4389, 7
    %v4392 = vshll.u32 %v4082, 16
    %v4394 = vor.u32 %v4391, %v4392
    %v4395 = vrot.slane %v4391, 4
    %v4397 = vshrl.u32 %v4083, 16
    %v4399 = vrot.slane %v4397, 7
    %v4400 = vshll.u32 %v4083, 16
    %v4402 = vor.u32 %v4399, %v4400
    %v4403 = vsel %vm4115, %v4395, %v4402
    %v4404 = vrot.slane %v4399, 4
    %v4406 = vshrl.u32 %v4084, 16
    %v4408 = vrot.slane %v4406, 7
    %v4409 = vshll.u32 %v4084, 16
    %v4411 = vor.u32 %v4408, %v4409
    %v4412 = vrot.slane %v4408, 4
    %v4414 = vshrl.u32 %v4085, 16
    %v4416 = vrot.slane %v4414, 7
    %v4417 = vshll.u32 %v4085, 16
    %v4419 = vor.u32 %v4416, %v4417
    %v4420 = vsel %vm4115, %v4412, %v4419
    %v4421 = vrot.slane %v4416, 4
    %v4423 = vshrl.u32 %v4086, 16
    %v4425 = vrot.slane %v4423, 7
    %v4426 = vshll.u32 %v4086, 16
    %v4428 = vor.u32 %v4425, %v4426
    %v4429 = vrot.slane %v4425, 4
    %v4431 = vshrl.u32 %v4087, 16
    %v4433 = vrot.slane %v4431, 7
    %v4434 = vshll.u32 %v4087, 16
    %v4436 = vor.u32 %v4433, %v4434
    %v4437 = vsel %vm4115, %v4429, %v4436
    %v4438 = vrot.slane %v4433, 4
    %v4440 = vshrl.u32 %v4088, 16
    %v4442 = vrot.slane %v4440, 7
    %v4443 = vshll.u32 %v4088, 16
    %v4445 = vor.u32 %v4442, %v4443
    %v4446 = vrot.slane %v4442, 4
    %v4448 = vshrl.u32 %v4089, 16
    %v4450 = vrot.slane %v4448, 7
    %v4451 = vshll.u32 %v4089, 16
    %v4453 = vor.u32 %v4450, %v4451
    %v4454 = vsel %vm4115, %v4446, %v4453
    %v4455 = vrot.slane %v4450, 4
    %v4457 = vshrl.u32 %v4090, 16
    %v4459 = vrot.slane %v4457, 7
    %v4460 = vshll.u32 %v4090, 16
    %v4462 = vor.u32 %v4459, %v4460
    %v4463 = vrot.slane %v4459, 4
    %v4465 = vshrl.u32 %v4091, 16
    %v4467 = vrot.slane %v4465, 7
    %v4468 = vshll.u32 %v4091, 16
    %v4470 = vor.u32 %v4467, %v4468
    %v4471 = vsel %vm4115, %v4463, %v4470
    %v4472 = vrot.slane %v4467, 4
    %v4474 = vshrl.u32 %v4092, 16
    %v4476 = vrot.slane %v4474, 7
    %v4477 = vshll.u32 %v4092, 16
    %v4479 = vor.u32 %v4476, %v4477
    %v4480 = vrot.slane %v4476, 4
    %v4482 = vshrl.u32 %v4093, 16
    %v4484 = vrot.slane %v4482, 7
    %v4485 = vshll.u32 %v4093, 16
    %v4487 = vor.u32 %v4484, %v4485
    %v4488 = vsel %vm4115, %v4480, %v4487
    %v4489 = vrot.slane %v4484, 4
    %v4491 = vshrl.u32 %v4094, 16
    %v4493 = vrot.slane %v4491, 7
    %v4494 = vshll.u32 %v4094, 16
    %v4496 = vor.u32 %v4493, %v4494
    %v4497 = vrot.slane %v4493, 4
    %v4499 = vshrl.u32 %v4095, 16
    %v4501 = vrot.slane %v4499, 7
    %v4502 = vshll.u32 %v4095, 16
    %v4504 = vor.u32 %v4501, %v4502
    %v4505 = vsel %vm4115, %v4497, %v4504
    %v4506 = vrot.slane %v4501, 4
    %v4508 = vshrl.u32 %v4096, 16
    %v4510 = vrot.slane %v4508, 7
    %v4511 = vshll.u32 %v4096, 16
    %v4513 = vor.u32 %v4510, %v4511
    %v4514 = vrot.slane %v4510, 4
    %v4516 = vshrl.u32 %v4097, 16
    %v4518 = vrot.slane %v4516, 7
    %v4519 = vshll.u32 %v4097, 16
    %v4521 = vor.u32 %v4518, %v4519
    %v4522 = vsel %vm4115, %v4514, %v4521
    %v4523 = vrot.slane %v4518, 4
    %v4525 = vshrl.u32 %v4098, 16
    %v4527 = vrot.slane %v4525, 7
    %v4528 = vshll.u32 %v4098, 16
    %v4530 = vor.u32 %v4527, %v4528
    %v4531 = vrot.slane %v4527, 4
    %v4533 = vshrl.u32 %v4099, 16
    %v4535 = vrot.slane %v4533, 7
    %v4536 = vshll.u32 %v4099, 16
    %v4538 = vor.u32 %v4535, %v4536
    %v4539 = vsel %vm4115, %v4531, %v4538
    %v4540 = vrot.slane %v4535, 4
    %v4542 = vshrl.u32 %v4100, 16
    %v4544 = vrot.slane %v4542, 7
    %v4545 = vshll.u32 %v4100, 16
    %v4547 = vor.u32 %v4544, %v4545
    %v4548 = vrot.slane %v4544, 4
    %v4550 = vshrl.u32 %v4101, 16
    %v4552 = vrot.slane %v4550, 7
    %v4553 = vshll.u32 %v4101, 16
    %v4555 = vor.u32 %v4552, %v4553
    %v4556 = vsel %vm4115, %v4548, %v4555
    %v4557 = vrot.slane %v4552, 4
    %v4559 = vshrl.u32 %v4102, 16
    %v4561 = vrot.slane %v4559, 7
    %v4562 = vshll.u32 %v4102, 16
    %v4564 = vor.u32 %v4561, %v4562
    %v4565 = vrot.slane %v4561, 4
    %v4567 = vshrl.u32 %v4103, 16
    %v4569 = vrot.slane %v4567, 7
    %v4570 = vshll.u32 %v4103, 16
    %v4572 = vor.u32 %v4569, %v4570
    %v4573 = vsel %vm4115, %v4565, %v4572
    %v4574 = vrot.slane %v4569, 4
    %v4576 = vshrl.u32 %v4104, 16
    %v4578 = vrot.slane %v4576, 7
    %v4579 = vshll.u32 %v4104, 16
    %v4581 = vor.u32 %v4578, %v4579
    %v4582 = vrot.slane %v4578, 4
    %v4584 = vshrl.u32 %v4105, 16
    %v4586 = vrot.slane %v4584, 7
    %v4587 = vshll.u32 %v4105, 16
    %v4589 = vor.u32 %v4586, %v4587
    %v4590 = vsel %vm4115, %v4582, %v4589
    %v4591 = vrot.slane %v4586, 4
    %v4593 = vshrl.u32 %v4106, 16
    %v4595 = vrot.slane %v4593, 7
    %v4596 = vshll.u32 %v4106, 16
    %v4598 = vor.u32 %v4595, %v4596
    %v4599 = vrot.slane %v4595, 4
    %v4601 = vshrl.u32 %v4107, 16
    %v4603 = vrot.slane %v4601, 7
    %v4604 = vshll.u32 %v4107, 16
    %v4606 = vor.u32 %v4603, %v4604
    %v4607 = vsel %vm4115, %v4599, %v4606
    %v4608 = vrot.slane %v4603, 4
    %v4610 = vshrl.u32 %v4108, 16
    %v4612 = vrot.slane %v4610, 7
    %v4613 = vshll.u32 %v4108, 16
    %v4615 = vor.u32 %v4612, %v4613
    %v4616 = vrot.slane %v4612, 4
    %v4618 = vshrl.u32 %v4109, 16
    %v4620 = vrot.slane %v4618, 7
    %v4621 = vshll.u32 %v4109, 16
    %v4623 = vor.u32 %v4620, %v4621
    %v4624 = vsel %vm4115, %v4616, %v4623
    %v4625 = vrot.slane %v4620, 4
    %v4627 = vshrl.u32 %v4110, 16
    %v4629 = vrot.slane %v4627, 7
    %v4630 = vshll.u32 %v4110, 16
    %v4632 = vor.u32 %v4629, %v4630
    %v4633 = vrot.slane %v4629, 4
    %v4635 = vshrl.u32 %v4111, 16
    %v4637 = vrot.slane %v4635, 7
    %v4638 = vshll.u32 %v4111, 16
    %v4640 = vor.u32 %v4637, %v4638
    %v4641 = vsel %vm4115, %v4633, %v4640
    %v4642 = vrot.slane %v4637, 4
    %v4644 = vshrl.u32 %v4112, 16
    %v4646 = vrot.slane %v4644, 7
    %v4647 = vshll.u32 %v4112, 16
    %v4649 = vor.u32 %v4646, %v4647
    %v4650 = vrot.slane %v4646, 4
    %v4652 = vshrl.u32 %v4113, 16
    %v4654 = vrot.slane %v4652, 7
    %v4655 = vshll.u32 %v4113, 16
    %v4657 = vor.u32 %v4654, %v4655
    %v4658 = vsel %vm4115, %v4650, %v4657
    %v4659 = vrot.slane %v4654, 4
    %vm4756 = vcmask 1043456
    %vm4757 = vmand %vm4756, %vm3824
    %v4758 = vld [vmem:[%s3724] sm:$0xf]
    %v4759 = vsel %vm4757, %v4122, %v4758
    %4760 = vst [vmem:[%s3724] sm:$0xf] %v4759
    %4761 = vst [vmem:[%s3724 + $0x4] sm:$0xf] %v4131
    %v4762 = vld [vmem:[%s3724 + $0x8] sm:$0x1]
    %v4763 = vsel %vm3727, %v4132, %v4762
    %4764 = vst [vmem:[%s3724 + $0x8] sm:$0x1] %v4763
    %v4765 = vld [vmem:[%s3724 + $0xc] sm:$0xf]
    %v4766 = vsel %vm4757, %v4139, %v4765
    %4767 = vst [vmem:[%s3724 + $0xc] sm:$0xf] %v4766
    %4768 = vst [vmem:[%s3724 + $0x10] sm:$0xf] %v4148
    %v4769 = vld [vmem:[%s3724 + $0x14] sm:$0x1]
    %v4770 = vsel %vm3727, %v4149, %v4769
    %4771 = vst [vmem:[%s3724 + $0x14] sm:$0x1] %v4770
    %v4772 = vld [vmem:[%s3724 + $0x18] sm:$0xf]
    %v4773 = vsel %vm4757, %v4156, %v4772
    %4774 = vst [vmem:[%s3724 + $0x18] sm:$0xf] %v4773
    %4775 = vst [vmem:[%s3724 + $0x1c] sm:$0xf] %v4165
    %v4776 = vld [vmem:[%s3724 + $0x20] sm:$0x1]
    %v4777 = vsel %vm3727, %v4166, %v4776
    %4778 = vst [vmem:[%s3724 + $0x20] sm:$0x1] %v4777
    %v4779 = vld [vmem:[%s3724 + $0x24] sm:$0xf]
    %v4780 = vsel %vm4757, %v4173, %v4779
    %4781 = vst [vmem:[%s3724 + $0x24] sm:$0xf] %v4780
    %4782 = vst [vmem:[%s3724 + $0x28] sm:$0xf] %v4182
    %v4783 = vld [vmem:[%s3724 + $0x2c] sm:$0x1]
    %v4784 = vsel %vm3727, %v4183, %v4783
    %4785 = vst [vmem:[%s3724 + $0x2c] sm:$0x1] %v4784
    %v4786 = vld [vmem:[%s3724 + $0x30] sm:$0xf]
    %v4787 = vsel %vm4757, %v4190, %v4786
    %4788 = vst [vmem:[%s3724 + $0x30] sm:$0xf] %v4787
    %4789 = vst [vmem:[%s3724 + $0x34] sm:$0xf] %v4199
    %v4790 = vld [vmem:[%s3724 + $0x38] sm:$0x1]
    %v4791 = vsel %vm3727, %v4200, %v4790
    %4792 = vst [vmem:[%s3724 + $0x38] sm:$0x1] %v4791
    %v4793 = vld [vmem:[%s3724 + $0x3c] sm:$0xf]
    %v4794 = vsel %vm4757, %v4207, %v4793
    %4795 = vst [vmem:[%s3724 + $0x3c] sm:$0xf] %v4794
    %4796 = vst [vmem:[%s3724 + $0x40] sm:$0xf] %v4216
    %v4797 = vld [vmem:[%s3724 + $0x44] sm:$0x1]
    %v4798 = vsel %vm3727, %v4217, %v4797
    %4799 = vst [vmem:[%s3724 + $0x44] sm:$0x1] %v4798
    %v4800 = vld [vmem:[%s3724 + $0x48] sm:$0xf]
    %v4801 = vsel %vm4757, %v4224, %v4800
    %4802 = vst [vmem:[%s3724 + $0x48] sm:$0xf] %v4801
    %4803 = vst [vmem:[%s3724 + $0x4c] sm:$0xf] %v4233
    %v4804 = vld [vmem:[%s3724 + $0x50] sm:$0x1]
    %v4805 = vsel %vm3727, %v4234, %v4804
    %4806 = vst [vmem:[%s3724 + $0x50] sm:$0x1] %v4805
    %v4807 = vld [vmem:[%s3724 + $0x54] sm:$0xf]
    %v4808 = vsel %vm4757, %v4241, %v4807
    %4809 = vst [vmem:[%s3724 + $0x54] sm:$0xf] %v4808
    %4810 = vst [vmem:[%s3724 + $0x58] sm:$0xf] %v4250
    %v4811 = vld [vmem:[%s3724 + $0x5c] sm:$0x1]
    %v4812 = vsel %vm3727, %v4251, %v4811
    %4813 = vst [vmem:[%s3724 + $0x5c] sm:$0x1] %v4812
    %v4814 = vld [vmem:[%s3724 + $0x60] sm:$0xf]
    %v4815 = vsel %vm4757, %v4258, %v4814
    %4816 = vst [vmem:[%s3724 + $0x60] sm:$0xf] %v4815
    %4817 = vst [vmem:[%s3724 + $0x64] sm:$0xf] %v4267
    %v4818 = vld [vmem:[%s3724 + $0x68] sm:$0x1]
    %v4819 = vsel %vm3727, %v4268, %v4818
    %4820 = vst [vmem:[%s3724 + $0x68] sm:$0x1] %v4819
    %v4821 = vld [vmem:[%s3724 + $0x6c] sm:$0xf]
    %v4822 = vsel %vm4757, %v4275, %v4821
    %4823 = vst [vmem:[%s3724 + $0x6c] sm:$0xf] %v4822
    %4824 = vst [vmem:[%s3724 + $0x70] sm:$0xf] %v4284
    %v4825 = vld [vmem:[%s3724 + $0x74] sm:$0x1]
    %v4826 = vsel %vm3727, %v4285, %v4825
    %4827 = vst [vmem:[%s3724 + $0x74] sm:$0x1] %v4826
    %v4828 = vld [vmem:[%s3724 + $0x78] sm:$0xf]
    %v4829 = vsel %vm4757, %v4292, %v4828
    %4830 = vst [vmem:[%s3724 + $0x78] sm:$0xf] %v4829
    %4831 = vst [vmem:[%s3724 + $0x7c] sm:$0xf] %v4301
    %v4832 = vld [vmem:[%s3724 + $0x80] sm:$0x1]
    %v4833 = vsel %vm3727, %v4302, %v4832
    %4834 = vst [vmem:[%s3724 + $0x80] sm:$0x1] %v4833
    %v4835 = vld [vmem:[%s3724 + $0x84] sm:$0xf]
    %v4836 = vsel %vm4757, %v4309, %v4835
    %4837 = vst [vmem:[%s3724 + $0x84] sm:$0xf] %v4836
    %4838 = vst [vmem:[%s3724 + $0x88] sm:$0xf] %v4318
    %v4839 = vld [vmem:[%s3724 + $0x8c] sm:$0x1]
    %v4840 = vsel %vm3727, %v4319, %v4839
    %4841 = vst [vmem:[%s3724 + $0x8c] sm:$0x1] %v4840
    %v4842 = vld [vmem:[%s3724 + $0x90] sm:$0xf]
    %v4843 = vsel %vm4757, %v4326, %v4842
    %4844 = vst [vmem:[%s3724 + $0x90] sm:$0xf] %v4843
    %4845 = vst [vmem:[%s3724 + $0x94] sm:$0xf] %v4335
    %v4846 = vld [vmem:[%s3724 + $0x98] sm:$0x1]
    %v4847 = vsel %vm3727, %v4336, %v4846
    %4848 = vst [vmem:[%s3724 + $0x98] sm:$0x1] %v4847
    %v4849 = vld [vmem:[%s3724 + $0x9c] sm:$0xf]
    %v4850 = vsel %vm4757, %v4343, %v4849
    %4851 = vst [vmem:[%s3724 + $0x9c] sm:$0xf] %v4850
    %4852 = vst [vmem:[%s3724 + $0xa0] sm:$0xf] %v4352
    %v4853 = vld [vmem:[%s3724 + $0xa4] sm:$0x1]
    %v4854 = vsel %vm3727, %v4353, %v4853
    %4855 = vst [vmem:[%s3724 + $0xa4] sm:$0x1] %v4854
    %v4856 = vld [vmem:[%s3724 + $0xa8] sm:$0xf]
    %v4857 = vsel %vm4757, %v4360, %v4856
    %4858 = vst [vmem:[%s3724 + $0xa8] sm:$0xf] %v4857
    %4859 = vst [vmem:[%s3724 + $0xac] sm:$0xf] %v4369
    %v4860 = vld [vmem:[%s3724 + $0xb0] sm:$0x1]
    %v4861 = vsel %vm3727, %v4370, %v4860
    %4862 = vst [vmem:[%s3724 + $0xb0] sm:$0x1] %v4861
    %v4863 = vld [vmem:[%s3724 + $0xb4] sm:$0xf]
    %v4864 = vsel %vm4757, %v4377, %v4863
    %4865 = vst [vmem:[%s3724 + $0xb4] sm:$0xf] %v4864
    %4866 = vst [vmem:[%s3724 + $0xb8] sm:$0xf] %v4386
    %v4867 = vld [vmem:[%s3724 + $0xbc] sm:$0x1]
    %v4868 = vsel %vm3727, %v4387, %v4867
    %4869 = vst [vmem:[%s3724 + $0xbc] sm:$0x1] %v4868
    %v4870 = vld [vmem:[%s3724 + $0xd8] sm:$0xf]
    %v4871 = vsel %vm4757, %v4394, %v4870
    %4872 = vst [vmem:[%s3724 + $0xd8] sm:$0xf] %v4871
    %4873 = vst [vmem:[%s3724 + $0xdc] sm:$0xf] %v4403
    %v4874 = vld [vmem:[%s3724 + $0xe0] sm:$0x1]
    %v4875 = vsel %vm3727, %v4404, %v4874
    %4876 = vst [vmem:[%s3724 + $0xe0] sm:$0x1] %v4875
    %v4877 = vld [vmem:[%s3724 + $0xe4] sm:$0xf]
    %v4878 = vsel %vm4757, %v4411, %v4877
    %4879 = vst [vmem:[%s3724 + $0xe4] sm:$0xf] %v4878
    %4880 = vst [vmem:[%s3724 + $0xe8] sm:$0xf] %v4420
    %v4881 = vld [vmem:[%s3724 + $0xec] sm:$0x1]
    %v4882 = vsel %vm3727, %v4421, %v4881
    %4883 = vst [vmem:[%s3724 + $0xec] sm:$0x1] %v4882
    %v4884 = vld [vmem:[%s3724 + $0xf0] sm:$0xf]
    %v4885 = vsel %vm4757, %v4428, %v4884
    %4886 = vst [vmem:[%s3724 + $0xf0] sm:$0xf] %v4885
    %4887 = vst [vmem:[%s3724 + $0xf4] sm:$0xf] %v4437
    %v4888 = vld [vmem:[%s3724 + $0xf8] sm:$0x1]
    %v4889 = vsel %vm3727, %v4438, %v4888
    %4890 = vst [vmem:[%s3724 + $0xf8] sm:$0x1] %v4889
    %v4891 = vld [vmem:[%s3724 + $0xfc] sm:$0xf]
    %v4892 = vsel %vm4757, %v4445, %v4891
    %4893 = vst [vmem:[%s3724 + $0xfc] sm:$0xf] %v4892
    %4894 = vst [vmem:[%s3724 + $0x100] sm:$0xf] %v4454
    %v4895 = vld [vmem:[%s3724 + $0x104] sm:$0x1]
    %v4896 = vsel %vm3727, %v4455, %v4895
    %4897 = vst [vmem:[%s3724 + $0x104] sm:$0x1] %v4896
    %v4898 = vld [vmem:[%s3724 + $0x108] sm:$0xf]
    %v4899 = vsel %vm4757, %v4462, %v4898
    %4900 = vst [vmem:[%s3724 + $0x108] sm:$0xf] %v4899
    %4901 = vst [vmem:[%s3724 + $0x10c] sm:$0xf] %v4471
    %v4902 = vld [vmem:[%s3724 + $0x110] sm:$0x1]
    %v4903 = vsel %vm3727, %v4472, %v4902
    %4904 = vst [vmem:[%s3724 + $0x110] sm:$0x1] %v4903
    %v4905 = vld [vmem:[%s3724 + $0x114] sm:$0xf]
    %v4906 = vsel %vm4757, %v4479, %v4905
    %4907 = vst [vmem:[%s3724 + $0x114] sm:$0xf] %v4906
    %4908 = vst [vmem:[%s3724 + $0x118] sm:$0xf] %v4488
    %v4909 = vld [vmem:[%s3724 + $0x11c] sm:$0x1]
    %v4910 = vsel %vm3727, %v4489, %v4909
    %4911 = vst [vmem:[%s3724 + $0x11c] sm:$0x1] %v4910
    %v4912 = vld [vmem:[%s3724 + $0x120] sm:$0xf]
    %v4913 = vsel %vm4757, %v4496, %v4912
    %4914 = vst [vmem:[%s3724 + $0x120] sm:$0xf] %v4913
    %4915 = vst [vmem:[%s3724 + $0x124] sm:$0xf] %v4505
    %v4916 = vld [vmem:[%s3724 + $0x128] sm:$0x1]
    %v4917 = vsel %vm3727, %v4506, %v4916
    %4918 = vst [vmem:[%s3724 + $0x128] sm:$0x1] %v4917
    %v4919 = vld [vmem:[%s3724 + $0x12c] sm:$0xf]
    %v4920 = vsel %vm4757, %v4513, %v4919
    %4921 = vst [vmem:[%s3724 + $0x12c] sm:$0xf] %v4920
    %4922 = vst [vmem:[%s3724 + $0x130] sm:$0xf] %v4522
    %v4923 = vld [vmem:[%s3724 + $0x134] sm:$0x1]
    %v4924 = vsel %vm3727, %v4523, %v4923
    %4925 = vst [vmem:[%s3724 + $0x134] sm:$0x1] %v4924
    %v4926 = vld [vmem:[%s3724 + $0x138] sm:$0xf]
    %v4927 = vsel %vm4757, %v4530, %v4926
    %4928 = vst [vmem:[%s3724 + $0x138] sm:$0xf] %v4927
    %4929 = vst [vmem:[%s3724 + $0x13c] sm:$0xf] %v4539
    %v4930 = vld [vmem:[%s3724 + $0x140] sm:$0x1]
    %v4931 = vsel %vm3727, %v4540, %v4930
    %4932 = vst [vmem:[%s3724 + $0x140] sm:$0x1] %v4931
    %v4933 = vld [vmem:[%s3724 + $0x144] sm:$0xf]
    %v4934 = vsel %vm4757, %v4547, %v4933
    %4935 = vst [vmem:[%s3724 + $0x144] sm:$0xf] %v4934
    %4936 = vst [vmem:[%s3724 + $0x148] sm:$0xf] %v4556
    %v4937 = vld [vmem:[%s3724 + $0x14c] sm:$0x1]
    %v4938 = vsel %vm3727, %v4557, %v4937
    %4939 = vst [vmem:[%s3724 + $0x14c] sm:$0x1] %v4938
    %v4940 = vld [vmem:[%s3724 + $0x150] sm:$0xf]
    %v4941 = vsel %vm4757, %v4564, %v4940
    %4942 = vst [vmem:[%s3724 + $0x150] sm:$0xf] %v4941
    %4943 = vst [vmem:[%s3724 + $0x154] sm:$0xf] %v4573
    %v4944 = vld [vmem:[%s3724 + $0x158] sm:$0x1]
    %v4945 = vsel %vm3727, %v4574, %v4944
    %4946 = vst [vmem:[%s3724 + $0x158] sm:$0x1] %v4945
    %v4947 = vld [vmem:[%s3724 + $0x15c] sm:$0xf]
    %v4948 = vsel %vm4757, %v4581, %v4947
    %4949 = vst [vmem:[%s3724 + $0x15c] sm:$0xf] %v4948
    %4950 = vst [vmem:[%s3724 + $0x160] sm:$0xf] %v4590
    %v4951 = vld [vmem:[%s3724 + $0x164] sm:$0x1]
    %v4952 = vsel %vm3727, %v4591, %v4951
    %4953 = vst [vmem:[%s3724 + $0x164] sm:$0x1] %v4952
    %v4954 = vld [vmem:[%s3724 + $0x168] sm:$0xf]
    %v4955 = vsel %vm4757, %v4598, %v4954
    %4956 = vst [vmem:[%s3724 + $0x168] sm:$0xf] %v4955
    %4957 = vst [vmem:[%s3724 + $0x16c] sm:$0xf] %v4607
    %v4958 = vld [vmem:[%s3724 + $0x170] sm:$0x1]
    %v4959 = vsel %vm3727, %v4608, %v4958
    %4960 = vst [vmem:[%s3724 + $0x170] sm:$0x1] %v4959
    %v4961 = vld [vmem:[%s3724 + $0x174] sm:$0xf]
    %v4962 = vsel %vm4757, %v4615, %v4961
    %4963 = vst [vmem:[%s3724 + $0x174] sm:$0xf] %v4962
    %4964 = vst [vmem:[%s3724 + $0x178] sm:$0xf] %v4624
    %v4965 = vld [vmem:[%s3724 + $0x17c] sm:$0x1]
    %v4966 = vsel %vm3727, %v4625, %v4965
    %4967 = vst [vmem:[%s3724 + $0x17c] sm:$0x1] %v4966
    %v4968 = vld [vmem:[%s3724 + $0x180] sm:$0xf]
    %v4969 = vsel %vm4757, %v4632, %v4968
    %4970 = vst [vmem:[%s3724 + $0x180] sm:$0xf] %v4969
    %4971 = vst [vmem:[%s3724 + $0x184] sm:$0xf] %v4641
    %v4972 = vld [vmem:[%s3724 + $0x188] sm:$0x1]
    %v4973 = vsel %vm3727, %v4642, %v4972
    %4974 = vst [vmem:[%s3724 + $0x188] sm:$0x1] %v4973
    %v4975 = vld [vmem:[%s3724 + $0x18c] sm:$0xf]
    %v4976 = vsel %vm4757, %v4649, %v4975
    %4977 = vst [vmem:[%s3724 + $0x18c] sm:$0xf] %v4976
    %4978 = vst [vmem:[%s3724 + $0x190] sm:$0xf] %v4658
    %v4979 = vld [vmem:[%s3724 + $0x194] sm:$0x1]
    %v4980 = vsel %vm3727, %v4659, %v4979
    %4981 = vst [vmem:[%s3724 + $0x194] sm:$0x1] %v4980
    %v4982 = vld [vmem:[#allocation2] sm:$0xf]
    %v4983 = vld [vmem:[#allocation2 + $0x4] sm:$0xf]
    %v4984 = vld [vmem:[#allocation2 + $0x8] sm:$0x1]
    %v4985 = vld [vmem:[#allocation2 + $0xc] sm:$0xf]
    %v4986 = vld [vmem:[#allocation2 + $0x10] sm:$0xf]
    %v4987 = vld [vmem:[#allocation2 + $0x14] sm:$0x1]
    %v4988 = vld [vmem:[#allocation2 + $0x18] sm:$0xf]
    %v4989 = vld [vmem:[#allocation2 + $0x1c] sm:$0xf]
    %v4990 = vld [vmem:[#allocation2 + $0x20] sm:$0x1]
    %v4991 = vld [vmem:[#allocation2 + $0x24] sm:$0xf]
    %v4992 = vld [vmem:[#allocation2 + $0x28] sm:$0xf]
    %v4993 = vld [vmem:[#allocation2 + $0x2c] sm:$0x1]
    %v4994 = vld [vmem:[#allocation2 + $0x30] sm:$0xf]
    %v4995 = vld [vmem:[#allocation2 + $0x34] sm:$0xf]
    %v4996 = vld [vmem:[#allocation2 + $0x38] sm:$0x1]
    %v4997 = vld [vmem:[#allocation2 + $0x3c] sm:$0xf]
    %v4998 = vld [vmem:[#allocation2 + $0x40] sm:$0xf]
    %v4999 = vld [vmem:[#allocation2 + $0x44] sm:$0x1]
    %v5000 = vld [vmem:[#allocation2 + $0x48] sm:$0xf]
    %v5001 = vld [vmem:[#allocation2 + $0x4c] sm:$0xf]
    %v5002 = vld [vmem:[#allocation2 + $0x50] sm:$0x1]
    %v5003 = vld [vmem:[#allocation2 + $0x54] sm:$0xf]
    %v5004 = vld [vmem:[#allocation2 + $0x58] sm:$0xf]
    %v5005 = vld [vmem:[#allocation2 + $0x5c] sm:$0x1]
    %v5006 = vld [vmem:[#allocation2 + $0x60] sm:$0xf]
    %v5007 = vld [vmem:[#allocation2 + $0x64] sm:$0xf]
    %v5008 = vld [vmem:[#allocation2 + $0x68] sm:$0x1]
    %v5009 = vld [vmem:[#allocation2 + $0x6c] sm:$0xf]
    %v5010 = vld [vmem:[#allocation2 + $0x70] sm:$0xf]
    %v5011 = vld [vmem:[#allocation2 + $0x74] sm:$0x1]
    %v5012 = vld [vmem:[#allocation2 + $0x78] sm:$0xf]
    %v5013 = vld [vmem:[#allocation2 + $0x7c] sm:$0xf]
    %v5014 = vld [vmem:[#allocation2 + $0x80] sm:$0x1]
    %v5015 = vld [vmem:[#allocation2 + $0x84] sm:$0xf]
    %v5016 = vld [vmem:[#allocation2 + $0x88] sm:$0xf]
    %v5017 = vld [vmem:[#allocation2 + $0x8c] sm:$0x1]
    %v5018 = vld [vmem:[#allocation2 + $0x90] sm:$0xf]
    %v5019 = vld [vmem:[#allocation2 + $0x94] sm:$0xf]
    %v5020 = vld [vmem:[#allocation2 + $0x98] sm:$0x1]
    %v5021 = vld [vmem:[#allocation2 + $0x9c] sm:$0xf]
    %v5022 = vld [vmem:[#allocation2 + $0xa0] sm:$0xf]
    %v5023 = vld [vmem:[#allocation2 + $0xa4] sm:$0x1]
    %v5024 = vld [vmem:[#allocation2 + $0xa8] sm:$0xf]
    %v5025 = vld [vmem:[#allocation2 + $0xac] sm:$0xf]
    %v5026 = vld [vmem:[#allocation2 + $0xb0] sm:$0x1]
    %v5027 = vld [vmem:[#allocation2 + $0xb4] sm:$0xf]
    %v5028 = vld [vmem:[#allocation2 + $0xb8] sm:$0xf]
    %v5029 = vld [vmem:[#allocation2 + $0xbc] sm:$0x1]
    %v5030 = vld [vmem:[#allocation2 + $0xc0] sm:$0xf]
    %v5031 = vld [vmem:[#allocation2 + $0xc4] sm:$0xf]
    %v5032 = vld [vmem:[#allocation2 + $0xc8] sm:$0x1]
    %v5033 = vld [vmem:[#allocation2 + $0xcc] sm:$0xf]
    %v5034 = vld [vmem:[#allocation2 + $0xd0] sm:$0xf]
    %v5035 = vld [vmem:[#allocation2 + $0xd4] sm:$0x1]
    %v5036 = vld [vmem:[#allocation2 + $0xd8] sm:$0xf]
    %v5037 = vld [vmem:[#allocation2 + $0xdc] sm:$0xf]
    %v5038 = vld [vmem:[#allocation2 + $0xe0] sm:$0x1]
    %v5039 = vld [vmem:[#allocation2 + $0xe4] sm:$0xf]
    %v5040 = vld [vmem:[#allocation2 + $0xe8] sm:$0xf]
    %v5041 = vld [vmem:[#allocation2 + $0xec] sm:$0x1]
    %v5042 = vld [vmem:[#allocation2 + $0xf0] sm:$0xf]
    %v5043 = vld [vmem:[#allocation2 + $0xf4] sm:$0xf]
    %v5044 = vld [vmem:[#allocation2 + $0xf8] sm:$0x1]
    %v5045 = vld [vmem:[#allocation2 + $0xfc] sm:$0xf]
    %v5046 = vld [vmem:[#allocation2 + $0x100] sm:$0xf]
    %v5047 = vld [vmem:[#allocation2 + $0x104] sm:$0x1]
    %v5048 = vld [vmem:[#allocation2 + $0x108] sm:$0xf]
    %v5049 = vld [vmem:[#allocation2 + $0x10c] sm:$0xf]
    %v5050 = vld [vmem:[#allocation2 + $0x110] sm:$0x1]
    %v5051 = vld [vmem:[#allocation2 + $0x114] sm:$0xf]
    %v5052 = vld [vmem:[#allocation2 + $0x118] sm:$0xf]
    %v5053 = vld [vmem:[#allocation2 + $0x11c] sm:$0x1]
    %v5054 = vld [vmem:[#allocation2 + $0x120] sm:$0xf]
    %v5055 = vld [vmem:[#allocation2 + $0x124] sm:$0xf]
    %v5056 = vld [vmem:[#allocation2 + $0x128] sm:$0x1]
    %v5057 = vld [vmem:[#allocation2 + $0x12c] sm:$0xf]
    %v5058 = vld [vmem:[#allocation2 + $0x130] sm:$0xf]
    %v5059 = vld [vmem:[#allocation2 + $0x134] sm:$0x1]
    %v5060 = vld [vmem:[#allocation2 + $0x138] sm:$0xf]
    %v5061 = vld [vmem:[#allocation2 + $0x13c] sm:$0xf]
    %v5062 = vld [vmem:[#allocation2 + $0x140] sm:$0x1]
    %v5063 = vld [vmem:[#allocation2 + $0x144] sm:$0xf]
    %v5064 = vld [vmem:[#allocation2 + $0x148] sm:$0xf]
    %v5065 = vld [vmem:[#allocation2 + $0x14c] sm:$0x1]
    %v5066 = vld [vmem:[#allocation2 + $0x150] sm:$0xf]
    %v5067 = vld [vmem:[#allocation2 + $0x154] sm:$0xf]
    %v5068 = vld [vmem:[#allocation2 + $0x158] sm:$0x1]
    %v5069 = vld [vmem:[#allocation2 + $0x15c] sm:$0xf]
    %v5070 = vld [vmem:[#allocation2 + $0x160] sm:$0xf]
    %v5071 = vld [vmem:[#allocation2 + $0x164] sm:$0x1]
    %v5072 = vld [vmem:[#allocation2 + $0x168] sm:$0xf]
    %v5073 = vld [vmem:[#allocation2 + $0x16c] sm:$0xf]
    %v5074 = vld [vmem:[#allocation2 + $0x170] sm:$0x1]
    %v5075 = vld [vmem:[#allocation2 + $0x174] sm:$0xf]
    %v5076 = vld [vmem:[#allocation2 + $0x178] sm:$0xf]
    %v5077 = vld [vmem:[#allocation2 + $0x17c] sm:$0x1]
    %v5078 = vld [vmem:[#allocation2 + $0x180] sm:$0xf]
    %v5079 = vld [vmem:[#allocation2 + $0x184] sm:$0xf]
    %v5080 = vld [vmem:[#allocation2 + $0x188] sm:$0x1]
    %v5081 = vld [vmem:[#allocation2 + $0x18c] sm:$0xf]
    %v5082 = vld [vmem:[#allocation2 + $0x190] sm:$0xf]
    %v5083 = vld [vmem:[#allocation2 + $0x194] sm:$0x1]
    %v5084 = vld [vmem:[#allocation2 + $0x198] sm:$0xf]
    %v5085 = vld [vmem:[#allocation2 + $0x19c] sm:$0xf]
    %v5086 = vld [vmem:[#allocation2 + $0x1a0] sm:$0x1]
    %v5087 = vld [vmem:[#allocation2 + $0x1a4] sm:$0xf]
    %v5088 = vld [vmem:[#allocation2 + $0x1a8] sm:$0xf]
    %v5089 = vld [vmem:[#allocation2 + $0x1ac] sm:$0x1]
    %v5154 = vunpack.c.l.b16 %v4982
    %v5155 = vunpack.c.l.b16 %v4983
    %v5156 = vunpack.c.l.b16 %v4985
    %v5157 = vunpack.c.l.b16 %v4986
    %v5158 = vunpack.c.l.b16 %v4988
    %v5159 = vunpack.c.l.b16 %v4989
    %v5160 = vunpack.c.l.b16 %v4991
    %v5161 = vunpack.c.l.b16 %v4992
    %v5162 = vunpack.c.l.b16 %v4994
    %v5163 = vunpack.c.l.b16 %v4995
    %v5164 = vunpack.c.l.b16 %v4997
    %v5165 = vunpack.c.l.b16 %v4998
    %v5166 = vunpack.c.l.b16 %v5000
    %v5167 = vunpack.c.l.b16 %v5001
    %v5168 = vunpack.c.l.b16 %v5003
    %v5169 = vunpack.c.l.b16 %v5004
    %v5170 = vunpack.c.l.b16 %v5006
    %v5171 = vunpack.c.l.b16 %v5007
    %v5172 = vunpack.c.l.b16 %v5009
    %v5173 = vunpack.c.l.b16 %v5010
    %v5174 = vunpack.c.l.b16 %v5012
    %v5175 = vunpack.c.l.b16 %v5013
    %v5176 = vunpack.c.l.b16 %v5015
    %v5177 = vunpack.c.l.b16 %v5016
    %v5178 = vunpack.c.l.b16 %v5018
    %v5179 = vunpack.c.l.b16 %v5019
    %v5180 = vunpack.c.l.b16 %v5021
    %v5181 = vunpack.c.l.b16 %v5022
    %v5182 = vunpack.c.l.b16 %v5024
    %v5183 = vunpack.c.l.b16 %v5025
    %v5184 = vunpack.c.l.b16 %v5027
    %v5185 = vunpack.c.l.b16 %v5028
    %v5186 = vunpack.c.l.b16 %v5036
    %v5187 = vunpack.c.l.b16 %v5037
    %v5188 = vunpack.c.l.b16 %v5039
    %v5189 = vunpack.c.l.b16 %v5040
    %v5190 = vunpack.c.l.b16 %v5042
    %v5191 = vunpack.c.l.b16 %v5043
    %v5192 = vunpack.c.l.b16 %v5045
    %v5193 = vunpack.c.l.b16 %v5046
    %v5194 = vunpack.c.l.b16 %v5048
    %v5195 = vunpack.c.l.b16 %v5049
    %v5196 = vunpack.c.l.b16 %v5051
    %v5197 = vunpack.c.l.b16 %v5052
    %v5198 = vunpack.c.l.b16 %v5054
    %v5199 = vunpack.c.l.b16 %v5055
    %v5200 = vunpack.c.l.b16 %v5057
    %v5201 = vunpack.c.l.b16 %v5058
    %v5202 = vunpack.c.l.b16 %v5060
    %v5203 = vunpack.c.l.b16 %v5061
    %v5204 = vunpack.c.l.b16 %v5063
    %v5205 = vunpack.c.l.b16 %v5064
    %v5206 = vunpack.c.l.b16 %v5066
    %v5207 = vunpack.c.l.b16 %v5067
    %v5208 = vunpack.c.l.b16 %v5069
    %v5209 = vunpack.c.l.b16 %v5070
    %v5210 = vunpack.c.l.b16 %v5072
    %v5211 = vunpack.c.l.b16 %v5073
    %v5212 = vunpack.c.l.b16 %v5075
    %v5213 = vunpack.c.l.b16 %v5076
    %v5214 = vunpack.c.l.b16 %v5078
    %v5215 = vunpack.c.l.b16 %v5079
    %v5216 = vunpack.c.l.b16 %v5081
    %v5217 = vunpack.c.l.b16 %v5082
    %v5218 = vpack.c.b16 %v5155, %v5154
    %v5219 = vpack.c.b16 %v5157, %v5156
    %v5220 = vpack.c.b16 %v5159, %v5158
    %v5221 = vpack.c.b16 %v5161, %v5160
    %v5222 = vpack.c.b16 %v5163, %v5162
    %v5223 = vpack.c.b16 %v5165, %v5164
    %v5224 = vpack.c.b16 %v5167, %v5166
    %v5225 = vpack.c.b16 %v5169, %v5168
    %v5226 = vpack.c.b16 %v5171, %v5170
    %v5227 = vpack.c.b16 %v5173, %v5172
    %v5228 = vpack.c.b16 %v5175, %v5174
    %v5229 = vpack.c.b16 %v5177, %v5176
    %v5230 = vpack.c.b16 %v5179, %v5178
    %v5231 = vpack.c.b16 %v5181, %v5180
    %v5232 = vpack.c.b16 %v5183, %v5182
    %v5233 = vpack.c.b16 %v5185, %v5184
    %v5234 = vpack.c.b16 %v5187, %v5186
    %v5235 = vpack.c.b16 %v5189, %v5188
    %v5236 = vpack.c.b16 %v5191, %v5190
    %v5237 = vpack.c.b16 %v5193, %v5192
    %v5238 = vpack.c.b16 %v5195, %v5194
    %v5239 = vpack.c.b16 %v5197, %v5196
    %v5240 = vpack.c.b16 %v5199, %v5198
    %v5241 = vpack.c.b16 %v5201, %v5200
    %v5242 = vpack.c.b16 %v5203, %v5202
    %v5243 = vpack.c.b16 %v5205, %v5204
    %v5244 = vpack.c.b16 %v5207, %v5206
    %v5245 = vpack.c.b16 %v5209, %v5208
    %v5246 = vpack.c.b16 %v5211, %v5210
    %v5247 = vpack.c.b16 %v5213, %v5212
    %v5248 = vpack.c.b16 %v5215, %v5214
    %v5249 = vpack.c.b16 %v5217, %v5216
    %v5314 = vunpack.c.l.b16 %v4984
    %v5315 = vunpack.c.l.b16 %v4987
    %v5316 = vunpack.c.l.b16 %v4990
    %v5317 = vunpack.c.l.b16 %v4993
    %v5318 = vunpack.c.l.b16 %v4996
    %v5319 = vunpack.c.l.b16 %v4999
    %v5320 = vunpack.c.l.b16 %v5002
    %v5321 = vunpack.c.l.b16 %v5005
    %v5322 = vunpack.c.l.b16 %v5008
    %v5323 = vunpack.c.l.b16 %v5011
    %v5324 = vunpack.c.l.b16 %v5014
    %v5325 = vunpack.c.l.b16 %v5017
    %v5326 = vunpack.c.l.b16 %v5020
    %v5327 = vunpack.c.l.b16 %v5023
    %v5328 = vunpack.c.l.b16 %v5026
    %v5329 = vunpack.c.l.b16 %v5029
    %v5330 = vunpack.c.l.b16 %v5038
    %v5331 = vunpack.c.l.b16 %v5041
    %v5332 = vunpack.c.l.b16 %v5044
    %v5333 = vunpack.c.l.b16 %v5047
    %v5334 = vunpack.c.l.b16 %v5050
    %v5335 = vunpack.c.l.b16 %v5053
    %v5336 = vunpack.c.l.b16 %v5056
    %v5337 = vunpack.c.l.b16 %v5059
    %v5338 = vunpack.c.l.b16 %v5062
    %v5339 = vunpack.c.l.b16 %v5065
    %v5340 = vunpack.c.l.b16 %v5068
    %v5341 = vunpack.c.l.b16 %v5071
    %v5342 = vunpack.c.l.b16 %v5074
    %v5343 = vunpack.c.l.b16 %v5077
    %v5344 = vunpack.c.l.b16 %v5080
    %v5345 = vunpack.c.l.b16 %v5083
    %v5346 = vpack.c.b16 %v5314, %v5314
    %v5347 = vpack.c.b16 %v5315, %v5315
    %v5348 = vpack.c.b16 %v5316, %v5316
    %v5349 = vpack.c.b16 %v5317, %v5317
    %v5350 = vpack.c.b16 %v5318, %v5318
    %v5351 = vpack.c.b16 %v5319, %v5319
    %v5352 = vpack.c.b16 %v5320, %v5320
    %v5353 = vpack.c.b16 %v5321, %v5321
    %v5354 = vpack.c.b16 %v5322, %v5322
    %v5355 = vpack.c.b16 %v5323, %v5323
    %v5356 = vpack.c.b16 %v5324, %v5324
    %v5357 = vpack.c.b16 %v5325, %v5325
    %v5358 = vpack.c.b16 %v5326, %v5326
    %v5359 = vpack.c.b16 %v5327, %v5327
    %v5360 = vpack.c.b16 %v5328, %v5328
    %v5361 = vpack.c.b16 %v5329, %v5329
    %v5362 = vpack.c.b16 %v5330, %v5330
    %v5363 = vpack.c.b16 %v5331, %v5331
    %v5364 = vpack.c.b16 %v5332, %v5332
    %v5365 = vpack.c.b16 %v5333, %v5333
    %v5366 = vpack.c.b16 %v5334, %v5334
    %v5367 = vpack.c.b16 %v5335, %v5335
    %v5368 = vpack.c.b16 %v5336, %v5336
    %v5369 = vpack.c.b16 %v5337, %v5337
    %v5370 = vpack.c.b16 %v5338, %v5338
    %v5371 = vpack.c.b16 %v5339, %v5339
    %v5372 = vpack.c.b16 %v5340, %v5340
    %v5373 = vpack.c.b16 %v5341, %v5341
    %v5374 = vpack.c.b16 %v5342, %v5342
    %v5375 = vpack.c.b16 %v5343, %v5343
    %v5376 = vpack.c.b16 %v5344, %v5344
    %v5377 = vpack.c.b16 %v5345, %v5345
    %v5379 = vshrl.u32 %v5218, 16
    %v5381 = vshll.u32 %v5218, 16
    %v5383 = vrot.slane %v5381, 1
    %v5384 = vor.u32 %v5379, %v5383
    %v5386 = vshll.u32 %v5346, 16
    %v5388 = vrot.slane %v5386, 1
    %v5389 = vsel %vm471, %v5384, %v5388
    %v5391 = vshrl.u32 %v5219, 16
    %v5393 = vshll.u32 %v5219, 16
    %v5395 = vrot.slane %v5393, 1
    %v5396 = vor.u32 %v5391, %v5395
    %v5398 = vshll.u32 %v5347, 16
    %v5400 = vrot.slane %v5398, 1
    %v5401 = vsel %vm471, %v5396, %v5400
    %v5403 = vshrl.u32 %v5220, 16
    %v5405 = vshll.u32 %v5220, 16
    %v5407 = vrot.slane %v5405, 1
    %v5408 = vor.u32 %v5403, %v5407
    %v5410 = vshll.u32 %v5348, 16
    %v5412 = vrot.slane %v5410, 1
    %v5413 = vsel %vm471, %v5408, %v5412
    %v5415 = vshrl.u32 %v5221, 16
    %v5417 = vshll.u32 %v5221, 16
    %v5419 = vrot.slane %v5417, 1
    %v5420 = vor.u32 %v5415, %v5419
    %v5422 = vshll.u32 %v5349, 16
    %v5424 = vrot.slane %v5422, 1
    %v5425 = vsel %vm471, %v5420, %v5424
    %v5427 = vshrl.u32 %v5222, 16
    %v5429 = vshll.u32 %v5222, 16
    %v5431 = vrot.slane %v5429, 1
    %v5432 = vor.u32 %v5427, %v5431
    %v5434 = vshll.u32 %v5350, 16
    %v5436 = vrot.slane %v5434, 1
    %v5437 = vsel %vm471, %v5432, %v5436
    %v5439 = vshrl.u32 %v5223, 16
    %v5441 = vshll.u32 %v5223, 16
    %v5443 = vrot.slane %v5441, 1
    %v5444 = vor.u32 %v5439, %v5443
    %v5446 = vshll.u32 %v5351, 16
    %v5448 = vrot.slane %v5446, 1
    %v5449 = vsel %vm471, %v5444, %v5448
    %v5451 = vshrl.u32 %v5224, 16
    %v5453 = vshll.u32 %v5224, 16
    %v5455 = vrot.slane %v5453, 1
    %v5456 = vor.u32 %v5451, %v5455
    %v5458 = vshll.u32 %v5352, 16
    %v5460 = vrot.slane %v5458, 1
    %v5461 = vsel %vm471, %v5456, %v5460
    %v5463 = vshrl.u32 %v5225, 16
    %v5465 = vshll.u32 %v5225, 16
    %v5467 = vrot.slane %v5465, 1
    %v5468 = vor.u32 %v5463, %v5467
    %v5470 = vshll.u32 %v5353, 16
    %v5472 = vrot.slane %v5470, 1
    %v5473 = vsel %vm471, %v5468, %v5472
    %v5475 = vshrl.u32 %v5226, 16
    %v5477 = vshll.u32 %v5226, 16
    %v5479 = vrot.slane %v5477, 1
    %v5480 = vor.u32 %v5475, %v5479
    %v5482 = vshll.u32 %v5354, 16
    %v5484 = vrot.slane %v5482, 1
    %v5485 = vsel %vm471, %v5480, %v5484
    %v5487 = vshrl.u32 %v5227, 16
    %v5489 = vshll.u32 %v5227, 16
    %v5491 = vrot.slane %v5489, 1
    %v5492 = vor.u32 %v5487, %v5491
    %v5494 = vshll.u32 %v5355, 16
    %v5496 = vrot.slane %v5494, 1
    %v5497 = vsel %vm471, %v5492, %v5496
    %v5499 = vshrl.u32 %v5228, 16
    %v5501 = vshll.u32 %v5228, 16
    %v5503 = vrot.slane %v5501, 1
    %v5504 = vor.u32 %v5499, %v5503
    %v5506 = vshll.u32 %v5356, 16
    %v5508 = vrot.slane %v5506, 1
    %v5509 = vsel %vm471, %v5504, %v5508
    %v5511 = vshrl.u32 %v5229, 16
    %v5513 = vshll.u32 %v5229, 16
    %v5515 = vrot.slane %v5513, 1
    %v5516 = vor.u32 %v5511, %v5515
    %v5518 = vshll.u32 %v5357, 16
    %v5520 = vrot.slane %v5518, 1
    %v5521 = vsel %vm471, %v5516, %v5520
    %v5523 = vshrl.u32 %v5230, 16
    %v5525 = vshll.u32 %v5230, 16
    %v5527 = vrot.slane %v5525, 1
    %v5528 = vor.u32 %v5523, %v5527
    %v5530 = vshll.u32 %v5358, 16
    %v5532 = vrot.slane %v5530, 1
    %v5533 = vsel %vm471, %v5528, %v5532
    %v5535 = vshrl.u32 %v5231, 16
    %v5537 = vshll.u32 %v5231, 16
    %v5539 = vrot.slane %v5537, 1
    %v5540 = vor.u32 %v5535, %v5539
    %v5542 = vshll.u32 %v5359, 16
    %v5544 = vrot.slane %v5542, 1
    %v5545 = vsel %vm471, %v5540, %v5544
    %v5547 = vshrl.u32 %v5232, 16
    %v5549 = vshll.u32 %v5232, 16
    %v5551 = vrot.slane %v5549, 1
    %v5552 = vor.u32 %v5547, %v5551
    %v5554 = vshll.u32 %v5360, 16
    %v5556 = vrot.slane %v5554, 1
    %v5557 = vsel %vm471, %v5552, %v5556
    %v5559 = vshrl.u32 %v5233, 16
    %v5561 = vshll.u32 %v5233, 16
    %v5563 = vrot.slane %v5561, 1
    %v5564 = vor.u32 %v5559, %v5563
    %v5566 = vshll.u32 %v5361, 16
    %v5568 = vrot.slane %v5566, 1
    %v5569 = vsel %vm471, %v5564, %v5568
    %v5571 = vshrl.u32 %v5234, 16
    %v5573 = vshll.u32 %v5234, 16
    %v5575 = vrot.slane %v5573, 1
    %v5576 = vor.u32 %v5571, %v5575
    %v5578 = vshll.u32 %v5362, 16
    %v5580 = vrot.slane %v5578, 1
    %v5581 = vsel %vm471, %v5576, %v5580
    %v5583 = vshrl.u32 %v5235, 16
    %v5585 = vshll.u32 %v5235, 16
    %v5587 = vrot.slane %v5585, 1
    %v5588 = vor.u32 %v5583, %v5587
    %v5590 = vshll.u32 %v5363, 16
    %v5592 = vrot.slane %v5590, 1
    %v5593 = vsel %vm471, %v5588, %v5592
    %v5595 = vshrl.u32 %v5236, 16
    %v5597 = vshll.u32 %v5236, 16
    %v5599 = vrot.slane %v5597, 1
    %v5600 = vor.u32 %v5595, %v5599
    %v5602 = vshll.u32 %v5364, 16
    %v5604 = vrot.slane %v5602, 1
    %v5605 = vsel %vm471, %v5600, %v5604
    %v5607 = vshrl.u32 %v5237, 16
    %v5609 = vshll.u32 %v5237, 16
    %v5611 = vrot.slane %v5609, 1
    %v5612 = vor.u32 %v5607, %v5611
    %v5614 = vshll.u32 %v5365, 16
    %v5616 = vrot.slane %v5614, 1
    %v5617 = vsel %vm471, %v5612, %v5616
    %v5619 = vshrl.u32 %v5238, 16
    %v5621 = vshll.u32 %v5238, 16
    %v5623 = vrot.slane %v5621, 1
    %v5624 = vor.u32 %v5619, %v5623
    %v5626 = vshll.u32 %v5366, 16
    %v5628 = vrot.slane %v5626, 1
    %v5629 = vsel %vm471, %v5624, %v5628
    %v5631 = vshrl.u32 %v5239, 16
    %v5633 = vshll.u32 %v5239, 16
    %v5635 = vrot.slane %v5633, 1
    %v5636 = vor.u32 %v5631, %v5635
    %v5638 = vshll.u32 %v5367, 16
    %v5640 = vrot.slane %v5638, 1
    %v5641 = vsel %vm471, %v5636, %v5640
    %v5643 = vshrl.u32 %v5240, 16
    %v5645 = vshll.u32 %v5240, 16
    %v5647 = vrot.slane %v5645, 1
    %v5648 = vor.u32 %v5643, %v5647
    %v5650 = vshll.u32 %v5368, 16
    %v5652 = vrot.slane %v5650, 1
    %v5653 = vsel %vm471, %v5648, %v5652
    %v5655 = vshrl.u32 %v5241, 16
    %v5657 = vshll.u32 %v5241, 16
    %v5659 = vrot.slane %v5657, 1
    %v5660 = vor.u32 %v5655, %v5659
    %v5662 = vshll.u32 %v5369, 16
    %v5664 = vrot.slane %v5662, 1
    %v5665 = vsel %vm471, %v5660, %v5664
    %v5667 = vshrl.u32 %v5242, 16
    %v5669 = vshll.u32 %v5242, 16
    %v5671 = vrot.slane %v5669, 1
    %v5672 = vor.u32 %v5667, %v5671
    %v5674 = vshll.u32 %v5370, 16
    %v5676 = vrot.slane %v5674, 1
    %v5677 = vsel %vm471, %v5672, %v5676
    %v5679 = vshrl.u32 %v5243, 16
    %v5681 = vshll.u32 %v5243, 16
    %v5683 = vrot.slane %v5681, 1
    %v5684 = vor.u32 %v5679, %v5683
    %v5686 = vshll.u32 %v5371, 16
    %v5688 = vrot.slane %v5686, 1
    %v5689 = vsel %vm471, %v5684, %v5688
    %v5691 = vshrl.u32 %v5244, 16
    %v5693 = vshll.u32 %v5244, 16
    %v5695 = vrot.slane %v5693, 1
    %v5696 = vor.u32 %v5691, %v5695
    %v5698 = vshll.u32 %v5372, 16
    %v5700 = vrot.slane %v5698, 1
    %v5701 = vsel %vm471, %v5696, %v5700
    %v5703 = vshrl.u32 %v5245, 16
    %v5705 = vshll.u32 %v5245, 16
    %v5707 = vrot.slane %v5705, 1
    %v5708 = vor.u32 %v5703, %v5707
    %v5710 = vshll.u32 %v5373, 16
    %v5712 = vrot.slane %v5710, 1
    %v5713 = vsel %vm471, %v5708, %v5712
    %v5715 = vshrl.u32 %v5246, 16
    %v5717 = vshll.u32 %v5246, 16
    %v5719 = vrot.slane %v5717, 1
    %v5720 = vor.u32 %v5715, %v5719
    %v5722 = vshll.u32 %v5374, 16
    %v5724 = vrot.slane %v5722, 1
    %v5725 = vsel %vm471, %v5720, %v5724
    %v5727 = vshrl.u32 %v5247, 16
    %v5729 = vshll.u32 %v5247, 16
    %v5731 = vrot.slane %v5729, 1
    %v5732 = vor.u32 %v5727, %v5731
    %v5734 = vshll.u32 %v5375, 16
    %v5736 = vrot.slane %v5734, 1
    %v5737 = vsel %vm471, %v5732, %v5736
    %v5739 = vshrl.u32 %v5248, 16
    %v5741 = vshll.u32 %v5248, 16
    %v5743 = vrot.slane %v5741, 1
    %v5744 = vor.u32 %v5739, %v5743
    %v5746 = vshll.u32 %v5376, 16
    %v5748 = vrot.slane %v5746, 1
    %v5749 = vsel %vm471, %v5744, %v5748
    %v5751 = vshrl.u32 %v5249, 16
    %v5753 = vshll.u32 %v5249, 16
    %v5755 = vrot.slane %v5753, 1
    %v5756 = vor.u32 %v5751, %v5755
    %v5758 = vshll.u32 %v5377, 16
    %v5760 = vrot.slane %v5758, 1
    %v5761 = vsel %vm471, %v5756, %v5760
    %v5794 = vrot.slane %v5218, 1
    %v5795 = vrot.slane %v5346, 1
    %v5796 = vsel %vm888, %v5794, %v5795
    %v5797 = vrot.slane %v5219, 1
    %v5798 = vrot.slane %v5347, 1
    %v5799 = vsel %vm888, %v5797, %v5798
    %v5800 = vrot.slane %v5220, 1
    %v5801 = vrot.slane %v5348, 1
    %v5802 = vsel %vm888, %v5800, %v5801
    %v5803 = vrot.slane %v5221, 1
    %v5804 = vrot.slane %v5349, 1
    %v5805 = vsel %vm888, %v5803, %v5804
    %v5806 = vrot.slane %v5222, 1
    %v5807 = vrot.slane %v5350, 1
    %v5808 = vsel %vm888, %v5806, %v5807
    %v5809 = vrot.slane %v5223, 1
    %v5810 = vrot.slane %v5351, 1
    %v5811 = vsel %vm888, %v5809, %v5810
    %v5812 = vrot.slane %v5224, 1
    %v5813 = vrot.slane %v5352, 1
    %v5814 = vsel %vm888, %v5812, %v5813
    %v5815 = vrot.slane %v5225, 1
    %v5816 = vrot.slane %v5353, 1
    %v5817 = vsel %vm888, %v5815, %v5816
    %v5818 = vrot.slane %v5226, 1
    %v5819 = vrot.slane %v5354, 1
    %v5820 = vsel %vm888, %v5818, %v5819
    %v5821 = vrot.slane %v5227, 1
    %v5822 = vrot.slane %v5355, 1
    %v5823 = vsel %vm888, %v5821, %v5822
    %v5824 = vrot.slane %v5228, 1
    %v5825 = vrot.slane %v5356, 1
    %v5826 = vsel %vm888, %v5824, %v5825
    %v5827 = vrot.slane %v5229, 1
    %v5828 = vrot.slane %v5357, 1
    %v5829 = vsel %vm888, %v5827, %v5828
    %v5830 = vrot.slane %v5230, 1
    %v5831 = vrot.slane %v5358, 1
    %v5832 = vsel %vm888, %v5830, %v5831
    %v5833 = vrot.slane %v5231, 1
    %v5834 = vrot.slane %v5359, 1
    %v5835 = vsel %vm888, %v5833, %v5834
    %v5836 = vrot.slane %v5232, 1
    %v5837 = vrot.slane %v5360, 1
    %v5838 = vsel %vm888, %v5836, %v5837
    %v5839 = vrot.slane %v5233, 1
    %v5840 = vrot.slane %v5361, 1
    %v5841 = vsel %vm888, %v5839, %v5840
    %v5842 = vrot.slane %v5234, 1
    %v5843 = vrot.slane %v5362, 1
    %v5844 = vsel %vm888, %v5842, %v5843
    %v5845 = vrot.slane %v5235, 1
    %v5846 = vrot.slane %v5363, 1
    %v5847 = vsel %vm888, %v5845, %v5846
    %v5848 = vrot.slane %v5236, 1
    %v5849 = vrot.slane %v5364, 1
    %v5850 = vsel %vm888, %v5848, %v5849
    %v5851 = vrot.slane %v5237, 1
    %v5852 = vrot.slane %v5365, 1
    %v5853 = vsel %vm888, %v5851, %v5852
    %v5854 = vrot.slane %v5238, 1
    %v5855 = vrot.slane %v5366, 1
    %v5856 = vsel %vm888, %v5854, %v5855
    %v5857 = vrot.slane %v5239, 1
    %v5858 = vrot.slane %v5367, 1
    %v5859 = vsel %vm888, %v5857, %v5858
    %v5860 = vrot.slane %v5240, 1
    %v5861 = vrot.slane %v5368, 1
    %v5862 = vsel %vm888, %v5860, %v5861
    %v5863 = vrot.slane %v5241, 1
    %v5864 = vrot.slane %v5369, 1
    %v5865 = vsel %vm888, %v5863, %v5864
    %v5866 = vrot.slane %v5242, 1
    %v5867 = vrot.slane %v5370, 1
    %v5868 = vsel %vm888, %v5866, %v5867
    %v5869 = vrot.slane %v5243, 1
    %v5870 = vrot.slane %v5371, 1
    %v5871 = vsel %vm888, %v5869, %v5870
    %v5872 = vrot.slane %v5244, 1
    %v5873 = vrot.slane %v5372, 1
    %v5874 = vsel %vm888, %v5872, %v5873
    %v5875 = vrot.slane %v5245, 1
    %v5876 = vrot.slane %v5373, 1
    %v5877 = vsel %vm888, %v5875, %v5876
    %v5878 = vrot.slane %v5246, 1
    %v5879 = vrot.slane %v5374, 1
    %v5880 = vsel %vm888, %v5878, %v5879
    %v5881 = vrot.slane %v5247, 1
    %v5882 = vrot.slane %v5375, 1
    %v5883 = vsel %vm888, %v5881, %v5882
    %v5884 = vrot.slane %v5248, 1
    %v5885 = vrot.slane %v5376, 1
    %v5886 = vsel %vm888, %v5884, %v5885
    %v5887 = vrot.slane %v5249, 1
    %v5888 = vrot.slane %v5377, 1
    %v5889 = vsel %vm888, %v5887, %v5888
    %v5926 = vunpack.c.l.b16 %v5030
    %v5927 = vunpack.c.l.b16 %v5031
    %v5928 = vunpack.c.l.b16 %v5084
    %v5929 = vunpack.c.l.b16 %v5085
    %v5930 = vpack.c.b16 %v5927, %v5926
    %v5931 = vpack.c.b16 %v5929, %v5928
    %v5936 = vunpack.c.l.b16 %v5032
    %v5937 = vunpack.c.l.b16 %v5086
    %v5938 = vpack.c.b16 %v5936, %v5936
    %v5939 = vpack.c.b16 %v5937, %v5937
    %v5941 = vshrl.u32 %v5930, 16
    %v5943 = vshll.u32 %v5930, 16
    %v5945 = vrot.slane %v5943, 1
    %v5946 = vor.u32 %v5941, %v5945
    %v5948 = vshll.u32 %v5938, 16
    %v5950 = vrot.slane %v5948, 1
    %v5951 = vsel %vm471, %v5946, %v5950
    %v5953 = vshrl.u32 %v5931, 16
    %v5955 = vshll.u32 %v5931, 16
    %v5957 = vrot.slane %v5955, 1
    %v5958 = vor.u32 %v5953, %v5957
    %v5960 = vshll.u32 %v5939, 16
    %v5962 = vrot.slane %v5960, 1
    %v5963 = vsel %vm471, %v5958, %v5962
    %v5966 = vrot.slane %v5930, 1
    %v5967 = vrot.slane %v5938, 1
    %v5968 = vsel %vm888, %v5966, %v5967
    %v5969 = vrot.slane %v5931, 1
    %v5970 = vrot.slane %v5939, 1
    %v5971 = vsel %vm888, %v5969, %v5970
    %v5978 = vunpack.c.l.b16 %v5033
    %v5979 = vunpack.c.l.b16 %v5034
    %v5980 = vunpack.c.l.b16 %v5087
    %v5981 = vunpack.c.l.b16 %v5088
    %v5982 = vpack.c.b16 %v5979, %v5978
    %v5983 = vpack.c.b16 %v5981, %v5980
    %v5988 = vunpack.c.l.b16 %v5035
    %v5989 = vunpack.c.l.b16 %v5089
    %v5990 = vpack.c.b16 %v5988, %v5988
    %v5991 = vpack.c.b16 %v5989, %v5989
    %v5993 = vshrl.u32 %v5982, 16
    %v5995 = vshll.u32 %v5982, 16
    %v5997 = vrot.slane %v5995, 1
    %v5998 = vor.u32 %v5993, %v5997
    %v6000 = vshll.u32 %v5990, 16
    %v6002 = vrot.slane %v6000, 1
    %v6003 = vsel %vm471, %v5998, %v6002
    %v6005 = vshrl.u32 %v5983, 16
    %v6007 = vshll.u32 %v5983, 16
    %v6009 = vrot.slane %v6007, 1
    %v6010 = vor.u32 %v6005, %v6009
    %v6012 = vshll.u32 %v5991, 16
    %v6014 = vrot.slane %v6012, 1
    %v6015 = vsel %vm471, %v6010, %v6014
    %v6018 = vrot.slane %v5982, 1
    %v6019 = vrot.slane %v5990, 1
    %v6020 = vsel %vm888, %v6018, %v6019
    %v6021 = vrot.slane %v5983, 1
    %v6022 = vrot.slane %v5991, 1
    %v6023 = vsel %vm888, %v6021, %v6022
    %v6026 = vld [vmem:[#allocation7] sm:$0xf]
    %v6027 = vld [vmem:[#allocation7 + $0x4] sm:$0xf]
    %v6028 = vld [vmem:[#allocation7 + $0x8] sm:$0xf]
    %v6029 = vld [vmem:[#allocation7 + $0xc] sm:$0xf]
    %v6030 = vld [vmem:[#allocation7 + $0x10] sm:$0xf]
    %v6031 = vld [vmem:[#allocation7 + $0x14] sm:$0xf]
    %v6032 = vld [vmem:[#allocation7 + $0x18] sm:$0xf]
    %v6033 = vld [vmem:[#allocation7 + $0x1c] sm:$0xf]
    %v6034 = vld [vmem:[#allocation7 + $0x20] sm:$0xf]
    %v6035 = vld [vmem:[#allocation7 + $0x24] sm:$0xf]
    %v6036 = vld [vmem:[#allocation7 + $0x28] sm:$0xf]
    %v6037 = vld [vmem:[#allocation7 + $0x2c] sm:$0xf]
    %v6038 = vld [vmem:[#allocation7 + $0x30] sm:$0xf]
    %v6039 = vld [vmem:[#allocation7 + $0x34] sm:$0xf]
    %v6040 = vld [vmem:[#allocation7 + $0x38] sm:$0xf]
    %v6041 = vld [vmem:[#allocation7 + $0x3c] sm:$0xf]
    %v6042 = vld [vmem:[#allocation7 + $0x40] sm:$0xf]
    %v6043 = vld [vmem:[#allocation7 + $0x44] sm:$0xf]
    %v6044 = vld [vmem:[#allocation7 + $0x48] sm:$0xf]
    %v6045 = vld [vmem:[#allocation7 + $0x4c] sm:$0xf]
    %v6046 = vld [vmem:[#allocation7 + $0x50] sm:$0xf]
    %v6047 = vld [vmem:[#allocation7 + $0x54] sm:$0xf]
    %v6048 = vld [vmem:[#allocation7 + $0x58] sm:$0xf]
    %v6049 = vld [vmem:[#allocation7 + $0x5c] sm:$0xf]
    %v6050 = vld [vmem:[#allocation7 + $0x60] sm:$0xf]
    %v6051 = vld [vmem:[#allocation7 + $0x64] sm:$0xf]
    %v6052 = vld [vmem:[#allocation7 + $0x68] sm:$0xf]
    %v6053 = vld [vmem:[#allocation7 + $0x6c] sm:$0xf]
    %v6054 = vld [vmem:[#allocation7 + $0x70] sm:$0xf]
    %v6055 = vld [vmem:[#allocation7 + $0x74] sm:$0xf]
    %v6056 = vld [vmem:[#allocation7 + $0x78] sm:$0xf]
    %v6057 = vld [vmem:[#allocation7 + $0x7c] sm:$0xf]
    %v6058 = vld [vmem:[#allocation7 + $0x80] sm:$0xf]
    %v6059 = vld [vmem:[#allocation7 + $0x84] sm:$0xf]
    %v6060 = vld [vmem:[#allocation7 + $0x88] sm:$0xf]
    %v6061 = vld [vmem:[#allocation7 + $0x8c] sm:$0xf]
    %v6062 = vld [vmem:[#allocation7 + $0x90] sm:$0xf]
    %v6063 = vld [vmem:[#allocation7 + $0x94] sm:$0xf]
    %v6064 = vld [vmem:[#allocation7 + $0x98] sm:$0xf]
    %v6065 = vld [vmem:[#allocation7 + $0x9c] sm:$0xf]
    %v6066 = vld [vmem:[#allocation7 + $0xa0] sm:$0xf]
    %v6067 = vld [vmem:[#allocation7 + $0xa4] sm:$0xf]
    %v6068 = vld [vmem:[#allocation7 + $0xa8] sm:$0xf]
    %v6069 = vld [vmem:[#allocation7 + $0xac] sm:$0xf]
    %v6070 = vld [vmem:[#allocation7 + $0xb0] sm:$0xf]
    %v6071 = vld [vmem:[#allocation7 + $0xb4] sm:$0xf]
    %v6072 = vld [vmem:[#allocation7 + $0xb8] sm:$0xf]
    %v6073 = vld [vmem:[#allocation7 + $0xbc] sm:$0xf]
    %v6074 = vld [vmem:[#allocation7 + $0xc0] sm:$0xf]
    %v6075 = vld [vmem:[#allocation7 + $0xc4] sm:$0xf]
    %v6076 = vld [vmem:[#allocation7 + $0xc8] sm:$0xf]
    %v6077 = vld [vmem:[#allocation7 + $0xcc] sm:$0xf]
    %v6078 = vld [vmem:[#allocation7 + $0xd0] sm:$0xf]
    %v6079 = vld [vmem:[#allocation7 + $0xd4] sm:$0xf]
    %v6080 = vld [vmem:[#allocation7 + $0xd8] sm:$0xf]
    %v6081 = vld [vmem:[#allocation7 + $0xdc] sm:$0xf]
    %v6082 = vld [vmem:[#allocation7 + $0xe0] sm:$0xf]
    %v6083 = vld [vmem:[#allocation7 + $0xe4] sm:$0xf]
    %v6084 = vld [vmem:[#allocation7 + $0xe8] sm:$0xf]
    %v6085 = vld [vmem:[#allocation7 + $0xec] sm:$0xf]
    %v6086 = vld [vmem:[#allocation7 + $0xf0] sm:$0xf]
    %v6087 = vld [vmem:[#allocation7 + $0xf4] sm:$0xf]
    %v6088 = vld [vmem:[#allocation7 + $0xf8] sm:$0xf]
    %v6089 = vld [vmem:[#allocation7 + $0xfc] sm:$0xf]
    %v6090 = vld [vmem:[#allocation7 + $0x100] sm:$0xf]
    %v6091 = vld [vmem:[#allocation7 + $0x104] sm:$0xf]
    %v6092 = vld [vmem:[#allocation7 + $0x108] sm:$0xf]
    %v6093 = vld [vmem:[#allocation7 + $0x10c] sm:$0xf]
    %v6094 = vld [vmem:[#allocation7 + $0x110] sm:$0xf]
    %v6095 = vld [vmem:[#allocation7 + $0x114] sm:$0xf]
    %v6096 = vld [vmem:[#allocation7 + $0x118] sm:$0xf]
    %v6097 = vld [vmem:[#allocation7 + $0x11c] sm:$0xf]
    %v6098 = vld [vmem:[#allocation7 + $0x120] sm:$0xf]
    %v6099 = vld [vmem:[#allocation7 + $0x124] sm:$0xf]
    %v6100 = vld [vmem:[#allocation7 + $0x128] sm:$0xf]
    %v6101 = vld [vmem:[#allocation7 + $0x12c] sm:$0xf]
    %v6102 = vld [vmem:[#allocation7 + $0x130] sm:$0xf]
    %v6103 = vld [vmem:[#allocation7 + $0x134] sm:$0xf]
    %v6104 = vld [vmem:[#allocation7 + $0x138] sm:$0xf]
    %v6105 = vld [vmem:[#allocation7 + $0x13c] sm:$0xf]
    %v6106 = vld [vmem:[#allocation7 + $0x140] sm:$0xf]
    %v6107 = vld [vmem:[#allocation7 + $0x144] sm:$0xf]
    %v6108 = vld [vmem:[#allocation7 + $0x148] sm:$0xf]
    %v6109 = vld [vmem:[#allocation7 + $0x14c] sm:$0xf]
    %v6110 = vld [vmem:[#allocation7 + $0x150] sm:$0xf]
    %v6111 = vld [vmem:[#allocation7 + $0x154] sm:$0xf]
    %v6112 = vld [vmem:[#allocation7 + $0x158] sm:$0xf]
    %v6113 = vld [vmem:[#allocation7 + $0x15c] sm:$0xf]
    %v6114 = vld [vmem:[#allocation7 + $0x160] sm:$0xf]
    %v6115 = vld [vmem:[#allocation7 + $0x164] sm:$0xf]
    %v6116 = vld [vmem:[#allocation7 + $0x168] sm:$0xf]
    %v6117 = vld [vmem:[#allocation7 + $0x16c] sm:$0xf]
    %v6118 = vld [vmem:[#allocation7 + $0x170] sm:$0xf]
    %v6119 = vld [vmem:[#allocation7 + $0x174] sm:$0xf]
    %v6120 = vld [vmem:[#allocation7 + $0x178] sm:$0xf]
    %v6121 = vld [vmem:[#allocation7 + $0x17c] sm:$0xf]
    %v6122 = vld [vmem:[#allocation7 + $0x180] sm:$0xf]
    %v6123 = vld [vmem:[#allocation7 + $0x184] sm:$0xf]
    %v6124 = vld [vmem:[#allocation7 + $0x188] sm:$0xf]
    %v6125 = vld [vmem:[#allocation7 + $0x18c] sm:$0xf]
    %v6126 = vld [vmem:[#allocation7 + $0x190] sm:$0xf]
    %v6127 = vld [vmem:[#allocation7 + $0x194] sm:$0xf]
    %v6128 = vld [vmem:[#allocation7 + $0x198] sm:$0xf]
    %v6129 = vld [vmem:[#allocation7 + $0x19c] sm:$0xf]
    %v6130 = vld [vmem:[#allocation7 + $0x1a0] sm:$0xf]
    %v6131 = vld [vmem:[#allocation7 + $0x1a4] sm:$0xf]
    %v6132 = vld [vmem:[#allocation7 + $0x1a8] sm:$0xf]
    %v6133 = vld [vmem:[#allocation7 + $0x1ac] sm:$0xf]
    %v6134 = vld [vmem:[#allocation7 + $0x1b0] sm:$0xf]
    %v6135 = vld [vmem:[#allocation7 + $0x1b4] sm:$0xf]
    %v6136 = vld [vmem:[#allocation7 + $0x1b8] sm:$0xf]
    %v6137 = vld [vmem:[#allocation7 + $0x1bc] sm:$0xf]
    %v6138 = vld [vmem:[#allocation7 + $0x1c0] sm:$0xf]
    %v6139 = vld [vmem:[#allocation7 + $0x1c4] sm:$0xf]
    %v6140 = vld [vmem:[#allocation7 + $0x1c8] sm:$0xf]
    %v6141 = vld [vmem:[#allocation7 + $0x1cc] sm:$0xf]
    %v6142 = vld [vmem:[#allocation7 + $0x1d0] sm:$0xf]
    %v6143 = vld [vmem:[#allocation7 + $0x1d4] sm:$0xf]
    %v6144 = vld [vmem:[#allocation7 + $0x1d8] sm:$0xf]
    %v6145 = vld [vmem:[#allocation7 + $0x1dc] sm:$0xf]
    %v6146 = vld [vmem:[#allocation7 + $0x1e0] sm:$0xf]
    %v6147 = vld [vmem:[#allocation7 + $0x1e4] sm:$0xf]
    %v6148 = vld [vmem:[#allocation7 + $0x1e8] sm:$0xf]
    %v6149 = vld [vmem:[#allocation7 + $0x1ec] sm:$0xf]
    %v6150 = vld [vmem:[#allocation7 + $0x1f0] sm:$0xf]
    %v6151 = vld [vmem:[#allocation7 + $0x1f4] sm:$0xf]
    %v6152 = vld [vmem:[#allocation7 + $0x1f8] sm:$0xf]
    %v6153 = vld [vmem:[#allocation7 + $0x1fc] sm:$0xf]
    %v6154 = vld [vmem:[#allocation7 + $0x200] sm:$0xf]
    %v6155 = vld [vmem:[#allocation7 + $0x204] sm:$0xf]
    %v6156 = vld [vmem:[#allocation7 + $0x208] sm:$0xf]
    %v6157 = vld [vmem:[#allocation7 + $0x20c] sm:$0xf]
    %v6158 = vld [vmem:[#allocation7 + $0x210] sm:$0xf]
    %v6159 = vld [vmem:[#allocation7 + $0x214] sm:$0xf]
    %v6160 = vld [vmem:[#allocation7 + $0x218] sm:$0xf]
    %v6161 = vld [vmem:[#allocation7 + $0x21c] sm:$0xf]
    %v6162 = vld [vmem:[#allocation7 + $0x220] sm:$0xf]
    %v6163 = vld [vmem:[#allocation7 + $0x224] sm:$0xf]
    %v6164 = vld [vmem:[#allocation7 + $0x228] sm:$0xf]
    %v6165 = vld [vmem:[#allocation7 + $0x22c] sm:$0xf]
    %v6166 = vld [vmem:[#allocation7 + $0x230] sm:$0xf]
    %v6167 = vld [vmem:[#allocation7 + $0x234] sm:$0xf]
    %v6168 = vld [vmem:[#allocation7 + $0x238] sm:$0xf]
    %v6169 = vld [vmem:[#allocation7 + $0x23c] sm:$0xf]
    %v6314 = vunpack.c.l.b16 %v6026
    %v6315 = vunpack.c.l.b16 %v6027
    %v6316 = vunpack.c.l.b16 %v6028
    %v6317 = vunpack.c.l.b16 %v6029
    %v6318 = vunpack.c.l.b16 %v6030
    %v6319 = vunpack.c.l.b16 %v6031
    %v6320 = vunpack.c.l.b16 %v6032
    %v6321 = vunpack.c.l.b16 %v6033
    %v6322 = vunpack.c.l.b16 %v6034
    %v6323 = vunpack.c.l.b16 %v6035
    %v6324 = vunpack.c.l.b16 %v6036
    %v6325 = vunpack.c.l.b16 %v6037
    %v6326 = vunpack.c.l.b16 %v6038
    %v6327 = vunpack.c.l.b16 %v6039
    %v6328 = vunpack.c.l.b16 %v6040
    %v6329 = vunpack.c.l.b16 %v6041
    %v6330 = vunpack.c.l.b16 %v6042
    %v6331 = vunpack.c.l.b16 %v6043
    %v6332 = vunpack.c.l.b16 %v6044
    %v6333 = vunpack.c.l.b16 %v6045
    %v6334 = vunpack.c.l.b16 %v6046
    %v6335 = vunpack.c.l.b16 %v6047
    %v6336 = vunpack.c.l.b16 %v6048
    %v6337 = vunpack.c.l.b16 %v6049
    %v6338 = vunpack.c.l.b16 %v6050
    %v6339 = vunpack.c.l.b16 %v6051
    %v6340 = vunpack.c.l.b16 %v6052
    %v6341 = vunpack.c.l.b16 %v6053
    %v6342 = vunpack.c.l.b16 %v6054
    %v6343 = vunpack.c.l.b16 %v6055
    %v6344 = vunpack.c.l.b16 %v6056
    %v6345 = vunpack.c.l.b16 %v6057
    %v6346 = vunpack.c.l.b16 %v6058
    %v6347 = vunpack.c.l.b16 %v6059
    %v6348 = vunpack.c.l.b16 %v6060
    %v6349 = vunpack.c.l.b16 %v6061
    %v6350 = vunpack.c.l.b16 %v6062
    %v6351 = vunpack.c.l.b16 %v6063
    %v6352 = vunpack.c.l.b16 %v6064
    %v6353 = vunpack.c.l.b16 %v6065
    %v6354 = vunpack.c.l.b16 %v6066
    %v6355 = vunpack.c.l.b16 %v6067
    %v6356 = vunpack.c.l.b16 %v6068
    %v6357 = vunpack.c.l.b16 %v6069
    %v6358 = vunpack.c.l.b16 %v6070
    %v6359 = vunpack.c.l.b16 %v6071
    %v6360 = vunpack.c.l.b16 %v6072
    %v6361 = vunpack.c.l.b16 %v6073
    %v6362 = vunpack.c.l.b16 %v6074
    %v6363 = vunpack.c.l.b16 %v6075
    %v6364 = vunpack.c.l.b16 %v6076
    %v6365 = vunpack.c.l.b16 %v6077
    %v6366 = vunpack.c.l.b16 %v6078
    %v6367 = vunpack.c.l.b16 %v6079
    %v6368 = vunpack.c.l.b16 %v6080
    %v6369 = vunpack.c.l.b16 %v6081
    %v6370 = vunpack.c.l.b16 %v6082
    %v6371 = vunpack.c.l.b16 %v6083
    %v6372 = vunpack.c.l.b16 %v6084
    %v6373 = vunpack.c.l.b16 %v6085
    %v6374 = vunpack.c.l.b16 %v6086
    %v6375 = vunpack.c.l.b16 %v6087
    %v6376 = vunpack.c.l.b16 %v6088
    %v6377 = vunpack.c.l.b16 %v6089
    %v6378 = vunpack.c.l.b16 %v6090
    %v6379 = vunpack.c.l.b16 %v6091
    %v6380 = vunpack.c.l.b16 %v6092
    %v6381 = vunpack.c.l.b16 %v6093
    %v6382 = vunpack.c.l.b16 %v6094
    %v6383 = vunpack.c.l.b16 %v6095
    %v6384 = vunpack.c.l.b16 %v6096
    %v6385 = vunpack.c.l.b16 %v6097
    %v6386 = vunpack.c.l.b16 %v6098
    %v6387 = vunpack.c.l.b16 %v6099
    %v6388 = vunpack.c.l.b16 %v6100
    %v6389 = vunpack.c.l.b16 %v6101
    %v6390 = vunpack.c.l.b16 %v6102
    %v6391 = vunpack.c.l.b16 %v6103
    %v6392 = vunpack.c.l.b16 %v6104
    %v6393 = vunpack.c.l.b16 %v6105
    %v6394 = vunpack.c.l.b16 %v6106
    %v6395 = vunpack.c.l.b16 %v6107
    %v6396 = vunpack.c.l.b16 %v6108
    %v6397 = vunpack.c.l.b16 %v6109
    %v6398 = vunpack.c.l.b16 %v6110
    %v6399 = vunpack.c.l.b16 %v6111
    %v6400 = vunpack.c.l.b16 %v6112
    %v6401 = vunpack.c.l.b16 %v6113
    %v6402 = vunpack.c.l.b16 %v6114
    %v6403 = vunpack.c.l.b16 %v6115
    %v6404 = vunpack.c.l.b16 %v6116
    %v6405 = vunpack.c.l.b16 %v6117
    %v6406 = vunpack.c.l.b16 %v6118
    %v6407 = vunpack.c.l.b16 %v6119
    %v6408 = vunpack.c.l.b16 %v6120
    %v6409 = vunpack.c.l.b16 %v6121
    %v6410 = vunpack.c.l.b16 %v6122
    %v6411 = vunpack.c.l.b16 %v6123
    %v6412 = vunpack.c.l.b16 %v6124
    %v6413 = vunpack.c.l.b16 %v6125
    %v6414 = vunpack.c.l.b16 %v6126
    %v6415 = vunpack.c.l.b16 %v6127
    %v6416 = vunpack.c.l.b16 %v6128
    %v6417 = vunpack.c.l.b16 %v6129
    %v6418 = vunpack.c.l.b16 %v6130
    %v6419 = vunpack.c.l.b16 %v6131
    %v6420 = vunpack.c.l.b16 %v6132
    %v6421 = vunpack.c.l.b16 %v6133
    %v6422 = vunpack.c.l.b16 %v6134
    %v6423 = vunpack.c.l.b16 %v6135
    %v6424 = vunpack.c.l.b16 %v6136
    %v6425 = vunpack.c.l.b16 %v6137
    %v6426 = vunpack.c.l.b16 %v6138
    %v6427 = vunpack.c.l.b16 %v6139
    %v6428 = vunpack.c.l.b16 %v6140
    %v6429 = vunpack.c.l.b16 %v6141
    %v6430 = vunpack.c.l.b16 %v6142
    %v6431 = vunpack.c.l.b16 %v6143
    %v6432 = vunpack.c.l.b16 %v6144
    %v6433 = vunpack.c.l.b16 %v6145
    %v6434 = vunpack.c.l.b16 %v6146
    %v6435 = vunpack.c.l.b16 %v6147
    %v6436 = vunpack.c.l.b16 %v6148
    %v6437 = vunpack.c.l.b16 %v6149
    %v6438 = vunpack.c.l.b16 %v6150
    %v6439 = vunpack.c.l.b16 %v6151
    %v6440 = vunpack.c.l.b16 %v6152
    %v6441 = vunpack.c.l.b16 %v6153
    %v6442 = vunpack.c.l.b16 %v6154
    %v6443 = vunpack.c.l.b16 %v6155
    %v6444 = vunpack.c.l.b16 %v6156
    %v6445 = vunpack.c.l.b16 %v6157
    %v6446 = vunpack.c.l.b16 %v6158
    %v6447 = vunpack.c.l.b16 %v6159
    %v6448 = vunpack.c.l.b16 %v6160
    %v6449 = vunpack.c.l.b16 %v6161
    %v6450 = vunpack.c.l.b16 %v6162
    %v6451 = vunpack.c.l.b16 %v6163
    %v6452 = vunpack.c.l.b16 %v6164
    %v6453 = vunpack.c.l.b16 %v6165
    %v6454 = vunpack.c.l.b16 %v6166
    %v6455 = vunpack.c.l.b16 %v6167
    %v6456 = vunpack.c.l.b16 %v6168
    %v6457 = vunpack.c.l.b16 %v6169
    %v6458 = vpack.c.b16 %v6315, %v6314
    %v6459 = vpack.c.b16 %v6317, %v6316
    %v6460 = vpack.c.b16 %v6319, %v6318
    %v6461 = vpack.c.b16 %v6321, %v6320
    %v6462 = vpack.c.b16 %v6323, %v6322
    %v6463 = vpack.c.b16 %v6325, %v6324
    %v6464 = vpack.c.b16 %v6327, %v6326
    %v6465 = vpack.c.b16 %v6329, %v6328
    %v6466 = vpack.c.b16 %v6331, %v6330
    %v6467 = vpack.c.b16 %v6333, %v6332
    %v6468 = vpack.c.b16 %v6335, %v6334
    %v6469 = vpack.c.b16 %v6337, %v6336
    %v6470 = vpack.c.b16 %v6339, %v6338
    %v6471 = vpack.c.b16 %v6341, %v6340
    %v6472 = vpack.c.b16 %v6343, %v6342
    %v6473 = vpack.c.b16 %v6345, %v6344
    %v6474 = vpack.c.b16 %v6347, %v6346
    %v6475 = vpack.c.b16 %v6349, %v6348
    %v6476 = vpack.c.b16 %v6351, %v6350
    %v6477 = vpack.c.b16 %v6353, %v6352
    %v6478 = vpack.c.b16 %v6355, %v6354
    %v6479 = vpack.c.b16 %v6357, %v6356
    %v6480 = vpack.c.b16 %v6359, %v6358
    %v6481 = vpack.c.b16 %v6361, %v6360
    %v6482 = vpack.c.b16 %v6363, %v6362
    %v6483 = vpack.c.b16 %v6365, %v6364
    %v6484 = vpack.c.b16 %v6367, %v6366
    %v6485 = vpack.c.b16 %v6369, %v6368
    %v6486 = vpack.c.b16 %v6371, %v6370
    %v6487 = vpack.c.b16 %v6373, %v6372
    %v6488 = vpack.c.b16 %v6375, %v6374
    %v6489 = vpack.c.b16 %v6377, %v6376
    %v6490 = vpack.c.b16 %v6379, %v6378
    %v6491 = vpack.c.b16 %v6381, %v6380
    %v6492 = vpack.c.b16 %v6383, %v6382
    %v6493 = vpack.c.b16 %v6385, %v6384
    %v6494 = vpack.c.b16 %v6387, %v6386
    %v6495 = vpack.c.b16 %v6389, %v6388
    %v6496 = vpack.c.b16 %v6391, %v6390
    %v6497 = vpack.c.b16 %v6393, %v6392
    %v6498 = vpack.c.b16 %v6395, %v6394
    %v6499 = vpack.c.b16 %v6397, %v6396
    %v6500 = vpack.c.b16 %v6399, %v6398
    %v6501 = vpack.c.b16 %v6401, %v6400
    %v6502 = vpack.c.b16 %v6403, %v6402
    %v6503 = vpack.c.b16 %v6405, %v6404
    %v6504 = vpack.c.b16 %v6407, %v6406
    %v6505 = vpack.c.b16 %v6409, %v6408
    %v6506 = vpack.c.b16 %v6411, %v6410
    %v6507 = vpack.c.b16 %v6413, %v6412
    %v6508 = vpack.c.b16 %v6415, %v6414
    %v6509 = vpack.c.b16 %v6417, %v6416
    %v6510 = vpack.c.b16 %v6419, %v6418
    %v6511 = vpack.c.b16 %v6421, %v6420
    %v6512 = vpack.c.b16 %v6423, %v6422
    %v6513 = vpack.c.b16 %v6425, %v6424
    %v6514 = vpack.c.b16 %v6427, %v6426
    %v6515 = vpack.c.b16 %v6429, %v6428
    %v6516 = vpack.c.b16 %v6431, %v6430
    %v6517 = vpack.c.b16 %v6433, %v6432
    %v6518 = vpack.c.b16 %v6435, %v6434
    %v6519 = vpack.c.b16 %v6437, %v6436
    %v6520 = vpack.c.b16 %v6439, %v6438
    %v6521 = vpack.c.b16 %v6441, %v6440
    %v6522 = vpack.c.b16 %v6443, %v6442
    %v6523 = vpack.c.b16 %v6445, %v6444
    %v6524 = vpack.c.b16 %v6447, %v6446
    %v6525 = vpack.c.b16 %v6449, %v6448
    %v6526 = vpack.c.b16 %v6451, %v6450
    %v6527 = vpack.c.b16 %v6453, %v6452
    %v6528 = vpack.c.b16 %v6455, %v6454
    %v6529 = vpack.c.b16 %v6457, %v6456
    %6602 = vmatprep.subr.bf16.mxu0 0
    %6603 = vmatpush1.bf16.msra.mxu0 %v6458
    %6604 = vmatprep.subr.bf16.mxu0 0
    %6605 = vmatpush1.bf16.msra.mxu0 %v6459
    %6606 = vmatprep.subr.bf16.mxu0 0
    %6607 = vmatpush1.bf16.msra.mxu0 %v6460
    %6608 = vmatprep.subr.bf16.mxu0 0
    %6609 = vmatpush1.bf16.msra.mxu0 %v6461
    %6610 = vmatprep.subr.bf16.mxu0 0
    %6611 = vmatpush1.bf16.msra.mxu0 %v6462
    %6612 = vmatprep.subr.bf16.mxu0 0
    %6613 = vmatpush1.bf16.msra.mxu0 %v6463
    %6614 = vmatprep.subr.bf16.mxu0 0
    %6615 = vmatpush1.bf16.msra.mxu0 %v6464
    %6616 = vmatprep.subr.bf16.mxu0 0
    %6617 = vmatpush1.bf16.msra.mxu0 %v6465
    %6618 = vmatprep.subr.bf16.mxu0 0
    %6619 = vmatpush1.bf16.msra.mxu0 %v6466
    %6620 = vmatprep.subr.bf16.mxu0 0
    %6621 = vmatpush1.bf16.msra.mxu0 %v6467
    %6622 = vmatprep.subr.bf16.mxu0 0
    %6623 = vmatpush1.bf16.msra.mxu0 %v6468
    %6624 = vmatprep.subr.bf16.mxu0 0
    %6625 = vmatpush1.bf16.msra.mxu0 %v6469
    %6626 = vmatprep.subr.bf16.mxu0 0
    %6627 = vmatpush1.bf16.msra.mxu0 %v6470
    %6628 = vmatprep.subr.bf16.mxu0 0
    %6629 = vmatpush1.bf16.msra.mxu0 %v6471
    %6630 = vmatprep.subr.bf16.mxu0 0
    %6631 = vmatpush1.bf16.msra.mxu0 %v6472
    %6632 = vmatprep.subr.bf16.mxu0 0
    %6633 = vmatpush1.bf16.msra.mxu0 %v6473
    %6634 = vmatprep.mubr.bf16.mxu0 %v5389
    %6635 = vmatmul.mubr.bf16.gmra.mrb[0].mxu0 %v5218
    %v6636 = vpop.f32.mrb[0].mxu0
    %v6637 = vadd.f32 0.0, %v6636
    %v6638 = vpop.f32.mrb[0].mxu0
    %v6639 = vpop.f32.mrb[0].mxu0
    %v6640 = vadd.f32 0.0, %v6639
    %v6641 = vpop.f32.mrb[0].mxu0
    %6642 = vmatprep.mubr.bf16.mxu0 %v5401
    %6643 = vmatmul.mubr.bf16.gmra.mrb[0].mxu0 %v5219
    %v6644 = vpop.f32.mrb[0].mxu0
    %v6645 = vadd.f32 0.0, %v6644
    %v6646 = vpop.f32.mrb[0].mxu0
    %v6647 = vpop.f32.mrb[0].mxu0
    %v6648 = vadd.f32 0.0, %v6647
    %v6649 = vpop.f32.mrb[0].mxu0
    %6650 = vmatprep.mubr.bf16.mxu0 %v5413
    %6651 = vmatmul.mubr.bf16.gmra.mrb[0].mxu0 %v5220
    %v6652 = vpop.f32.mrb[0].mxu0
    %v6653 = vadd.f32 0.0, %v6652
    %v6654 = vpop.f32.mrb[0].mxu0
    %v6655 = vpop.f32.mrb[0].mxu0
    %v6656 = vadd.f32 0.0, %v6655
    %v6657 = vpop.f32.mrb[0].mxu0
    %6658 = vmatprep.mubr.bf16.mxu0 %v5425
    %6659 = vmatmul.mubr.bf16.gmra.mrb[0].mxu0 %v5221
    %v6660 = vpop.f32.mrb[0].mxu0
    %v6661 = vadd.f32 0.0, %v6660
    %v6662 = vpop.f32.mrb[0].mxu0
    %v6663 = vpop.f32.mrb[0].mxu0
    %v6664 = vadd.f32 0.0, %v6663
    %v6665 = vpop.f32.mrb[0].mxu0
    %6666 = vmatprep.mubr.bf16.mxu0 %v5437
    %6667 = vmatmul.mubr.bf16.gmra.mrb[0].mxu0 %v5222
    %v6668 = vpop.f32.mrb[0].mxu0
    %v6669 = vadd.f32 0.0, %v6668
    %v6670 = vpop.f32.mrb[0].mxu0
    %v6671 = vpop.f32.mrb[0].mxu0
    %v6672 = vadd.f32 0.0, %v6671
    %v6673 = vpop.f32.mrb[0].mxu0
    %6674 = vmatprep.mubr.bf16.mxu0 %v5449
    %6675 = vmatmul.mubr.bf16.gmra.mrb[0].mxu0 %v5223
    %v6676 = vpop.f32.mrb[0].mxu0
    %v6677 = vadd.f32 0.0, %v6676
    %v6678 = vpop.f32.mrb[0].mxu0
    %v6679 = vpop.f32.mrb[0].mxu0
    %v6680 = vadd.f32 0.0, %v6679
    %v6681 = vpop.f32.mrb[0].mxu0
    %6682 = vmatprep.mubr.bf16.mxu0 %v5461
    %6683 = vmatmul.mubr.bf16.gmra.mrb[0].mxu0 %v5224
    %v6684 = vpop.f32.mrb[0].mxu0
    %v6685 = vadd.f32 0.0, %v6684
    %v6686 = vpop.f32.mrb[0].mxu0
    %v6687 = vpop.f32.mrb[0].mxu0
    %v6688 = vadd.f32 0.0, %v6687
    %v6689 = vpop.f32.mrb[0].mxu0
    %6690 = vmatprep.mubr.bf16.mxu0 %v5473
    %6691 = vmatmul.mubr.bf16.gmra.mrb[0].mxu0 %v5225
    %v6692 = vpop.f32.mrb[0].mxu0
    %v6693 = vadd.f32 0.0, %v6692
    %v6694 = vpop.f32.mrb[0].mxu0
    %v6695 = vpop.f32.mrb[0].mxu0
    %v6696 = vadd.f32 0.0, %v6695
    %v6697 = vpop.f32.mrb[0].mxu0
    %6698 = vmatprep.mubr.bf16.mxu0 %v5485
    %6699 = vmatmul.mubr.bf16.gmra.mrb[0].mxu0 %v5226
    %v6700 = vpop.f32.mrb[0].mxu0
    %v6701 = vadd.f32 0.0, %v6700
    %v6702 = vpop.f32.mrb[0].mxu0
    %v6703 = vpop.f32.mrb[0].mxu0
    %v6704 = vadd.f32 0.0, %v6703
    %v6705 = vpop.f32.mrb[0].mxu0
    %6706 = vmatprep.mubr.bf16.mxu0 %v5497
    %6707 = vmatmul.mubr.bf16.gmra.mrb[0].mxu0 %v5227
    %v6708 = vpop.f32.mrb[0].mxu0
    %v6709 = vadd.f32 0.0, %v6708
    %v6710 = vpop.f32.mrb[0].mxu0
    %v6711 = vpop.f32.mrb[0].mxu0
    %v6712 = vadd.f32 0.0, %v6711
    %v6713 = vpop.f32.mrb[0].mxu0
    %6714 = vmatprep.mubr.bf16.mxu0 %v5509
    %6715 = vmatmul.mubr.bf16.gmra.mrb[0].mxu0 %v5228
    %v6716 = vpop.f32.mrb[0].mxu0
    %v6717 = vadd.f32 0.0, %v6716
    %v6718 = vpop.f32.mrb[0].mxu0
    %v6719 = vpop.f32.mrb[0].mxu0
    %v6720 = vadd.f32 0.0, %v6719
    %v6721 = vpop.f32.mrb[0].mxu0
    %6722 = vmatprep.mubr.bf16.mxu0 %v5521
    %6723 = vmatmul.mubr.bf16.gmra.mrb[0].mxu0 %v5229
    %v6724 = vpop.f32.mrb[0].mxu0
    %v6725 = vadd.f32 0.0, %v6724
    %v6726 = vpop.f32.mrb[0].mxu0
    %v6727 = vpop.f32.mrb[0].mxu0
    %v6728 = vadd.f32 0.0, %v6727
    %v6729 = vpop.f32.mrb[0].mxu0
    %6730 = vmatprep.mubr.bf16.mxu0 %v5533
    %6731 = vmatmul.mubr.bf16.gmra.mrb[0].mxu0 %v5230
    %v6732 = vpop.f32.mrb[0].mxu0
    %v6733 = vadd.f32 0.0, %v6732
    %v6734 = vpop.f32.mrb[0].mxu0
    %v6735 = vpop.f32.mrb[0].mxu0
    %v6736 = vadd.f32 0.0, %v6735
    %v6737 = vpop.f32.mrb[0].mxu0
    %6738 = vmatprep.mubr.bf16.mxu0 %v5545
    %6739 = vmatmul.mubr.bf16.gmra.mrb[0].mxu0 %v5231
    %v6740 = vpop.f32.mrb[0].mxu0
    %v6741 = vadd.f32 0.0, %v6740
    %v6742 = vpop.f32.mrb[0].mxu0
    %v6743 = vpop.f32.mrb[0].mxu0
    %v6744 = vadd.f32 0.0, %v6743
    %v6745 = vpop.f32.mrb[0].mxu0
    %6746 = vmatprep.mubr.bf16.mxu0 %v5557
    %6747 = vmatmul.mubr.bf16.gmra.mrb[0].mxu0 %v5232
    %v6748 = vpop.f32.mrb[0].mxu0
    %v6749 = vadd.f32 0.0, %v6748
    %v6750 = vpop.f32.mrb[0].mxu0
    %v6751 = vpop.f32.mrb[0].mxu0
    %v6752 = vadd.f32 0.0, %v6751
    %v6753 = vpop.f32.mrb[0].mxu0
    %6754 = vmatprep.mubr.bf16.mxu0 %v5569
    %6755 = vmatmul.mubr.bf16.gmra.mrb[0].mxu0 %v5233
    %v6756 = vpop.f32.mrb[0].mxu0
    %v6757 = vadd.f32 0.0, %v6756
    %v6758 = vpop.f32.mrb[0].mxu0
    %v6759 = vpop.f32.mrb[0].mxu0
    %v6760 = vadd.f32 0.0, %v6759
    %v6761 = vpop.f32.mrb[0].mxu0
    %6762 = vmatprep.mubr.bf16.mxu0 %v5581
    %6763 = vmatmul.mubr.bf16.gmra.mrb[0].mxu0 %v5234
    %v6764 = vpop.f32.mrb[0].mxu0
    %v6765 = vadd.f32 0.0, %v6764
    %v6766 = vpop.f32.mrb[0].mxu0
    %v6767 = vpop.f32.mrb[0].mxu0
    %v6768 = vadd.f32 0.0, %v6767
    %v6769 = vpop.f32.mrb[0].mxu0
    %6770 = vmatprep.mubr.bf16.mxu0 %v5593
    %6771 = vmatmul.mubr.bf16.gmra.mrb[0].mxu0 %v5235
    %v6772 = vpop.f32.mrb[0].mxu0
    %v6773 = vadd.f32 0.0, %v6772
    %v6774 = vpop.f32.mrb[0].mxu0
    %v6775 = vpop.f32.mrb[0].mxu0
    %v6776 = vadd.f32 0.0, %v6775
    %v6777 = vpop.f32.mrb[0].mxu0
    %6778 = vmatprep.mubr.bf16.mxu0 %v5605
    %6779 = vmatmul.mubr.bf16.gmra.mrb[0].mxu0 %v5236
    %v6780 = vpop.f32.mrb[0].mxu0
    %v6781 = vadd.f32 0.0, %v6780
    %v6782 = vpop.f32.mrb[0].mxu0
    %v6783 = vpop.f32.mrb[0].mxu0
    %v6784 = vadd.f32 0.0, %v6783
    %v6785 = vpop.f32.mrb[0].mxu0
    %6786 = vmatprep.mubr.bf16.mxu0 %v5617
    %6787 = vmatmul.mubr.bf16.gmra.mrb[0].mxu0 %v5237
    %v6788 = vpop.f32.mrb[0].mxu0
    %v6789 = vadd.f32 0.0, %v6788
    %v6790 = vpop.f32.mrb[0].mxu0
    %v6791 = vpop.f32.mrb[0].mxu0
    %v6792 = vadd.f32 0.0, %v6791
    %v6793 = vpop.f32.mrb[0].mxu0
    %6794 = vmatprep.mubr.bf16.mxu0 %v5629
    %6795 = vmatmul.mubr.bf16.gmra.mrb[0].mxu0 %v5238
    %v6796 = vpop.f32.mrb[0].mxu0
    %v6797 = vadd.f32 0.0, %v6796
    %v6798 = vpop.f32.mrb[0].mxu0
    %v6799 = vpop.f32.mrb[0].mxu0
    %v6800 = vadd.f32 0.0, %v6799
    %v6801 = vpop.f32.mrb[0].mxu0
    %6802 = vmatprep.mubr.bf16.mxu0 %v5641
    %6803 = vmatmul.mubr.bf16.gmra.mrb[0].mxu0 %v5239
    %v6804 = vpop.f32.mrb[0].mxu0
    %v6805 = vadd.f32 0.0, %v6804
    %v6806 = vpop.f32.mrb[0].mxu0
    %v6807 = vpop.f32.mrb[0].mxu0
    %v6808 = vadd.f32 0.0, %v6807
    %v6809 = vpop.f32.mrb[0].mxu0
    %6810 = vmatprep.mubr.bf16.mxu0 %v5653
    %6811 = vmatmul.mubr.bf16.gmra.mrb[0].mxu0 %v5240
    %v6812 = vpop.f32.mrb[0].mxu0
    %v6813 = vadd.f32 0.0, %v6812
    %v6814 = vpop.f32.mrb[0].mxu0
    %v6815 = vpop.f32.mrb[0].mxu0
    %v6816 = vadd.f32 0.0, %v6815
    %v6817 = vpop.f32.mrb[0].mxu0
    %6818 = vmatprep.mubr.bf16.mxu0 %v5665
    %6819 = vmatmul.mubr.bf16.gmra.mrb[0].mxu0 %v5241
    %v6820 = vpop.f32.mrb[0].mxu0
    %v6821 = vadd.f32 0.0, %v6820
    %v6822 = vpop.f32.mrb[0].mxu0
    %v6823 = vpop.f32.mrb[0].mxu0
    %v6824 = vadd.f32 0.0, %v6823
    %v6825 = vpop.f32.mrb[0].mxu0
    %6826 = vmatprep.mubr.bf16.mxu0 %v5677
    %6827 = vmatmul.mubr.bf16.gmra.mrb[0].mxu0 %v5242
    %v6828 = vpop.f32.mrb[0].mxu0
    %v6829 = vadd.f32 0.0, %v6828
    %v6830 = vpop.f32.mrb[0].mxu0
    %v6831 = vpop.f32.mrb[0].mxu0
    %v6832 = vadd.f32 0.0, %v6831
    %v6833 = vpop.f32.mrb[0].mxu0
    %6834 = vmatprep.mubr.bf16.mxu0 %v5689
    %6835 = vmatmul.mubr.bf16.gmra.mrb[0].mxu0 %v5243
    %v6836 = vpop.f32.mrb[0].mxu0
    %v6837 = vadd.f32 0.0, %v6836
    %v6838 = vpop.f32.mrb[0].mxu0
    %v6839 = vpop.f32.mrb[0].mxu0
    %v6840 = vadd.f32 0.0, %v6839
    %v6841 = vpop.f32.mrb[0].mxu0
    %6842 = vmatprep.mubr.bf16.mxu0 %v5701
    %6843 = vmatmul.mubr.bf16.gmra.mrb[0].mxu0 %v5244
    %v6844 = vpop.f32.mrb[0].mxu0
    %v6845 = vadd.f32 0.0, %v6844
    %v6846 = vpop.f32.mrb[0].mxu0
    %v6847 = vpop.f32.mrb[0].mxu0
    %v6848 = vadd.f32 0.0, %v6847
    %v6849 = vpop.f32.mrb[0].mxu0
    %6850 = vmatprep.mubr.bf16.mxu0 %v5713
    %6851 = vmatmul.mubr.bf16.gmra.mrb[0].mxu0 %v5245
    %v6852 = vpop.f32.mrb[0].mxu0
    %v6853 = vadd.f32 0.0, %v6852
    %v6854 = vpop.f32.mrb[0].mxu0
    %v6855 = vpop.f32.mrb[0].mxu0
    %v6856 = vadd.f32 0.0, %v6855
    %v6857 = vpop.f32.mrb[0].mxu0
    %6858 = vmatprep.mubr.bf16.mxu0 %v5725
    %6859 = vmatmul.mubr.bf16.gmra.mrb[0].mxu0 %v5246
    %v6860 = vpop.f32.mrb[0].mxu0
    %v6861 = vadd.f32 0.0, %v6860
    %v6862 = vpop.f32.mrb[0].mxu0
    %v6863 = vpop.f32.mrb[0].mxu0
    %v6864 = vadd.f32 0.0, %v6863
    %v6865 = vpop.f32.mrb[0].mxu0
    %6866 = vmatprep.mubr.bf16.mxu0 %v5737
    %6867 = vmatmul.mubr.bf16.gmra.mrb[0].mxu0 %v5247
    %v6868 = vpop.f32.mrb[0].mxu0
    %v6869 = vadd.f32 0.0, %v6868
    %v6870 = vpop.f32.mrb[0].mxu0
    %v6871 = vpop.f32.mrb[0].mxu0
    %v6872 = vadd.f32 0.0, %v6871
    %v6873 = vpop.f32.mrb[0].mxu0
    %6874 = vmatprep.mubr.bf16.mxu0 %v5749
    %6875 = vmatmul.mubr.bf16.gmra.mrb[0].mxu0 %v5248
    %v6876 = vpop.f32.mrb[0].mxu0
    %v6877 = vadd.f32 0.0, %v6876
    %v6878 = vpop.f32.mrb[0].mxu0
    %v6879 = vpop.f32.mrb[0].mxu0
    %v6880 = vadd.f32 0.0, %v6879
    %v6881 = vpop.f32.mrb[0].mxu0
    %6882 = vmatprep.mubr.bf16.mxu0 %v5761
    %6883 = vmatmul.mubr.bf16.gmra.mrb[0].mxu0 %v5249
    %v6884 = vpop.f32.mrb[0].mxu0
    %v6885 = vadd.f32 0.0, %v6884
    %v6886 = vpop.f32.mrb[0].mxu0
    %v6887 = vpop.f32.mrb[0].mxu0
    %v6888 = vadd.f32 0.0, %v6887
    %v6889 = vpop.f32.mrb[0].mxu0
    %6890 = vdwg.mxu0
    %6891 = vmatprep.subr.bf16.mxu0 0
    %6892 = vmatpush1.bf16.msra.mxu0 %v6474
    %6893 = vmatprep.subr.bf16.mxu0 0
    %6894 = vmatpush1.bf16.msra.mxu0 %v6475
    %6895 = vmatprep.subr.bf16.mxu0 0
    %6896 = vmatpush1.bf16.msra.mxu0 %v6476
    %6897 = vmatprep.subr.bf16.mxu0 0
    %6898 = vmatpush1.bf16.msra.mxu0 %v6477
    %6899 = vmatprep.subr.bf16.mxu0 0
    %6900 = vmatpush1.bf16.msra.mxu0 %v6478
    %6901 = vmatprep.subr.bf16.mxu0 0
    %6902 = vmatpush1.bf16.msra.mxu0 %v6479
    %6903 = vmatprep.subr.bf16.mxu0 0
    %6904 = vmatpush1.bf16.msra.mxu0 %v6480
    %6905 = vmatprep.subr.bf16.mxu0 0
    %6906 = vmatpush1.bf16.msra.mxu0 %v6481
    %6907 = vmatprep.subr.bf16.mxu0 0
    %6908 = vmatpush1.bf16.msra.mxu0 %v6482
    %6909 = vmatprep.subr.bf16.mxu0 0
    %6910 = vmatpush1.bf16.msra.mxu0 %v6483
    %6911 = vmatprep.subr.bf16.mxu0 0
    %6912 = vmatpush1.bf16.msra.mxu0 %v6484
    %6913 = vmatprep.subr.bf16.mxu0 0
    %6914 = vmatpush1.bf16.msra.mxu0 %v6485
    %6915 = vmatprep.subr.bf16.mxu0 0
    %6916 = vmatpush1.bf16.msra.mxu0 %v6486
    %6917 = vmatprep.subr.bf16.mxu0 0
    %6918 = vmatpush1.bf16.msra.mxu0 %v6487
    %6919 = vmatprep.subr.bf16.mxu0 0
    %6920 = vmatpush1.bf16.msra.mxu0 %v6488
    %6921 = vmatprep.subr.bf16.mxu0 0
    %6922 = vmatpush1.bf16.msra.mxu0 %v6489
    %6923 = vmatprep.mubr.bf16.mxu0 %v5219
    %6924 = vmatmul.mubr.bf16.gmra.mrb[0].mxu0 %v5796
    %v6925 = vpop.f32.mrb[0].mxu0
    %v6926 = vadd.f32 %v6637, %v6925
    %v6927 = vpop.f32.mrb[0].mxu0
    %v6928 = vpop.f32.mrb[0].mxu0
    %v6929 = vadd.f32 %v6640, %v6928
    %v6930 = vpop.f32.mrb[0].mxu0
    %6931 = vmatprep.mubr.bf16.mxu0 %v5220
    %6932 = vmatmul.mubr.bf16.gmra.mrb[0].mxu0 %v5799
    %v6933 = vpop.f32.mrb[0].mxu0
    %v6934 = vadd.f32 %v6645, %v6933
    %v6935 = vpop.f32.mrb[0].mxu0
    %v6936 = vpop.f32.mrb[0].mxu0
    %v6937 = vadd.f32 %v6648, %v6936
    %v6938 = vpop.f32.mrb[0].mxu0
    %6939 = vmatprep.mubr.bf16.mxu0 %v5221
    %6940 = vmatmul.mubr.bf16.gmra.mrb[0].mxu0 %v5802
    %v6941 = vpop.f32.mrb[0].mxu0
    %v6942 = vadd.f32 %v6653, %v6941
    %v6943 = vpop.f32.mrb[0].mxu0
    %v6944 = vpop.f32.mrb[0].mxu0
    %v6945 = vadd.f32 %v6656, %v6944
    %v6946 = vpop.f32.mrb[0].mxu0
    %6947 = vmatprep.mubr.bf16.mxu0 %v5222
    %6948 = vmatmul.mubr.bf16.gmra.mrb[0].mxu0 %v5805
    %v6949 = vpop.f32.mrb[0].mxu0
    %v6950 = vadd.f32 %v6661, %v6949
    %v6951 = vpop.f32.mrb[0].mxu0
    %v6952 = vpop.f32.mrb[0].mxu0
    %v6953 = vadd.f32 %v6664, %v6952
    %v6954 = vpop.f32.mrb[0].mxu0
    %6955 = vmatprep.mubr.bf16.mxu0 %v5223
    %6956 = vmatmul.mubr.bf16.gmra.mrb[0].mxu0 %v5808
    %v6957 = vpop.f32.mrb[0].mxu0
    %v6958 = vadd.f32 %v6669, %v6957
    %v6959 = vpop.f32.mrb[0].mxu0
    %v6960 = vpop.f32.mrb[0].mxu0
    %v6961 = vadd.f32 %v6672, %v6960
    %v6962 = vpop.f32.mrb[0].mxu0
    %6963 = vmatprep.mubr.bf16.mxu0 %v5224
    %6964 = vmatmul.mubr.bf16.gmra.mrb[0].mxu0 %v5811
    %v6965 = vpop.f32.mrb[0].mxu0
    %v6966 = vadd.f32 %v6677, %v6965
    %v6967 = vpop.f32.mrb[0].mxu0
    %v6968 = vpop.f32.mrb[0].mxu0
    %v6969 = vadd.f32 %v6680, %v6968
    %v6970 = vpop.f32.mrb[0].mxu0
    %6971 = vmatprep.mubr.bf16.mxu0 %v5225
    %6972 = vmatmul.mubr.bf16.gmra.mrb[0].mxu0 %v5814
    %v6973 = vpop.f32.mrb[0].mxu0
    %v6974 = vadd.f32 %v6685, %v6973
    %v6975 = vpop.f32.mrb[0].mxu0
    %v6976 = vpop.f32.mrb[0].mxu0
    %v6977 = vadd.f32 %v6688, %v6976
    %v6978 = vpop.f32.mrb[0].mxu0
    %6979 = vmatprep.mubr.bf16.mxu0 %v5226
    %6980 = vmatmul.mubr.bf16.gmra.mrb[0].mxu0 %v5817
    %v6981 = vpop.f32.mrb[0].mxu0
    %v6982 = vadd.f32 %v6693, %v6981
    %v6983 = vpop.f32.mrb[0].mxu0
    %v6984 = vpop.f32.mrb[0].mxu0
    %v6985 = vadd.f32 %v6696, %v6984
    %v6986 = vpop.f32.mrb[0].mxu0
    %6987 = vmatprep.mubr.bf16.mxu0 %v5227
    %6988 = vmatmul.mubr.bf16.gmra.mrb[0].mxu0 %v5820
    %v6989 = vpop.f32.mrb[0].mxu0
    %v6990 = vadd.f32 %v6701, %v6989
    %v6991 = vpop.f32.mrb[0].mxu0
    %v6992 = vpop.f32.mrb[0].mxu0
    %v6993 = vadd.f32 %v6704, %v6992
    %v6994 = vpop.f32.mrb[0].mxu0
    %6995 = vmatprep.mubr.bf16.mxu0 %v5228
    %6996 = vmatmul.mubr.bf16.gmra.mrb[0].mxu0 %v5823
    %v6997 = vpop.f32.mrb[0].mxu0
    %v6998 = vadd.f32 %v6709, %v6997
    %v6999 = vpop.f32.mrb[0].mxu0
    %v7000 = vpop.f32.mrb[0].mxu0
    %v7001 = vadd.f32 %v6712, %v7000
    %v7002 = vpop.f32.mrb[0].mxu0
    %7003 = vmatprep.mubr.bf16.mxu0 %v5229
    %7004 = vmatmul.mubr.bf16.gmra.mrb[0].mxu0 %v5826
    %v7005 = vpop.f32.mrb[0].mxu0
    %v7006 = vadd.f32 %v6717, %v7005
    %v7007 = vpop.f32.mrb[0].mxu0
    %v7008 = vpop.f32.mrb[0].mxu0
    %v7009 = vadd.f32 %v6720, %v7008
    %v7010 = vpop.f32.mrb[0].mxu0
    %7011 = vmatprep.mubr.bf16.mxu0 %v5230
    %7012 = vmatmul.mubr.bf16.gmra.mrb[0].mxu0 %v5829
    %v7013 = vpop.f32.mrb[0].mxu0
    %v7014 = vadd.f32 %v6725, %v7013
    %v7015 = vpop.f32.mrb[0].mxu0
    %v7016 = vpop.f32.mrb[0].mxu0
    %v7017 = vadd.f32 %v6728, %v7016
    %v7018 = vpop.f32.mrb[0].mxu0
    %7019 = vmatprep.mubr.bf16.mxu0 %v5231
    %7020 = vmatmul.mubr.bf16.gmra.mrb[0].mxu0 %v5832
    %v7021 = vpop.f32.mrb[0].mxu0
    %v7022 = vadd.f32 %v6733, %v7021
    %v7023 = vpop.f32.mrb[0].mxu0
    %v7024 = vpop.f32.mrb[0].mxu0
    %v7025 = vadd.f32 %v6736, %v7024
    %v7026 = vpop.f32.mrb[0].mxu0
    %7027 = vmatprep.mubr.bf16.mxu0 %v5232
    %7028 = vmatmul.mubr.bf16.gmra.mrb[0].mxu0 %v5835
    %v7029 = vpop.f32.mrb[0].mxu0
    %v7030 = vadd.f32 %v6741, %v7029
    %v7031 = vpop.f32.mrb[0].mxu0
    %v7032 = vpop.f32.mrb[0].mxu0
    %v7033 = vadd.f32 %v6744, %v7032
    %v7034 = vpop.f32.mrb[0].mxu0
    %7035 = vmatprep.mubr.bf16.mxu0 %v5233
    %7036 = vmatmul.mubr.bf16.gmra.mrb[0].mxu0 %v5838
    %v7037 = vpop.f32.mrb[0].mxu0
    %v7038 = vadd.f32 %v6749, %v7037
    %v7039 = vpop.f32.mrb[0].mxu0
    %v7040 = vpop.f32.mrb[0].mxu0
    %v7041 = vadd.f32 %v6752, %v7040
    %v7042 = vpop.f32.mrb[0].mxu0
    %7043 = vmatprep.mubr.bf16.mxu0 %v5930
    %7044 = vmatmul.mubr.bf16.gmra.mrb[0].mxu0 %v5841
    %v7045 = vpop.f32.mrb[0].mxu0
    %v7046 = vadd.f32 %v6757, %v7045
    %v7047 = vpop.f32.mrb[0].mxu0
    %v7048 = vpop.f32.mrb[0].mxu0
    %v7049 = vadd.f32 %v6760, %v7048
    %v7050 = vpop.f32.mrb[0].mxu0
    %7051 = vmatprep.mubr.bf16.mxu0 %v5235
    %7052 = vmatmul.mubr.bf16.gmra.mrb[0].mxu0 %v5844
    %v7053 = vpop.f32.mrb[0].mxu0
    %v7054 = vadd.f32 %v6765, %v7053
    %v7055 = vpop.f32.mrb[0].mxu0
    %v7056 = vpop.f32.mrb[0].mxu0
    %v7057 = vadd.f32 %v6768, %v7056
    %v7058 = vpop.f32.mrb[0].mxu0
    %7059 = vmatprep.mubr.bf16.mxu0 %v5236
    %7060 = vmatmul.mubr.bf16.gmra.mrb[0].mxu0 %v5847
    %v7061 = vpop.f32.mrb[0].mxu0
    %v7062 = vadd.f32 %v6773, %v7061
    %v7063 = vpop.f32.mrb[0].mxu0
    %v7064 = vpop.f32.mrb[0].mxu0
    %v7065 = vadd.f32 %v6776, %v7064
    %v7066 = vpop.f32.mrb[0].mxu0
    %7067 = vmatprep.mubr.bf16.mxu0 %v5237
    %7068 = vmatmul.mubr.bf16.gmra.mrb[0].mxu0 %v5850
    %v7069 = vpop.f32.mrb[0].mxu0
    %v7070 = vadd.f32 %v6781, %v7069
    %v7071 = vpop.f32.mrb[0].mxu0
    %v7072 = vpop.f32.mrb[0].mxu0
    %v7073 = vadd.f32 %v6784, %v7072
    %v7074 = vpop.f32.mrb[0].mxu0
    %7075 = vmatprep.mubr.bf16.mxu0 %v5238
    %7076 = vmatmul.mubr.bf16.gmra.mrb[0].mxu0 %v5853
    %v7077 = vpop.f32.mrb[0].mxu0
    %v7078 = vadd.f32 %v6789, %v7077
    %v7079 = vpop.f32.mrb[0].mxu0
    %v7080 = vpop.f32.mrb[0].mxu0
    %v7081 = vadd.f32 %v6792, %v7080
    %v7082 = vpop.f32.mrb[0].mxu0
    %7083 = vmatprep.mubr.bf16.mxu0 %v5239
    %7084 = vmatmul.mubr.bf16.gmra.mrb[0].mxu0 %v5856
    %v7085 = vpop.f32.mrb[0].mxu0
    %v7086 = vadd.f32 %v6797, %v7085
    %v7087 = vpop.f32.mrb[0].mxu0
    %v7088 = vpop.f32.mrb[0].mxu0
    %v7089 = vadd.f32 %v6800, %v7088
    %v7090 = vpop.f32.mrb[0].mxu0
    %7091 = vmatprep.mubr.bf16.mxu0 %v5240
    %7092 = vmatmul.mubr.bf16.gmra.mrb[0].mxu0 %v5859
    %v7093 = vpop.f32.mrb[0].mxu0
    %v7094 = vadd.f32 %v6805, %v7093
    %v7095 = vpop.f32.mrb[0].mxu0
    %v7096 = vpop.f32.mrb[0].mxu0
    %v7097 = vadd.f32 %v6808, %v7096
    %v7098 = vpop.f32.mrb[0].mxu0
    %7099 = vmatprep.mubr.bf16.mxu0 %v5241
    %7100 = vmatmul.mubr.bf16.gmra.mrb[0].mxu0 %v5862
    %v7101 = vpop.f32.mrb[0].mxu0
    %v7102 = vadd.f32 %v6813, %v7101
    %v7103 = vpop.f32.mrb[0].mxu0
    %v7104 = vpop.f32.mrb[0].mxu0
    %v7105 = vadd.f32 %v6816, %v7104
    %v7106 = vpop.f32.mrb[0].mxu0
    %7107 = vmatprep.mubr.bf16.mxu0 %v5242
    %7108 = vmatmul.mubr.bf16.gmra.mrb[0].mxu0 %v5865
    %v7109 = vpop.f32.mrb[0].mxu0
    %v7110 = vadd.f32 %v6821, %v7109
    %v7111 = vpop.f32.mrb[0].mxu0
    %v7112 = vpop.f32.mrb[0].mxu0
    %v7113 = vadd.f32 %v6824, %v7112
    %v7114 = vpop.f32.mrb[0].mxu0
    %7115 = vmatprep.mubr.bf16.mxu0 %v5243
    %7116 = vmatmul.mubr.bf16.gmra.mrb[0].mxu0 %v5868
    %v7117 = vpop.f32.mrb[0].mxu0
    %v7118 = vadd.f32 %v6829, %v7117
    %v7119 = vpop.f32.mrb[0].mxu0
    %v7120 = vpop.f32.mrb[0].mxu0
    %v7121 = vadd.f32 %v6832, %v7120
    %v7122 = vpop.f32.mrb[0].mxu0
    %7123 = vmatprep.mubr.bf16.mxu0 %v5244
    %7124 = vmatmul.mubr.bf16.gmra.mrb[0].mxu0 %v5871
    %v7125 = vpop.f32.mrb[0].mxu0
    %v7126 = vadd.f32 %v6837, %v7125
    %v7127 = vpop.f32.mrb[0].mxu0
    %v7128 = vpop.f32.mrb[0].mxu0
    %v7129 = vadd.f32 %v6840, %v7128
    %v7130 = vpop.f32.mrb[0].mxu0
    %7131 = vmatprep.mubr.bf16.mxu0 %v5245
    %7132 = vmatmul.mubr.bf16.gmra.mrb[0].mxu0 %v5874
    %v7133 = vpop.f32.mrb[0].mxu0
    %v7134 = vadd.f32 %v6845, %v7133
    %v7135 = vpop.f32.mrb[0].mxu0
    %v7136 = vpop.f32.mrb[0].mxu0
    %v7137 = vadd.f32 %v6848, %v7136
    %v7138 = vpop.f32.mrb[0].mxu0
    %7139 = vmatprep.mubr.bf16.mxu0 %v5246
    %7140 = vmatmul.mubr.bf16.gmra.mrb[0].mxu0 %v5877
    %v7141 = vpop.f32.mrb[0].mxu0
    %v7142 = vadd.f32 %v6853, %v7141
    %v7143 = vpop.f32.mrb[0].mxu0
    %v7144 = vpop.f32.mrb[0].mxu0
    %v7145 = vadd.f32 %v6856, %v7144
    %v7146 = vpop.f32.mrb[0].mxu0
    %7147 = vmatprep.mubr.bf16.mxu0 %v5247
    %7148 = vmatmul.mubr.bf16.gmra.mrb[0].mxu0 %v5880
    %v7149 = vpop.f32.mrb[0].mxu0
    %v7150 = vadd.f32 %v6861, %v7149
    %v7151 = vpop.f32.mrb[0].mxu0
    %v7152 = vpop.f32.mrb[0].mxu0
    %v7153 = vadd.f32 %v6864, %v7152
    %v7154 = vpop.f32.mrb[0].mxu0
    %7155 = vmatprep.mubr.bf16.mxu0 %v5248
    %7156 = vmatmul.mubr.bf16.gmra.mrb[0].mxu0 %v5883
    %v7157 = vpop.f32.mrb[0].mxu0
    %v7158 = vadd.f32 %v6869, %v7157
    %v7159 = vpop.f32.mrb[0].mxu0
    %v7160 = vpop.f32.mrb[0].mxu0
    %v7161 = vadd.f32 %v6872, %v7160
    %v7162 = vpop.f32.mrb[0].mxu0
    %7163 = vmatprep.mubr.bf16.mxu0 %v5249
    %7164 = vmatmul.mubr.bf16.gmra.mrb[0].mxu0 %v5886
    %v7165 = vpop.f32.mrb[0].mxu0
    %v7166 = vadd.f32 %v6877, %v7165
    %v7167 = vpop.f32.mrb[0].mxu0
    %v7168 = vpop.f32.mrb[0].mxu0
    %v7169 = vadd.f32 %v6880, %v7168
    %v7170 = vpop.f32.mrb[0].mxu0
    %7171 = vmatprep.mubr.bf16.mxu0 %v5931
    %7172 = vmatmul.mubr.bf16.gmra.mrb[0].mxu0 %v5889
    %v7173 = vpop.f32.mrb[0].mxu0
    %v7174 = vadd.f32 %v6885, %v7173
    %v7175 = vpop.f32.mrb[0].mxu0
    %v7176 = vpop.f32.mrb[0].mxu0
    %v7177 = vadd.f32 %v6888, %v7176
    %v7178 = vpop.f32.mrb[0].mxu0
    %7179 = vdwg.mxu0
    %7180 = vmatprep.subr.bf16.mxu0 0
    %7181 = vmatpush1.bf16.msra.mxu0 %v6490
    %7182 = vmatprep.subr.bf16.mxu0 0
    %7183 = vmatpush1.bf16.msra.mxu0 %v6491
    %7184 = vmatprep.subr.bf16.mxu0 0
    %7185 = vmatpush1.bf16.msra.mxu0 %v6492
    %7186 = vmatprep.subr.bf16.mxu0 0
    %7187 = vmatpush1.bf16.msra.mxu0 %v6493
    %7188 = vmatprep.subr.bf16.mxu0 0
    %7189 = vmatpush1.bf16.msra.mxu0 %v6494
    %7190 = vmatprep.subr.bf16.mxu0 0
    %7191 = vmatpush1.bf16.msra.mxu0 %v6495
    %7192 = vmatprep.subr.bf16.mxu0 0
    %7193 = vmatpush1.bf16.msra.mxu0 %v6496
    %7194 = vmatprep.subr.bf16.mxu0 0
    %7195 = vmatpush1.bf16.msra.mxu0 %v6497
    %7196 = vmatprep.subr.bf16.mxu0 0
    %7197 = vmatpush1.bf16.msra.mxu0 %v6498
    %7198 = vmatprep.subr.bf16.mxu0 0
    %7199 = vmatpush1.bf16.msra.mxu0 %v6499
    %7200 = vmatprep.subr.bf16.mxu0 0
    %7201 = vmatpush1.bf16.msra.mxu0 %v6500
    %7202 = vmatprep.subr.bf16.mxu0 0
    %7203 = vmatpush1.bf16.msra.mxu0 %v6501
    %7204 = vmatprep.subr.bf16.mxu0 0
    %7205 = vmatpush1.bf16.msra.mxu0 %v6502
    %7206 = vmatprep.subr.bf16.mxu0 0
    %7207 = vmatpush1.bf16.msra.mxu0 %v6503
    %7208 = vmatprep.subr.bf16.mxu0 0
    %7209 = vmatpush1.bf16.msra.mxu0 %v6504
    %7210 = vmatprep.subr.bf16.mxu0 0
    %7211 = vmatpush1.bf16.msra.mxu0 %v6505
    %7212 = vmatprep.mubr.bf16.mxu0 %v5799
    %7213 = vmatmul.mubr.bf16.gmra.mrb[0].mxu0 %v5401
    %v7214 = vpop.f32.mrb[0].mxu0
    %v7215 = vadd.f32 %v6926, %v7214
    %v7216 = vpop.f32.mrb[0].mxu0
    %v7217 = vpop.f32.mrb[0].mxu0
    %v7218 = vadd.f32 %v6929, %v7217
    %v7219 = vpop.f32.mrb[0].mxu0
    %7220 = vmatprep.mubr.bf16.mxu0 %v5802
    %7221 = vmatmul.mubr.bf16.gmra.mrb[0].mxu0 %v5413
    %v7222 = vpop.f32.mrb[0].mxu0
    %v7223 = vadd.f32 %v6934, %v7222
    %v7224 = vpop.f32.mrb[0].mxu0
    %v7225 = vpop.f32.mrb[0].mxu0
    %v7226 = vadd.f32 %v6937, %v7225
    %v7227 = vpop.f32.mrb[0].mxu0
    %7228 = vmatprep.mubr.bf16.mxu0 %v5805
    %7229 = vmatmul.mubr.bf16.gmra.mrb[0].mxu0 %v5425
    %v7230 = vpop.f32.mrb[0].mxu0
    %v7231 = vadd.f32 %v6942, %v7230
    %v7232 = vpop.f32.mrb[0].mxu0
    %v7233 = vpop.f32.mrb[0].mxu0
    %v7234 = vadd.f32 %v6945, %v7233
    %v7235 = vpop.f32.mrb[0].mxu0
    %7236 = vmatprep.mubr.bf16.mxu0 %v5808
    %7237 = vmatmul.mubr.bf16.gmra.mrb[0].mxu0 %v5437
    %v7238 = vpop.f32.mrb[0].mxu0
    %v7239 = vadd.f32 %v6950, %v7238
    %v7240 = vpop.f32.mrb[0].mxu0
    %v7241 = vpop.f32.mrb[0].mxu0
    %v7242 = vadd.f32 %v6953, %v7241
    %v7243 = vpop.f32.mrb[0].mxu0
    %7244 = vmatprep.mubr.bf16.mxu0 %v5811
    %7245 = vmatmul.mubr.bf16.gmra.mrb[0].mxu0 %v5449
    %v7246 = vpop.f32.mrb[0].mxu0
    %v7247 = vadd.f32 %v6958, %v7246
    %v7248 = vpop.f32.mrb[0].mxu0
    %v7249 = vpop.f32.mrb[0].mxu0
    %v7250 = vadd.f32 %v6961, %v7249
    %v7251 = vpop.f32.mrb[0].mxu0
    %7252 = vmatprep.mubr.bf16.mxu0 %v5814
    %7253 = vmatmul.mubr.bf16.gmra.mrb[0].mxu0 %v5461
    %v7254 = vpop.f32.mrb[0].mxu0
    %v7255 = vadd.f32 %v6966, %v7254
    %v7256 = vpop.f32.mrb[0].mxu0
    %v7257 = vpop.f32.mrb[0].mxu0
    %v7258 = vadd.f32 %v6969, %v7257
    %v7259 = vpop.f32.mrb[0].mxu0
    %7260 = vmatprep.mubr.bf16.mxu0 %v5817
    %7261 = vmatmul.mubr.bf16.gmra.mrb[0].mxu0 %v5473
    %v7262 = vpop.f32.mrb[0].mxu0
    %v7263 = vadd.f32 %v6974, %v7262
    %v7264 = vpop.f32.mrb[0].mxu0
    %v7265 = vpop.f32.mrb[0].mxu0
    %v7266 = vadd.f32 %v6977, %v7265
    %v7267 = vpop.f32.mrb[0].mxu0
    %7268 = vmatprep.mubr.bf16.mxu0 %v5820
    %7269 = vmatmul.mubr.bf16.gmra.mrb[0].mxu0 %v5485
    %v7270 = vpop.f32.mrb[0].mxu0
    %v7271 = vadd.f32 %v6982, %v7270
    %v7272 = vpop.f32.mrb[0].mxu0
    %v7273 = vpop.f32.mrb[0].mxu0
    %v7274 = vadd.f32 %v6985, %v7273
    %v7275 = vpop.f32.mrb[0].mxu0
    %7276 = vmatprep.mubr.bf16.mxu0 %v5823
    %7277 = vmatmul.mubr.bf16.gmra.mrb[0].mxu0 %v5497
    %v7278 = vpop.f32.mrb[0].mxu0
    %v7279 = vadd.f32 %v6990, %v7278
    %v7280 = vpop.f32.mrb[0].mxu0
    %v7281 = vpop.f32.mrb[0].mxu0
    %v7282 = vadd.f32 %v6993, %v7281
    %v7283 = vpop.f32.mrb[0].mxu0
    %7284 = vmatprep.mubr.bf16.mxu0 %v5826
    %7285 = vmatmul.mubr.bf16.gmra.mrb[0].mxu0 %v5509
    %v7286 = vpop.f32.mrb[0].mxu0
    %v7287 = vadd.f32 %v6998, %v7286
    %v7288 = vpop.f32.mrb[0].mxu0
    %v7289 = vpop.f32.mrb[0].mxu0
    %v7290 = vadd.f32 %v7001, %v7289
    %v7291 = vpop.f32.mrb[0].mxu0
    %7292 = vmatprep.mubr.bf16.mxu0 %v5829
    %7293 = vmatmul.mubr.bf16.gmra.mrb[0].mxu0 %v5521
    %v7294 = vpop.f32.mrb[0].mxu0
    %v7295 = vadd.f32 %v7006, %v7294
    %v7296 = vpop.f32.mrb[0].mxu0
    %v7297 = vpop.f32.mrb[0].mxu0
    %v7298 = vadd.f32 %v7009, %v7297
    %v7299 = vpop.f32.mrb[0].mxu0
    %7300 = vmatprep.mubr.bf16.mxu0 %v5832
    %7301 = vmatmul.mubr.bf16.gmra.mrb[0].mxu0 %v5533
    %v7302 = vpop.f32.mrb[0].mxu0
    %v7303 = vadd.f32 %v7014, %v7302
    %v7304 = vpop.f32.mrb[0].mxu0
    %v7305 = vpop.f32.mrb[0].mxu0
    %v7306 = vadd.f32 %v7017, %v7305
    %v7307 = vpop.f32.mrb[0].mxu0
    %7308 = vmatprep.mubr.bf16.mxu0 %v5835
    %7309 = vmatmul.mubr.bf16.gmra.mrb[0].mxu0 %v5545
    %v7310 = vpop.f32.mrb[0].mxu0
    %v7311 = vadd.f32 %v7022, %v7310
    %v7312 = vpop.f32.mrb[0].mxu0
    %v7313 = vpop.f32.mrb[0].mxu0
    %v7314 = vadd.f32 %v7025, %v7313
    %v7315 = vpop.f32.mrb[0].mxu0
    %7316 = vmatprep.mubr.bf16.mxu0 %v5838
    %7317 = vmatmul.mubr.bf16.gmra.mrb[0].mxu0 %v5557
    %v7318 = vpop.f32.mrb[0].mxu0
    %v7319 = vadd.f32 %v7030, %v7318
    %v7320 = vpop.f32.mrb[0].mxu0
    %v7321 = vpop.f32.mrb[0].mxu0
    %v7322 = vadd.f32 %v7033, %v7321
    %v7323 = vpop.f32.mrb[0].mxu0
    %7324 = vmatprep.mubr.bf16.mxu0 %v5841
    %7325 = vmatmul.mubr.bf16.gmra.mrb[0].mxu0 %v5569
    %v7326 = vpop.f32.mrb[0].mxu0
    %v7327 = vadd.f32 %v7038, %v7326
    %v7328 = vpop.f32.mrb[0].mxu0
    %v7329 = vpop.f32.mrb[0].mxu0
    %v7330 = vadd.f32 %v7041, %v7329
    %v7331 = vpop.f32.mrb[0].mxu0
    %7332 = vmatprep.mubr.bf16.mxu0 %v5968
    %7333 = vmatmul.mubr.bf16.gmra.mrb[0].mxu0 %v5951
    %v7334 = vpop.f32.mrb[0].mxu0
    %v7335 = vadd.f32 %v7046, %v7334
    %v7336 = vpop.f32.mrb[0].mxu0
    %v7337 = vpop.f32.mrb[0].mxu0
    %v7338 = vadd.f32 %v7049, %v7337
    %v7339 = vpop.f32.mrb[0].mxu0
    %7340 = vmatprep.mubr.bf16.mxu0 %v5847
    %7341 = vmatmul.mubr.bf16.gmra.mrb[0].mxu0 %v5593
    %v7342 = vpop.f32.mrb[0].mxu0
    %v7343 = vadd.f32 %v7054, %v7342
    %v7344 = vpop.f32.mrb[0].mxu0
    %v7345 = vpop.f32.mrb[0].mxu0
    %v7346 = vadd.f32 %v7057, %v7345
    %v7347 = vpop.f32.mrb[0].mxu0
    %7348 = vmatprep.mubr.bf16.mxu0 %v5850
    %7349 = vmatmul.mubr.bf16.gmra.mrb[0].mxu0 %v5605
    %v7350 = vpop.f32.mrb[0].mxu0
    %v7351 = vadd.f32 %v7062, %v7350
    %v7352 = vpop.f32.mrb[0].mxu0
    %v7353 = vpop.f32.mrb[0].mxu0
    %v7354 = vadd.f32 %v7065, %v7353
    %v7355 = vpop.f32.mrb[0].mxu0
    %7356 = vmatprep.mubr.bf16.mxu0 %v5853
    %7357 = vmatmul.mubr.bf16.gmra.mrb[0].mxu0 %v5617
    %v7358 = vpop.f32.mrb[0].mxu0
    %v7359 = vadd.f32 %v7070, %v7358
    %v7360 = vpop.f32.mrb[0].mxu0
    %v7361 = vpop.f32.mrb[0].mxu0
    %v7362 = vadd.f32 %v7073, %v7361
    %v7363 = vpop.f32.mrb[0].mxu0
    %7364 = vmatprep.mubr.bf16.mxu0 %v5856
    %7365 = vmatmul.mubr.bf16.gmra.mrb[0].mxu0 %v5629
    %v7366 = vpop.f32.mrb[0].mxu0
    %v7367 = vadd.f32 %v7078, %v7366
    %v7368 = vpop.f32.mrb[0].mxu0
    %v7369 = vpop.f32.mrb[0].mxu0
    %v7370 = vadd.f32 %v7081, %v7369
    %v7371 = vpop.f32.mrb[0].mxu0
    %7372 = vmatprep.mubr.bf16.mxu0 %v5859
    %7373 = vmatmul.mubr.bf16.gmra.mrb[0].mxu0 %v5641
    %v7374 = vpop.f32.mrb[0].mxu0
    %v7375 = vadd.f32 %v7086, %v7374
    %v7376 = vpop.f32.mrb[0].mxu0
    %v7377 = vpop.f32.mrb[0].mxu0
    %v7378 = vadd.f32 %v7089, %v7377
    %v7379 = vpop.f32.mrb[0].mxu0
    %7380 = vmatprep.mubr.bf16.mxu0 %v5862
    %7381 = vmatmul.mubr.bf16.gmra.mrb[0].mxu0 %v5653
    %v7382 = vpop.f32.mrb[0].mxu0
    %v7383 = vadd.f32 %v7094, %v7382
    %v7384 = vpop.f32.mrb[0].mxu0
    %v7385 = vpop.f32.mrb[0].mxu0
    %v7386 = vadd.f32 %v7097, %v7385
    %v7387 = vpop.f32.mrb[0].mxu0
    %7388 = vmatprep.mubr.bf16.mxu0 %v5865
    %7389 = vmatmul.mubr.bf16.gmra.mrb[0].mxu0 %v5665
    %v7390 = vpop.f32.mrb[0].mxu0
    %v7391 = vadd.f32 %v7102, %v7390
    %v7392 = vpop.f32.mrb[0].mxu0
    %v7393 = vpop.f32.mrb[0].mxu0
    %v7394 = vadd.f32 %v7105, %v7393
    %v7395 = vpop.f32.mrb[0].mxu0
    %7396 = vmatprep.mubr.bf16.mxu0 %v5868
    %7397 = vmatmul.mubr.bf16.gmra.mrb[0].mxu0 %v5677
    %v7398 = vpop.f32.mrb[0].mxu0
    %v7399 = vadd.f32 %v7110, %v7398
    %v7400 = vpop.f32.mrb[0].mxu0
    %v7401 = vpop.f32.mrb[0].mxu0
    %v7402 = vadd.f32 %v7113, %v7401
    %v7403 = vpop.f32.mrb[0].mxu0
    %7404 = vmatprep.mubr.bf16.mxu0 %v5871
    %7405 = vmatmul.mubr.bf16.gmra.mrb[0].mxu0 %v5689
    %v7406 = vpop.f32.mrb[0].mxu0
    %v7407 = vadd.f32 %v7118, %v7406
    %v7408 = vpop.f32.mrb[0].mxu0
    %v7409 = vpop.f32.mrb[0].mxu0
    %v7410 = vadd.f32 %v7121, %v7409
    %v7411 = vpop.f32.mrb[0].mxu0
    %7412 = vmatprep.mubr.bf16.mxu0 %v5874
    %7413 = vmatmul.mubr.bf16.gmra.mrb[0].mxu0 %v5701
    %v7414 = vpop.f32.mrb[0].mxu0
    %v7415 = vadd.f32 %v7126, %v7414
    %v7416 = vpop.f32.mrb[0].mxu0
    %v7417 = vpop.f32.mrb[0].mxu0
    %v7418 = vadd.f32 %v7129, %v7417
    %v7419 = vpop.f32.mrb[0].mxu0
    %7420 = vmatprep.mubr.bf16.mxu0 %v5877
    %7421 = vmatmul.mubr.bf16.gmra.mrb[0].mxu0 %v5713
    %v7422 = vpop.f32.mrb[0].mxu0
    %v7423 = vadd.f32 %v7134, %v7422
    %v7424 = vpop.f32.mrb[0].mxu0
    %v7425 = vpop.f32.mrb[0].mxu0
    %v7426 = vadd.f32 %v7137, %v7425
    %v7427 = vpop.f32.mrb[0].mxu0
    %7428 = vmatprep.mubr.bf16.mxu0 %v5880
    %7429 = vmatmul.mubr.bf16.gmra.mrb[0].mxu0 %v5725
    %v7430 = vpop.f32.mrb[0].mxu0
    %v7431 = vadd.f32 %v7142, %v7430
    %v7432 = vpop.f32.mrb[0].mxu0
    %v7433 = vpop.f32.mrb[0].mxu0
    %v7434 = vadd.f32 %v7145, %v7433
    %v7435 = vpop.f32.mrb[0].mxu0
    %7436 = vmatprep.mubr.bf16.mxu0 %v5883
    %7437 = vmatmul.mubr.bf16.gmra.mrb[0].mxu0 %v5737
    %v7438 = vpop.f32.mrb[0].mxu0
    %v7439 = vadd.f32 %v7150, %v7438
    %v7440 = vpop.f32.mrb[0].mxu0
    %v7441 = vpop.f32.mrb[0].mxu0
    %v7442 = vadd.f32 %v7153, %v7441
    %v7443 = vpop.f32.mrb[0].mxu0
    %7444 = vmatprep.mubr.bf16.mxu0 %v5886
    %7445 = vmatmul.mubr.bf16.gmra.mrb[0].mxu0 %v5749
    %v7446 = vpop.f32.mrb[0].mxu0
    %v7447 = vadd.f32 %v7158, %v7446
    %v7448 = vpop.f32.mrb[0].mxu0
    %v7449 = vpop.f32.mrb[0].mxu0
    %v7450 = vadd.f32 %v7161, %v7449
    %v7451 = vpop.f32.mrb[0].mxu0
    %7452 = vmatprep.mubr.bf16.mxu0 %v5889
    %7453 = vmatmul.mubr.bf16.gmra.mrb[0].mxu0 %v5761
    %v7454 = vpop.f32.mrb[0].mxu0
    %v7455 = vadd.f32 %v7166, %v7454
    %v7456 = vpop.f32.mrb[0].mxu0
    %v7457 = vpop.f32.mrb[0].mxu0
    %v7458 = vadd.f32 %v7169, %v7457
    %v7459 = vpop.f32.mrb[0].mxu0
    %7460 = vmatprep.mubr.bf16.mxu0 %v5971
    %7461 = vmatmul.mubr.bf16.gmra.mrb[0].mxu0 %v5963
    %v7462 = vpop.f32.mrb[0].mxu0
    %v7463 = vadd.f32 %v7174, %v7462
    %v7464 = vpop.f32.mrb[0].mxu0
    %v7465 = vpop.f32.mrb[0].mxu0
    %v7466 = vadd.f32 %v7177, %v7465
    %v7467 = vpop.f32.mrb[0].mxu0
    %7468 = vdwg.mxu0
    %7469 = vmatprep.subr.bf16.mxu0 0
    %7470 = vmatpush1.bf16.msra.mxu0 %v6506
    %7471 = vmatprep.subr.bf16.mxu0 0
    %7472 = vmatpush1.bf16.msra.mxu0 %v6507
    %7473 = vmatprep.subr.bf16.mxu0 0
    %7474 = vmatpush1.bf16.msra.mxu0 %v6508
    %7475 = vmatprep.subr.bf16.mxu0 0
    %7476 = vmatpush1.bf16.msra.mxu0 %v6509
    %7477 = vmatprep.subr.bf16.mxu0 0
    %7478 = vmatpush1.bf16.msra.mxu0 %v6510
    %7479 = vmatprep.subr.bf16.mxu0 0
    %7480 = vmatpush1.bf16.msra.mxu0 %v6511
    %7481 = vmatprep.subr.bf16.mxu0 0
    %7482 = vmatpush1.bf16.msra.mxu0 %v6512
    %7483 = vmatprep.subr.bf16.mxu0 0
    %7484 = vmatpush1.bf16.msra.mxu0 %v6513
    %7485 = vmatprep.subr.bf16.mxu0 0
    %7486 = vmatpush1.bf16.msra.mxu0 %v6514
    %7487 = vmatprep.subr.bf16.mxu0 0
    %7488 = vmatpush1.bf16.msra.mxu0 %v6515
    %7489 = vmatprep.subr.bf16.mxu0 0
    %7490 = vmatpush1.bf16.msra.mxu0 %v6516
    %7491 = vmatprep.subr.bf16.mxu0 0
    %7492 = vmatpush1.bf16.msra.mxu0 %v6517
    %7493 = vmatprep.subr.bf16.mxu0 0
    %7494 = vmatpush1.bf16.msra.mxu0 %v6518
    %7495 = vmatprep.subr.bf16.mxu0 0
    %7496 = vmatpush1.bf16.msra.mxu0 %v6519
    %7497 = vmatprep.subr.bf16.mxu0 0
    %7498 = vmatpush1.bf16.msra.mxu0 %v6520
    %7499 = vmatprep.subr.bf16.mxu0 0
    %7500 = vmatpush1.bf16.msra.mxu0 %v6521
    %7501 = vmatprep.mubr.bf16.mxu0 %v5413
    %7502 = vmatmul.mubr.bf16.gmra.mrb[0].mxu0 %v5220
    %v7503 = vpop.f32.mrb[0].mxu0
    %v7504 = vadd.f32 %v7215, %v7503
    %v7505 = vpop.f32.mrb[0].mxu0
    %v7506 = vpop.f32.mrb[0].mxu0
    %v7507 = vadd.f32 %v7218, %v7506
    %v7508 = vpop.f32.mrb[0].mxu0
    %7509 = vmatprep.mubr.bf16.mxu0 %v5425
    %7510 = vmatmul.mubr.bf16.gmra.mrb[0].mxu0 %v5221
    %v7511 = vpop.f32.mrb[0].mxu0
    %v7512 = vadd.f32 %v7223, %v7511
    %v7513 = vpop.f32.mrb[0].mxu0
    %v7514 = vpop.f32.mrb[0].mxu0
    %v7515 = vadd.f32 %v7226, %v7514
    %v7516 = vpop.f32.mrb[0].mxu0
    %7517 = vmatprep.mubr.bf16.mxu0 %v5437
    %7518 = vmatmul.mubr.bf16.gmra.mrb[0].mxu0 %v5222
    %v7519 = vpop.f32.mrb[0].mxu0
    %v7520 = vadd.f32 %v7231, %v7519
    %v7521 = vpop.f32.mrb[0].mxu0
    %v7522 = vpop.f32.mrb[0].mxu0
    %v7523 = vadd.f32 %v7234, %v7522
    %v7524 = vpop.f32.mrb[0].mxu0
    %7525 = vmatprep.mubr.bf16.mxu0 %v5449
    %7526 = vmatmul.mubr.bf16.gmra.mrb[0].mxu0 %v5223
    %v7527 = vpop.f32.mrb[0].mxu0
    %v7528 = vadd.f32 %v7239, %v7527
    %v7529 = vpop.f32.mrb[0].mxu0
    %v7530 = vpop.f32.mrb[0].mxu0
    %v7531 = vadd.f32 %v7242, %v7530
    %v7532 = vpop.f32.mrb[0].mxu0
    %7533 = vmatprep.mubr.bf16.mxu0 %v5461
    %7534 = vmatmul.mubr.bf16.gmra.mrb[0].mxu0 %v5224
    %v7535 = vpop.f32.mrb[0].mxu0
    %v7536 = vadd.f32 %v7247, %v7535
    %v7537 = vpop.f32.mrb[0].mxu0
    %v7538 = vpop.f32.mrb[0].mxu0
    %v7539 = vadd.f32 %v7250, %v7538
    %v7540 = vpop.f32.mrb[0].mxu0
    %7541 = vmatprep.mubr.bf16.mxu0 %v5473
    %7542 = vmatmul.mubr.bf16.gmra.mrb[0].mxu0 %v5225
    %v7543 = vpop.f32.mrb[0].mxu0
    %v7544 = vadd.f32 %v7255, %v7543
    %v7545 = vpop.f32.mrb[0].mxu0
    %v7546 = vpop.f32.mrb[0].mxu0
    %v7547 = vadd.f32 %v7258, %v7546
    %v7548 = vpop.f32.mrb[0].mxu0
    %7549 = vmatprep.mubr.bf16.mxu0 %v5485
    %7550 = vmatmul.mubr.bf16.gmra.mrb[0].mxu0 %v5226
    %v7551 = vpop.f32.mrb[0].mxu0
    %v7552 = vadd.f32 %v7263, %v7551
    %v7553 = vpop.f32.mrb[0].mxu0
    %v7554 = vpop.f32.mrb[0].mxu0
    %v7555 = vadd.f32 %v7266, %v7554
    %v7556 = vpop.f32.mrb[0].mxu0
    %7557 = vmatprep.mubr.bf16.mxu0 %v5497
    %7558 = vmatmul.mubr.bf16.gmra.mrb[0].mxu0 %v5227
    %v7559 = vpop.f32.mrb[0].mxu0
    %v7560 = vadd.f32 %v7271, %v7559
    %v7561 = vpop.f32.mrb[0].mxu0
    %v7562 = vpop.f32.mrb[0].mxu0
    %v7563 = vadd.f32 %v7274, %v7562
    %v7564 = vpop.f32.mrb[0].mxu0
    %7565 = vmatprep.mubr.bf16.mxu0 %v5509
    %7566 = vmatmul.mubr.bf16.gmra.mrb[0].mxu0 %v5228
    %v7567 = vpop.f32.mrb[0].mxu0
    %v7568 = vadd.f32 %v7279, %v7567
    %v7569 = vpop.f32.mrb[0].mxu0
    %v7570 = vpop.f32.mrb[0].mxu0
    %v7571 = vadd.f32 %v7282, %v7570
    %v7572 = vpop.f32.mrb[0].mxu0
    %7573 = vmatprep.mubr.bf16.mxu0 %v5521
    %7574 = vmatmul.mubr.bf16.gmra.mrb[0].mxu0 %v5229
    %v7575 = vpop.f32.mrb[0].mxu0
    %v7576 = vadd.f32 %v7287, %v7575
    %v7577 = vpop.f32.mrb[0].mxu0
    %v7578 = vpop.f32.mrb[0].mxu0
    %v7579 = vadd.f32 %v7290, %v7578
    %v7580 = vpop.f32.mrb[0].mxu0
    %7581 = vmatprep.mubr.bf16.mxu0 %v5533
    %7582 = vmatmul.mubr.bf16.gmra.mrb[0].mxu0 %v5230
    %v7583 = vpop.f32.mrb[0].mxu0
    %v7584 = vadd.f32 %v7295, %v7583
    %v7585 = vpop.f32.mrb[0].mxu0
    %v7586 = vpop.f32.mrb[0].mxu0
    %v7587 = vadd.f32 %v7298, %v7586
    %v7588 = vpop.f32.mrb[0].mxu0
    %7589 = vmatprep.mubr.bf16.mxu0 %v5545
    %7590 = vmatmul.mubr.bf16.gmra.mrb[0].mxu0 %v5231
    %v7591 = vpop.f32.mrb[0].mxu0
    %v7592 = vadd.f32 %v7303, %v7591
    %v7593 = vpop.f32.mrb[0].mxu0
    %v7594 = vpop.f32.mrb[0].mxu0
    %v7595 = vadd.f32 %v7306, %v7594
    %v7596 = vpop.f32.mrb[0].mxu0
    %7597 = vmatprep.mubr.bf16.mxu0 %v5557
    %7598 = vmatmul.mubr.bf16.gmra.mrb[0].mxu0 %v5232
    %v7599 = vpop.f32.mrb[0].mxu0
    %v7600 = vadd.f32 %v7311, %v7599
    %v7601 = vpop.f32.mrb[0].mxu0
    %v7602 = vpop.f32.mrb[0].mxu0
    %v7603 = vadd.f32 %v7314, %v7602
    %v7604 = vpop.f32.mrb[0].mxu0
    %7605 = vmatprep.mubr.bf16.mxu0 %v5569
    %7606 = vmatmul.mubr.bf16.gmra.mrb[0].mxu0 %v5233
    %v7607 = vpop.f32.mrb[0].mxu0
    %v7608 = vadd.f32 %v7319, %v7607
    %v7609 = vpop.f32.mrb[0].mxu0
    %v7610 = vpop.f32.mrb[0].mxu0
    %v7611 = vadd.f32 %v7322, %v7610
    %v7612 = vpop.f32.mrb[0].mxu0
    %7613 = vmatprep.mubr.bf16.mxu0 %v5951
    %7614 = vmatmul.mubr.bf16.gmra.mrb[0].mxu0 %v5930
    %v7615 = vpop.f32.mrb[0].mxu0
    %v7616 = vadd.f32 %v7327, %v7615
    %v7617 = vpop.f32.mrb[0].mxu0
    %v7618 = vpop.f32.mrb[0].mxu0
    %v7619 = vadd.f32 %v7330, %v7618
    %v7620 = vpop.f32.mrb[0].mxu0
    %7621 = vmatprep.mubr.bf16.mxu0 %v6003
    %7622 = vmatmul.mubr.bf16.gmra.mrb[0].mxu0 %v5982
    %v7623 = vpop.f32.mrb[0].mxu0
    %v7624 = vadd.f32 %v7335, %v7623
    %v7625 = vpop.f32.mrb[0].mxu0
    %v7626 = vpop.f32.mrb[0].mxu0
    %v7627 = vadd.f32 %v7338, %v7626
    %v7628 = vpop.f32.mrb[0].mxu0
    %7629 = vmatprep.mubr.bf16.mxu0 %v5605
    %7630 = vmatmul.mubr.bf16.gmra.mrb[0].mxu0 %v5236
    %v7631 = vpop.f32.mrb[0].mxu0
    %v7632 = vadd.f32 %v7343, %v7631
    %v7633 = vpop.f32.mrb[0].mxu0
    %v7634 = vpop.f32.mrb[0].mxu0
    %v7635 = vadd.f32 %v7346, %v7634
    %v7636 = vpop.f32.mrb[0].mxu0
    %7637 = vmatprep.mubr.bf16.mxu0 %v5617
    %7638 = vmatmul.mubr.bf16.gmra.mrb[0].mxu0 %v5237
    %v7639 = vpop.f32.mrb[0].mxu0
    %v7640 = vadd.f32 %v7351, %v7639
    %v7641 = vpop.f32.mrb[0].mxu0
    %v7642 = vpop.f32.mrb[0].mxu0
    %v7643 = vadd.f32 %v7354, %v7642
    %v7644 = vpop.f32.mrb[0].mxu0
    %7645 = vmatprep.mubr.bf16.mxu0 %v5629
    %7646 = vmatmul.mubr.bf16.gmra.mrb[0].mxu0 %v5238
    %v7647 = vpop.f32.mrb[0].mxu0
    %v7648 = vadd.f32 %v7359, %v7647
    %v7649 = vpop.f32.mrb[0].mxu0
    %v7650 = vpop.f32.mrb[0].mxu0
    %v7651 = vadd.f32 %v7362, %v7650
    %v7652 = vpop.f32.mrb[0].mxu0
    %7653 = vmatprep.mubr.bf16.mxu0 %v5641
    %7654 = vmatmul.mubr.bf16.gmra.mrb[0].mxu0 %v5239
    %v7655 = vpop.f32.mrb[0].mxu0
    %v7656 = vadd.f32 %v7367, %v7655
    %v7657 = vpop.f32.mrb[0].mxu0
    %v7658 = vpop.f32.mrb[0].mxu0
    %v7659 = vadd.f32 %v7370, %v7658
    %v7660 = vpop.f32.mrb[0].mxu0
    %7661 = vmatprep.mubr.bf16.mxu0 %v5653
    %7662 = vmatmul.mubr.bf16.gmra.mrb[0].mxu0 %v5240
    %v7663 = vpop.f32.mrb[0].mxu0
    %v7664 = vadd.f32 %v7375, %v7663
    %v7665 = vpop.f32.mrb[0].mxu0
    %v7666 = vpop.f32.mrb[0].mxu0
    %v7667 = vadd.f32 %v7378, %v7666
    %v7668 = vpop.f32.mrb[0].mxu0
    %7669 = vmatprep.mubr.bf16.mxu0 %v5665
    %7670 = vmatmul.mubr.bf16.gmra.mrb[0].mxu0 %v5241
    %v7671 = vpop.f32.mrb[0].mxu0
    %v7672 = vadd.f32 %v7383, %v7671
    %v7673 = vpop.f32.mrb[0].mxu0
    %v7674 = vpop.f32.mrb[0].mxu0
    %v7675 = vadd.f32 %v7386, %v7674
    %v7676 = vpop.f32.mrb[0].mxu0
    %7677 = vmatprep.mubr.bf16.mxu0 %v5677
    %7678 = vmatmul.mubr.bf16.gmra.mrb[0].mxu0 %v5242
    %v7679 = vpop.f32.mrb[0].mxu0
    %v7680 = vadd.f32 %v7391, %v7679
    %v7681 = vpop.f32.mrb[0].mxu0
    %v7682 = vpop.f32.mrb[0].mxu0
    %v7683 = vadd.f32 %v7394, %v7682
    %v7684 = vpop.f32.mrb[0].mxu0
    %7685 = vmatprep.mubr.bf16.mxu0 %v5689
    %7686 = vmatmul.mubr.bf16.gmra.mrb[0].mxu0 %v5243
    %v7687 = vpop.f32.mrb[0].mxu0
    %v7688 = vadd.f32 %v7399, %v7687
    %v7689 = vpop.f32.mrb[0].mxu0
    %v7690 = vpop.f32.mrb[0].mxu0
    %v7691 = vadd.f32 %v7402, %v7690
    %v7692 = vpop.f32.mrb[0].mxu0
    %7693 = vmatprep.mubr.bf16.mxu0 %v5701
    %7694 = vmatmul.mubr.bf16.gmra.mrb[0].mxu0 %v5244
    %v7695 = vpop.f32.mrb[0].mxu0
    %v7696 = vadd.f32 %v7407, %v7695
    %v7697 = vpop.f32.mrb[0].mxu0
    %v7698 = vpop.f32.mrb[0].mxu0
    %v7699 = vadd.f32 %v7410, %v7698
    %v7700 = vpop.f32.mrb[0].mxu0
    %7701 = vmatprep.mubr.bf16.mxu0 %v5713
    %7702 = vmatmul.mubr.bf16.gmra.mrb[0].mxu0 %v5245
    %v7703 = vpop.f32.mrb[0].mxu0
    %v7704 = vadd.f32 %v7415, %v7703
    %v7705 = vpop.f32.mrb[0].mxu0
    %v7706 = vpop.f32.mrb[0].mxu0
    %v7707 = vadd.f32 %v7418, %v7706
    %v7708 = vpop.f32.mrb[0].mxu0
    %7709 = vmatprep.mubr.bf16.mxu0 %v5725
    %7710 = vmatmul.mubr.bf16.gmra.mrb[0].mxu0 %v5246
    %v7711 = vpop.f32.mrb[0].mxu0
    %v7712 = vadd.f32 %v7423, %v7711
    %v7713 = vpop.f32.mrb[0].mxu0
    %v7714 = vpop.f32.mrb[0].mxu0
    %v7715 = vadd.f32 %v7426, %v7714
    %v7716 = vpop.f32.mrb[0].mxu0
    %7717 = vmatprep.mubr.bf16.mxu0 %v5737
    %7718 = vmatmul.mubr.bf16.gmra.mrb[0].mxu0 %v5247
    %v7719 = vpop.f32.mrb[0].mxu0
    %v7720 = vadd.f32 %v7431, %v7719
    %v7721 = vpop.f32.mrb[0].mxu0
    %v7722 = vpop.f32.mrb[0].mxu0
    %v7723 = vadd.f32 %v7434, %v7722
    %v7724 = vpop.f32.mrb[0].mxu0
    %7725 = vmatprep.mubr.bf16.mxu0 %v5749
    %7726 = vmatmul.mubr.bf16.gmra.mrb[0].mxu0 %v5248
    %v7727 = vpop.f32.mrb[0].mxu0
    %v7728 = vadd.f32 %v7439, %v7727
    %v7729 = vpop.f32.mrb[0].mxu0
    %v7730 = vpop.f32.mrb[0].mxu0
    %v7731 = vadd.f32 %v7442, %v7730
    %v7732 = vpop.f32.mrb[0].mxu0
    %7733 = vmatprep.mubr.bf16.mxu0 %v5761
    %7734 = vmatmul.mubr.bf16.gmra.mrb[0].mxu0 %v5249
    %v7735 = vpop.f32.mrb[0].mxu0
    %v7736 = vadd.f32 %v7447, %v7735
    %v7737 = vpop.f32.mrb[0].mxu0
    %v7738 = vpop.f32.mrb[0].mxu0
    %v7739 = vadd.f32 %v7450, %v7738
    %v7740 = vpop.f32.mrb[0].mxu0
    %7741 = vmatprep.mubr.bf16.mxu0 %v5963
    %7742 = vmatmul.mubr.bf16.gmra.mrb[0].mxu0 %v5931
    %v7743 = vpop.f32.mrb[0].mxu0
    %v7744 = vadd.f32 %v7455, %v7743
    %v7745 = vpop.f32.mrb[0].mxu0
    %v7746 = vpop.f32.mrb[0].mxu0
    %v7747 = vadd.f32 %v7458, %v7746
    %v7748 = vpop.f32.mrb[0].mxu0
    %7749 = vmatprep.mubr.bf16.mxu0 %v6015
    %7750 = vmatmul.mubr.bf16.gmra.mrb[0].mxu0 %v5983
    %v7751 = vpop.f32.mrb[0].mxu0
    %v7752 = vadd.f32 %v7463, %v7751
    %v7753 = vpop.f32.mrb[0].mxu0
    %v7754 = vpop.f32.mrb[0].mxu0
    %v7755 = vadd.f32 %v7466, %v7754
    %v7756 = vpop.f32.mrb[0].mxu0
    %7757 = vdwg.mxu0
    %7758 = vmatprep.subr.bf16.mxu0 0
    %7759 = vmatpush1.bf16.msra.mxu0 %v6522
    %7760 = vmatprep.subr.bf16.mxu0 0
    %7761 = vmatpush1.bf16.msra.mxu0 %v6523
    %7762 = vmatprep.subr.bf16.mxu0 0
    %7763 = vmatpush1.bf16.msra.mxu0 %v6524
    %7764 = vmatprep.subr.bf16.mxu0 0
    %7765 = vmatpush1.bf16.msra.mxu0 %v6525
    %7766 = vmatprep.subr.bf16.mxu0 0
    %7767 = vmatpush1.bf16.msra.mxu0 %v6526
    %7768 = vmatprep.subr.bf16.mxu0 0
    %7769 = vmatpush1.bf16.msra.mxu0 %v6527
    %7770 = vmatprep.subr.bf16.mxu0 0
    %7771 = vmatpush1.bf16.msra.mxu0 %v6528
    %7772 = vmatprep.subr.bf16.mxu0 0
    %7773 = vmatpush1.bf16.msra.mxu0 %v6529
    %7774 = vmatprep.subr.bf16.mxu0 0
    %7775 = vmatpush1.bf16.msra.mxu0 0
    %7776 = vmatprep.subr.bf16.mxu0 0
    %7777 = vmatpush1.bf16.msra.mxu0 0
    %7778 = vmatprep.subr.bf16.mxu0 0
    %7779 = vmatpush1.bf16.msra.mxu0 0
    %7780 = vmatprep.subr.bf16.mxu0 0
    %7781 = vmatpush1.bf16.msra.mxu0 0
    %7782 = vmatprep.subr.bf16.mxu0 0
    %7783 = vmatpush1.bf16.msra.mxu0 0
    %7784 = vmatprep.subr.bf16.mxu0 0
    %7785 = vmatpush1.bf16.msra.mxu0 0
    %7786 = vmatprep.subr.bf16.mxu0 0
    %7787 = vmatpush1.bf16.msra.mxu0 0
    %7788 = vmatprep.subr.bf16.mxu0 0
    %7789 = vmatpush1.bf16.msra.mxu0 0
    %7790 = vmatprep.mubr.bf16.mxu0 0
    %7791 = vmatmul.mubr.bf16.gmra.mrb[0].mxu0 %v5802
    %v7792 = vpop.f32.mrb[0].mxu0
    %v7793 = vadd.f32 %v7504, %v7792
    %v7794 = vpop.f32.mrb[0].mxu0
    %v7795 = vpop.f32.mrb[0].mxu0
    %v7796 = vadd.f32 %v7507, %v7795
    %v7797 = vpop.f32.mrb[0].mxu0
    %7798 = vmatprep.mubr.bf16.mxu0 0
    %7799 = vmatmul.mubr.bf16.gmra.mrb[0].mxu0 %v5805
    %v7800 = vpop.f32.mrb[0].mxu0
    %v7801 = vadd.f32 %v7512, %v7800
    %v7802 = vpop.f32.mrb[0].mxu0
    %v7803 = vpop.f32.mrb[0].mxu0
    %v7804 = vadd.f32 %v7515, %v7803
    %v7805 = vpop.f32.mrb[0].mxu0
    %7806 = vmatprep.mubr.bf16.mxu0 0
    %7807 = vmatmul.mubr.bf16.gmra.mrb[0].mxu0 %v5808
    %v7808 = vpop.f32.mrb[0].mxu0
    %v7809 = vadd.f32 %v7520, %v7808
    %v7810 = vpop.f32.mrb[0].mxu0
    %v7811 = vpop.f32.mrb[0].mxu0
    %v7812 = vadd.f32 %v7523, %v7811
    %v7813 = vpop.f32.mrb[0].mxu0
    %7814 = vmatprep.mubr.bf16.mxu0 0
    %7815 = vmatmul.mubr.bf16.gmra.mrb[0].mxu0 %v5811
    %v7816 = vpop.f32.mrb[0].mxu0
    %v7817 = vadd.f32 %v7528, %v7816
    %v7818 = vpop.f32.mrb[0].mxu0
    %v7819 = vpop.f32.mrb[0].mxu0
    %v7820 = vadd.f32 %v7531, %v7819
    %v7821 = vpop.f32.mrb[0].mxu0
    %7822 = vmatprep.mubr.bf16.mxu0 0
    %7823 = vmatmul.mubr.bf16.gmra.mrb[0].mxu0 %v5814
    %v7824 = vpop.f32.mrb[0].mxu0
    %v7825 = vadd.f32 %v7536, %v7824
    %v7826 = vpop.f32.mrb[0].mxu0
    %v7827 = vpop.f32.mrb[0].mxu0
    %v7828 = vadd.f32 %v7539, %v7827
    %v7829 = vpop.f32.mrb[0].mxu0
    %7830 = vmatprep.mubr.bf16.mxu0 0
    %7831 = vmatmul.mubr.bf16.gmra.mrb[0].mxu0 %v5817
    %v7832 = vpop.f32.mrb[0].mxu0
    %v7833 = vadd.f32 %v7544, %v7832
    %v7834 = vpop.f32.mrb[0].mxu0
    %v7835 = vpop.f32.mrb[0].mxu0
    %v7836 = vadd.f32 %v7547, %v7835
    %v7837 = vpop.f32.mrb[0].mxu0
    %7838 = vmatprep.mubr.bf16.mxu0 0
    %7839 = vmatmul.mubr.bf16.gmra.mrb[0].mxu0 %v5820
    %v7840 = vpop.f32.mrb[0].mxu0
    %v7841 = vadd.f32 %v7552, %v7840
    %v7842 = vpop.f32.mrb[0].mxu0
    %v7843 = vpop.f32.mrb[0].mxu0
    %v7844 = vadd.f32 %v7555, %v7843
    %v7845 = vpop.f32.mrb[0].mxu0
    %7846 = vmatprep.mubr.bf16.mxu0 0
    %7847 = vmatmul.mubr.bf16.gmra.mrb[0].mxu0 %v5823
    %v7848 = vpop.f32.mrb[0].mxu0
    %v7849 = vadd.f32 %v7560, %v7848
    %v7850 = vpop.f32.mrb[0].mxu0
    %v7851 = vpop.f32.mrb[0].mxu0
    %v7852 = vadd.f32 %v7563, %v7851
    %v7853 = vpop.f32.mrb[0].mxu0
    %7854 = vmatprep.mubr.bf16.mxu0 0
    %7855 = vmatmul.mubr.bf16.gmra.mrb[0].mxu0 %v5826
    %v7856 = vpop.f32.mrb[0].mxu0
    %v7857 = vadd.f32 %v7568, %v7856
    %v7858 = vpop.f32.mrb[0].mxu0
    %v7859 = vpop.f32.mrb[0].mxu0
    %v7860 = vadd.f32 %v7571, %v7859
    %v7861 = vpop.f32.mrb[0].mxu0
    %7862 = vmatprep.mubr.bf16.mxu0 0
    %7863 = vmatmul.mubr.bf16.gmra.mrb[0].mxu0 %v5829
    %v7864 = vpop.f32.mrb[0].mxu0
    %v7865 = vadd.f32 %v7576, %v7864
    %v7866 = vpop.f32.mrb[0].mxu0
    %v7867 = vpop.f32.mrb[0].mxu0
    %v7868 = vadd.f32 %v7579, %v7867
    %v7869 = vpop.f32.mrb[0].mxu0
    %7870 = vmatprep.mubr.bf16.mxu0 0
    %7871 = vmatmul.mubr.bf16.gmra.mrb[0].mxu0 %v5832
    %v7872 = vpop.f32.mrb[0].mxu0
    %v7873 = vadd.f32 %v7584, %v7872
    %v7874 = vpop.f32.mrb[0].mxu0
    %v7875 = vpop.f32.mrb[0].mxu0
    %v7876 = vadd.f32 %v7587, %v7875
    %v7877 = vpop.f32.mrb[0].mxu0
    %7878 = vmatprep.mubr.bf16.mxu0 0
    %7879 = vmatmul.mubr.bf16.gmra.mrb[0].mxu0 %v5835
    %v7880 = vpop.f32.mrb[0].mxu0
    %v7881 = vadd.f32 %v7592, %v7880
    %v7882 = vpop.f32.mrb[0].mxu0
    %v7883 = vpop.f32.mrb[0].mxu0
    %v7884 = vadd.f32 %v7595, %v7883
    %v7885 = vpop.f32.mrb[0].mxu0
    %7886 = vmatprep.mubr.bf16.mxu0 0
    %7887 = vmatmul.mubr.bf16.gmra.mrb[0].mxu0 %v5838
    %v7888 = vpop.f32.mrb[0].mxu0
    %v7889 = vadd.f32 %v7600, %v7888
    %v7890 = vpop.f32.mrb[0].mxu0
    %v7891 = vpop.f32.mrb[0].mxu0
    %v7892 = vadd.f32 %v7603, %v7891
    %v7893 = vpop.f32.mrb[0].mxu0
    %7894 = vmatprep.mubr.bf16.mxu0 0
    %7895 = vmatmul.mubr.bf16.gmra.mrb[0].mxu0 %v5841
    %v7896 = vpop.f32.mrb[0].mxu0
    %v7897 = vadd.f32 %v7608, %v7896
    %v7898 = vpop.f32.mrb[0].mxu0
    %v7899 = vpop.f32.mrb[0].mxu0
    %v7900 = vadd.f32 %v7611, %v7899
    %v7901 = vpop.f32.mrb[0].mxu0
    %7902 = vmatprep.mubr.bf16.mxu0 0
    %7903 = vmatmul.mubr.bf16.gmra.mrb[0].mxu0 %v5968
    %v7904 = vpop.f32.mrb[0].mxu0
    %v7905 = vadd.f32 %v7616, %v7904
    %v7906 = vpop.f32.mrb[0].mxu0
    %v7907 = vpop.f32.mrb[0].mxu0
    %v7908 = vadd.f32 %v7619, %v7907
    %v7909 = vpop.f32.mrb[0].mxu0
    %7910 = vmatprep.mubr.bf16.mxu0 0
    %7911 = vmatmul.mubr.bf16.gmra.mrb[0].mxu0 %v6020
    %v7912 = vpop.f32.mrb[0].mxu0
    %v7913 = vadd.f32 %v7624, %v7912
    %v7914 = vpop.f32.mrb[0].mxu0
    %v7915 = vpop.f32.mrb[0].mxu0
    %v7916 = vadd.f32 %v7627, %v7915
    %v7917 = vpop.f32.mrb[0].mxu0
    %7918 = vmatprep.mubr.bf16.mxu0 0
    %7919 = vmatmul.mubr.bf16.gmra.mrb[0].mxu0 %v5850
    %v7920 = vpop.f32.mrb[0].mxu0
    %v7921 = vadd.f32 %v7632, %v7920
    %v7922 = vpop.f32.mrb[0].mxu0
    %v7923 = vpop.f32.mrb[0].mxu0
    %v7924 = vadd.f32 %v7635, %v7923
    %v7925 = vpop.f32.mrb[0].mxu0
    %7926 = vmatprep.mubr.bf16.mxu0 0
    %7927 = vmatmul.mubr.bf16.gmra.mrb[0].mxu0 %v5853
    %v7928 = vpop.f32.mrb[0].mxu0
    %v7929 = vadd.f32 %v7640, %v7928
    %v7930 = vpop.f32.mrb[0].mxu0
    %v7931 = vpop.f32.mrb[0].mxu0
    %v7932 = vadd.f32 %v7643, %v7931
    %v7933 = vpop.f32.mrb[0].mxu0
    %7934 = vmatprep.mubr.bf16.mxu0 0
    %7935 = vmatmul.mubr.bf16.gmra.mrb[0].mxu0 %v5856
    %v7936 = vpop.f32.mrb[0].mxu0
    %v7937 = vadd.f32 %v7648, %v7936
    %v7938 = vpop.f32.mrb[0].mxu0
    %v7939 = vpop.f32.mrb[0].mxu0
    %v7940 = vadd.f32 %v7651, %v7939
    %v7941 = vpop.f32.mrb[0].mxu0
    %7942 = vmatprep.mubr.bf16.mxu0 0
    %7943 = vmatmul.mubr.bf16.gmra.mrb[0].mxu0 %v5859
    %v7944 = vpop.f32.mrb[0].mxu0
    %v7945 = vadd.f32 %v7656, %v7944
    %v7946 = vpop.f32.mrb[0].mxu0
    %v7947 = vpop.f32.mrb[0].mxu0
    %v7948 = vadd.f32 %v7659, %v7947
    %v7949 = vpop.f32.mrb[0].mxu0
    %7950 = vmatprep.mubr.bf16.mxu0 0
    %7951 = vmatmul.mubr.bf16.gmra.mrb[0].mxu0 %v5862
    %v7952 = vpop.f32.mrb[0].mxu0
    %v7953 = vadd.f32 %v7664, %v7952
    %v7954 = vpop.f32.mrb[0].mxu0
    %v7955 = vpop.f32.mrb[0].mxu0
    %v7956 = vadd.f32 %v7667, %v7955
    %v7957 = vpop.f32.mrb[0].mxu0
    %7958 = vmatprep.mubr.bf16.mxu0 0
    %7959 = vmatmul.mubr.bf16.gmra.mrb[0].mxu0 %v5865
    %v7960 = vpop.f32.mrb[0].mxu0
    %v7961 = vadd.f32 %v7672, %v7960
    %v7962 = vpop.f32.mrb[0].mxu0
    %v7963 = vpop.f32.mrb[0].mxu0
    %v7964 = vadd.f32 %v7675, %v7963
    %v7965 = vpop.f32.mrb[0].mxu0
    %7966 = vmatprep.mubr.bf16.mxu0 0
    %7967 = vmatmul.mubr.bf16.gmra.mrb[0].mxu0 %v5868
    %v7968 = vpop.f32.mrb[0].mxu0
    %v7969 = vadd.f32 %v7680, %v7968
    %v7970 = vpop.f32.mrb[0].mxu0
    %v7971 = vpop.f32.mrb[0].mxu0
    %v7972 = vadd.f32 %v7683, %v7971
    %v7973 = vpop.f32.mrb[0].mxu0
    %7974 = vmatprep.mubr.bf16.mxu0 0
    %7975 = vmatmul.mubr.bf16.gmra.mrb[0].mxu0 %v5871
    %v7976 = vpop.f32.mrb[0].mxu0
    %v7977 = vadd.f32 %v7688, %v7976
    %v7978 = vpop.f32.mrb[0].mxu0
    %v7979 = vpop.f32.mrb[0].mxu0
    %v7980 = vadd.f32 %v7691, %v7979
    %v7981 = vpop.f32.mrb[0].mxu0
    %7982 = vmatprep.mubr.bf16.mxu0 0
    %7983 = vmatmul.mubr.bf16.gmra.mrb[0].mxu0 %v5874
    %v7984 = vpop.f32.mrb[0].mxu0
    %v7985 = vadd.f32 %v7696, %v7984
    %v7986 = vpop.f32.mrb[0].mxu0
    %v7987 = vpop.f32.mrb[0].mxu0
    %v7988 = vadd.f32 %v7699, %v7987
    %v7989 = vpop.f32.mrb[0].mxu0
    %7990 = vmatprep.mubr.bf16.mxu0 0
    %7991 = vmatmul.mubr.bf16.gmra.mrb[0].mxu0 %v5877
    %v7992 = vpop.f32.mrb[0].mxu0
    %v7993 = vadd.f32 %v7704, %v7992
    %v7994 = vpop.f32.mrb[0].mxu0
    %v7995 = vpop.f32.mrb[0].mxu0
    %v7996 = vadd.f32 %v7707, %v7995
    %v7997 = vpop.f32.mrb[0].mxu0
    %7998 = vmatprep.mubr.bf16.mxu0 0
    %7999 = vmatmul.mubr.bf16.gmra.mrb[0].mxu0 %v5880
    %v8000 = vpop.f32.mrb[0].mxu0
    %v8001 = vadd.f32 %v7712, %v8000
    %v8002 = vpop.f32.mrb[0].mxu0
    %v8003 = vpop.f32.mrb[0].mxu0
    %v8004 = vadd.f32 %v7715, %v8003
    %v8005 = vpop.f32.mrb[0].mxu0
    %8006 = vmatprep.mubr.bf16.mxu0 0
    %8007 = vmatmul.mubr.bf16.gmra.mrb[0].mxu0 %v5883
    %v8008 = vpop.f32.mrb[0].mxu0
    %v8009 = vadd.f32 %v7720, %v8008
    %v8010 = vpop.f32.mrb[0].mxu0
    %v8011 = vpop.f32.mrb[0].mxu0
    %v8012 = vadd.f32 %v7723, %v8011
    %v8013 = vpop.f32.mrb[0].mxu0
    %8014 = vmatprep.mubr.bf16.mxu0 0
    %8015 = vmatmul.mubr.bf16.gmra.mrb[0].mxu0 %v5886
    %v8016 = vpop.f32.mrb[0].mxu0
    %v8017 = vadd.f32 %v7728, %v8016
    %v8018 = vpop.f32.mrb[0].mxu0
    %v8019 = vpop.f32.mrb[0].mxu0
    %v8020 = vadd.f32 %v7731, %v8019
    %v8021 = vpop.f32.mrb[0].mxu0
    %8022 = vmatprep.mubr.bf16.mxu0 0
    %8023 = vmatmul.mubr.bf16.gmra.mrb[0].mxu0 %v5889
    %v8024 = vpop.f32.mrb[0].mxu0
    %v8025 = vadd.f32 %v7736, %v8024
    %v8026 = vpop.f32.mrb[0].mxu0
    %v8027 = vpop.f32.mrb[0].mxu0
    %v8028 = vadd.f32 %v7739, %v8027
    %v8029 = vpop.f32.mrb[0].mxu0
    %8030 = vmatprep.mubr.bf16.mxu0 0
    %8031 = vmatmul.mubr.bf16.gmra.mrb[0].mxu0 %v5971
    %v8032 = vpop.f32.mrb[0].mxu0
    %v8033 = vadd.f32 %v7744, %v8032
    %v8034 = vpop.f32.mrb[0].mxu0
    %v8035 = vpop.f32.mrb[0].mxu0
    %v8036 = vadd.f32 %v7747, %v8035
    %v8037 = vpop.f32.mrb[0].mxu0
    %8038 = vmatprep.mubr.bf16.mxu0 0
    %8039 = vmatmul.mubr.bf16.gmra.mrb[0].mxu0 %v6023
    %v8040 = vpop.f32.mrb[0].mxu0
    %v8041 = vadd.f32 %v7752, %v8040
    %v8042 = vpop.f32.mrb[0].mxu0
    %v8043 = vpop.f32.mrb[0].mxu0
    %v8044 = vadd.f32 %v7755, %v8043
    %v8045 = vpop.f32.mrb[0].mxu0
    %8046 = vdwg.mxu0
    %v8047 = vld [vmem:[%s6] sm:$0x1]
    %v8048 = vld [vmem:[%s7] sm:$0x1]
    %v8049 = vadd.f32 %v7793, %v7796
    %v8050 = vadd.f32 %v8049, %v7801
    %v8051 = vadd.f32 %v8050, %v7804
    %v8052 = vadd.f32 %v8051, %v7809
    %v8053 = vadd.f32 %v8052, %v7812
    %v8054 = vadd.f32 %v8053, %v7817
    %v8055 = vadd.f32 %v8054, %v7820
    %v8056 = vadd.f32 %v8055, %v7825
    %v8057 = vadd.f32 %v8056, %v7828
    %v8058 = vadd.f32 %v8057, %v7833
    %v8059 = vadd.f32 %v8058, %v7836
    %v8060 = vadd.f32 %v8059, %v7841
    %v8061 = vadd.f32 %v8060, %v7844
    %v8062 = vadd.f32 %v8061, %v7849
    %v8063 = vadd.f32 %v8062, %v7852
    %v8064 = vadd.f32 %v8063, %v7857
    %v8065 = vadd.f32 %v8064, %v7860
    %v8066 = vadd.f32 %v8065, %v7865
    %v8067 = vadd.f32 %v8066, %v7868
    %v8068 = vadd.f32 %v8067, %v7873
    %v8069 = vadd.f32 %v8068, %v7876
    %v8070 = vadd.f32 %v8069, %v7881
    %v8071 = vadd.f32 %v8070, %v7884
    %v8072 = vadd.f32 %v8071, %v7889
    %v8073 = vadd.f32 %v8072, %v7892
    %v8074 = vadd.f32 %v8073, %v7897
    %v8075 = vadd.f32 %v8074, %v7900
    %v8076 = vadd.f32 %v8075, %v7905
    %v8077 = vadd.f32 %v8076, %v7908
    %v8078 = vadd.f32 %v8077, %v7913
    %v8079 = vadd.f32 %v8078, %v7916
    %v8080 = vrot.slane %v8079, 4
    %v8081 = vadd.f32 %v8079, %v8080
    %v8082 = vrot.slane %v8081, 2
    %v8083 = vadd.f32 %v8081, %v8082
    %v8084 = vrot.slane %v8083, 1
    %v8085 = vadd.f32 %v8083, %v8084
    %v8086 = vadd.f32 %v7921, %v7924
    %v8087 = vadd.f32 %v8086, %v7929
    %v8088 = vadd.f32 %v8087, %v7932
    %v8089 = vadd.f32 %v8088, %v7937
    %v8090 = vadd.f32 %v8089, %v7940
    %v8091 = vadd.f32 %v8090, %v7945
    %v8092 = vadd.f32 %v8091, %v7948
    %v8093 = vadd.f32 %v8092, %v7953
    %v8094 = vadd.f32 %v8093, %v7956
    %v8095 = vadd.f32 %v8094, %v7961
    %v8096 = vadd.f32 %v8095, %v7964
    %v8097 = vadd.f32 %v8096, %v7969
    %v8098 = vadd.f32 %v8097, %v7972
    %v8099 = vadd.f32 %v8098, %v7977
    %v8100 = vadd.f32 %v8099, %v7980
    %v8101 = vadd.f32 %v8100, %v7985
    %v8102 = vadd.f32 %v8101, %v7988
    %v8103 = vadd.f32 %v8102, %v7993
    %v8104 = vadd.f32 %v8103, %v7996
    %v8105 = vadd.f32 %v8104, %v8001
    %v8106 = vadd.f32 %v8105, %v8004
    %v8107 = vadd.f32 %v8106, %v8009
    %v8108 = vadd.f32 %v8107, %v8012
    %v8109 = vadd.f32 %v8108, %v8017
    %v8110 = vadd.f32 %v8109, %v8020
    %v8111 = vadd.f32 %v8110, %v8025
    %v8112 = vadd.f32 %v8111, %v8028
    %v8113 = vadd.f32 %v8112, %v8033
    %v8114 = vadd.f32 %v8113, %v8036
    %v8115 = vadd.f32 %v8114, %v8041
    %v8116 = vadd.f32 %v8115, %v8044
    %v8117 = vrot.slane %v8116, 4
    %v8118 = vadd.f32 %v8116, %v8117
    %v8119 = vrot.slane %v8118, 2
    %v8120 = vadd.f32 %v8118, %v8119
    %v8121 = vrot.slane %v8120, 1
    %v8122 = vadd.f32 %v8120, %v8121
    %v8123 = vmul.f32 %v8085, %v3218
    %v8124 = vmul.f32 %v8122, %v3218
    %v8125 = vsub.f32 %v7793, %v8123
    %v8126 = vsub.f32 %v7796, %v8123
    %v8127 = vsub.f32 %v7801, %v8123
    %v8128 = vsub.f32 %v7804, %v8123
    %v8129 = vsub.f32 %v7809, %v8123
    %v8130 = vsub.f32 %v7812, %v8123
    %v8131 = vsub.f32 %v7817, %v8123
    %v8132 = vsub.f32 %v7820, %v8123
    %v8133 = vsub.f32 %v7825, %v8123
    %v8134 = vsub.f32 %v7828, %v8123
    %v8135 = vsub.f32 %v7833, %v8123
    %v8136 = vsub.f32 %v7836, %v8123
    %v8137 = vsub.f32 %v7841, %v8123
    %v8138 = vsub.f32 %v7844, %v8123
    %v8139 = vsub.f32 %v7849, %v8123
    %v8140 = vsub.f32 %v7852, %v8123
    %v8141 = vsub.f32 %v7857, %v8123
    %v8142 = vsub.f32 %v7860, %v8123
    %v8143 = vsub.f32 %v7865, %v8123
    %v8144 = vsub.f32 %v7868, %v8123
    %v8145 = vsub.f32 %v7873, %v8123
    %v8146 = vsub.f32 %v7876, %v8123
    %v8147 = vsub.f32 %v7881, %v8123
    %v8148 = vsub.f32 %v7884, %v8123
    %v8149 = vsub.f32 %v7889, %v8123
    %v8150 = vsub.f32 %v7892, %v8123
    %v8151 = vsub.f32 %v7897, %v8123
    %v8152 = vsub.f32 %v7900, %v8123
    %v8153 = vsub.f32 %v7905, %v8123
    %v8154 = vsub.f32 %v7908, %v8123
    %v8155 = vsub.f32 %v7913, %v8123
    %v8156 = vsub.f32 %v7916, %v8123
    %v8157 = vsub.f32 %v7921, %v8124
    %v8158 = vsub.f32 %v7924, %v8124
    %v8159 = vsub.f32 %v7929, %v8124
    %v8160 = vsub.f32 %v7932, %v8124
    %v8161 = vsub.f32 %v7937, %v8124
    %v8162 = vsub.f32 %v7940, %v8124
    %v8163 = vsub.f32 %v7945, %v8124
    %v8164 = vsub.f32 %v7948, %v8124
    %v8165 = vsub.f32 %v7953, %v8124
    %v8166 = vsub.f32 %v7956, %v8124
    %v8167 = vsub.f32 %v7961, %v8124
    %v8168 = vsub.f32 %v7964, %v8124
    %v8169 = vsub.f32 %v7969, %v8124
    %v8170 = vsub.f32 %v7972, %v8124
    %v8171 = vsub.f32 %v7977, %v8124
    %v8172 = vsub.f32 %v7980, %v8124
    %v8173 = vsub.f32 %v7985, %v8124
    %v8174 = vsub.f32 %v7988, %v8124
    %v8175 = vsub.f32 %v7993, %v8124
    %v8176 = vsub.f32 %v7996, %v8124
    %v8177 = vsub.f32 %v8001, %v8124
    %v8178 = vsub.f32 %v8004, %v8124
    %v8179 = vsub.f32 %v8009, %v8124
    %v8180 = vsub.f32 %v8012, %v8124
    %v8181 = vsub.f32 %v8017, %v8124
    %v8182 = vsub.f32 %v8020, %v8124
    %v8183 = vsub.f32 %v8025, %v8124
    %v8184 = vsub.f32 %v8028, %v8124
    %v8185 = vsub.f32 %v8033, %v8124
    %v8186 = vsub.f32 %v8036, %v8124
    %v8187 = vsub.f32 %v8041, %v8124
    %v8188 = vsub.f32 %v8044, %v8124
    %v8189 = vmul.f32 %v8125, %v8125
    %v8190 = vmul.f32 %v8126, %v8126
    %v8191 = vmul.f32 %v8127, %v8127
    %v8192 = vmul.f32 %v8128, %v8128
    %v8193 = vmul.f32 %v8129, %v8129
    %v8194 = vmul.f32 %v8130, %v8130
    %v8195 = vmul.f32 %v8131, %v8131
    %v8196 = vmul.f32 %v8132, %v8132
    %v8197 = vmul.f32 %v8133, %v8133
    %v8198 = vmul.f32 %v8134, %v8134
    %v8199 = vmul.f32 %v8135, %v8135
    %v8200 = vmul.f32 %v8136, %v8136
    %v8201 = vmul.f32 %v8137, %v8137
    %v8202 = vmul.f32 %v8138, %v8138
    %v8203 = vmul.f32 %v8139, %v8139
    %v8204 = vmul.f32 %v8140, %v8140
    %v8205 = vmul.f32 %v8141, %v8141
    %v8206 = vmul.f32 %v8142, %v8142
    %v8207 = vmul.f32 %v8143, %v8143
    %v8208 = vmul.f32 %v8144, %v8144
    %v8209 = vmul.f32 %v8145, %v8145
    %v8210 = vmul.f32 %v8146, %v8146
    %v8211 = vmul.f32 %v8147, %v8147
    %v8212 = vmul.f32 %v8148, %v8148
    %v8213 = vmul.f32 %v8149, %v8149
    %v8214 = vmul.f32 %v8150, %v8150
    %v8215 = vmul.f32 %v8151, %v8151
    %v8216 = vmul.f32 %v8152, %v8152
    %v8217 = vmul.f32 %v8153, %v8153
    %v8218 = vmul.f32 %v8154, %v8154
    %v8219 = vmul.f32 %v8155, %v8155
    %v8220 = vmul.f32 %v8156, %v8156
    %v8221 = vmul.f32 %v8157, %v8157
    %v8222 = vmul.f32 %v8158, %v8158
    %v8223 = vmul.f32 %v8159, %v8159
    %v8224 = vmul.f32 %v8160, %v8160
    %v8225 = vmul.f32 %v8161, %v8161
    %v8226 = vmul.f32 %v8162, %v8162
    %v8227 = vmul.f32 %v8163, %v8163
    %v8228 = vmul.f32 %v8164, %v8164
    %v8229 = vmul.f32 %v8165, %v8165
    %v8230 = vmul.f32 %v8166, %v8166
    %v8231 = vmul.f32 %v8167, %v8167
    %v8232 = vmul.f32 %v8168, %v8168
    %v8233 = vmul.f32 %v8169, %v8169
    %v8234 = vmul.f32 %v8170, %v8170
    %v8235 = vmul.f32 %v8171, %v8171
    %v8236 = vmul.f32 %v8172, %v8172
    %v8237 = vmul.f32 %v8173, %v8173
    %v8238 = vmul.f32 %v8174, %v8174
    %v8239 = vmul.f32 %v8175, %v8175
    %v8240 = vmul.f32 %v8176, %v8176
    %v8241 = vmul.f32 %v8177, %v8177
    %v8242 = vmul.f32 %v8178, %v8178
    %v8243 = vmul.f32 %v8179, %v8179
    %v8244 = vmul.f32 %v8180, %v8180
    %v8245 = vmul.f32 %v8181, %v8181
    %v8246 = vmul.f32 %v8182, %v8182
    %v8247 = vmul.f32 %v8183, %v8183
    %v8248 = vmul.f32 %v8184, %v8184
    %v8249 = vmul.f32 %v8185, %v8185
    %v8250 = vmul.f32 %v8186, %v8186
    %v8251 = vmul.f32 %v8187, %v8187
    %v8252 = vmul.f32 %v8188, %v8188
    %v8253 = vadd.f32 %v8189, %v8190
    %v8254 = vadd.f32 %v8253, %v8191
    %v8255 = vadd.f32 %v8254, %v8192
    %v8256 = vadd.f32 %v8255, %v8193
    %v8257 = vadd.f32 %v8256, %v8194
    %v8258 = vadd.f32 %v8257, %v8195
    %v8259 = vadd.f32 %v8258, %v8196
    %v8260 = vadd.f32 %v8259, %v8197
    %v8261 = vadd.f32 %v8260, %v8198
    %v8262 = vadd.f32 %v8261, %v8199
    %v8263 = vadd.f32 %v8262, %v8200
    %v8264 = vadd.f32 %v8263, %v8201
    %v8265 = vadd.f32 %v8264, %v8202
    %v8266 = vadd.f32 %v8265, %v8203
    %v8267 = vadd.f32 %v8266, %v8204
    %v8268 = vadd.f32 %v8267, %v8205
    %v8269 = vadd.f32 %v8268, %v8206
    %v8270 = vadd.f32 %v8269, %v8207
    %v8271 = vadd.f32 %v8270, %v8208
    %v8272 = vadd.f32 %v8271, %v8209
    %v8273 = vadd.f32 %v8272, %v8210
    %v8274 = vadd.f32 %v8273, %v8211
    %v8275 = vadd.f32 %v8274, %v8212
    %v8276 = vadd.f32 %v8275, %v8213
    %v8277 = vadd.f32 %v8276, %v8214
    %v8278 = vadd.f32 %v8277, %v8215
    %v8279 = vadd.f32 %v8278, %v8216
    %v8280 = vadd.f32 %v8279, %v8217
    %v8281 = vadd.f32 %v8280, %v8218
    %v8282 = vadd.f32 %v8281, %v8219
    %v8283 = vadd.f32 %v8282, %v8220
    %v8284 = vrot.slane %v8283, 4
    %v8285 = vadd.f32 %v8283, %v8284
    %v8286 = vrot.slane %v8285, 2
    %v8287 = vadd.f32 %v8285, %v8286
    %v8288 = vrot.slane %v8287, 1
    %v8289 = vadd.f32 %v8287, %v8288
    %v8290 = vadd.f32 %v8221, %v8222
    %v8291 = vadd.f32 %v8290, %v8223
    %v8292 = vadd.f32 %v8291, %v8224
    %v8293 = vadd.f32 %v8292, %v8225
    %v8294 = vadd.f32 %v8293, %v8226
    %v8295 = vadd.f32 %v8294, %v8227
    %v8296 = vadd.f32 %v8295, %v8228
    %v8297 = vadd.f32 %v8296, %v8229
    %v8298 = vadd.f32 %v8297, %v8230
    %v8299 = vadd.f32 %v8298, %v8231
    %v8300 = vadd.f32 %v8299, %v8232
    %v8301 = vadd.f32 %v8300, %v8233
    %v8302 = vadd.f32 %v8301, %v8234
    %v8303 = vadd.f32 %v8302, %v8235
    %v8304 = vadd.f32 %v8303, %v8236
    %v8305 = vadd.f32 %v8304, %v8237
    %v8306 = vadd.f32 %v8305, %v8238
    %v8307 = vadd.f32 %v8306, %v8239
    %v8308 = vadd.f32 %v8307, %v8240
    %v8309 = vadd.f32 %v8308, %v8241
    %v8310 = vadd.f32 %v8309, %v8242
    %v8311 = vadd.f32 %v8310, %v8243
    %v8312 = vadd.f32 %v8311, %v8244
    %v8313 = vadd.f32 %v8312, %v8245
    %v8314 = vadd.f32 %v8313, %v8246
    %v8315 = vadd.f32 %v8314, %v8247
    %v8316 = vadd.f32 %v8315, %v8248
    %v8317 = vadd.f32 %v8316, %v8249
    %v8318 = vadd.f32 %v8317, %v8250
    %v8319 = vadd.f32 %v8318, %v8251
    %v8320 = vadd.f32 %v8319, %v8252
    %v8321 = vrot.slane %v8320, 4
    %v8322 = vadd.f32 %v8320, %v8321
    %v8323 = vrot.slane %v8322, 2
    %v8324 = vadd.f32 %v8322, %v8323
    %v8325 = vrot.slane %v8324, 1
    %v8326 = vadd.f32 %v8324, %v8325
    %v8327 = vmul.f32 %v8289, %v3423
    %v8328 = vmul.f32 %v8326, %v3423
    %v8329 = vmul.f32 %v8123, %v8123
    %v8330 = vmul.f32 %v8124, %v8124
    %v8331 = vadd.f32 %v8327, %v8329
    %v8332 = vadd.f32 %v8328, %v8330
    %8333 = vadd.xlane.f32.xlu0 %v8123
    %v8334 = vpop.xlane.xlu0 %8333
    %8335 = vadd.xlane.f32.xlu0 %v8124
    %v8336 = vpop.xlane.xlu0 %8335
    %v8337 = vmul.f32 %v8334, 0.125
    %v8338 = vmul.f32 %v8336, 0.125
    %8339 = vadd.xlane.f32.xlu0 %v8331
    %v8340 = vpop.xlane.xlu0 %8339
    %8341 = vadd.xlane.f32.xlu0 %v8332
    %v8342 = vpop.xlane.xlu0 %8341
    %v8343 = vmul.f32 %v8340, 0.125
    %v8344 = vmul.f32 %v8342, 0.125
    %v8345 = vmul.f32 %v8337, %v8337
    %v8346 = vmul.f32 %v8338, %v8338
    %v8347 = vsub.f32 %v8343, %v8345
    %v8348 = vsub.f32 %v8344, %v8346
    %v8349 = vadd.f32 %v8123, %v8124
    %v8350 = vmul.f32 %v8349, %v3447
    %v8351 = vadd.f32 %v8331, %v8332
    %v8352 = vmul.f32 %v8351, %v3447
    %v8353 = vmul.f32 %v8350, %v8350
    %v8354 = vsub.f32 %v8352, %v8353
    %s8355 = sld [smem:[#allocation9 + $0x6]]
    %s8356 = sld [smem:[#allocation9 + $0x7]]
    %s8357 = sld [smem:[#allocation9 + $0x8]]
    %s8358 = sld [smem:[#allocation9 + $0x9]]
    %s8359 = sld [smem:[#allocation9 + $0xa]]
    %s8360 = sld [smem:[#allocation9 + $0xb]]
    %v8361 = vstv %s8355
    %v8362 = vmul.f32 %v8361, %v8123
    %v8363 = vmul.f32 %v8361, %v8124
    %v8364 = vstv %s8356
    %v8365 = vmul.f32 %v8364, %v8337
    %v8366 = vmul.f32 %v8364, %v8338
    %v8367 = vadd.f32 %v8362, %v8365
    %v8368 = vadd.f32 %v8363, %v8366
    %v8369 = vstv %s8357
    %v8370 = vmul.f32 %v8369, %v8350
    %v8371 = vadd.f32 %v8367, %v8370
    %v8372 = vadd.f32 %v8368, %v8370
    %v8373 = vstv %s8358
    %v8374 = vmul.f32 %v8373, %v8327
    %v8375 = vmul.f32 %v8373, %v8328
    %v8376 = vstv %s8359
    %v8377 = vmul.f32 %v8376, %v8347
    %v8378 = vmul.f32 %v8376, %v8348
    %v8379 = vadd.f32 %v8374, %v8377
    %v8380 = vadd.f32 %v8375, %v8378
    %v8381 = vstv %s8360
    %v8382 = vmul.f32 %v8381, %v8354
    %v8383 = vadd.f32 %v8379, %v8382
    %v8384 = vadd.f32 %v8380, %v8382
    %v8385 = vmax.f32 %v8383, 0.0
    %v8386 = vmax.f32 %v8384, 0.0
    %v8387 = vadd.f32 %v8385, 1e-05
    %v8388 = vadd.f32 %v8386, 1e-05
    %v8389 = vrsqrt.pop %v8387
    %v8390 = vrsqrt.pop %v8388
    %v8391 = vmul.f32 %v8047, %v8389
    %v8392 = vmul.f32 %v8047, %v8390
    %v8393 = vmul.f32 %v8371, %v8391
    %v8394 = vmul.f32 %v8372, %v8392
    %v8395 = vsub.f32 %v8048, %v8393
    %v8396 = vsub.f32 %v8048, %v8394
    %v8399 = vlaneseq
    %v8400 = vshrl.u32 %v8399, 7
    %v8401 = vsub.s32 0, %v8400
    %v8402 = vrot.slane %v8391, %v8401
    %v8403 = vlaneseq
    %v8404 = vshrl.u32 %v8403, 7
    %v8405 = vsub.s32 0, %v8404
    %v8406 = vrot.slane %v8392, %v8405
    %v8409 = vmul.f32 %v7793, %v8402
    %v8410 = vmul.f32 %v7796, %v8402
    %v8411 = vmul.f32 %v7801, %v8402
    %v8412 = vmul.f32 %v7804, %v8402
    %v8413 = vmul.f32 %v7809, %v8402
    %v8414 = vmul.f32 %v7812, %v8402
    %v8415 = vmul.f32 %v7817, %v8402
    %v8416 = vmul.f32 %v7820, %v8402
    %v8417 = vmul.f32 %v7825, %v8402
    %v8418 = vmul.f32 %v7828, %v8402
    %v8419 = vmul.f32 %v7833, %v8402
    %v8420 = vmul.f32 %v7836, %v8402
    %v8421 = vmul.f32 %v7841, %v8402
    %v8422 = vmul.f32 %v7844, %v8402
    %v8423 = vmul.f32 %v7849, %v8402
    %v8424 = vmul.f32 %v7852, %v8402
    %v8425 = vmul.f32 %v7857, %v8402
    %v8426 = vmul.f32 %v7860, %v8402
    %v8427 = vmul.f32 %v7865, %v8402
    %v8428 = vmul.f32 %v7868, %v8402
    %v8429 = vmul.f32 %v7873, %v8402
    %v8430 = vmul.f32 %v7876, %v8402
    %v8431 = vmul.f32 %v7881, %v8402
    %v8432 = vmul.f32 %v7884, %v8402
    %v8433 = vmul.f32 %v7889, %v8402
    %v8434 = vmul.f32 %v7892, %v8402
    %v8435 = vmul.f32 %v7897, %v8402
    %v8436 = vmul.f32 %v7900, %v8402
    %v8437 = vmul.f32 %v7905, %v8402
    %v8438 = vmul.f32 %v7908, %v8402
    %v8439 = vmul.f32 %v7913, %v8402
    %v8440 = vmul.f32 %v7916, %v8402
    %v8441 = vmul.f32 %v7921, %v8406
    %v8442 = vmul.f32 %v7924, %v8406
    %v8443 = vmul.f32 %v7929, %v8406
    %v8444 = vmul.f32 %v7932, %v8406
    %v8445 = vmul.f32 %v7937, %v8406
    %v8446 = vmul.f32 %v7940, %v8406
    %v8447 = vmul.f32 %v7945, %v8406
    %v8448 = vmul.f32 %v7948, %v8406
    %v8449 = vmul.f32 %v7953, %v8406
    %v8450 = vmul.f32 %v7956, %v8406
    %v8451 = vmul.f32 %v7961, %v8406
    %v8452 = vmul.f32 %v7964, %v8406
    %v8453 = vmul.f32 %v7969, %v8406
    %v8454 = vmul.f32 %v7972, %v8406
    %v8455 = vmul.f32 %v7977, %v8406
    %v8456 = vmul.f32 %v7980, %v8406
    %v8457 = vmul.f32 %v7985, %v8406
    %v8458 = vmul.f32 %v7988, %v8406
    %v8459 = vmul.f32 %v7993, %v8406
    %v8460 = vmul.f32 %v7996, %v8406
    %v8461 = vmul.f32 %v8001, %v8406
    %v8462 = vmul.f32 %v8004, %v8406
    %v8463 = vmul.f32 %v8009, %v8406
    %v8464 = vmul.f32 %v8012, %v8406
    %v8465 = vmul.f32 %v8017, %v8406
    %v8466 = vmul.f32 %v8020, %v8406
    %v8467 = vmul.f32 %v8025, %v8406
    %v8468 = vmul.f32 %v8028, %v8406
    %v8469 = vmul.f32 %v8033, %v8406
    %v8470 = vmul.f32 %v8036, %v8406
    %v8471 = vmul.f32 %v8041, %v8406
    %v8472 = vmul.f32 %v8044, %v8406
    %v8475 = vlaneseq
    %v8476 = vshrl.u32 %v8475, 7
    %v8477 = vsub.s32 0, %v8476
    %v8478 = vrot.slane %v8395, %v8477
    %v8479 = vlaneseq
    %v8480 = vshrl.u32 %v8479, 7
    %v8481 = vsub.s32 0, %v8480
    %v8482 = vrot.slane %v8396, %v8481
    %v8485 = vadd.f32 %v8409, %v8478
    %v8486 = vadd.f32 %v8410, %v8478
    %v8487 = vadd.f32 %v8411, %v8478
    %v8488 = vadd.f32 %v8412, %v8478
    %v8489 = vadd.f32 %v8413, %v8478
    %v8490 = vadd.f32 %v8414, %v8478
    %v8491 = vadd.f32 %v8415, %v8478
    %v8492 = vadd.f32 %v8416, %v8478
    %v8493 = vadd.f32 %v8417, %v8478
    %v8494 = vadd.f32 %v8418, %v8478
    %v8495 = vadd.f32 %v8419, %v8478
    %v8496 = vadd.f32 %v8420, %v8478
    %v8497 = vadd.f32 %v8421, %v8478
    %v8498 = vadd.f32 %v8422, %v8478
    %v8499 = vadd.f32 %v8423, %v8478
    %v8500 = vadd.f32 %v8424, %v8478
    %v8501 = vadd.f32 %v8425, %v8478
    %v8502 = vadd.f32 %v8426, %v8478
    %v8503 = vadd.f32 %v8427, %v8478
    %v8504 = vadd.f32 %v8428, %v8478
    %v8505 = vadd.f32 %v8429, %v8478
    %v8506 = vadd.f32 %v8430, %v8478
    %v8507 = vadd.f32 %v8431, %v8478
    %v8508 = vadd.f32 %v8432, %v8478
    %v8509 = vadd.f32 %v8433, %v8478
    %v8510 = vadd.f32 %v8434, %v8478
    %v8511 = vadd.f32 %v8435, %v8478
    %v8512 = vadd.f32 %v8436, %v8478
    %v8513 = vadd.f32 %v8437, %v8478
    %v8514 = vadd.f32 %v8438, %v8478
    %v8515 = vadd.f32 %v8439, %v8478
    %v8516 = vadd.f32 %v8440, %v8478
    %v8517 = vadd.f32 %v8441, %v8482
    %v8518 = vadd.f32 %v8442, %v8482
    %v8519 = vadd.f32 %v8443, %v8482
    %v8520 = vadd.f32 %v8444, %v8482
    %v8521 = vadd.f32 %v8445, %v8482
    %v8522 = vadd.f32 %v8446, %v8482
    %v8523 = vadd.f32 %v8447, %v8482
    %v8524 = vadd.f32 %v8448, %v8482
    %v8525 = vadd.f32 %v8449, %v8482
    %v8526 = vadd.f32 %v8450, %v8482
    %v8527 = vadd.f32 %v8451, %v8482
    %v8528 = vadd.f32 %v8452, %v8482
    %v8529 = vadd.f32 %v8453, %v8482
    %v8530 = vadd.f32 %v8454, %v8482
    %v8531 = vadd.f32 %v8455, %v8482
    %v8532 = vadd.f32 %v8456, %v8482
    %v8533 = vadd.f32 %v8457, %v8482
    %v8534 = vadd.f32 %v8458, %v8482
    %v8535 = vadd.f32 %v8459, %v8482
    %v8536 = vadd.f32 %v8460, %v8482
    %v8537 = vadd.f32 %v8461, %v8482
    %v8538 = vadd.f32 %v8462, %v8482
    %v8539 = vadd.f32 %v8463, %v8482
    %v8540 = vadd.f32 %v8464, %v8482
    %v8541 = vadd.f32 %v8465, %v8482
    %v8542 = vadd.f32 %v8466, %v8482
    %v8543 = vadd.f32 %v8467, %v8482
    %v8544 = vadd.f32 %v8468, %v8482
    %v8545 = vadd.f32 %v8469, %v8482
    %v8546 = vadd.f32 %v8470, %v8482
    %v8547 = vadd.f32 %v8471, %v8482
    %v8548 = vadd.f32 %v8472, %v8482
    %v8549 = vld [vmem:[#allocation3] sm:$0xff]
    %v8550 = vld [vmem:[#allocation3 + $0x8] sm:$0xff]
    %v8551 = vld [vmem:[#allocation3 + $0x10] sm:$0xff]
    %v8552 = vld [vmem:[#allocation3 + $0x18] sm:$0xff]
    %v8553 = vld [vmem:[#allocation3 + $0x20] sm:$0xff]
    %v8554 = vld [vmem:[#allocation3 + $0x28] sm:$0xff]
    %v8555 = vld [vmem:[#allocation3 + $0x30] sm:$0xff]
    %v8556 = vld [vmem:[#allocation3 + $0x38] sm:$0xff]
    %v8557 = vld [vmem:[#allocation3 + $0x40] sm:$0xff]
    %v8558 = vld [vmem:[#allocation3 + $0x48] sm:$0xff]
    %v8559 = vld [vmem:[#allocation3 + $0x50] sm:$0xff]
    %v8560 = vld [vmem:[#allocation3 + $0x58] sm:$0xff]
    %v8561 = vld [vmem:[#allocation3 + $0x60] sm:$0xff]
    %v8562 = vld [vmem:[#allocation3 + $0x68] sm:$0xff]
    %v8563 = vld [vmem:[#allocation3 + $0x70] sm:$0xff]
    %v8564 = vld [vmem:[#allocation3 + $0x78] sm:$0xff]
    %v8565 = vld [vmem:[#allocation3 + $0x80] sm:$0xff]
    %v8566 = vld [vmem:[#allocation3 + $0x88] sm:$0xff]
    %v8567 = vld [vmem:[#allocation3 + $0x90] sm:$0xff]
    %v8568 = vld [vmem:[#allocation3 + $0x98] sm:$0xff]
    %v8569 = vld [vmem:[#allocation3 + $0xa0] sm:$0xff]
    %v8570 = vld [vmem:[#allocation3 + $0xa8] sm:$0xff]
    %v8571 = vld [vmem:[#allocation3 + $0xb0] sm:$0xff]
    %v8572 = vld [vmem:[#allocation3 + $0xb8] sm:$0xff]
    %v8573 = vld [vmem:[#allocation3 + $0xc0] sm:$0xff]
    %v8574 = vld [vmem:[#allocation3 + $0xc8] sm:$0xff]
    %v8575 = vld [vmem:[#allocation3 + $0xd0] sm:$0xff]
    %v8576 = vld [vmem:[#allocation3 + $0xd8] sm:$0xff]
    %v8577 = vld [vmem:[#allocation3 + $0xe0] sm:$0xff]
    %v8578 = vld [vmem:[#allocation3 + $0xe8] sm:$0xff]
    %v8579 = vld [vmem:[#allocation3 + $0xf0] sm:$0xff]
    %v8580 = vld [vmem:[#allocation3 + $0xf8] sm:$0xff]
    %v8581 = vld [vmem:[#allocation3 + $0x100] sm:$0xff]
    %v8582 = vld [vmem:[#allocation3 + $0x108] sm:$0xff]
    %v8583 = vld [vmem:[#allocation3 + $0x110] sm:$0xff]
    %v8584 = vld [vmem:[#allocation3 + $0x118] sm:$0xff]
    %v8585 = vld [vmem:[#allocation3 + $0x120] sm:$0xff]
    %v8586 = vld [vmem:[#allocation3 + $0x128] sm:$0xff]
    %v8587 = vld [vmem:[#allocation3 + $0x130] sm:$0xff]
    %v8588 = vld [vmem:[#allocation3 + $0x138] sm:$0xff]
    %v8589 = vld [vmem:[#allocation3 + $0x140] sm:$0xff]
    %v8590 = vld [vmem:[#allocation3 + $0x148] sm:$0xff]
    %v8591 = vld [vmem:[#allocation3 + $0x150] sm:$0xff]
    %v8592 = vld [vmem:[#allocation3 + $0x158] sm:$0xff]
    %v8593 = vld [vmem:[#allocation3 + $0x160] sm:$0xff]
    %v8594 = vld [vmem:[#allocation3 + $0x168] sm:$0xff]
    %v8595 = vld [vmem:[#allocation3 + $0x170] sm:$0xff]
    %v8596 = vld [vmem:[#allocation3 + $0x178] sm:$0xff]
    %v8597 = vld [vmem:[#allocation3 + $0x180] sm:$0xff]
    %v8598 = vld [vmem:[#allocation3 + $0x188] sm:$0xff]
    %v8599 = vld [vmem:[#allocation3 + $0x190] sm:$0xff]
    %v8600 = vld [vmem:[#allocation3 + $0x198] sm:$0xff]
    %v8601 = vld [vmem:[#allocation3 + $0x1a0] sm:$0xff]
    %v8602 = vld [vmem:[#allocation3 + $0x1a8] sm:$0xff]
    %v8603 = vld [vmem:[#allocation3 + $0x1b0] sm:$0xff]
    %v8604 = vld [vmem:[#allocation3 + $0x1b8] sm:$0xff]
    %v8605 = vld [vmem:[#allocation3 + $0x1c0] sm:$0xff]
    %v8606 = vld [vmem:[#allocation3 + $0x1c8] sm:$0xff]
    %v8607 = vld [vmem:[#allocation3 + $0x1d0] sm:$0xff]
    %v8608 = vld [vmem:[#allocation3 + $0x1d8] sm:$0xff]
    %v8609 = vld [vmem:[#allocation3 + $0x1e0] sm:$0xff]
    %v8610 = vld [vmem:[#allocation3 + $0x1e8] sm:$0xff]
    %v8611 = vld [vmem:[#allocation3 + $0x1f0] sm:$0xff]
    %v8612 = vld [vmem:[#allocation3 + $0x1f8] sm:$0xff]
    %v8613 = vadd.f32 %v8485, %v8549
    %v8614 = vadd.f32 %v8486, %v8550
    %v8615 = vadd.f32 %v8487, %v8551
    %v8616 = vadd.f32 %v8488, %v8552
    %v8617 = vadd.f32 %v8489, %v8553
    %v8618 = vadd.f32 %v8490, %v8554
    %v8619 = vadd.f32 %v8491, %v8555
    %v8620 = vadd.f32 %v8492, %v8556
    %v8621 = vadd.f32 %v8493, %v8557
    %v8622 = vadd.f32 %v8494, %v8558
    %v8623 = vadd.f32 %v8495, %v8559
    %v8624 = vadd.f32 %v8496, %v8560
    %v8625 = vadd.f32 %v8497, %v8561
    %v8626 = vadd.f32 %v8498, %v8562
    %v8627 = vadd.f32 %v8499, %v8563
    %v8628 = vadd.f32 %v8500, %v8564
    %v8629 = vadd.f32 %v8501, %v8565
    %v8630 = vadd.f32 %v8502, %v8566
    %v8631 = vadd.f32 %v8503, %v8567
    %v8632 = vadd.f32 %v8504, %v8568
    %v8633 = vadd.f32 %v8505, %v8569
    %v8634 = vadd.f32 %v8506, %v8570
    %v8635 = vadd.f32 %v8507, %v8571
    %v8636 = vadd.f32 %v8508, %v8572
    %v8637 = vadd.f32 %v8509, %v8573
    %v8638 = vadd.f32 %v8510, %v8574
    %v8639 = vadd.f32 %v8511, %v8575
    %v8640 = vadd.f32 %v8512, %v8576
    %v8641 = vadd.f32 %v8513, %v8577
    %v8642 = vadd.f32 %v8514, %v8578
    %v8643 = vadd.f32 %v8515, %v8579
    %v8644 = vadd.f32 %v8516, %v8580
    %v8645 = vadd.f32 %v8517, %v8581
    %v8646 = vadd.f32 %v8518, %v8582
    %v8647 = vadd.f32 %v8519, %v8583
    %v8648 = vadd.f32 %v8520, %v8584
    %v8649 = vadd.f32 %v8521, %v8585
    %v8650 = vadd.f32 %v8522, %v8586
    %v8651 = vadd.f32 %v8523, %v8587
    %v8652 = vadd.f32 %v8524, %v8588
    %v8653 = vadd.f32 %v8525, %v8589
    %v8654 = vadd.f32 %v8526, %v8590
    %v8655 = vadd.f32 %v8527, %v8591
    %v8656 = vadd.f32 %v8528, %v8592
    %v8657 = vadd.f32 %v8529, %v8593
    %v8658 = vadd.f32 %v8530, %v8594
    %v8659 = vadd.f32 %v8531, %v8595
    %v8660 = vadd.f32 %v8532, %v8596
    %v8661 = vadd.f32 %v8533, %v8597
    %v8662 = vadd.f32 %v8534, %v8598
    %v8663 = vadd.f32 %v8535, %v8599
    %v8664 = vadd.f32 %v8536, %v8600
    %v8665 = vadd.f32 %v8537, %v8601
    %v8666 = vadd.f32 %v8538, %v8602
    %v8667 = vadd.f32 %v8539, %v8603
    %v8668 = vadd.f32 %v8540, %v8604
    %v8669 = vadd.f32 %v8541, %v8605
    %v8670 = vadd.f32 %v8542, %v8606
    %v8671 = vadd.f32 %v8543, %v8607
    %v8672 = vadd.f32 %v8544, %v8608
    %v8673 = vadd.f32 %v8545, %v8609
    %v8674 = vadd.f32 %v8546, %v8610
    %v8675 = vadd.f32 %v8547, %v8611
    %v8676 = vadd.f32 %v8548, %v8612
    %v8677 = vmax.f32 %v8613, 0.0
    %v8678 = vmax.f32 %v8614, 0.0
    %v8679 = vmax.f32 %v8615, 0.0
    %v8680 = vmax.f32 %v8616, 0.0
    %v8681 = vmax.f32 %v8617, 0.0
    %v8682 = vmax.f32 %v8618, 0.0
    %v8683 = vmax.f32 %v8619, 0.0
    %v8684 = vmax.f32 %v8620, 0.0
    %v8685 = vmax.f32 %v8621, 0.0
    %v8686 = vmax.f32 %v8622, 0.0
    %v8687 = vmax.f32 %v8623, 0.0
    %v8688 = vmax.f32 %v8624, 0.0
    %v8689 = vmax.f32 %v8625, 0.0
    %v8690 = vmax.f32 %v8626, 0.0
    %v8691 = vmax.f32 %v8627, 0.0
    %v8692 = vmax.f32 %v8628, 0.0
    %v8693 = vmax.f32 %v8629, 0.0
    %v8694 = vmax.f32 %v8630, 0.0
    %v8695 = vmax.f32 %v8631, 0.0
    %v8696 = vmax.f32 %v8632, 0.0
    %v8697 = vmax.f32 %v8633, 0.0
    %v8698 = vmax.f32 %v8634, 0.0
    %v8699 = vmax.f32 %v8635, 0.0
    %v8700 = vmax.f32 %v8636, 0.0
    %v8701 = vmax.f32 %v8637, 0.0
    %v8702 = vmax.f32 %v8638, 0.0
    %v8703 = vmax.f32 %v8639, 0.0
    %v8704 = vmax.f32 %v8640, 0.0
    %v8705 = vmax.f32 %v8641, 0.0
    %v8706 = vmax.f32 %v8642, 0.0
    %v8707 = vmax.f32 %v8643, 0.0
    %v8708 = vmax.f32 %v8644, 0.0
    %v8709 = vmax.f32 %v8645, 0.0
    %v8710 = vmax.f32 %v8646, 0.0
    %v8711 = vmax.f32 %v8647, 0.0
    %v8712 = vmax.f32 %v8648, 0.0
    %v8713 = vmax.f32 %v8649, 0.0
    %v8714 = vmax.f32 %v8650, 0.0
    %v8715 = vmax.f32 %v8651, 0.0
    %v8716 = vmax.f32 %v8652, 0.0
    %v8717 = vmax.f32 %v8653, 0.0
    %v8718 = vmax.f32 %v8654, 0.0
    %v8719 = vmax.f32 %v8655, 0.0
    %v8720 = vmax.f32 %v8656, 0.0
    %v8721 = vmax.f32 %v8657, 0.0
    %v8722 = vmax.f32 %v8658, 0.0
    %v8723 = vmax.f32 %v8659, 0.0
    %v8724 = vmax.f32 %v8660, 0.0
    %v8725 = vmax.f32 %v8661, 0.0
    %v8726 = vmax.f32 %v8662, 0.0
    %v8727 = vmax.f32 %v8663, 0.0
    %v8728 = vmax.f32 %v8664, 0.0
    %v8729 = vmax.f32 %v8665, 0.0
    %v8730 = vmax.f32 %v8666, 0.0
    %v8731 = vmax.f32 %v8667, 0.0
    %v8732 = vmax.f32 %v8668, 0.0
    %v8733 = vmax.f32 %v8669, 0.0
    %v8734 = vmax.f32 %v8670, 0.0
    %v8735 = vmax.f32 %v8671, 0.0
    %v8736 = vmax.f32 %v8672, 0.0
    %v8737 = vmax.f32 %v8673, 0.0
    %v8738 = vmax.f32 %v8674, 0.0
    %v8739 = vmax.f32 %v8675, 0.0
    %v8740 = vmax.f32 %v8676, 0.0
    %8741 = vst [vmem:[#allocation10] sm:$0xff] %v8677
    %8742 = vst [vmem:[#allocation10 + $0x8] sm:$0xff] %v8678
    %8743 = vst [vmem:[#allocation10 + $0x10] sm:$0xff] %v8679
    %8744 = vst [vmem:[#allocation10 + $0x18] sm:$0xff] %v8680
    %8745 = vst [vmem:[#allocation10 + $0x20] sm:$0xff] %v8681
    %8746 = vst [vmem:[#allocation10 + $0x28] sm:$0xff] %v8682
    %8747 = vst [vmem:[#allocation10 + $0x30] sm:$0xff] %v8683
    %8748 = vst [vmem:[#allocation10 + $0x38] sm:$0xff] %v8684
    %8749 = vst [vmem:[#allocation10 + $0x40] sm:$0xff] %v8685
    %8750 = vst [vmem:[#allocation10 + $0x48] sm:$0xff] %v8686
    %8751 = vst [vmem:[#allocation10 + $0x50] sm:$0xff] %v8687
    %8752 = vst [vmem:[#allocation10 + $0x58] sm:$0xff] %v8688
    %8753 = vst [vmem:[#allocation10 + $0x60] sm:$0xff] %v8689
    %8754 = vst [vmem:[#allocation10 + $0x68] sm:$0xff] %v8690
    %8755 = vst [vmem:[#allocation10 + $0x70] sm:$0xff] %v8691
    %8756 = vst [vmem:[#allocation10 + $0x78] sm:$0xff] %v8692
    %8757 = vst [vmem:[#allocation10 + $0x80] sm:$0xff] %v8693
    %8758 = vst [vmem:[#allocation10 + $0x88] sm:$0xff] %v8694
    %8759 = vst [vmem:[#allocation10 + $0x90] sm:$0xff] %v8695
    %8760 = vst [vmem:[#allocation10 + $0x98] sm:$0xff] %v8696
    %8761 = vst [vmem:[#allocation10 + $0xa0] sm:$0xff] %v8697
    %8762 = vst [vmem:[#allocation10 + $0xa8] sm:$0xff] %v8698
    %8763 = vst [vmem:[#allocation10 + $0xb0] sm:$0xff] %v8699
    %8764 = vst [vmem:[#allocation10 + $0xb8] sm:$0xff] %v8700
    %8765 = vst [vmem:[#allocation10 + $0xc0] sm:$0xff] %v8701
    %8766 = vst [vmem:[#allocation10 + $0xc8] sm:$0xff] %v8702
    %8767 = vst [vmem:[#allocation10 + $0xd0] sm:$0xff] %v8703
    %8768 = vst [vmem:[#allocation10 + $0xd8] sm:$0xff] %v8704
    %8769 = vst [vmem:[#allocation10 + $0xe0] sm:$0xff] %v8705
    %8770 = vst [vmem:[#allocation10 + $0xe8] sm:$0xff] %v8706
    %8771 = vst [vmem:[#allocation10 + $0xf0] sm:$0xff] %v8707
    %8772 = vst [vmem:[#allocation10 + $0xf8] sm:$0xff] %v8708
    %8773 = vst [vmem:[#allocation10 + $0x100] sm:$0xff] %v8709
    %8774 = vst [vmem:[#allocation10 + $0x108] sm:$0xff] %v8710
    %8775 = vst [vmem:[#allocation10 + $0x110] sm:$0xff] %v8711
    %8776 = vst [vmem:[#allocation10 + $0x118] sm:$0xff] %v8712
    %8777 = vst [vmem:[#allocation10 + $0x120] sm:$0xff] %v8713
    %8778 = vst [vmem:[#allocation10 + $0x128] sm:$0xff] %v8714
    %8779 = vst [vmem:[#allocation10 + $0x130] sm:$0xff] %v8715
    %8780 = vst [vmem:[#allocation10 + $0x138] sm:$0xff] %v8716
    %8781 = vst [vmem:[#allocation10 + $0x140] sm:$0xff] %v8717
    %8782 = vst [vmem:[#allocation10 + $0x148] sm:$0xff] %v8718
    %8783 = vst [vmem:[#allocation10 + $0x150] sm:$0xff] %v8719
    %8784 = vst [vmem:[#allocation10 + $0x158] sm:$0xff] %v8720
    %8785 = vst [vmem:[#allocation10 + $0x160] sm:$0xff] %v8721
    %8786 = vst [vmem:[#allocation10 + $0x168] sm:$0xff] %v8722
    %8787 = vst [vmem:[#allocation10 + $0x170] sm:$0xff] %v8723
    %8788 = vst [vmem:[#allocation10 + $0x178] sm:$0xff] %v8724
    %8789 = vst [vmem:[#allocation10 + $0x180] sm:$0xff] %v8725
    %8790 = vst [vmem:[#allocation10 + $0x188] sm:$0xff] %v8726
    %8791 = vst [vmem:[#allocation10 + $0x190] sm:$0xff] %v8727
    %8792 = vst [vmem:[#allocation10 + $0x198] sm:$0xff] %v8728
    %8793 = vst [vmem:[#allocation10 + $0x1a0] sm:$0xff] %v8729
    %8794 = vst [vmem:[#allocation10 + $0x1a8] sm:$0xff] %v8730
    %8795 = vst [vmem:[#allocation10 + $0x1b0] sm:$0xff] %v8731
    %8796 = vst [vmem:[#allocation10 + $0x1b8] sm:$0xff] %v8732
    %8797 = vst [vmem:[#allocation10 + $0x1c0] sm:$0xff] %v8733
    %8798 = vst [vmem:[#allocation10 + $0x1c8] sm:$0xff] %v8734
    %8799 = vst [vmem:[#allocation10 + $0x1d0] sm:$0xff] %v8735
    %8800 = vst [vmem:[#allocation10 + $0x1d8] sm:$0xff] %v8736
    %8801 = vst [vmem:[#allocation10 + $0x1e0] sm:$0xff] %v8737
    %8802 = vst [vmem:[#allocation10 + $0x1e8] sm:$0xff] %v8738
    %8803 = vst [vmem:[#allocation10 + $0x1f0] sm:$0xff] %v8739
    %8804 = vst [vmem:[#allocation10 + $0x1f8] sm:$0xff] %v8740
    // Predicated region
    $region50: #{tpu_custom_call.1} parent=1 // pred_check
      _
    $region51: #{tpu_custom_call.1} parent=1 // pred_check_branch
      %8806 = sbr.rel (0) target = $region53
    $region52: #{tpu_custom_call.1} parent=1 // pred_region
      %s8808 = ssub.s32 8192, 8192
      %8809 = vsyncadd [#allocation5], %s8808
      %s8810 = sshll.u32 [#allocation10], 4
      %s8811 = int_to_ptr.vmem [resolvable:$true] %s8810
      %8816 = dma.vmem_to_hbm [thread:$0]  %s8811, 8192, %s9, [#allocation5], 128, 128, 8
    $region53: #{tpu_custom_call.1} parent=1 // pred_fallthru
      _
    // Predicated region
    $region54: #{tpu_custom_call.1} parent=1 // pred_check
      _
    $region55: #{tpu_custom_call.1} parent=1 // pred_check_branch
      %8818 = sbr.rel (0) target = $region57
    $region56: #{tpu_custom_call.1} parent=1 // pred_region
      %8819 = dma.done [#allocation5], 8192
    $region57: #{tpu_custom_call.1} parent=1 // pred_fallthru
      _
    %8820 = vsyncpa [#allocation4], 1
    %8821 = vsyncpa [#allocation8], 1
    %8822 = vsyncpa [#allocation5], 1
    %8823 = vsyncpa [#allocation6], 1

</llo_original>
